<compile_context>
chip_gen: v7x
topology: tpu7x:2x2x1
jax: 0.10.0
libtpu: 0.0.40
codegen_flags: <defaults>
</compile_context>

<pallas_src>
import numpy as np
import jax
import jax.numpy as jnp
from jax.experimental import pallas as pl
from jax.experimental.pallas import tpu as pltpu


# ----------------------------------------------------------------------------
# Setup-time parameter preprocessing (plain JAX / numpy, runs once).
# ----------------------------------------------------------------------------
def spectral_normalize(w_oihw, n_iter=1, eps=1e-12):
    """Spectral-norm weight reparameterization (setup-time, plain JAX).
    One power iteration from a deterministic u (torch keeps a persistent random
    u across forwards; weights here are synthetic, so determinism is preferred)."""
    cout = w_oihw.shape[0]
    wm = w_oihw.reshape(cout, -1)
    u = jnp.ones((cout,), jnp.float32) / jnp.sqrt(jnp.float32(cout))
    v = None
    for _ in range(n_iter):
        v = wm.T @ u
        v = v / (jnp.linalg.norm(v) + eps)
        u = wm @ v
        u = u / (jnp.linalg.norm(u) + eps)
    sigma = u @ (wm @ v)
    return w_oihw / sigma


def _build_block_constants(w_oihw, bias, hin, win, stride, pad):
    """Expand one conv layer into the fused kernel's matmul operands.

    R[dy]  : (Ho, Hin)             0/1 row selection (vertical tap dy + stride).
    G      : (KH*Win*Cin, Wo*Cout) horizontal-tap + channel contraction weights,
                                   rows ordered (dy, w, cin), cols ordered (ox, cout).
    b_row  : (1, Wo*Cout)          bias broadcast over the (col, chan) lane layout.
    Zero padding is folded into R/G (out-of-range taps get zero coefficients),
    so activations are stored unpadded in the (H, W*C) layout.
    """
    w = np.asarray(w_oihw, np.float32)
    b = np.asarray(bias, np.float32)
    cout, cin, kh, kw = w.shape
    ho = (hin + 2 * pad - kh) // stride + 1
    wo = (win + 2 * pad - kw) // stride + 1

    r = np.zeros((kh, ho, hin), np.float32)
    for dy in range(kh):
        for oy in range(ho):
            h_in = stride * oy + dy - pad
            if 0 <= h_in < hin:
                r[dy, oy, h_in] = 1.0

    g = np.zeros((kh, win * cin, wo * cout), np.float32)
    for dy in range(kh):
        for ox in range(wo):
            for dx in range(kw):
                w_in = stride * ox + dx - pad
                if 0 <= w_in < win:
                    g[dy, w_in * cin:(w_in + 1) * cin,
                      ox * cout:(ox + 1) * cout] = w[:, :, dy, dx].T
    g = g.reshape(kh * win * cin, wo * cout)

    b_row = np.tile(b, wo)[None, :]
    return r, g, b_row, ho, wo


def _instance_norm_matrix(cout, ho, wo):
    """(Wo*Cout, Wo*Cout) matrix that averages lanes sharing the same channel."""
    ch = np.arange(wo * cout) % cout
    return (ch[:, None] == ch[None, :]).astype(np.float32) / float(ho * wo)


# ----------------------------------------------------------------------------
# Fused Pallas kernel: all six blocks for one batch element per grid step.
# ----------------------------------------------------------------------------
def _make_fused_kernel(block_cfgs):
    """Ref order: x_ref, then per block [r_ref, g_ref, b_ref, (mm_ref if norm)],
    then out_ref. All shapes are static; the Python loops unroll at trace time."""

    def kernel(*refs):
        x_ref, out_ref = refs[0], refs[-1]
        a = x_ref[0]                                    # (H0, W0*Cin) bf16
        y = None
        idx = 1
        for cfg in block_cfgs:
            r_ref, g_ref, b_ref = refs[idx], refs[idx + 1], refs[idx + 2]
            idx += 3
            mm_ref = None
            if cfg["norm"]:
                mm_ref = refs[idx]
                idx += 1

            # Conv: vertical taps via 0/1 row-selection matmuls (exact in bf16),
            # then one bf16 MXU matmul with K = KH*Win*Cin (multiple of 128),
            # accumulated in f32.
            taps = []
            for dy in range(cfg["kh"]):
                t = jnp.dot(r_ref[dy], a, preferred_element_type=jnp.float32)
                taps.append(t.astype(jnp.bfloat16))
            s_cat = taps[0] if len(taps) == 1 else jnp.concatenate(taps, axis=-1)
            y = jnp.dot(s_cat, g_ref[...], preferred_element_type=jnp.float32)
            y = y + b_ref[...]                          # (1, Wo*Cout) f32 bias row

            if cfg["norm"]:
                # InstanceNorm2d (affine=False, eps=1e-5): one-pass f32 stats,
                # per-channel reduce/broadcast via the same-channel matmul.
                ssum = jnp.sum(y, axis=0, keepdims=True)
                ssq = jnp.sum(y * y, axis=0, keepdims=True)
                mean = jnp.dot(ssum, mm_ref[...],
                               preferred_element_type=jnp.float32)
                ex2 = jnp.dot(ssq, mm_ref[...],
                              preferred_element_type=jnp.float32)
                var = ex2 - mean * mean
                y = (y - mean) * jax.lax.rsqrt(var + 1e-5)

            if cfg["act"] == "lrelu":
                y = jnp.where(y >= 0.0, y, 0.2 * y)

            a = y.astype(jnp.bfloat16)                  # next block's input (stays on-chip)

        out_ref[0] = y                                  # (1, 1) f32 patch logit

    return kernel


# ----------------------------------------------------------------------------
# Module wrapper.
# ----------------------------------------------------------------------------
class PatchDiscriminatorPallas:
    """block1..block6 of the PyTorch PatchDiscriminator, fused in one pallas_call."""

    def __init__(self, in_channels=4, latent_channels=8, image_size=32, key=None):
        if key is None:
            key = jax.random.PRNGKey(42)
        lc = latent_channels
        #             (cin,        cout,   k, s, p, norm,  act)
        self.specs = [
            (in_channels, lc,      7, 1, 3, False, "lrelu"),   # block1 (norm='none')
            (lc,          lc * 2,  4, 2, 1, True,  "lrelu"),   # block2
            (lc * 2,      lc * 4,  4, 2, 1, True,  "lrelu"),   # block3
            (lc * 4,      lc * 4,  4, 2, 1, True,  "lrelu"),   # block4
            (lc * 4,      lc * 4,  4, 2, 1, True,  "lrelu"),   # block5
            (lc * 4,      1,       4, 2, 1, False, "none"),    # block6
        ]
        self.in_channels = in_channels
        self.image_size = image_size

        self.params = []     # (w, b) spectral-normalized f32 (for the reference path)
        self.consts = []     # flat kernel operands: per block [R, G, bias_row, (mm)]
        self.cfgs = []       # static per-block kernel config
        h, w_sp = image_size, image_size
        for i, (cin, cout, k, s, p, nrm, act) in enumerate(self.specs):
            kw_, kb_ = jax.random.split(jax.random.fold_in(key, i))
            wgt = 0.05 * jax.random.normal(kw_, (cout, cin, k, k), jnp.float32)
            b = 0.01 * jax.random.normal(kb_, (cout,), jnp.float32)
            wgt = spectral_normalize(wgt)               # sn=True on every conv
            self.params.append((wgt, b))

            r, g, b_row, ho, wo = _build_block_constants(wgt, b, h, w_sp, s, p)
            self.consts += [jnp.asarray(r, jnp.bfloat16),   # 0/1: exact in bf16
                            jnp.asarray(g, jnp.bfloat16),   # bf16 MXU operand
                            jnp.asarray(b_row, jnp.float32)]
            if nrm:
                self.consts.append(
                    jnp.asarray(_instance_norm_matrix(cout, ho, wo), jnp.float32))
            self.cfgs.append(dict(kh=k, norm=nrm, act=act))
            h, w_sp = ho, wo
        assert (h, w_sp) == (1, 1), "image_size must reduce to a 1x1 patch output"
        self._kernel = _make_fused_kernel(self.cfgs)

    def __call__(self, x_nchw):
        n, cin, h, w = x_nchw.shape
        assert cin == self.in_channels and h == w == self.image_size
        # NCHW -> (N, H, W*C): spatial rows on sublanes, (col, chan) on lanes.
        a0 = jnp.transpose(x_nchw, (0, 2, 3, 1)).reshape(n, h, w * cin)
        a0 = a0.astype(jnp.bfloat16)

        in_specs = [pl.BlockSpec((1, h, w * cin), lambda i: (i, 0, 0))]
        for c in self.consts:
            # Whole-array blocks with a constant index map: consecutive grid
            # steps revisit the same block, so the pipeline skips the re-DMA.
            zeros = (0,) * c.ndim
            in_specs.append(pl.BlockSpec(c.shape, lambda i, z=zeros: z))

        out = pl.pallas_call(
            self._kernel,
            out_shape=jax.ShapeDtypeStruct((n, 1, 1), jnp.float32),
            grid=(n,),
            in_specs=in_specs,
            out_specs=pl.BlockSpec((1, 1, 1), lambda i: (i, 0, 0)),
            compiler_params=pltpu.CompilerParams(
                dimension_semantics=("parallel",)),
        )(a0, *self.consts)
        return out.reshape(n, 1, 1, 1)

    def reference(self, x_nchw):
        """Pure-XLA reference with matching bf16-operand / f32-accumulate numerics."""
        a = x_nchw.astype(jnp.bfloat16)
        y = None
        for (wgt, b), (cin, cout, k, s, p, nrm, act) in zip(self.params, self.specs):
            y = jax.lax.conv_general_dilated(
                a, wgt.astype(jnp.bfloat16),
                window_strides=(s, s), padding=[(p, p), (p, p)],
                dimension_numbers=("NCHW", "OIHW", "NCHW"),
                preferred_element_type=jnp.float32)
            y = y + b.reshape(1, -1, 1, 1)
            if nrm:
                mean = jnp.mean(y, axis=(2, 3), keepdims=True)
                var = jnp.mean((y - mean) ** 2, axis=(2, 3), keepdims=True)
                y = (y - mean) * jax.lax.rsqrt(var + 1e-5)
            if act == "lrelu":
                y = jnp.where(y >= 0.0, y, 0.2 * y)
            a = y.astype(jnp.bfloat16)
        return y


if __name__ == "__main__":
    # 32x32 input: the smallest spatial size for which the five stride-2 stages
    # after the stride-1 stem still yield a valid 1x1 patch output.
    x = jax.random.normal(jax.random.PRNGKey(0), (2, 4, 32, 32), jnp.float32)

    model = PatchDiscriminatorPallas(in_channels=4, latent_channels=8,
                                     image_size=32)
    y = jax.block_until_ready(model(x))

    assert y.shape == (2, 1, 1, 1), y.shape
    assert bool(jnp.all(jnp.isfinite(y)))

    # Validate the fused kernel against the pure-XLA reference.
    y_ref = jax.block_until_ready(model.reference(x))
    np.testing.assert_allclose(np.asarray(y), np.asarray(y_ref),
                               rtol=5e-2, atol=5e-2)
    print("KERNEL_OK")
</pallas_src>

<mosaic_0001>
module attributes {stable_mosaic.version = 11 : i64} {
  func.func @kernel(%arg0: i32, %arg1: memref<1x32x128xbf16, #tpu.memory_space<vmem>>, %arg2: memref<7x32x32xbf16, #tpu.memory_space<vmem>>, %arg3: memref<896x256xbf16, #tpu.memory_space<vmem>>, %arg4: memref<1x256xf32, #tpu.memory_space<vmem>>, %arg5: memref<4x16x32xbf16, #tpu.memory_space<vmem>>, %arg6: memref<1024x256xbf16, #tpu.memory_space<vmem>>, %arg7: memref<1x256xf32, #tpu.memory_space<vmem>>, %arg8: memref<256x256xf32, #tpu.memory_space<vmem>>, %arg9: memref<4x8x16xbf16, #tpu.memory_space<vmem>>, %arg10: memref<1024x256xbf16, #tpu.memory_space<vmem>>, %arg11: memref<1x256xf32, #tpu.memory_space<vmem>>, %arg12: memref<256x256xf32, #tpu.memory_space<vmem>>, %arg13: memref<4x4x8xbf16, #tpu.memory_space<vmem>>, %arg14: memref<1024x128xbf16, #tpu.memory_space<vmem>>, %arg15: memref<1x128xf32, #tpu.memory_space<vmem>>, %arg16: memref<128x128xf32, #tpu.memory_space<vmem>>, %arg17: memref<4x2x4xbf16, #tpu.memory_space<vmem>>, %arg18: memref<512x64xbf16, #tpu.memory_space<vmem>>, %arg19: memref<1x64xf32, #tpu.memory_space<vmem>>, %arg20: memref<64x64xf32, #tpu.memory_space<vmem>>, %arg21: memref<4x1x2xbf16, #tpu.memory_space<vmem>>, %arg22: memref<256x1xbf16, #tpu.memory_space<vmem>>, %arg23: memref<1x1xf32, #tpu.memory_space<vmem>>, %arg24: memref<1x1x1xf32, #tpu.memory_space<vmem>>) attributes {dimension_semantics = [#tpu.dimension_semantics<parallel>], iteration_bounds = array<i64: 2>, scalar_prefetch = 0 : i64, scratch_operands = 0 : i64, tpu.core_type = #tpu.core_type<tc>, window_params = [{transform_indices = @transform_0, window_bounds = array<i64: 1, 32, 128>}, {pipeline_mode = #tpu.pipeline_mode<synchronous>, transform_indices = @transform_1, window_bounds = array<i64: 7, 32, 32>}, {pipeline_mode = #tpu.pipeline_mode<synchronous>, transform_indices = @transform_2, window_bounds = array<i64: 896, 256>}, {pipeline_mode = #tpu.pipeline_mode<synchronous>, transform_indices = @transform_3, window_bounds = array<i64: 1, 256>}, {pipeline_mode = #tpu.pipeline_mode<synchronous>, transform_indices = @transform_4, window_bounds = array<i64: 4, 16, 32>}, {pipeline_mode = #tpu.pipeline_mode<synchronous>, transform_indices = @transform_5, window_bounds = array<i64: 1024, 256>}, {pipeline_mode = #tpu.pipeline_mode<synchronous>, transform_indices = @transform_6, window_bounds = array<i64: 1, 256>}, {pipeline_mode = #tpu.pipeline_mode<synchronous>, transform_indices = @transform_7, window_bounds = array<i64: 256, 256>}, {pipeline_mode = #tpu.pipeline_mode<synchronous>, transform_indices = @transform_8, window_bounds = array<i64: 4, 8, 16>}, {pipeline_mode = #tpu.pipeline_mode<synchronous>, transform_indices = @transform_9, window_bounds = array<i64: 1024, 256>}, {pipeline_mode = #tpu.pipeline_mode<synchronous>, transform_indices = @transform_10, window_bounds = array<i64: 1, 256>}, {pipeline_mode = #tpu.pipeline_mode<synchronous>, transform_indices = @transform_11, window_bounds = array<i64: 256, 256>}, {pipeline_mode = #tpu.pipeline_mode<synchronous>, transform_indices = @transform_12, window_bounds = array<i64: 4, 4, 8>}, {pipeline_mode = #tpu.pipeline_mode<synchronous>, transform_indices = @transform_13, window_bounds = array<i64: 1024, 128>}, {pipeline_mode = #tpu.pipeline_mode<synchronous>, transform_indices = @transform_14, window_bounds = array<i64: 1, 128>}, {pipeline_mode = #tpu.pipeline_mode<synchronous>, transform_indices = @transform_15, window_bounds = array<i64: 128, 128>}, {pipeline_mode = #tpu.pipeline_mode<synchronous>, transform_indices = @transform_16, window_bounds = array<i64: 4, 2, 4>}, {pipeline_mode = #tpu.pipeline_mode<synchronous>, transform_indices = @transform_17, window_bounds = array<i64: 512, 64>}, {pipeline_mode = #tpu.pipeline_mode<synchronous>, transform_indices = @transform_18, window_bounds = array<i64: 1, 64>}, {pipeline_mode = #tpu.pipeline_mode<synchronous>, transform_indices = @transform_19, window_bounds = array<i64: 64, 64>}, {pipeline_mode = #tpu.pipeline_mode<synchronous>, transform_indices = @transform_20, window_bounds = array<i64: 4, 1, 2>}, {pipeline_mode = #tpu.pipeline_mode<synchronous>, transform_indices = @transform_21, window_bounds = array<i64: 256, 1>}, {pipeline_mode = #tpu.pipeline_mode<synchronous>, transform_indices = @transform_22, window_bounds = array<i64: 1, 1>}, {transform_indices = @transform_23, window_bounds = array<i64: 1, 1, 1>}]} {
    %c0 = arith.constant 0 : index
    %c0_0 = arith.constant 0 : index
    %c0_1 = arith.constant 0 : index
    %0 = vector.load %arg1[%c0, %c0_0, %c0_1] : memref<1x32x128xbf16, #tpu.memory_space<vmem>>, vector<1x32x128xbf16>
    %1 = vector.shape_cast %0 : vector<1x32x128xbf16> to vector<32x128xbf16>
    %c0_2 = arith.constant 0 : index
    %c0_3 = arith.constant 0 : index
    %c0_4 = arith.constant 0 : index
    %2 = vector.load %arg2[%c0_2, %c0_3, %c0_4] : memref<7x32x32xbf16, #tpu.memory_space<vmem>>, vector<1x32x32xbf16>
    %3 = vector.shape_cast %2 : vector<1x32x32xbf16> to vector<32x32xbf16>
    %cst = arith.constant dense<0.000000e+00> : vector<32x128xf32>
    %4 = tpu.matmul %3, %1, %cst {dimension_numbers = #tpu.dot_dimension_numbers<[1], [0], [0], [1], [0, 0, 1, 1], [], []>} : vector<32x32xbf16>, vector<32x128xbf16>, vector<32x128xf32> -> vector<32x128xf32>
    %5 = arith.truncf %4 : vector<32x128xf32> to vector<32x128xbf16>
    %c1 = arith.constant 1 : index
    %c0_5 = arith.constant 0 : index
    %c0_6 = arith.constant 0 : index
    %6 = vector.load %arg2[%c1, %c0_5, %c0_6] : memref<7x32x32xbf16, #tpu.memory_space<vmem>>, vector<1x32x32xbf16>
    %7 = vector.shape_cast %6 : vector<1x32x32xbf16> to vector<32x32xbf16>
    %cst_7 = arith.constant dense<0.000000e+00> : vector<32x128xf32>
    %8 = tpu.matmul %7, %1, %cst_7 {dimension_numbers = #tpu.dot_dimension_numbers<[1], [0], [0], [1], [0, 0, 1, 1], [], []>} : vector<32x32xbf16>, vector<32x128xbf16>, vector<32x128xf32> -> vector<32x128xf32>
    %9 = arith.truncf %8 : vector<32x128xf32> to vector<32x128xbf16>
    %c2 = arith.constant 2 : index
    %c0_8 = arith.constant 0 : index
    %c0_9 = arith.constant 0 : index
    %10 = vector.load %arg2[%c2, %c0_8, %c0_9] : memref<7x32x32xbf16, #tpu.memory_space<vmem>>, vector<1x32x32xbf16>
    %11 = vector.shape_cast %10 : vector<1x32x32xbf16> to vector<32x32xbf16>
    %cst_10 = arith.constant dense<0.000000e+00> : vector<32x128xf32>
    %12 = tpu.matmul %11, %1, %cst_10 {dimension_numbers = #tpu.dot_dimension_numbers<[1], [0], [0], [1], [0, 0, 1, 1], [], []>} : vector<32x32xbf16>, vector<32x128xbf16>, vector<32x128xf32> -> vector<32x128xf32>
    %13 = arith.truncf %12 : vector<32x128xf32> to vector<32x128xbf16>
    %c3 = arith.constant 3 : index
    %c0_11 = arith.constant 0 : index
    %c0_12 = arith.constant 0 : index
    %14 = vector.load %arg2[%c3, %c0_11, %c0_12] : memref<7x32x32xbf16, #tpu.memory_space<vmem>>, vector<1x32x32xbf16>
    %15 = vector.shape_cast %14 : vector<1x32x32xbf16> to vector<32x32xbf16>
    %cst_13 = arith.constant dense<0.000000e+00> : vector<32x128xf32>
    %16 = tpu.matmul %15, %1, %cst_13 {dimension_numbers = #tpu.dot_dimension_numbers<[1], [0], [0], [1], [0, 0, 1, 1], [], []>} : vector<32x32xbf16>, vector<32x128xbf16>, vector<32x128xf32> -> vector<32x128xf32>
    %17 = arith.truncf %16 : vector<32x128xf32> to vector<32x128xbf16>
    %c4 = arith.constant 4 : index
    %c0_14 = arith.constant 0 : index
    %c0_15 = arith.constant 0 : index
    %18 = vector.load %arg2[%c4, %c0_14, %c0_15] : memref<7x32x32xbf16, #tpu.memory_space<vmem>>, vector<1x32x32xbf16>
    %19 = vector.shape_cast %18 : vector<1x32x32xbf16> to vector<32x32xbf16>
    %cst_16 = arith.constant dense<0.000000e+00> : vector<32x128xf32>
    %20 = tpu.matmul %19, %1, %cst_16 {dimension_numbers = #tpu.dot_dimension_numbers<[1], [0], [0], [1], [0, 0, 1, 1], [], []>} : vector<32x32xbf16>, vector<32x128xbf16>, vector<32x128xf32> -> vector<32x128xf32>
    %21 = arith.truncf %20 : vector<32x128xf32> to vector<32x128xbf16>
    %c5 = arith.constant 5 : index
    %c0_17 = arith.constant 0 : index
    %c0_18 = arith.constant 0 : index
    %22 = vector.load %arg2[%c5, %c0_17, %c0_18] : memref<7x32x32xbf16, #tpu.memory_space<vmem>>, vector<1x32x32xbf16>
    %23 = vector.shape_cast %22 : vector<1x32x32xbf16> to vector<32x32xbf16>
    %cst_19 = arith.constant dense<0.000000e+00> : vector<32x128xf32>
    %24 = tpu.matmul %23, %1, %cst_19 {dimension_numbers = #tpu.dot_dimension_numbers<[1], [0], [0], [1], [0, 0, 1, 1], [], []>} : vector<32x32xbf16>, vector<32x128xbf16>, vector<32x128xf32> -> vector<32x128xf32>
    %25 = arith.truncf %24 : vector<32x128xf32> to vector<32x128xbf16>
    %c6 = arith.constant 6 : index
    %c0_20 = arith.constant 0 : index
    %c0_21 = arith.constant 0 : index
    %26 = vector.load %arg2[%c6, %c0_20, %c0_21] : memref<7x32x32xbf16, #tpu.memory_space<vmem>>, vector<1x32x32xbf16>
    %27 = vector.shape_cast %26 : vector<1x32x32xbf16> to vector<32x32xbf16>
    %cst_22 = arith.constant dense<0.000000e+00> : vector<32x128xf32>
    %28 = tpu.matmul %27, %1, %cst_22 {dimension_numbers = #tpu.dot_dimension_numbers<[1], [0], [0], [1], [0, 0, 1, 1], [], []>} : vector<32x32xbf16>, vector<32x128xbf16>, vector<32x128xf32> -> vector<32x128xf32>
    %29 = arith.truncf %28 : vector<32x128xf32> to vector<32x128xbf16>
    %30 = tpu.concatenate %5, %9, %13, %17, %21, %25, %29 in 1 : vector<32x128xbf16>, vector<32x128xbf16>, vector<32x128xbf16>, vector<32x128xbf16>, vector<32x128xbf16>, vector<32x128xbf16>, vector<32x128xbf16> -> vector<32x896xbf16>
    %c0_23 = arith.constant 0 : index
    %c0_24 = arith.constant 0 : index
    %31 = vector.load %arg3[%c0_23, %c0_24] : memref<896x256xbf16, #tpu.memory_space<vmem>>, vector<896x256xbf16>
    %cst_25 = arith.constant dense<0.000000e+00> : vector<32x256xf32>
    %32 = tpu.matmul %30, %31, %cst_25 {dimension_numbers = #tpu.dot_dimension_numbers<[1], [0], [0], [1], [0, 0, 1, 1], [], []>} : vector<32x896xbf16>, vector<896x256xbf16>, vector<32x256xf32> -> vector<32x256xf32>
    %c0_26 = arith.constant 0 : index
    %c0_27 = arith.constant 0 : index
    %33 = vector.load %arg4[%c0_26, %c0_27] : memref<1x256xf32, #tpu.memory_space<vmem>>, vector<1x256xf32>
    %34 = vector.broadcast %33 : vector<1x256xf32> to vector<32x256xf32>
    %35 = arith.addf %32, %34 : vector<32x256xf32>
    %cst_28 = arith.constant 0.000000e+00 : f32
    %36 = vector.broadcast %cst_28 : f32 to vector<32x256xf32>
    %37 = arith.cmpf oge, %35, %36 : vector<32x256xf32>
    %cst_29 = arith.constant 2.000000e-01 : f32
    %38 = vector.broadcast %cst_29 : f32 to vector<32x256xf32>
    %39 = arith.mulf %38, %35 : vector<32x256xf32>
    %40 = arith.select %37, %35, %39 : vector<32x256xi1>, vector<32x256xf32>
    %41 = arith.truncf %40 : vector<32x256xf32> to vector<32x256xbf16>
    %c0_30 = arith.constant 0 : index
    %c0_31 = arith.constant 0 : index
    %c0_32 = arith.constant 0 : index
    %42 = vector.load %arg5[%c0_30, %c0_31, %c0_32] : memref<4x16x32xbf16, #tpu.memory_space<vmem>>, vector<1x16x32xbf16>
    %43 = vector.shape_cast %42 : vector<1x16x32xbf16> to vector<16x32xbf16>
    %cst_33 = arith.constant dense<0.000000e+00> : vector<16x256xf32>
    %44 = tpu.matmul %43, %41, %cst_33 {dimension_numbers = #tpu.dot_dimension_numbers<[1], [0], [0], [1], [0, 0, 1, 1], [], []>} : vector<16x32xbf16>, vector<32x256xbf16>, vector<16x256xf32> -> vector<16x256xf32>
    %45 = arith.truncf %44 : vector<16x256xf32> to vector<16x256xbf16>
    %c1_34 = arith.constant 1 : index
    %c0_35 = arith.constant 0 : index
    %c0_36 = arith.constant 0 : index
    %46 = vector.load %arg5[%c1_34, %c0_35, %c0_36] : memref<4x16x32xbf16, #tpu.memory_space<vmem>>, vector<1x16x32xbf16>
    %47 = vector.shape_cast %46 : vector<1x16x32xbf16> to vector<16x32xbf16>
    %cst_37 = arith.constant dense<0.000000e+00> : vector<16x256xf32>
    %48 = tpu.matmul %47, %41, %cst_37 {dimension_numbers = #tpu.dot_dimension_numbers<[1], [0], [0], [1], [0, 0, 1, 1], [], []>} : vector<16x32xbf16>, vector<32x256xbf16>, vector<16x256xf32> -> vector<16x256xf32>
    %49 = arith.truncf %48 : vector<16x256xf32> to vector<16x256xbf16>
    %c2_38 = arith.constant 2 : index
    %c0_39 = arith.constant 0 : index
    %c0_40 = arith.constant 0 : index
    %50 = vector.load %arg5[%c2_38, %c0_39, %c0_40] : memref<4x16x32xbf16, #tpu.memory_space<vmem>>, vector<1x16x32xbf16>
    %51 = vector.shape_cast %50 : vector<1x16x32xbf16> to vector<16x32xbf16>
    %cst_41 = arith.constant dense<0.000000e+00> : vector<16x256xf32>
    %52 = tpu.matmul %51, %41, %cst_41 {dimension_numbers = #tpu.dot_dimension_numbers<[1], [0], [0], [1], [0, 0, 1, 1], [], []>} : vector<16x32xbf16>, vector<32x256xbf16>, vector<16x256xf32> -> vector<16x256xf32>
    %53 = arith.truncf %52 : vector<16x256xf32> to vector<16x256xbf16>
    %c3_42 = arith.constant 3 : index
    %c0_43 = arith.constant 0 : index
    %c0_44 = arith.constant 0 : index
    %54 = vector.load %arg5[%c3_42, %c0_43, %c0_44] : memref<4x16x32xbf16, #tpu.memory_space<vmem>>, vector<1x16x32xbf16>
    %55 = vector.shape_cast %54 : vector<1x16x32xbf16> to vector<16x32xbf16>
    %cst_45 = arith.constant dense<0.000000e+00> : vector<16x256xf32>
    %56 = tpu.matmul %55, %41, %cst_45 {dimension_numbers = #tpu.dot_dimension_numbers<[1], [0], [0], [1], [0, 0, 1, 1], [], []>} : vector<16x32xbf16>, vector<32x256xbf16>, vector<16x256xf32> -> vector<16x256xf32>
    %57 = arith.truncf %56 : vector<16x256xf32> to vector<16x256xbf16>
    %58 = tpu.concatenate %45, %49, %53, %57 in 1 : vector<16x256xbf16>, vector<16x256xbf16>, vector<16x256xbf16>, vector<16x256xbf16> -> vector<16x1024xbf16>
    %c0_46 = arith.constant 0 : index
    %c0_47 = arith.constant 0 : index
    %59 = vector.load %arg6[%c0_46, %c0_47] : memref<1024x256xbf16, #tpu.memory_space<vmem>>, vector<1024x256xbf16>
    %cst_48 = arith.constant dense<0.000000e+00> : vector<16x256xf32>
    %60 = tpu.matmul %58, %59, %cst_48 {dimension_numbers = #tpu.dot_dimension_numbers<[1], [0], [0], [1], [0, 0, 1, 1], [], []>} : vector<16x1024xbf16>, vector<1024x256xbf16>, vector<16x256xf32> -> vector<16x256xf32>
    %c0_49 = arith.constant 0 : index
    %c0_50 = arith.constant 0 : index
    %61 = vector.load %arg7[%c0_49, %c0_50] : memref<1x256xf32, #tpu.memory_space<vmem>>, vector<1x256xf32>
    %62 = vector.broadcast %61 : vector<1x256xf32> to vector<16x256xf32>
    %63 = arith.addf %60, %62 : vector<16x256xf32>
    %cst_51 = arith.constant dense<0.000000e+00> : vector<256xf32>
    %64 = vector.multi_reduction <add>, %63, %cst_51 [0] : vector<16x256xf32> to vector<256xf32>
    %65 = vector.shape_cast %64 : vector<256xf32> to vector<1x256xf32>
    %66 = arith.mulf %63, %63 : vector<16x256xf32>
    %cst_52 = arith.constant dense<0.000000e+00> : vector<256xf32>
    %67 = vector.multi_reduction <add>, %66, %cst_52 [0] : vector<16x256xf32> to vector<256xf32>
    %68 = vector.shape_cast %67 : vector<256xf32> to vector<1x256xf32>
    %c0_53 = arith.constant 0 : index
    %c0_54 = arith.constant 0 : index
    %69 = vector.load %arg8[%c0_53, %c0_54] : memref<256x256xf32, #tpu.memory_space<vmem>>, vector<256x256xf32>
    %cst_55 = arith.constant dense<0.000000e+00> : vector<1x256xf32>
    %70 = tpu.matmul %65, %69, %cst_55 {dimension_numbers = #tpu.dot_dimension_numbers<[1], [0], [0], [1], [0, 0, 1, 1], [], []>} : vector<1x256xf32>, vector<256x256xf32>, vector<1x256xf32> -> vector<1x256xf32>
    %c0_56 = arith.constant 0 : index
    %c0_57 = arith.constant 0 : index
    %71 = vector.load %arg8[%c0_56, %c0_57] : memref<256x256xf32, #tpu.memory_space<vmem>>, vector<256x256xf32>
    %cst_58 = arith.constant dense<0.000000e+00> : vector<1x256xf32>
    %72 = tpu.matmul %68, %71, %cst_58 {dimension_numbers = #tpu.dot_dimension_numbers<[1], [0], [0], [1], [0, 0, 1, 1], [], []>} : vector<1x256xf32>, vector<256x256xf32>, vector<1x256xf32> -> vector<1x256xf32>
    %73 = arith.mulf %70, %70 : vector<1x256xf32>
    %74 = arith.subf %72, %73 : vector<1x256xf32>
    %75 = vector.broadcast %70 : vector<1x256xf32> to vector<16x256xf32>
    %76 = arith.subf %63, %75 : vector<16x256xf32>
    %cst_59 = arith.constant 9.99999974E-6 : f32
    %77 = vector.broadcast %cst_59 : f32 to vector<1x256xf32>
    %78 = arith.addf %74, %77 : vector<1x256xf32>
    %79 = math.rsqrt %78 : vector<1x256xf32>
    %80 = vector.broadcast %79 : vector<1x256xf32> to vector<16x256xf32>
    %81 = arith.mulf %76, %80 : vector<16x256xf32>
    %cst_60 = arith.constant 0.000000e+00 : f32
    %82 = vector.broadcast %cst_60 : f32 to vector<16x256xf32>
    %83 = arith.cmpf oge, %81, %82 : vector<16x256xf32>
    %cst_61 = arith.constant 2.000000e-01 : f32
    %84 = vector.broadcast %cst_61 : f32 to vector<16x256xf32>
    %85 = arith.mulf %84, %81 : vector<16x256xf32>
    %86 = arith.select %83, %81, %85 : vector<16x256xi1>, vector<16x256xf32>
    %87 = arith.truncf %86 : vector<16x256xf32> to vector<16x256xbf16>
    %c0_62 = arith.constant 0 : index
    %c0_63 = arith.constant 0 : index
    %c0_64 = arith.constant 0 : index
    %88 = vector.load %arg9[%c0_62, %c0_63, %c0_64] : memref<4x8x16xbf16, #tpu.memory_space<vmem>>, vector<1x8x16xbf16>
    %89 = vector.shape_cast %88 : vector<1x8x16xbf16> to vector<8x16xbf16>
    %cst_65 = arith.constant dense<0.000000e+00> : vector<8x256xf32>
    %90 = tpu.matmul %89, %87, %cst_65 {dimension_numbers = #tpu.dot_dimension_numbers<[1], [0], [0], [1], [0, 0, 1, 1], [], []>} : vector<8x16xbf16>, vector<16x256xbf16>, vector<8x256xf32> -> vector<8x256xf32>
    %91 = arith.truncf %90 : vector<8x256xf32> to vector<8x256xbf16>
    %c1_66 = arith.constant 1 : index
    %c0_67 = arith.constant 0 : index
    %c0_68 = arith.constant 0 : index
    %92 = vector.load %arg9[%c1_66, %c0_67, %c0_68] : memref<4x8x16xbf16, #tpu.memory_space<vmem>>, vector<1x8x16xbf16>
    %93 = vector.shape_cast %92 : vector<1x8x16xbf16> to vector<8x16xbf16>
    %cst_69 = arith.constant dense<0.000000e+00> : vector<8x256xf32>
    %94 = tpu.matmul %93, %87, %cst_69 {dimension_numbers = #tpu.dot_dimension_numbers<[1], [0], [0], [1], [0, 0, 1, 1], [], []>} : vector<8x16xbf16>, vector<16x256xbf16>, vector<8x256xf32> -> vector<8x256xf32>
    %95 = arith.truncf %94 : vector<8x256xf32> to vector<8x256xbf16>
    %c2_70 = arith.constant 2 : index
    %c0_71 = arith.constant 0 : index
    %c0_72 = arith.constant 0 : index
    %96 = vector.load %arg9[%c2_70, %c0_71, %c0_72] : memref<4x8x16xbf16, #tpu.memory_space<vmem>>, vector<1x8x16xbf16>
    %97 = vector.shape_cast %96 : vector<1x8x16xbf16> to vector<8x16xbf16>
    %cst_73 = arith.constant dense<0.000000e+00> : vector<8x256xf32>
    %98 = tpu.matmul %97, %87, %cst_73 {dimension_numbers = #tpu.dot_dimension_numbers<[1], [0], [0], [1], [0, 0, 1, 1], [], []>} : vector<8x16xbf16>, vector<16x256xbf16>, vector<8x256xf32> -> vector<8x256xf32>
    %99 = arith.truncf %98 : vector<8x256xf32> to vector<8x256xbf16>
    %c3_74 = arith.constant 3 : index
    %c0_75 = arith.constant 0 : index
    %c0_76 = arith.constant 0 : index
    %100 = vector.load %arg9[%c3_74, %c0_75, %c0_76] : memref<4x8x16xbf16, #tpu.memory_space<vmem>>, vector<1x8x16xbf16>
    %101 = vector.shape_cast %100 : vector<1x8x16xbf16> to vector<8x16xbf16>
    %cst_77 = arith.constant dense<0.000000e+00> : vector<8x256xf32>
    %102 = tpu.matmul %101, %87, %cst_77 {dimension_numbers = #tpu.dot_dimension_numbers<[1], [0], [0], [1], [0, 0, 1, 1], [], []>} : vector<8x16xbf16>, vector<16x256xbf16>, vector<8x256xf32> -> vector<8x256xf32>
    %103 = arith.truncf %102 : vector<8x256xf32> to vector<8x256xbf16>
    %104 = tpu.concatenate %91, %95, %99, %103 in 1 : vector<8x256xbf16>, vector<8x256xbf16>, vector<8x256xbf16>, vector<8x256xbf16> -> vector<8x1024xbf16>
    %c0_78 = arith.constant 0 : index
    %c0_79 = arith.constant 0 : index
    %105 = vector.load %arg10[%c0_78, %c0_79] : memref<1024x256xbf16, #tpu.memory_space<vmem>>, vector<1024x256xbf16>
    %cst_80 = arith.constant dense<0.000000e+00> : vector<8x256xf32>
    %106 = tpu.matmul %104, %105, %cst_80 {dimension_numbers = #tpu.dot_dimension_numbers<[1], [0], [0], [1], [0, 0, 1, 1], [], []>} : vector<8x1024xbf16>, vector<1024x256xbf16>, vector<8x256xf32> -> vector<8x256xf32>
    %c0_81 = arith.constant 0 : index
    %c0_82 = arith.constant 0 : index
    %107 = vector.load %arg11[%c0_81, %c0_82] : memref<1x256xf32, #tpu.memory_space<vmem>>, vector<1x256xf32>
    %108 = vector.broadcast %107 : vector<1x256xf32> to vector<8x256xf32>
    %109 = arith.addf %106, %108 : vector<8x256xf32>
    %cst_83 = arith.constant dense<0.000000e+00> : vector<256xf32>
    %110 = vector.multi_reduction <add>, %109, %cst_83 [0] : vector<8x256xf32> to vector<256xf32>
    %111 = vector.shape_cast %110 : vector<256xf32> to vector<1x256xf32>
    %112 = arith.mulf %109, %109 : vector<8x256xf32>
    %cst_84 = arith.constant dense<0.000000e+00> : vector<256xf32>
    %113 = vector.multi_reduction <add>, %112, %cst_84 [0] : vector<8x256xf32> to vector<256xf32>
    %114 = vector.shape_cast %113 : vector<256xf32> to vector<1x256xf32>
    %c0_85 = arith.constant 0 : index
    %c0_86 = arith.constant 0 : index
    %115 = vector.load %arg12[%c0_85, %c0_86] : memref<256x256xf32, #tpu.memory_space<vmem>>, vector<256x256xf32>
    %cst_87 = arith.constant dense<0.000000e+00> : vector<1x256xf32>
    %116 = tpu.matmul %111, %115, %cst_87 {dimension_numbers = #tpu.dot_dimension_numbers<[1], [0], [0], [1], [0, 0, 1, 1], [], []>} : vector<1x256xf32>, vector<256x256xf32>, vector<1x256xf32> -> vector<1x256xf32>
    %c0_88 = arith.constant 0 : index
    %c0_89 = arith.constant 0 : index
    %117 = vector.load %arg12[%c0_88, %c0_89] : memref<256x256xf32, #tpu.memory_space<vmem>>, vector<256x256xf32>
    %cst_90 = arith.constant dense<0.000000e+00> : vector<1x256xf32>
    %118 = tpu.matmul %114, %117, %cst_90 {dimension_numbers = #tpu.dot_dimension_numbers<[1], [0], [0], [1], [0, 0, 1, 1], [], []>} : vector<1x256xf32>, vector<256x256xf32>, vector<1x256xf32> -> vector<1x256xf32>
    %119 = arith.mulf %116, %116 : vector<1x256xf32>
    %120 = arith.subf %118, %119 : vector<1x256xf32>
    %121 = vector.broadcast %116 : vector<1x256xf32> to vector<8x256xf32>
    %122 = arith.subf %109, %121 : vector<8x256xf32>
    %cst_91 = arith.constant 9.99999974E-6 : f32
    %123 = vector.broadcast %cst_91 : f32 to vector<1x256xf32>
    %124 = arith.addf %120, %123 : vector<1x256xf32>
    %125 = math.rsqrt %124 : vector<1x256xf32>
    %126 = vector.broadcast %125 : vector<1x256xf32> to vector<8x256xf32>
    %127 = arith.mulf %122, %126 : vector<8x256xf32>
    %cst_92 = arith.constant 0.000000e+00 : f32
    %128 = vector.broadcast %cst_92 : f32 to vector<8x256xf32>
    %129 = arith.cmpf oge, %127, %128 : vector<8x256xf32>
    %cst_93 = arith.constant 2.000000e-01 : f32
    %130 = vector.broadcast %cst_93 : f32 to vector<8x256xf32>
    %131 = arith.mulf %130, %127 : vector<8x256xf32>
    %132 = arith.select %129, %127, %131 : vector<8x256xi1>, vector<8x256xf32>
    %133 = arith.truncf %132 : vector<8x256xf32> to vector<8x256xbf16>
    %c0_94 = arith.constant 0 : index
    %c0_95 = arith.constant 0 : index
    %c0_96 = arith.constant 0 : index
    %134 = vector.load %arg13[%c0_94, %c0_95, %c0_96] : memref<4x4x8xbf16, #tpu.memory_space<vmem>>, vector<1x4x8xbf16>
    %135 = vector.shape_cast %134 : vector<1x4x8xbf16> to vector<4x8xbf16>
    %cst_97 = arith.constant dense<0.000000e+00> : vector<4x256xf32>
    %136 = tpu.matmul %135, %133, %cst_97 {dimension_numbers = #tpu.dot_dimension_numbers<[1], [0], [0], [1], [0, 0, 1, 1], [], []>} : vector<4x8xbf16>, vector<8x256xbf16>, vector<4x256xf32> -> vector<4x256xf32>
    %137 = arith.truncf %136 : vector<4x256xf32> to vector<4x256xbf16>
    %c1_98 = arith.constant 1 : index
    %c0_99 = arith.constant 0 : index
    %c0_100 = arith.constant 0 : index
    %138 = vector.load %arg13[%c1_98, %c0_99, %c0_100] : memref<4x4x8xbf16, #tpu.memory_space<vmem>>, vector<1x4x8xbf16>
    %139 = vector.shape_cast %138 : vector<1x4x8xbf16> to vector<4x8xbf16>
    %cst_101 = arith.constant dense<0.000000e+00> : vector<4x256xf32>
    %140 = tpu.matmul %139, %133, %cst_101 {dimension_numbers = #tpu.dot_dimension_numbers<[1], [0], [0], [1], [0, 0, 1, 1], [], []>} : vector<4x8xbf16>, vector<8x256xbf16>, vector<4x256xf32> -> vector<4x256xf32>
    %141 = arith.truncf %140 : vector<4x256xf32> to vector<4x256xbf16>
    %c2_102 = arith.constant 2 : index
    %c0_103 = arith.constant 0 : index
    %c0_104 = arith.constant 0 : index
    %142 = vector.load %arg13[%c2_102, %c0_103, %c0_104] : memref<4x4x8xbf16, #tpu.memory_space<vmem>>, vector<1x4x8xbf16>
    %143 = vector.shape_cast %142 : vector<1x4x8xbf16> to vector<4x8xbf16>
    %cst_105 = arith.constant dense<0.000000e+00> : vector<4x256xf32>
    %144 = tpu.matmul %143, %133, %cst_105 {dimension_numbers = #tpu.dot_dimension_numbers<[1], [0], [0], [1], [0, 0, 1, 1], [], []>} : vector<4x8xbf16>, vector<8x256xbf16>, vector<4x256xf32> -> vector<4x256xf32>
    %145 = arith.truncf %144 : vector<4x256xf32> to vector<4x256xbf16>
    %c3_106 = arith.constant 3 : index
    %c0_107 = arith.constant 0 : index
    %c0_108 = arith.constant 0 : index
    %146 = vector.load %arg13[%c3_106, %c0_107, %c0_108] : memref<4x4x8xbf16, #tpu.memory_space<vmem>>, vector<1x4x8xbf16>
    %147 = vector.shape_cast %146 : vector<1x4x8xbf16> to vector<4x8xbf16>
    %cst_109 = arith.constant dense<0.000000e+00> : vector<4x256xf32>
    %148 = tpu.matmul %147, %133, %cst_109 {dimension_numbers = #tpu.dot_dimension_numbers<[1], [0], [0], [1], [0, 0, 1, 1], [], []>} : vector<4x8xbf16>, vector<8x256xbf16>, vector<4x256xf32> -> vector<4x256xf32>
    %149 = arith.truncf %148 : vector<4x256xf32> to vector<4x256xbf16>
    %150 = tpu.concatenate %137, %141, %145, %149 in 1 : vector<4x256xbf16>, vector<4x256xbf16>, vector<4x256xbf16>, vector<4x256xbf16> -> vector<4x1024xbf16>
    %c0_110 = arith.constant 0 : index
    %c0_111 = arith.constant 0 : index
    %151 = vector.load %arg14[%c0_110, %c0_111] : memref<1024x128xbf16, #tpu.memory_space<vmem>>, vector<1024x128xbf16>
    %cst_112 = arith.constant dense<0.000000e+00> : vector<4x128xf32>
    %152 = tpu.matmul %150, %151, %cst_112 {dimension_numbers = #tpu.dot_dimension_numbers<[1], [0], [0], [1], [0, 0, 1, 1], [], []>} : vector<4x1024xbf16>, vector<1024x128xbf16>, vector<4x128xf32> -> vector<4x128xf32>
    %c0_113 = arith.constant 0 : index
    %c0_114 = arith.constant 0 : index
    %153 = vector.load %arg15[%c0_113, %c0_114] : memref<1x128xf32, #tpu.memory_space<vmem>>, vector<1x128xf32>
    %154 = vector.broadcast %153 : vector<1x128xf32> to vector<4x128xf32>
    %155 = arith.addf %152, %154 : vector<4x128xf32>
    %cst_115 = arith.constant dense<0.000000e+00> : vector<128xf32>
    %156 = vector.multi_reduction <add>, %155, %cst_115 [0] : vector<4x128xf32> to vector<128xf32>
    %157 = vector.shape_cast %156 : vector<128xf32> to vector<1x128xf32>
    %158 = arith.mulf %155, %155 : vector<4x128xf32>
    %cst_116 = arith.constant dense<0.000000e+00> : vector<128xf32>
    %159 = vector.multi_reduction <add>, %158, %cst_116 [0] : vector<4x128xf32> to vector<128xf32>
    %160 = vector.shape_cast %159 : vector<128xf32> to vector<1x128xf32>
    %c0_117 = arith.constant 0 : index
    %c0_118 = arith.constant 0 : index
    %161 = vector.load %arg16[%c0_117, %c0_118] : memref<128x128xf32, #tpu.memory_space<vmem>>, vector<128x128xf32>
    %cst_119 = arith.constant dense<0.000000e+00> : vector<1x128xf32>
    %162 = tpu.matmul %157, %161, %cst_119 {dimension_numbers = #tpu.dot_dimension_numbers<[1], [0], [0], [1], [0, 0, 1, 1], [], []>} : vector<1x128xf32>, vector<128x128xf32>, vector<1x128xf32> -> vector<1x128xf32>
    %c0_120 = arith.constant 0 : index
    %c0_121 = arith.constant 0 : index
    %163 = vector.load %arg16[%c0_120, %c0_121] : memref<128x128xf32, #tpu.memory_space<vmem>>, vector<128x128xf32>
    %cst_122 = arith.constant dense<0.000000e+00> : vector<1x128xf32>
    %164 = tpu.matmul %160, %163, %cst_122 {dimension_numbers = #tpu.dot_dimension_numbers<[1], [0], [0], [1], [0, 0, 1, 1], [], []>} : vector<1x128xf32>, vector<128x128xf32>, vector<1x128xf32> -> vector<1x128xf32>
    %165 = arith.mulf %162, %162 : vector<1x128xf32>
    %166 = arith.subf %164, %165 : vector<1x128xf32>
    %167 = vector.broadcast %162 : vector<1x128xf32> to vector<4x128xf32>
    %168 = arith.subf %155, %167 : vector<4x128xf32>
    %cst_123 = arith.constant 9.99999974E-6 : f32
    %169 = vector.broadcast %cst_123 : f32 to vector<1x128xf32>
    %170 = arith.addf %166, %169 : vector<1x128xf32>
    %171 = math.rsqrt %170 : vector<1x128xf32>
    %172 = vector.broadcast %171 : vector<1x128xf32> to vector<4x128xf32>
    %173 = arith.mulf %168, %172 : vector<4x128xf32>
    %cst_124 = arith.constant 0.000000e+00 : f32
    %174 = vector.broadcast %cst_124 : f32 to vector<4x128xf32>
    %175 = arith.cmpf oge, %173, %174 : vector<4x128xf32>
    %cst_125 = arith.constant 2.000000e-01 : f32
    %176 = vector.broadcast %cst_125 : f32 to vector<4x128xf32>
    %177 = arith.mulf %176, %173 : vector<4x128xf32>
    %178 = arith.select %175, %173, %177 : vector<4x128xi1>, vector<4x128xf32>
    %179 = arith.truncf %178 : vector<4x128xf32> to vector<4x128xbf16>
    %c0_126 = arith.constant 0 : index
    %c0_127 = arith.constant 0 : index
    %c0_128 = arith.constant 0 : index
    %180 = vector.load %arg17[%c0_126, %c0_127, %c0_128] : memref<4x2x4xbf16, #tpu.memory_space<vmem>>, vector<1x2x4xbf16>
    %181 = vector.shape_cast %180 : vector<1x2x4xbf16> to vector<2x4xbf16>
    %cst_129 = arith.constant dense<0.000000e+00> : vector<2x128xf32>
    %182 = tpu.matmul %181, %179, %cst_129 {dimension_numbers = #tpu.dot_dimension_numbers<[1], [0], [0], [1], [0, 0, 1, 1], [], []>} : vector<2x4xbf16>, vector<4x128xbf16>, vector<2x128xf32> -> vector<2x128xf32>
    %183 = arith.truncf %182 : vector<2x128xf32> to vector<2x128xbf16>
    %c1_130 = arith.constant 1 : index
    %c0_131 = arith.constant 0 : index
    %c0_132 = arith.constant 0 : index
    %184 = vector.load %arg17[%c1_130, %c0_131, %c0_132] : memref<4x2x4xbf16, #tpu.memory_space<vmem>>, vector<1x2x4xbf16>
    %185 = vector.shape_cast %184 : vector<1x2x4xbf16> to vector<2x4xbf16>
    %cst_133 = arith.constant dense<0.000000e+00> : vector<2x128xf32>
    %186 = tpu.matmul %185, %179, %cst_133 {dimension_numbers = #tpu.dot_dimension_numbers<[1], [0], [0], [1], [0, 0, 1, 1], [], []>} : vector<2x4xbf16>, vector<4x128xbf16>, vector<2x128xf32> -> vector<2x128xf32>
    %187 = arith.truncf %186 : vector<2x128xf32> to vector<2x128xbf16>
    %c2_134 = arith.constant 2 : index
    %c0_135 = arith.constant 0 : index
    %c0_136 = arith.constant 0 : index
    %188 = vector.load %arg17[%c2_134, %c0_135, %c0_136] : memref<4x2x4xbf16, #tpu.memory_space<vmem>>, vector<1x2x4xbf16>
    %189 = vector.shape_cast %188 : vector<1x2x4xbf16> to vector<2x4xbf16>
    %cst_137 = arith.constant dense<0.000000e+00> : vector<2x128xf32>
    %190 = tpu.matmul %189, %179, %cst_137 {dimension_numbers = #tpu.dot_dimension_numbers<[1], [0], [0], [1], [0, 0, 1, 1], [], []>} : vector<2x4xbf16>, vector<4x128xbf16>, vector<2x128xf32> -> vector<2x128xf32>
    %191 = arith.truncf %190 : vector<2x128xf32> to vector<2x128xbf16>
    %c3_138 = arith.constant 3 : index
    %c0_139 = arith.constant 0 : index
    %c0_140 = arith.constant 0 : index
    %192 = vector.load %arg17[%c3_138, %c0_139, %c0_140] : memref<4x2x4xbf16, #tpu.memory_space<vmem>>, vector<1x2x4xbf16>
    %193 = vector.shape_cast %192 : vector<1x2x4xbf16> to vector<2x4xbf16>
    %cst_141 = arith.constant dense<0.000000e+00> : vector<2x128xf32>
    %194 = tpu.matmul %193, %179, %cst_141 {dimension_numbers = #tpu.dot_dimension_numbers<[1], [0], [0], [1], [0, 0, 1, 1], [], []>} : vector<2x4xbf16>, vector<4x128xbf16>, vector<2x128xf32> -> vector<2x128xf32>
    %195 = arith.truncf %194 : vector<2x128xf32> to vector<2x128xbf16>
    %196 = tpu.concatenate %183, %187, %191, %195 in 1 : vector<2x128xbf16>, vector<2x128xbf16>, vector<2x128xbf16>, vector<2x128xbf16> -> vector<2x512xbf16>
    %c0_142 = arith.constant 0 : index
    %c0_143 = arith.constant 0 : index
    %197 = vector.load %arg18[%c0_142, %c0_143] : memref<512x64xbf16, #tpu.memory_space<vmem>>, vector<512x64xbf16>
    %cst_144 = arith.constant dense<0.000000e+00> : vector<2x64xf32>
    %198 = tpu.matmul %196, %197, %cst_144 {dimension_numbers = #tpu.dot_dimension_numbers<[1], [0], [0], [1], [0, 0, 1, 1], [], []>} : vector<2x512xbf16>, vector<512x64xbf16>, vector<2x64xf32> -> vector<2x64xf32>
    %c0_145 = arith.constant 0 : index
    %c0_146 = arith.constant 0 : index
    %199 = vector.load %arg19[%c0_145, %c0_146] : memref<1x64xf32, #tpu.memory_space<vmem>>, vector<1x64xf32>
    %200 = vector.broadcast %199 : vector<1x64xf32> to vector<2x64xf32>
    %201 = arith.addf %198, %200 : vector<2x64xf32>
    %cst_147 = arith.constant dense<0.000000e+00> : vector<64xf32>
    %202 = vector.multi_reduction <add>, %201, %cst_147 [0] : vector<2x64xf32> to vector<64xf32>
    %203 = vector.shape_cast %202 : vector<64xf32> to vector<1x64xf32>
    %204 = arith.mulf %201, %201 : vector<2x64xf32>
    %cst_148 = arith.constant dense<0.000000e+00> : vector<64xf32>
    %205 = vector.multi_reduction <add>, %204, %cst_148 [0] : vector<2x64xf32> to vector<64xf32>
    %206 = vector.shape_cast %205 : vector<64xf32> to vector<1x64xf32>
    %c0_149 = arith.constant 0 : index
    %c0_150 = arith.constant 0 : index
    %207 = vector.load %arg20[%c0_149, %c0_150] : memref<64x64xf32, #tpu.memory_space<vmem>>, vector<64x64xf32>
    %cst_151 = arith.constant dense<0.000000e+00> : vector<1x64xf32>
    %208 = tpu.matmul %203, %207, %cst_151 {dimension_numbers = #tpu.dot_dimension_numbers<[1], [0], [0], [1], [0, 0, 1, 1], [], []>} : vector<1x64xf32>, vector<64x64xf32>, vector<1x64xf32> -> vector<1x64xf32>
    %c0_152 = arith.constant 0 : index
    %c0_153 = arith.constant 0 : index
    %209 = vector.load %arg20[%c0_152, %c0_153] : memref<64x64xf32, #tpu.memory_space<vmem>>, vector<64x64xf32>
    %cst_154 = arith.constant dense<0.000000e+00> : vector<1x64xf32>
    %210 = tpu.matmul %206, %209, %cst_154 {dimension_numbers = #tpu.dot_dimension_numbers<[1], [0], [0], [1], [0, 0, 1, 1], [], []>} : vector<1x64xf32>, vector<64x64xf32>, vector<1x64xf32> -> vector<1x64xf32>
    %211 = arith.mulf %208, %208 : vector<1x64xf32>
    %212 = arith.subf %210, %211 : vector<1x64xf32>
    %213 = vector.broadcast %208 : vector<1x64xf32> to vector<2x64xf32>
    %214 = arith.subf %201, %213 : vector<2x64xf32>
    %cst_155 = arith.constant 9.99999974E-6 : f32
    %215 = vector.broadcast %cst_155 : f32 to vector<1x64xf32>
    %216 = arith.addf %212, %215 : vector<1x64xf32>
    %217 = math.rsqrt %216 : vector<1x64xf32>
    %218 = vector.broadcast %217 : vector<1x64xf32> to vector<2x64xf32>
    %219 = arith.mulf %214, %218 : vector<2x64xf32>
    %cst_156 = arith.constant 0.000000e+00 : f32
    %220 = vector.broadcast %cst_156 : f32 to vector<2x64xf32>
    %221 = arith.cmpf oge, %219, %220 : vector<2x64xf32>
    %cst_157 = arith.constant 2.000000e-01 : f32
    %222 = vector.broadcast %cst_157 : f32 to vector<2x64xf32>
    %223 = arith.mulf %222, %219 : vector<2x64xf32>
    %224 = arith.select %221, %219, %223 : vector<2x64xi1>, vector<2x64xf32>
    %225 = arith.truncf %224 : vector<2x64xf32> to vector<2x64xbf16>
    %c0_158 = arith.constant 0 : index
    %c0_159 = arith.constant 0 : index
    %c0_160 = arith.constant 0 : index
    %226 = vector.load %arg21[%c0_158, %c0_159, %c0_160] : memref<4x1x2xbf16, #tpu.memory_space<vmem>>, vector<1x1x2xbf16>
    %227 = vector.shape_cast %226 : vector<1x1x2xbf16> to vector<1x2xbf16>
    %cst_161 = arith.constant dense<0.000000e+00> : vector<1x64xf32>
    %228 = tpu.matmul %227, %225, %cst_161 {dimension_numbers = #tpu.dot_dimension_numbers<[1], [0], [0], [1], [0, 0, 1, 1], [], []>} : vector<1x2xbf16>, vector<2x64xbf16>, vector<1x64xf32> -> vector<1x64xf32>
    %229 = arith.truncf %228 : vector<1x64xf32> to vector<1x64xbf16>
    %c1_162 = arith.constant 1 : index
    %c0_163 = arith.constant 0 : index
    %c0_164 = arith.constant 0 : index
    %230 = vector.load %arg21[%c1_162, %c0_163, %c0_164] : memref<4x1x2xbf16, #tpu.memory_space<vmem>>, vector<1x1x2xbf16>
    %231 = vector.shape_cast %230 : vector<1x1x2xbf16> to vector<1x2xbf16>
    %cst_165 = arith.constant dense<0.000000e+00> : vector<1x64xf32>
    %232 = tpu.matmul %231, %225, %cst_165 {dimension_numbers = #tpu.dot_dimension_numbers<[1], [0], [0], [1], [0, 0, 1, 1], [], []>} : vector<1x2xbf16>, vector<2x64xbf16>, vector<1x64xf32> -> vector<1x64xf32>
    %233 = arith.truncf %232 : vector<1x64xf32> to vector<1x64xbf16>
    %c2_166 = arith.constant 2 : index
    %c0_167 = arith.constant 0 : index
    %c0_168 = arith.constant 0 : index
    %234 = vector.load %arg21[%c2_166, %c0_167, %c0_168] : memref<4x1x2xbf16, #tpu.memory_space<vmem>>, vector<1x1x2xbf16>
    %235 = vector.shape_cast %234 : vector<1x1x2xbf16> to vector<1x2xbf16>
    %cst_169 = arith.constant dense<0.000000e+00> : vector<1x64xf32>
    %236 = tpu.matmul %235, %225, %cst_169 {dimension_numbers = #tpu.dot_dimension_numbers<[1], [0], [0], [1], [0, 0, 1, 1], [], []>} : vector<1x2xbf16>, vector<2x64xbf16>, vector<1x64xf32> -> vector<1x64xf32>
    %237 = arith.truncf %236 : vector<1x64xf32> to vector<1x64xbf16>
    %c3_170 = arith.constant 3 : index
    %c0_171 = arith.constant 0 : index
    %c0_172 = arith.constant 0 : index
    %238 = vector.load %arg21[%c3_170, %c0_171, %c0_172] : memref<4x1x2xbf16, #tpu.memory_space<vmem>>, vector<1x1x2xbf16>
    %239 = vector.shape_cast %238 : vector<1x1x2xbf16> to vector<1x2xbf16>
    %cst_173 = arith.constant dense<0.000000e+00> : vector<1x64xf32>
    %240 = tpu.matmul %239, %225, %cst_173 {dimension_numbers = #tpu.dot_dimension_numbers<[1], [0], [0], [1], [0, 0, 1, 1], [], []>} : vector<1x2xbf16>, vector<2x64xbf16>, vector<1x64xf32> -> vector<1x64xf32>
    %241 = arith.truncf %240 : vector<1x64xf32> to vector<1x64xbf16>
    %242 = tpu.concatenate %229, %233, %237, %241 in 1 : vector<1x64xbf16>, vector<1x64xbf16>, vector<1x64xbf16>, vector<1x64xbf16> -> vector<1x256xbf16>
    %c0_174 = arith.constant 0 : index
    %c0_175 = arith.constant 0 : index
    %243 = vector.load %arg22[%c0_174, %c0_175] : memref<256x1xbf16, #tpu.memory_space<vmem>>, vector<256x1xbf16>
    %cst_176 = arith.constant dense<0.000000e+00> : vector<1x1xf32>
    %244 = tpu.matmul %242, %243, %cst_176 {dimension_numbers = #tpu.dot_dimension_numbers<[1], [0], [0], [1], [0, 0, 1, 1], [], []>} : vector<1x256xbf16>, vector<256x1xbf16>, vector<1x1xf32> -> vector<1x1xf32>
    %c0_177 = arith.constant 0 : index
    %c0_178 = arith.constant 0 : index
    %245 = vector.load %arg23[%c0_177, %c0_178] : memref<1x1xf32, #tpu.memory_space<vmem>>, vector<1x1xf32>
    %246 = arith.addf %244, %245 : vector<1x1xf32>
    %c0_179 = arith.constant 0 : index
    %c0_180 = arith.constant 0 : index
    %c0_181 = arith.constant 0 : index
    %247 = vector.load %arg24[%c0_179, %c0_180, %c0_181] : memref<1x1x1xf32, #tpu.memory_space<vmem>>, vector<1x1x1xf32>
    %248 = vector.shape_cast %247 : vector<1x1x1xf32> to vector<1x1xf32>
    %249 = vector.shape_cast %246 : vector<1x1xf32> to vector<1x1x1xf32>
    tpu.vector_store %arg24[%c0_179, %c0_180, %c0_181], %249 {strides = array<i32>} : memref<1x1x1xf32, #tpu.memory_space<vmem>>, vector<1x1x1xf32>,
    return
  }
  func.func @transform_0(%arg0: i32) -> (i32, i32, i32) {
    %c0_i32 = arith.constant 0 : i32
    %c0_i32_0 = arith.constant 0 : i32
    %c0_i32_1 = arith.constant 0 : i32
    return %arg0, %c0_i32, %c0_i32_0 : i32, i32, i32
  }
  func.func @transform_1(%arg0: i32) -> (i32, i32, i32) {
    %c0_i32 = arith.constant 0 : i32
    %c0_i32_0 = arith.constant 0 : i32
    %c0_i32_1 = arith.constant 0 : i32
    %c0_i32_2 = arith.constant 0 : i32
    return %c0_i32, %c0_i32_0, %c0_i32_1 : i32, i32, i32
  }
  func.func @transform_2(%arg0: i32) -> (i32, i32) {
    %c0_i32 = arith.constant 0 : i32
    %c0_i32_0 = arith.constant 0 : i32
    %c0_i32_1 = arith.constant 0 : i32
    return %c0_i32, %c0_i32_0 : i32, i32
  }
  func.func @transform_3(%arg0: i32) -> (i32, i32) {
    %c0_i32 = arith.constant 0 : i32
    %c0_i32_0 = arith.constant 0 : i32
    %c0_i32_1 = arith.constant 0 : i32
    return %c0_i32, %c0_i32_0 : i32, i32
  }
  func.func @transform_4(%arg0: i32) -> (i32, i32, i32) {
    %c0_i32 = arith.constant 0 : i32
    %c0_i32_0 = arith.constant 0 : i32
    %c0_i32_1 = arith.constant 0 : i32
    %c0_i32_2 = arith.constant 0 : i32
    return %c0_i32, %c0_i32_0, %c0_i32_1 : i32, i32, i32
  }
  func.func @transform_5(%arg0: i32) -> (i32, i32) {
    %c0_i32 = arith.constant 0 : i32
    %c0_i32_0 = arith.constant 0 : i32
    %c0_i32_1 = arith.constant 0 : i32
    return %c0_i32, %c0_i32_0 : i32, i32
  }
  func.func @transform_6(%arg0: i32) -> (i32, i32) {
    %c0_i32 = arith.constant 0 : i32
    %c0_i32_0 = arith.constant 0 : i32
    %c0_i32_1 = arith.constant 0 : i32
    return %c0_i32, %c0_i32_0 : i32, i32
  }
  func.func @transform_7(%arg0: i32) -> (i32, i32) {
    %c0_i32 = arith.constant 0 : i32
    %c0_i32_0 = arith.constant 0 : i32
    %c0_i32_1 = arith.constant 0 : i32
    return %c0_i32, %c0_i32_0 : i32, i32
  }
  func.func @transform_8(%arg0: i32) -> (i32, i32, i32) {
    %c0_i32 = arith.constant 0 : i32
    %c0_i32_0 = arith.constant 0 : i32
    %c0_i32_1 = arith.constant 0 : i32
    %c0_i32_2 = arith.constant 0 : i32
    return %c0_i32, %c0_i32_0, %c0_i32_1 : i32, i32, i32
  }
  func.func @transform_9(%arg0: i32) -> (i32, i32) {
    %c0_i32 = arith.constant 0 : i32
    %c0_i32_0 = arith.constant 0 : i32
    %c0_i32_1 = arith.constant 0 : i32
    return %c0_i32, %c0_i32_0 : i32, i32
  }
  func.func @transform_10(%arg0: i32) -> (i32, i32) {
    %c0_i32 = arith.constant 0 : i32
    %c0_i32_0 = arith.constant 0 : i32
    %c0_i32_1 = arith.constant 0 : i32
    return %c0_i32, %c0_i32_0 : i32, i32
  }
  func.func @transform_11(%arg0: i32) -> (i32, i32) {
    %c0_i32 = arith.constant 0 : i32
    %c0_i32_0 = arith.constant 0 : i32
    %c0_i32_1 = arith.constant 0 : i32
    return %c0_i32, %c0_i32_0 : i32, i32
  }
  func.func @transform_12(%arg0: i32) -> (i32, i32, i32) {
    %c0_i32 = arith.constant 0 : i32
    %c0_i32_0 = arith.constant 0 : i32
    %c0_i32_1 = arith.constant 0 : i32
    %c0_i32_2 = arith.constant 0 : i32
    return %c0_i32, %c0_i32_0, %c0_i32_1 : i32, i32, i32
  }
  func.func @transform_13(%arg0: i32) -> (i32, i32) {
    %c0_i32 = arith.constant 0 : i32
    %c0_i32_0 = arith.constant 0 : i32
    %c0_i32_1 = arith.constant 0 : i32
    return %c0_i32, %c0_i32_0 : i32, i32
  }
  func.func @transform_14(%arg0: i32) -> (i32, i32) {
    %c0_i32 = arith.constant 0 : i32
    %c0_i32_0 = arith.constant 0 : i32
    %c0_i32_1 = arith.constant 0 : i32
    return %c0_i32, %c0_i32_0 : i32, i32
  }
  func.func @transform_15(%arg0: i32) -> (i32, i32) {
    %c0_i32 = arith.constant 0 : i32
    %c0_i32_0 = arith.constant 0 : i32
    %c0_i32_1 = arith.constant 0 : i32
    return %c0_i32, %c0_i32_0 : i32, i32
  }
  func.func @transform_16(%arg0: i32) -> (i32, i32, i32) {
    %c0_i32 = arith.constant 0 : i32
    %c0_i32_0 = arith.constant 0 : i32
    %c0_i32_1 = arith.constant 0 : i32
    %c0_i32_2 = arith.constant 0 : i32
    return %c0_i32, %c0_i32_0, %c0_i32_1 : i32, i32, i32
  }
  func.func @transform_17(%arg0: i32) -> (i32, i32) {
    %c0_i32 = arith.constant 0 : i32
    %c0_i32_0 = arith.constant 0 : i32
    %c0_i32_1 = arith.constant 0 : i32
    return %c0_i32, %c0_i32_0 : i32, i32
  }
  func.func @transform_18(%arg0: i32) -> (i32, i32) {
    %c0_i32 = arith.constant 0 : i32
    %c0_i32_0 = arith.constant 0 : i32
    %c0_i32_1 = arith.constant 0 : i32
    return %c0_i32, %c0_i32_0 : i32, i32
  }
  func.func @transform_19(%arg0: i32) -> (i32, i32) {
    %c0_i32 = arith.constant 0 : i32
    %c0_i32_0 = arith.constant 0 : i32
    %c0_i32_1 = arith.constant 0 : i32
    return %c0_i32, %c0_i32_0 : i32, i32
  }
  func.func @transform_20(%arg0: i32) -> (i32, i32, i32) {
    %c0_i32 = arith.constant 0 : i32
    %c0_i32_0 = arith.constant 0 : i32
    %c0_i32_1 = arith.constant 0 : i32
    %c0_i32_2 = arith.constant 0 : i32
    return %c0_i32, %c0_i32_0, %c0_i32_1 : i32, i32, i32
  }
  func.func @transform_21(%arg0: i32) -> (i32, i32) {
    %c0_i32 = arith.constant 0 : i32
    %c0_i32_0 = arith.constant 0 : i32
    %c0_i32_1 = arith.constant 0 : i32
    return %c0_i32, %c0_i32_0 : i32, i32
  }
  func.func @transform_22(%arg0: i32) -> (i32, i32) {
    %c0_i32 = arith.constant 0 : i32
    %c0_i32_0 = arith.constant 0 : i32
    %c0_i32_1 = arith.constant 0 : i32
    return %c0_i32, %c0_i32_0 : i32, i32
  }
  func.func @transform_23(%arg0: i32) -> (i32, i32, i32) {
    %c0_i32 = arith.constant 0 : i32
    %c0_i32_0 = arith.constant 0 : i32
    %c0_i32_1 = arith.constant 0 : i32
    return %arg0, %c0_i32, %c0_i32_0 : i32, i32, i32
  }
}

</mosaic_0001>

<llo_original>
// kernel: tpu_custom_call.1
$region0: #{tpu_custom_call.1}
  #allocation0 [shape = 'u32[]', space=smem, size = 0x4, offset = 0x4, fixed_abs, tag = 'smem constant byte address 0x4 - core index']
  #allocation1 [shape = 'u32[144,128]{1,0:T(1,128)}', space=vmem, size = 0x12000, scoped, tag = 'internal scratch']
  #allocation2 [shape = 'f32[1,1]{1,0:T(1,128)S(1)}', space=vmem, size = 0x200, scoped, tag = 'scoped memory for tpu_custom_call.1']
  %s0 = inlined_call_operand.hbm [shape: bf16[2,32,128], index: 0, kind: input, shape index: {}]
  %s1 = inlined_call_operand.hbm [shape: bf16[7,32,32], index: 1, kind: input, shape index: {}]
  %s2 = inlined_call_operand.hbm [shape: bf16[896,256], index: 2, kind: input, shape index: {}]
  %s3 = inlined_call_operand.hbm [shape: f32[1,256], index: 3, kind: input, shape index: {}]
  %s4 = inlined_call_operand.hbm [shape: bf16[4,16,32], index: 4, kind: input, shape index: {}]
  %s5 = inlined_call_operand.hbm [shape: bf16[1024,256], index: 5, kind: input, shape index: {}]
  %s6 = inlined_call_operand.hbm [shape: f32[1,256], index: 6, kind: input, shape index: {}]
  %s7 = inlined_call_operand.vmem [shape: f32[256,256], index: 7, kind: input, shape index: {}]
  %s8 = inlined_call_operand.hbm [shape: bf16[4,8,16], index: 8, kind: input, shape index: {}]
  %s9 = inlined_call_operand.hbm [shape: bf16[1024,256], index: 9, kind: input, shape index: {}]
  %s10 = inlined_call_operand.hbm [shape: f32[1,256], index: 10, kind: input, shape index: {}]
  %s11 = inlined_call_operand.hbm [shape: f32[256,256], index: 11, kind: input, shape index: {}]
  %s12 = inlined_call_operand.hbm [shape: bf16[4,4,8], index: 12, kind: input, shape index: {}]
  %s13 = inlined_call_operand.hbm [shape: bf16[1024,128], index: 13, kind: input, shape index: {}]
  %s14 = inlined_call_operand.vmem [shape: f32[1,128], index: 14, kind: input, shape index: {}]
  %s15 = inlined_call_operand.hbm [shape: f32[128,128], index: 15, kind: input, shape index: {}]
  %s16 = inlined_call_operand.vmem [shape: bf16[4,2,4], index: 16, kind: input, shape index: {}]
  %s17 = inlined_call_operand.vmem [shape: bf16[512,64], index: 17, kind: input, shape index: {}]
  %s18 = inlined_call_operand.vmem [shape: f32[1,64], index: 18, kind: input, shape index: {}]
  %s19 = inlined_call_operand.vmem [shape: f32[64,64], index: 19, kind: input, shape index: {}]
  %s20 = inlined_call_operand.vmem [shape: bf16[4,1,2], index: 20, kind: input, shape index: {}]
  %s21 = inlined_call_operand.vmem [shape: bf16[256,1], index: 21, kind: input, shape index: {}]
  %s22 = inlined_call_operand.<no memory space> [shape: f32[1,1], index: 22, kind: input, shape index: {}]
  %s23 = inlined_call_operand.vmem [shape: f32[2,1,1], index: 23, kind: output, shape index: {}]
  %s24 = sld [smem:[#allocation0]]
  $region181: #{tpu_custom_call.1} parent=0
    _
  %s26 = ssub.s32 1, %s24
  %s27 = scalar_select 0, %s26, %s24
  %v28 = vstv %s22
  %29 = vst [vmem:[#allocation2] sm:$0x1] %v28
  $region1: #{tpu_custom_call.1} parent=0
    #allocation3 [shape = 'u8[16384]{0}', space=vmem, size = 0x4000, scoped, tag = 'input window, operand 0']
    #allocation4 [shape = 's32[2]{0}', space=sflag, size = 0x8, scoped, tag = 'scoped memory for tpu_custom_call.1']
    #allocation5 [shape = 'u8[57344]{0}', space=vmem, size = 0xe000, scoped, tag = 'input window, operand 1, single buffered']
    #allocation6 [shape = 's32[1]{0}', space=sflag, size = 0x4, scoped, tag = 'scoped memory for tpu_custom_call.1']
    #allocation7 [shape = 'u8[458752]{0}', space=vmem, size = 0x70000, scoped, tag = 'input window, operand 2, single buffered']
    #allocation8 [shape = 'u8[1024]{0}', space=vmem, size = 0x400, scoped, tag = 'input window, operand 3, single buffered']
    #allocation9 [shape = 's32[1]{0}', space=sflag, size = 0x4, scoped, tag = 'scoped memory for tpu_custom_call.1']
    #allocation10 [shape = 'u8[16384]{0}', space=vmem, size = 0x4000, scoped, tag = 'input window, operand 4, single buffered']
    #allocation11 [shape = 'u8[524288]{0}', space=vmem, size = 0x80000, scoped, tag = 'input window, operand 5, single buffered']
    #allocation12 [shape = 's32[1]{0}', space=sflag, size = 0x4, scoped, tag = 'scoped memory for tpu_custom_call.1']
    #allocation13 [shape = 'u8[1024]{0}', space=vmem, size = 0x400, scoped, tag = 'input window, operand 6, single buffered']
    #allocation14 [shape = 'u8[8192]{0}', space=vmem, size = 0x2000, scoped, tag = 'input window, operand 8, single buffered']
    #allocation15 [shape = 's32[1]{0}', space=sflag, size = 0x4, scoped, tag = 'scoped memory for tpu_custom_call.1']
    #allocation16 [shape = 'u8[524288]{0}', space=vmem, size = 0x80000, scoped, tag = 'input window, operand 9, single buffered']
    #allocation17 [shape = 'u8[1024]{0}', space=vmem, size = 0x400, scoped, tag = 'input window, operand 10, single buffered']
    #allocation18 [shape = 's32[1]{0}', space=sflag, size = 0x4, scoped, tag = 'scoped memory for tpu_custom_call.1']
    #allocation19 [shape = 'u8[262144]{0}', space=vmem, size = 0x40000, scoped, tag = 'input window, operand 11, single buffered']
    #allocation20 [shape = 'u8[4096]{0}', space=vmem, size = 0x1000, scoped, tag = 'input window, operand 12, single buffered']
    #allocation21 [shape = 's32[1]{0}', space=sflag, size = 0x4, scoped, tag = 'scoped memory for tpu_custom_call.1']
    #allocation22 [shape = 'u8[262144]{0}', space=vmem, size = 0x40000, scoped, tag = 'input window, operand 13, single buffered']
    #allocation23 [shape = 'u8[65536]{0}', space=vmem, size = 0x10000, scoped, tag = 'input window, operand 15, single buffered']
    #allocation24 [shape = 's32[1]{0}', space=sflag, size = 0x4, scoped, tag = 'scoped memory for tpu_custom_call.1']
    %30 = vsyncpa [#allocation4], 0
    %s31 = scalar_lea.sflag [#allocation4], 1
    %32 = vsyncpa %s31, 0
    %33 = vsyncpa [#allocation6], 0
    %34 = vsyncpa [#allocation9], 0
    %35 = vsyncpa [#allocation12], 0
    %36 = vsyncpa [#allocation15], 0
    %37 = vsyncpa [#allocation18], 0
    %38 = vsyncpa [#allocation21], 0
    %39 = vsyncpa [#allocation24], 0
    loop: start=0, step=1, limit=4
    $region2: #{tpu_custom_call.1} parent=1 // loop_pre_header
      _
    $region3: #{tpu_custom_call.1} parent=1 // loop_header
      %s41 = sphi 0, %s45
      %p42 = scmp.ge.s32.totalorder %s41, 4
      %s51 = sphi 0, %s53
      %s54 = sphi 0, %s51
      %s55 = sphi 0, %s54
      %s71 = sphi 0, %s55
      %s75 = sphi 0, %s75
      %s77 = sphi 0, %s75
      %s78 = sphi 0, %s77
      %s92 = sphi 0, %s78
      %s96 = sphi 0, %s96
      %s98 = sphi 0, %s96
      %s99 = sphi 0, %s98
      %s113 = sphi 0, %s99
      %s117 = sphi 0, %s117
      %s119 = sphi 0, %s117
      %s120 = sphi 0, %s119
      %s134 = sphi 0, %s120
      %s138 = sphi 0, %s138
      %s140 = sphi 0, %s138
      %s141 = sphi 0, %s140
      %s155 = sphi 0, %s141
      %s159 = sphi 0, %s159
      %s161 = sphi 0, %s159
      %s162 = sphi 0, %s161
      %s176 = sphi 0, %s162
      %s180 = sphi 0, %s180
      %s182 = sphi 0, %s180
      %s183 = sphi 0, %s182
      %s197 = sphi 0, %s183
      %s201 = sphi 0, %s201
      %s203 = sphi 0, %s201
      %s204 = sphi 0, %s203
      %s218 = sphi 0, %s204
      %s222 = sphi 0, %s222
      %s224 = sphi 0, %s222
      %s225 = sphi 0, %s224
      %s239 = sphi 0, %s225
      %s243 = sphi 0, %s243
      %s245 = sphi 0, %s243
      %s246 = sphi 0, %s245
      %s260 = sphi 0, %s246
      %s264 = sphi 0, %s264
      %s266 = sphi 0, %s264
      %s267 = sphi 0, %s266
      %s281 = sphi 0, %s267
      %s285 = sphi 0, %s285
      %s287 = sphi 0, %s285
      %s288 = sphi 0, %s287
      %s302 = sphi 0, %s288
      %s306 = sphi 0, %s306
      %s308 = sphi 0, %s306
      %s309 = sphi 0, %s308
      %s323 = sphi 0, %s309
      %s327 = sphi 0, %s327
      %s329 = sphi 0, %s327
      %s330 = sphi 0, %s329
      %s344 = sphi 0, %s330
      %s348 = sphi 0, %s348
      %s350 = sphi 0, %s348
      %s351 = sphi 0, %s350
      %s365 = sphi 0, %s351
      %s369 = sphi 0, %s369
      %s371 = sphi 0, %s369
      %s372 = sphi 0, %s371
      %s386 = sphi 0, %s372
      %s390 = sphi 0, %s390
      %s392 = sphi 0, %s390
      %s393 = sphi 0, %s392
      %s407 = sphi 0, %s393
      %s411 = sphi 0, %s411
      %s413 = sphi 0, %s411
      %s414 = sphi 0, %s413
      %s428 = sphi 0, %s414
      %s432 = sphi 0, %s432
      %s434 = sphi 0, %s432
      %s435 = sphi 0, %s434
      %s449 = sphi 0, %s435
      %s453 = sphi 0, %s453
      %s455 = sphi 0, %s453
      %s456 = sphi 0, %s455
      %s470 = sphi 0, %s456
      %s474 = sphi 0, %s474
      %s476 = sphi 0, %s474
      %s477 = sphi 0, %s476
      %s491 = sphi 0, %s477
      %s495 = sphi 0, %s495
      %s497 = sphi 0, %s495
      %s498 = sphi 0, %s497
      %s512 = sphi 0, %s498
      %s516 = sphi 0, %s516
      %s518 = sphi 0, %s516
      %s519 = sphi 0, %s518
      %s533 = sphi 0, %s519
      %s539 = sphi 0, %s541
      %s542 = sphi 0, %s539
      %s543 = sphi 0, %s542
      %s559 = sphi 0, %s543
    $region4: #{tpu_custom_call.1} parent=1 // loop_header_branch
      %44 = sbr.rel (%p42) target = $region8
    $region5: #{tpu_custom_call.1} parent=1 // loop_body
      %s46 = ssub.s32 %s41, 1
      %s47 = ssub.s32 %s41, 2
      %s48 = sadd.s32 %s41, 1
      %s49 = ssub.s32 %s41, %s48
      %p50 = scmp.eq.s32.totalorder %s49, 0
      %s52 = sadd.s32 %s51, 1
      %s53 = scalar_select %p50, %s51, %s52
      %p56 = pneg %p50
      %p57 = scmp.eq.s32.totalorder %s41, 1
      %p58 = por %p56, %p57
      %p59 = scmp.ne.s32.totalorder %s51, %s54
      %p60 = scmp.eq.s32.totalorder %s41, 0
      %p61 = por %p59, %p60
      %p62 = scmp.ne.s32.totalorder %s51, %s54
      %p63 = scmp.eq.s32.totalorder %s46, 1
      %p64 = por %p62, %p63
      %p65 = scmp.ne.s32.totalorder %s54, %s55
      %p66 = scmp.eq.s32.totalorder %s46, 0
      %p67 = por %p65, %p66
      %p68 = scmp.ne.s32.totalorder %s54, %s55
      %p69 = scmp.eq.s32.totalorder %s47, 1
      %p70 = por %p68, %p69
      %p72 = scmp.ne.s32.totalorder %s55, %s71
      %p73 = scmp.eq.s32.totalorder %s47, 0
      %p74 = por %p72, %p73
      %s76 = sadd.s32 %s75, 1
      %p79 = scmp.eq.s32.totalorder %s41, 1
      %p80 = scmp.ne.s32.totalorder %s75, %s77
      %p81 = scmp.eq.s32.totalorder %s41, 0
      %p82 = por %p80, %p81
      %p83 = scmp.ne.s32.totalorder %s75, %s77
      %p84 = scmp.eq.s32.totalorder %s46, 1
      %p85 = por %p83, %p84
      %p86 = scmp.ne.s32.totalorder %s77, %s78
      %p87 = scmp.eq.s32.totalorder %s46, 0
      %p88 = por %p86, %p87
      %p89 = scmp.ne.s32.totalorder %s77, %s78
      %p90 = scmp.eq.s32.totalorder %s47, 1
      %p91 = por %p89, %p90
      %p93 = scmp.ne.s32.totalorder %s78, %s92
      %p94 = scmp.eq.s32.totalorder %s47, 0
      %p95 = por %p93, %p94
      %s97 = sadd.s32 %s96, 1
      %p100 = scmp.eq.s32.totalorder %s41, 1
      %p101 = scmp.ne.s32.totalorder %s96, %s98
      %p102 = scmp.eq.s32.totalorder %s41, 0
      %p103 = por %p101, %p102
      %p104 = scmp.ne.s32.totalorder %s96, %s98
      %p105 = scmp.eq.s32.totalorder %s46, 1
      %p106 = por %p104, %p105
      %p107 = scmp.ne.s32.totalorder %s98, %s99
      %p108 = scmp.eq.s32.totalorder %s46, 0
      %p109 = por %p107, %p108
      %p110 = scmp.ne.s32.totalorder %s98, %s99
      %p111 = scmp.eq.s32.totalorder %s47, 1
      %p112 = por %p110, %p111
      %p114 = scmp.ne.s32.totalorder %s99, %s113
      %p115 = scmp.eq.s32.totalorder %s47, 0
      %p116 = por %p114, %p115
      %s118 = sadd.s32 %s117, 1
      %p121 = scmp.eq.s32.totalorder %s41, 1
      %p122 = scmp.ne.s32.totalorder %s117, %s119
      %p123 = scmp.eq.s32.totalorder %s41, 0
      %p124 = por %p122, %p123
      %p125 = scmp.ne.s32.totalorder %s117, %s119
      %p126 = scmp.eq.s32.totalorder %s46, 1
      %p127 = por %p125, %p126
      %p128 = scmp.ne.s32.totalorder %s119, %s120
      %p129 = scmp.eq.s32.totalorder %s46, 0
      %p130 = por %p128, %p129
      %p131 = scmp.ne.s32.totalorder %s119, %s120
      %p132 = scmp.eq.s32.totalorder %s47, 1
      %p133 = por %p131, %p132
      %p135 = scmp.ne.s32.totalorder %s120, %s134
      %p136 = scmp.eq.s32.totalorder %s47, 0
      %p137 = por %p135, %p136
      %s139 = sadd.s32 %s138, 1
      %p142 = scmp.eq.s32.totalorder %s41, 1
      %p143 = scmp.ne.s32.totalorder %s138, %s140
      %p144 = scmp.eq.s32.totalorder %s41, 0
      %p145 = por %p143, %p144
      %p146 = scmp.ne.s32.totalorder %s138, %s140
      %p147 = scmp.eq.s32.totalorder %s46, 1
      %p148 = por %p146, %p147
      %p149 = scmp.ne.s32.totalorder %s140, %s141
      %p150 = scmp.eq.s32.totalorder %s46, 0
      %p151 = por %p149, %p150
      %p152 = scmp.ne.s32.totalorder %s140, %s141
      %p153 = scmp.eq.s32.totalorder %s47, 1
      %p154 = por %p152, %p153
      %p156 = scmp.ne.s32.totalorder %s141, %s155
      %p157 = scmp.eq.s32.totalorder %s47, 0
      %p158 = por %p156, %p157
      %s160 = sadd.s32 %s159, 1
      %p163 = scmp.eq.s32.totalorder %s41, 1
      %p164 = scmp.ne.s32.totalorder %s159, %s161
      %p165 = scmp.eq.s32.totalorder %s41, 0
      %p166 = por %p164, %p165
      %p167 = scmp.ne.s32.totalorder %s159, %s161
      %p168 = scmp.eq.s32.totalorder %s46, 1
      %p169 = por %p167, %p168
      %p170 = scmp.ne.s32.totalorder %s161, %s162
      %p171 = scmp.eq.s32.totalorder %s46, 0
      %p172 = por %p170, %p171
      %p173 = scmp.ne.s32.totalorder %s161, %s162
      %p174 = scmp.eq.s32.totalorder %s47, 1
      %p175 = por %p173, %p174
      %p177 = scmp.ne.s32.totalorder %s162, %s176
      %p178 = scmp.eq.s32.totalorder %s47, 0
      %p179 = por %p177, %p178
      %s181 = sadd.s32 %s180, 1
      %p184 = scmp.eq.s32.totalorder %s41, 1
      %p185 = scmp.ne.s32.totalorder %s180, %s182
      %p186 = scmp.eq.s32.totalorder %s41, 0
      %p187 = por %p185, %p186
      %p188 = scmp.ne.s32.totalorder %s180, %s182
      %p189 = scmp.eq.s32.totalorder %s46, 1
      %p190 = por %p188, %p189
      %p191 = scmp.ne.s32.totalorder %s182, %s183
      %p192 = scmp.eq.s32.totalorder %s46, 0
      %p193 = por %p191, %p192
      %p194 = scmp.ne.s32.totalorder %s182, %s183
      %p195 = scmp.eq.s32.totalorder %s47, 1
      %p196 = por %p194, %p195
      %p198 = scmp.ne.s32.totalorder %s183, %s197
      %p199 = scmp.eq.s32.totalorder %s47, 0
      %p200 = por %p198, %p199
      %s202 = sadd.s32 %s201, 1
      %p205 = scmp.eq.s32.totalorder %s41, 1
      %p206 = scmp.ne.s32.totalorder %s201, %s203
      %p207 = scmp.eq.s32.totalorder %s41, 0
      %p208 = por %p206, %p207
      %p209 = scmp.ne.s32.totalorder %s201, %s203
      %p210 = scmp.eq.s32.totalorder %s46, 1
      %p211 = por %p209, %p210
      %p212 = scmp.ne.s32.totalorder %s203, %s204
      %p213 = scmp.eq.s32.totalorder %s46, 0
      %p214 = por %p212, %p213
      %p215 = scmp.ne.s32.totalorder %s203, %s204
      %p216 = scmp.eq.s32.totalorder %s47, 1
      %p217 = por %p215, %p216
      %p219 = scmp.ne.s32.totalorder %s204, %s218
      %p220 = scmp.eq.s32.totalorder %s47, 0
      %p221 = por %p219, %p220
      %s223 = sadd.s32 %s222, 1
      %p226 = scmp.eq.s32.totalorder %s41, 1
      %p227 = scmp.ne.s32.totalorder %s222, %s224
      %p228 = scmp.eq.s32.totalorder %s41, 0
      %p229 = por %p227, %p228
      %p230 = scmp.ne.s32.totalorder %s222, %s224
      %p231 = scmp.eq.s32.totalorder %s46, 1
      %p232 = por %p230, %p231
      %p233 = scmp.ne.s32.totalorder %s224, %s225
      %p234 = scmp.eq.s32.totalorder %s46, 0
      %p235 = por %p233, %p234
      %p236 = scmp.ne.s32.totalorder %s224, %s225
      %p237 = scmp.eq.s32.totalorder %s47, 1
      %p238 = por %p236, %p237
      %p240 = scmp.ne.s32.totalorder %s225, %s239
      %p241 = scmp.eq.s32.totalorder %s47, 0
      %p242 = por %p240, %p241
      %s244 = sadd.s32 %s243, 1
      %p247 = scmp.eq.s32.totalorder %s41, 1
      %p248 = scmp.ne.s32.totalorder %s243, %s245
      %p249 = scmp.eq.s32.totalorder %s41, 0
      %p250 = por %p248, %p249
      %p251 = scmp.ne.s32.totalorder %s243, %s245
      %p252 = scmp.eq.s32.totalorder %s46, 1
      %p253 = por %p251, %p252
      %p254 = scmp.ne.s32.totalorder %s245, %s246
      %p255 = scmp.eq.s32.totalorder %s46, 0
      %p256 = por %p254, %p255
      %p257 = scmp.ne.s32.totalorder %s245, %s246
      %p258 = scmp.eq.s32.totalorder %s47, 1
      %p259 = por %p257, %p258
      %p261 = scmp.ne.s32.totalorder %s246, %s260
      %p262 = scmp.eq.s32.totalorder %s47, 0
      %p263 = por %p261, %p262
      %s265 = sadd.s32 %s264, 1
      %p268 = scmp.eq.s32.totalorder %s41, 1
      %p269 = scmp.ne.s32.totalorder %s264, %s266
      %p270 = scmp.eq.s32.totalorder %s41, 0
      %p271 = por %p269, %p270
      %p272 = scmp.ne.s32.totalorder %s264, %s266
      %p273 = scmp.eq.s32.totalorder %s46, 1
      %p274 = por %p272, %p273
      %p275 = scmp.ne.s32.totalorder %s266, %s267
      %p276 = scmp.eq.s32.totalorder %s46, 0
      %p277 = por %p275, %p276
      %p278 = scmp.ne.s32.totalorder %s266, %s267
      %p279 = scmp.eq.s32.totalorder %s47, 1
      %p280 = por %p278, %p279
      %p282 = scmp.ne.s32.totalorder %s267, %s281
      %p283 = scmp.eq.s32.totalorder %s47, 0
      %p284 = por %p282, %p283
      %s286 = sadd.s32 %s285, 1
      %p289 = scmp.eq.s32.totalorder %s41, 1
      %p290 = scmp.ne.s32.totalorder %s285, %s287
      %p291 = scmp.eq.s32.totalorder %s41, 0
      %p292 = por %p290, %p291
      %p293 = scmp.ne.s32.totalorder %s285, %s287
      %p294 = scmp.eq.s32.totalorder %s46, 1
      %p295 = por %p293, %p294
      %p296 = scmp.ne.s32.totalorder %s287, %s288
      %p297 = scmp.eq.s32.totalorder %s46, 0
      %p298 = por %p296, %p297
      %p299 = scmp.ne.s32.totalorder %s287, %s288
      %p300 = scmp.eq.s32.totalorder %s47, 1
      %p301 = por %p299, %p300
      %p303 = scmp.ne.s32.totalorder %s288, %s302
      %p304 = scmp.eq.s32.totalorder %s47, 0
      %p305 = por %p303, %p304
      %s307 = sadd.s32 %s306, 1
      %p310 = scmp.eq.s32.totalorder %s41, 1
      %p311 = scmp.ne.s32.totalorder %s306, %s308
      %p312 = scmp.eq.s32.totalorder %s41, 0
      %p313 = por %p311, %p312
      %p314 = scmp.ne.s32.totalorder %s306, %s308
      %p315 = scmp.eq.s32.totalorder %s46, 1
      %p316 = por %p314, %p315
      %p317 = scmp.ne.s32.totalorder %s308, %s309
      %p318 = scmp.eq.s32.totalorder %s46, 0
      %p319 = por %p317, %p318
      %p320 = scmp.ne.s32.totalorder %s308, %s309
      %p321 = scmp.eq.s32.totalorder %s47, 1
      %p322 = por %p320, %p321
      %p324 = scmp.ne.s32.totalorder %s309, %s323
      %p325 = scmp.eq.s32.totalorder %s47, 0
      %p326 = por %p324, %p325
      %s328 = sadd.s32 %s327, 1
      %p331 = scmp.eq.s32.totalorder %s41, 1
      %p332 = scmp.ne.s32.totalorder %s327, %s329
      %p333 = scmp.eq.s32.totalorder %s41, 0
      %p334 = por %p332, %p333
      %p335 = scmp.ne.s32.totalorder %s327, %s329
      %p336 = scmp.eq.s32.totalorder %s46, 1
      %p337 = por %p335, %p336
      %p338 = scmp.ne.s32.totalorder %s329, %s330
      %p339 = scmp.eq.s32.totalorder %s46, 0
      %p340 = por %p338, %p339
      %p341 = scmp.ne.s32.totalorder %s329, %s330
      %p342 = scmp.eq.s32.totalorder %s47, 1
      %p343 = por %p341, %p342
      %p345 = scmp.ne.s32.totalorder %s330, %s344
      %p346 = scmp.eq.s32.totalorder %s47, 0
      %p347 = por %p345, %p346
      %s349 = sadd.s32 %s348, 1
      %p352 = scmp.eq.s32.totalorder %s41, 1
      %p353 = scmp.ne.s32.totalorder %s348, %s350
      %p354 = scmp.eq.s32.totalorder %s41, 0
      %p355 = por %p353, %p354
      %p356 = scmp.ne.s32.totalorder %s348, %s350
      %p357 = scmp.eq.s32.totalorder %s46, 1
      %p358 = por %p356, %p357
      %p359 = scmp.ne.s32.totalorder %s350, %s351
      %p360 = scmp.eq.s32.totalorder %s46, 0
      %p361 = por %p359, %p360
      %p362 = scmp.ne.s32.totalorder %s350, %s351
      %p363 = scmp.eq.s32.totalorder %s47, 1
      %p364 = por %p362, %p363
      %p366 = scmp.ne.s32.totalorder %s351, %s365
      %p367 = scmp.eq.s32.totalorder %s47, 0
      %p368 = por %p366, %p367
      %s370 = sadd.s32 %s369, 1
      %p373 = scmp.eq.s32.totalorder %s41, 1
      %p374 = scmp.ne.s32.totalorder %s369, %s371
      %p375 = scmp.eq.s32.totalorder %s41, 0
      %p376 = por %p374, %p375
      %p377 = scmp.ne.s32.totalorder %s369, %s371
      %p378 = scmp.eq.s32.totalorder %s46, 1
      %p379 = por %p377, %p378
      %p380 = scmp.ne.s32.totalorder %s371, %s372
      %p381 = scmp.eq.s32.totalorder %s46, 0
      %p382 = por %p380, %p381
      %p383 = scmp.ne.s32.totalorder %s371, %s372
      %p384 = scmp.eq.s32.totalorder %s47, 1
      %p385 = por %p383, %p384
      %p387 = scmp.ne.s32.totalorder %s372, %s386
      %p388 = scmp.eq.s32.totalorder %s47, 0
      %p389 = por %p387, %p388
      %s391 = sadd.s32 %s390, 1
      %p394 = scmp.eq.s32.totalorder %s41, 1
      %p395 = scmp.ne.s32.totalorder %s390, %s392
      %p396 = scmp.eq.s32.totalorder %s41, 0
      %p397 = por %p395, %p396
      %p398 = scmp.ne.s32.totalorder %s390, %s392
      %p399 = scmp.eq.s32.totalorder %s46, 1
      %p400 = por %p398, %p399
      %p401 = scmp.ne.s32.totalorder %s392, %s393
      %p402 = scmp.eq.s32.totalorder %s46, 0
      %p403 = por %p401, %p402
      %p404 = scmp.ne.s32.totalorder %s392, %s393
      %p405 = scmp.eq.s32.totalorder %s47, 1
      %p406 = por %p404, %p405
      %p408 = scmp.ne.s32.totalorder %s393, %s407
      %p409 = scmp.eq.s32.totalorder %s47, 0
      %p410 = por %p408, %p409
      %s412 = sadd.s32 %s411, 1
      %p415 = scmp.eq.s32.totalorder %s41, 1
      %p416 = scmp.ne.s32.totalorder %s411, %s413
      %p417 = scmp.eq.s32.totalorder %s41, 0
      %p418 = por %p416, %p417
      %p419 = scmp.ne.s32.totalorder %s411, %s413
      %p420 = scmp.eq.s32.totalorder %s46, 1
      %p421 = por %p419, %p420
      %p422 = scmp.ne.s32.totalorder %s413, %s414
      %p423 = scmp.eq.s32.totalorder %s46, 0
      %p424 = por %p422, %p423
      %p425 = scmp.ne.s32.totalorder %s413, %s414
      %p426 = scmp.eq.s32.totalorder %s47, 1
      %p427 = por %p425, %p426
      %p429 = scmp.ne.s32.totalorder %s414, %s428
      %p430 = scmp.eq.s32.totalorder %s47, 0
      %p431 = por %p429, %p430
      %s433 = sadd.s32 %s432, 1
      %p436 = scmp.eq.s32.totalorder %s41, 1
      %p437 = scmp.ne.s32.totalorder %s432, %s434
      %p438 = scmp.eq.s32.totalorder %s41, 0
      %p439 = por %p437, %p438
      %p440 = scmp.ne.s32.totalorder %s432, %s434
      %p441 = scmp.eq.s32.totalorder %s46, 1
      %p442 = por %p440, %p441
      %p443 = scmp.ne.s32.totalorder %s434, %s435
      %p444 = scmp.eq.s32.totalorder %s46, 0
      %p445 = por %p443, %p444
      %p446 = scmp.ne.s32.totalorder %s434, %s435
      %p447 = scmp.eq.s32.totalorder %s47, 1
      %p448 = por %p446, %p447
      %p450 = scmp.ne.s32.totalorder %s435, %s449
      %p451 = scmp.eq.s32.totalorder %s47, 0
      %p452 = por %p450, %p451
      %s454 = sadd.s32 %s453, 1
      %p457 = scmp.eq.s32.totalorder %s41, 1
      %p458 = scmp.ne.s32.totalorder %s453, %s455
      %p459 = scmp.eq.s32.totalorder %s41, 0
      %p460 = por %p458, %p459
      %p461 = scmp.ne.s32.totalorder %s453, %s455
      %p462 = scmp.eq.s32.totalorder %s46, 1
      %p463 = por %p461, %p462
      %p464 = scmp.ne.s32.totalorder %s455, %s456
      %p465 = scmp.eq.s32.totalorder %s46, 0
      %p466 = por %p464, %p465
      %p467 = scmp.ne.s32.totalorder %s455, %s456
      %p468 = scmp.eq.s32.totalorder %s47, 1
      %p469 = por %p467, %p468
      %p471 = scmp.ne.s32.totalorder %s456, %s470
      %p472 = scmp.eq.s32.totalorder %s47, 0
      %p473 = por %p471, %p472
      %s475 = sadd.s32 %s474, 1
      %p478 = scmp.eq.s32.totalorder %s41, 1
      %p479 = scmp.ne.s32.totalorder %s474, %s476
      %p480 = scmp.eq.s32.totalorder %s41, 0
      %p481 = por %p479, %p480
      %p482 = scmp.ne.s32.totalorder %s474, %s476
      %p483 = scmp.eq.s32.totalorder %s46, 1
      %p484 = por %p482, %p483
      %p485 = scmp.ne.s32.totalorder %s476, %s477
      %p486 = scmp.eq.s32.totalorder %s46, 0
      %p487 = por %p485, %p486
      %p488 = scmp.ne.s32.totalorder %s476, %s477
      %p489 = scmp.eq.s32.totalorder %s47, 1
      %p490 = por %p488, %p489
      %p492 = scmp.ne.s32.totalorder %s477, %s491
      %p493 = scmp.eq.s32.totalorder %s47, 0
      %p494 = por %p492, %p493
      %s496 = sadd.s32 %s495, 1
      %p499 = scmp.eq.s32.totalorder %s41, 1
      %p500 = scmp.ne.s32.totalorder %s495, %s497
      %p501 = scmp.eq.s32.totalorder %s41, 0
      %p502 = por %p500, %p501
      %p503 = scmp.ne.s32.totalorder %s495, %s497
      %p504 = scmp.eq.s32.totalorder %s46, 1
      %p505 = por %p503, %p504
      %p506 = scmp.ne.s32.totalorder %s497, %s498
      %p507 = scmp.eq.s32.totalorder %s46, 0
      %p508 = por %p506, %p507
      %p509 = scmp.ne.s32.totalorder %s497, %s498
      %p510 = scmp.eq.s32.totalorder %s47, 1
      %p511 = por %p509, %p510
      %p513 = scmp.ne.s32.totalorder %s498, %s512
      %p514 = scmp.eq.s32.totalorder %s47, 0
      %p515 = por %p513, %p514
      %s517 = sadd.s32 %s516, 1
      %p520 = scmp.eq.s32.totalorder %s41, 1
      %p521 = scmp.ne.s32.totalorder %s516, %s518
      %p522 = scmp.eq.s32.totalorder %s41, 0
      %p523 = por %p521, %p522
      %p524 = scmp.ne.s32.totalorder %s516, %s518
      %p525 = scmp.eq.s32.totalorder %s46, 1
      %p526 = por %p524, %p525
      %p527 = scmp.ne.s32.totalorder %s518, %s519
      %p528 = scmp.eq.s32.totalorder %s46, 0
      %p529 = por %p527, %p528
      %p530 = scmp.ne.s32.totalorder %s518, %s519
      %p531 = scmp.eq.s32.totalorder %s47, 1
      %p532 = por %p530, %p531
      %p534 = scmp.ne.s32.totalorder %s519, %s533
      %p535 = scmp.eq.s32.totalorder %s47, 0
      %p536 = por %p534, %p535
      %s537 = ssub.s32 %s41, %s48
      %p538 = scmp.eq.s32.totalorder %s537, 0
      %s540 = sadd.s32 %s539, 1
      %s541 = scalar_select %p538, %s539, %s540
      %p544 = pneg %p538
      %p545 = scmp.eq.s32.totalorder %s41, 1
      %p546 = por %p544, %p545
      %p547 = scmp.ne.s32.totalorder %s539, %s542
      %p548 = scmp.eq.s32.totalorder %s41, 0
      %p549 = por %p547, %p548
      %p550 = scmp.ne.s32.totalorder %s539, %s542
      %p551 = scmp.eq.s32.totalorder %s46, 1
      %p552 = por %p550, %p551
      %p553 = scmp.ne.s32.totalorder %s542, %s543
      %p554 = scmp.eq.s32.totalorder %s46, 0
      %p555 = por %p553, %p554
      %p556 = scmp.ne.s32.totalorder %s542, %s543
      %p557 = scmp.eq.s32.totalorder %s47, 1
      %p558 = por %p556, %p557
      %p560 = scmp.ne.s32.totalorder %s543, %s559
      %p561 = scmp.eq.s32.totalorder %s47, 0
      %p562 = por %p560, %p561
      %p563 = scmp.le.s32.totalorder 1, %s41
      %p564 = scmp.lt.s32.totalorder %s41, 3
      %p565 = pnand %p563, %p564
      %p566 = pneg %p565
      // Predicated region
      $region9: #{tpu_custom_call.1} parent=5 // pred_check
        _
      $region10: #{tpu_custom_call.1} parent=5 // pred_check_branch
        %568 = sbr.rel (%p565) target = $region12
      $region11: #{tpu_custom_call.1} parent=5 // pred_region
        %s569 = ssub.s32 %s41, 1
        // Predicated region
        $region13: #{tpu_custom_call.1} parent=11 // pred_check
          %p570 = pneg %p88
        $region14: #{tpu_custom_call.1} parent=11 // pred_check_branch
          %572 = sbr.rel (%p570) target = $region16
        $region15: #{tpu_custom_call.1} parent=11 // pred_region
          %s574 = ssub.s32 1792, 1792
          %575 = vsyncadd [#allocation6], %s574
          %s576 = sshll.u32 [#allocation5], 4
          %s577 = int_to_ptr.vmem [resolvable:$true] %s576
          %582 = dma.hbm_to_vmem [thread:$0]  %s1, 1792, %s577, [#allocation6], 64, 64, 4
        $region16: #{tpu_custom_call.1} parent=11 // pred_fallthru
          _
        // Predicated region
        $region17: #{tpu_custom_call.1} parent=11 // pred_check
          %p583 = pneg %p109
        $region18: #{tpu_custom_call.1} parent=11 // pred_check_branch
          %585 = sbr.rel (%p583) target = $region20
        $region19: #{tpu_custom_call.1} parent=11 // pred_region
          %s587 = ssub.s32 14336, 14336
          %588 = vsyncadd [#allocation6], %s587
          %s589 = sshll.u32 [#allocation7], 4
          %s590 = int_to_ptr.vmem [resolvable:$true] %s589
          %595 = dma.hbm_to_vmem [thread:$0]  %s2, 14336, %s590, [#allocation6], 128, 128, 8
        $region20: #{tpu_custom_call.1} parent=11 // pred_fallthru
          _
        // Predicated region
        $region21: #{tpu_custom_call.1} parent=11 // pred_check
          %p596 = pneg %p130
        $region22: #{tpu_custom_call.1} parent=11 // pred_check_branch
          %598 = sbr.rel (%p596) target = $region24
        $region23: #{tpu_custom_call.1} parent=11 // pred_region
          %s600 = ssub.s32 32, 32
          %601 = vsyncadd [#allocation9], %s600
          %s603 = sshll.u32 [#allocation8], 4
          %s604 = int_to_ptr.vmem [resolvable:$true] %s603
          %606 = dma.hbm_to_vmem [thread:$0]  %s3, 32, %s604, [#allocation9]
        $region24: #{tpu_custom_call.1} parent=11 // pred_fallthru
          _
        // Predicated region
        $region25: #{tpu_custom_call.1} parent=11 // pred_check
          %p607 = pneg %p151
        $region26: #{tpu_custom_call.1} parent=11 // pred_check_branch
          %609 = sbr.rel (%p607) target = $region28
        $region27: #{tpu_custom_call.1} parent=11 // pred_region
          %s611 = ssub.s32 512, 512
          %612 = vsyncadd [#allocation9], %s611
          %s613 = sshll.u32 [#allocation10], 4
          %s614 = int_to_ptr.vmem [resolvable:$true] %s613
          %619 = dma.hbm_to_vmem [thread:$0]  %s4, 512, %s614, [#allocation9], 64, 64, 4
        $region28: #{tpu_custom_call.1} parent=11 // pred_fallthru
          _
        // Predicated region
        $region29: #{tpu_custom_call.1} parent=11 // pred_check
          %p620 = pneg %p172
        $region30: #{tpu_custom_call.1} parent=11 // pred_check_branch
          %622 = sbr.rel (%p620) target = $region32
        $region31: #{tpu_custom_call.1} parent=11 // pred_region
          %s624 = ssub.s32 16384, 16384
          %625 = vsyncadd [#allocation12], %s624
          %s626 = sshll.u32 [#allocation11], 4
          %s627 = int_to_ptr.vmem [resolvable:$true] %s626
          %632 = dma.hbm_to_vmem [thread:$0]  %s5, 16384, %s627, [#allocation12], 128, 128, 8
        $region32: #{tpu_custom_call.1} parent=11 // pred_fallthru
          _
        // Predicated region
        $region33: #{tpu_custom_call.1} parent=11 // pred_check
          %p633 = pneg %p193
        $region34: #{tpu_custom_call.1} parent=11 // pred_check_branch
          %635 = sbr.rel (%p633) target = $region36
        $region35: #{tpu_custom_call.1} parent=11 // pred_region
          %s637 = ssub.s32 32, 32
          %638 = vsyncadd [#allocation12], %s637
          %s640 = sshll.u32 [#allocation13], 4
          %s641 = int_to_ptr.vmem [resolvable:$true] %s640
          %643 = dma.hbm_to_vmem [thread:$0]  %s6, 32, %s641, [#allocation12]
        $region36: #{tpu_custom_call.1} parent=11 // pred_fallthru
          _
        // Predicated region
        $region37: #{tpu_custom_call.1} parent=11 // pred_check
          %p644 = pneg %p214
        $region38: #{tpu_custom_call.1} parent=11 // pred_check_branch
          %646 = sbr.rel (%p644) target = $region40
        $region39: #{tpu_custom_call.1} parent=11 // pred_region
          _
        $region40: #{tpu_custom_call.1} parent=11 // pred_fallthru
          _
        // Predicated region
        $region41: #{tpu_custom_call.1} parent=11 // pred_check
          %p647 = pneg %p235
        $region42: #{tpu_custom_call.1} parent=11 // pred_check_branch
          %649 = sbr.rel (%p647) target = $region44
        $region43: #{tpu_custom_call.1} parent=11 // pred_region
          %s651 = ssub.s32 256, 256
          %652 = vsyncadd [#allocation15], %s651
          %s653 = sshll.u32 [#allocation14], 4
          %s654 = int_to_ptr.vmem [resolvable:$true] %s653
          %659 = dma.hbm_to_vmem [thread:$0]  %s8, 256, %s654, [#allocation15], 64, 64, 4
        $region44: #{tpu_custom_call.1} parent=11 // pred_fallthru
          _
        // Predicated region
        $region45: #{tpu_custom_call.1} parent=11 // pred_check
          %p660 = pneg %p256
        $region46: #{tpu_custom_call.1} parent=11 // pred_check_branch
          %662 = sbr.rel (%p660) target = $region48
        $region47: #{tpu_custom_call.1} parent=11 // pred_region
          %s664 = ssub.s32 16384, 16384
          %665 = vsyncadd [#allocation15], %s664
          %s666 = sshll.u32 [#allocation16], 4
          %s667 = int_to_ptr.vmem [resolvable:$true] %s666
          %672 = dma.hbm_to_vmem [thread:$0]  %s9, 16384, %s667, [#allocation15], 128, 128, 8
        $region48: #{tpu_custom_call.1} parent=11 // pred_fallthru
          _
        // Predicated region
        $region49: #{tpu_custom_call.1} parent=11 // pred_check
          %p673 = pneg %p277
        $region50: #{tpu_custom_call.1} parent=11 // pred_check_branch
          %675 = sbr.rel (%p673) target = $region52
        $region51: #{tpu_custom_call.1} parent=11 // pred_region
          %s677 = ssub.s32 32, 32
          %678 = vsyncadd [#allocation18], %s677
          %s680 = sshll.u32 [#allocation17], 4
          %s681 = int_to_ptr.vmem [resolvable:$true] %s680
          %683 = dma.hbm_to_vmem [thread:$0]  %s10, 32, %s681, [#allocation18]
        $region52: #{tpu_custom_call.1} parent=11 // pred_fallthru
          _
        // Predicated region
        $region53: #{tpu_custom_call.1} parent=11 // pred_check
          %p684 = pneg %p298
        $region54: #{tpu_custom_call.1} parent=11 // pred_check_branch
          %686 = sbr.rel (%p684) target = $region56
        $region55: #{tpu_custom_call.1} parent=11 // pred_region
          %s688 = ssub.s32 8192, 8192
          %689 = vsyncadd [#allocation18], %s688
          %s690 = sshll.u32 [#allocation19], 4
          %s691 = int_to_ptr.vmem [resolvable:$true] %s690
          %696 = dma.hbm_to_vmem [thread:$0]  %s11, 8192, %s691, [#allocation18], 256, 256, 16
        $region56: #{tpu_custom_call.1} parent=11 // pred_fallthru
          _
        // Predicated region
        $region57: #{tpu_custom_call.1} parent=11 // pred_check
          %p697 = pneg %p319
        $region58: #{tpu_custom_call.1} parent=11 // pred_check_branch
          %699 = sbr.rel (%p697) target = $region60
        $region59: #{tpu_custom_call.1} parent=11 // pred_region
          %s701 = ssub.s32 128, 128
          %702 = vsyncadd [#allocation21], %s701
          %s703 = sshll.u32 [#allocation20], 4
          %s704 = int_to_ptr.vmem [resolvable:$true] %s703
          %709 = dma.hbm_to_vmem [thread:$0]  %s12, 128, %s704, [#allocation21], 32, 32, 2
        $region60: #{tpu_custom_call.1} parent=11 // pred_fallthru
          _
        // Predicated region
        $region61: #{tpu_custom_call.1} parent=11 // pred_check
          %p710 = pneg %p340
        $region62: #{tpu_custom_call.1} parent=11 // pred_check_branch
          %712 = sbr.rel (%p710) target = $region64
        $region63: #{tpu_custom_call.1} parent=11 // pred_region
          %s714 = ssub.s32 8192, 8192
          %715 = vsyncadd [#allocation21], %s714
          %s716 = sshll.u32 [#allocation22], 4
          %s717 = int_to_ptr.vmem [resolvable:$true] %s716
          %722 = dma.hbm_to_vmem [thread:$0]  %s13, 8192, %s717, [#allocation21], 64, 64, 4
        $region64: #{tpu_custom_call.1} parent=11 // pred_fallthru
          _
        // Predicated region
        $region65: #{tpu_custom_call.1} parent=11 // pred_check
          %p723 = pneg %p361
        $region66: #{tpu_custom_call.1} parent=11 // pred_check_branch
          %725 = sbr.rel (%p723) target = $region68
        $region67: #{tpu_custom_call.1} parent=11 // pred_region
          _
        $region68: #{tpu_custom_call.1} parent=11 // pred_fallthru
          _
        // Predicated region
        $region69: #{tpu_custom_call.1} parent=11 // pred_check
          %p726 = pneg %p382
        $region70: #{tpu_custom_call.1} parent=11 // pred_check_branch
          %728 = sbr.rel (%p726) target = $region72
        $region71: #{tpu_custom_call.1} parent=11 // pred_region
          %s730 = ssub.s32 2048, 2048
          %731 = vsyncadd [#allocation24], %s730
          %s732 = sshll.u32 [#allocation23], 4
          %s733 = int_to_ptr.vmem [resolvable:$true] %s732
          %738 = dma.hbm_to_vmem [thread:$0]  %s15, 2048, %s733, [#allocation24], 128, 128, 8
        $region72: #{tpu_custom_call.1} parent=11 // pred_fallthru
          _
        // Predicated region
        $region73: #{tpu_custom_call.1} parent=11 // pred_check
          %p739 = pneg %p403
        $region74: #{tpu_custom_call.1} parent=11 // pred_check_branch
          %741 = sbr.rel (%p739) target = $region76
        $region75: #{tpu_custom_call.1} parent=11 // pred_region
          _
        $region76: #{tpu_custom_call.1} parent=11 // pred_fallthru
          _
        // Predicated region
        $region77: #{tpu_custom_call.1} parent=11 // pred_check
          %p742 = pneg %p424
        $region78: #{tpu_custom_call.1} parent=11 // pred_check_branch
          %744 = sbr.rel (%p742) target = $region80
        $region79: #{tpu_custom_call.1} parent=11 // pred_region
          _
        $region80: #{tpu_custom_call.1} parent=11 // pred_fallthru
          _
        // Predicated region
        $region81: #{tpu_custom_call.1} parent=11 // pred_check
          %p745 = pneg %p445
        $region82: #{tpu_custom_call.1} parent=11 // pred_check_branch
          %747 = sbr.rel (%p745) target = $region84
        $region83: #{tpu_custom_call.1} parent=11 // pred_region
          _
        $region84: #{tpu_custom_call.1} parent=11 // pred_fallthru
          _
        // Predicated region
        $region85: #{tpu_custom_call.1} parent=11 // pred_check
          %p748 = pneg %p466
        $region86: #{tpu_custom_call.1} parent=11 // pred_check_branch
          %750 = sbr.rel (%p748) target = $region88
        $region87: #{tpu_custom_call.1} parent=11 // pred_region
          _
        $region88: #{tpu_custom_call.1} parent=11 // pred_fallthru
          _
        // Predicated region
        $region89: #{tpu_custom_call.1} parent=11 // pred_check
          %p751 = pneg %p487
        $region90: #{tpu_custom_call.1} parent=11 // pred_check_branch
          %753 = sbr.rel (%p751) target = $region92
        $region91: #{tpu_custom_call.1} parent=11 // pred_region
          _
        $region92: #{tpu_custom_call.1} parent=11 // pred_fallthru
          _
        // Predicated region
        $region93: #{tpu_custom_call.1} parent=11 // pred_check
          %p754 = pneg %p508
        $region94: #{tpu_custom_call.1} parent=11 // pred_check_branch
          %756 = sbr.rel (%p754) target = $region96
        $region95: #{tpu_custom_call.1} parent=11 // pred_region
          _
        $region96: #{tpu_custom_call.1} parent=11 // pred_fallthru
          _
        // Predicated region
        $region97: #{tpu_custom_call.1} parent=11 // pred_check
          %p757 = pneg %p529
        $region98: #{tpu_custom_call.1} parent=11 // pred_check_branch
          %759 = sbr.rel (%p757) target = $region100
        $region99: #{tpu_custom_call.1} parent=11 // pred_region
          _
        $region100: #{tpu_custom_call.1} parent=11 // pred_fallthru
          _
      $region12: #{tpu_custom_call.1} parent=5 // pred_fallthru
        _
      %p760 = scmp.lt.s32.totalorder %s41, 2
      // Predicated region
      $region101: #{tpu_custom_call.1} parent=5 // pred_check
        %p761 = pneg %p760
      $region102: #{tpu_custom_call.1} parent=5 // pred_check_branch
        %763 = sbr.rel (%p761) target = $region104
      $region103: #{tpu_custom_call.1} parent=5 // pred_region
        // Predicated region
        $region105: #{tpu_custom_call.1} parent=103 // pred_check
          %p764 = pneg %p61
        $region106: #{tpu_custom_call.1} parent=103 // pred_check_branch
          %766 = sbr.rel (%p764) target = $region108
        $region107: #{tpu_custom_call.1} parent=103 // pred_region
          %s767 = sand.u32 %s51, 1
          %s768 = scalar_lea.sflag [#allocation4], %s767
          %s769 = sand.u32 %s51, 1
          %s770 = smul.addr %s769, 16
          %s771 = scalar_lea.vmem [#allocation3], %s770
          %s773 = ssub.s32 256, 256
          %774 = vsyncadd %s768, %s773
          %s775 = smul.addr %s41, 4
          %s776 = smul.addr %s775, 64
          %s777 = scalar_lea.hbm %s0, %s776
          %s778 = sshll.u32 %s771, 4
          %s779 = int_to_ptr.vmem [resolvable:$true] %s778
          %784 = dma.hbm_to_vmem [thread:$0]  %s777, 256, %s779, %s768, 64, 64, 4
        $region108: #{tpu_custom_call.1} parent=103 // pred_fallthru
          _
      $region104: #{tpu_custom_call.1} parent=5 // pred_fallthru
        _
      %p785 = scmp.le.s32.totalorder 1, %s41
      %p786 = scmp.lt.s32.totalorder %s41, 3
      %p787 = pnand %p785, %p786
      %p788 = pneg %p787
      // Predicated region
      $region109: #{tpu_custom_call.1} parent=5 // pred_check
        _
      $region110: #{tpu_custom_call.1} parent=5 // pred_check_branch
        %790 = sbr.rel (%p787) target = $region112
      $region111: #{tpu_custom_call.1} parent=5 // pred_region
        %s791 = ssub.s32 %s41, 1
        %s792 = sand.u32 %s54, 1
        %s793 = scalar_lea.sflag [#allocation4], %s792
        %s794 = sand.u32 %s54, 1
        %s795 = smul.addr %s794, 16
        %s796 = scalar_lea.vmem [#allocation3], %s795
        // Predicated region
        $region113: #{tpu_custom_call.1} parent=111 // pred_check
          %p797 = pneg %p67
        $region114: #{tpu_custom_call.1} parent=111 // pred_check_branch
          %799 = sbr.rel (%p797) target = $region116
        $region115: #{tpu_custom_call.1} parent=111 // pred_region
          %800 = dma.done %s793, 256
        $region116: #{tpu_custom_call.1} parent=111 // pred_fallthru
          _
        // Predicated region
        $region117: #{tpu_custom_call.1} parent=111 // pred_check
          %p801 = pneg %p88
        $region118: #{tpu_custom_call.1} parent=111 // pred_check_branch
          %803 = sbr.rel (%p801) target = $region120
        $region119: #{tpu_custom_call.1} parent=111 // pred_region
          %804 = dma.done [#allocation6], 1792
        $region120: #{tpu_custom_call.1} parent=111 // pred_fallthru
          _
        // Predicated region
        $region121: #{tpu_custom_call.1} parent=111 // pred_check
          %p805 = pneg %p109
        $region122: #{tpu_custom_call.1} parent=111 // pred_check_branch
          %807 = sbr.rel (%p805) target = $region124
        $region123: #{tpu_custom_call.1} parent=111 // pred_region
          %808 = dma.done [#allocation6], 14336
        $region124: #{tpu_custom_call.1} parent=111 // pred_fallthru
          _
        // Predicated region
        $region125: #{tpu_custom_call.1} parent=111 // pred_check
          %p809 = pneg %p130
        $region126: #{tpu_custom_call.1} parent=111 // pred_check_branch
          %811 = sbr.rel (%p809) target = $region128
        $region127: #{tpu_custom_call.1} parent=111 // pred_region
          %812 = dma.done [#allocation9], 32
        $region128: #{tpu_custom_call.1} parent=111 // pred_fallthru
          _
        // Predicated region
        $region129: #{tpu_custom_call.1} parent=111 // pred_check
          %p813 = pneg %p151
        $region130: #{tpu_custom_call.1} parent=111 // pred_check_branch
          %815 = sbr.rel (%p813) target = $region132
        $region131: #{tpu_custom_call.1} parent=111 // pred_region
          %816 = dma.done [#allocation9], 512
        $region132: #{tpu_custom_call.1} parent=111 // pred_fallthru
          _
        // Predicated region
        $region133: #{tpu_custom_call.1} parent=111 // pred_check
          %p817 = pneg %p172
        $region134: #{tpu_custom_call.1} parent=111 // pred_check_branch
          %819 = sbr.rel (%p817) target = $region136
        $region135: #{tpu_custom_call.1} parent=111 // pred_region
          %820 = dma.done [#allocation12], 16384
        $region136: #{tpu_custom_call.1} parent=111 // pred_fallthru
          _
        // Predicated region
        $region137: #{tpu_custom_call.1} parent=111 // pred_check
          %p821 = pneg %p193
        $region138: #{tpu_custom_call.1} parent=111 // pred_check_branch
          %823 = sbr.rel (%p821) target = $region140
        $region139: #{tpu_custom_call.1} parent=111 // pred_region
          %824 = dma.done [#allocation12], 32
        $region140: #{tpu_custom_call.1} parent=111 // pred_fallthru
          _
        // Predicated region
        $region141: #{tpu_custom_call.1} parent=111 // pred_check
          %p825 = pneg %p235
        $region142: #{tpu_custom_call.1} parent=111 // pred_check_branch
          %827 = sbr.rel (%p825) target = $region144
        $region143: #{tpu_custom_call.1} parent=111 // pred_region
          %828 = dma.done [#allocation15], 256
        $region144: #{tpu_custom_call.1} parent=111 // pred_fallthru
          _
        // Predicated region
        $region145: #{tpu_custom_call.1} parent=111 // pred_check
          %p829 = pneg %p256
        $region146: #{tpu_custom_call.1} parent=111 // pred_check_branch
          %831 = sbr.rel (%p829) target = $region148
        $region147: #{tpu_custom_call.1} parent=111 // pred_region
          %832 = dma.done [#allocation15], 16384
        $region148: #{tpu_custom_call.1} parent=111 // pred_fallthru
          _
        // Predicated region
        $region149: #{tpu_custom_call.1} parent=111 // pred_check
          %p833 = pneg %p277
        $region150: #{tpu_custom_call.1} parent=111 // pred_check_branch
          %835 = sbr.rel (%p833) target = $region152
        $region151: #{tpu_custom_call.1} parent=111 // pred_region
          %836 = dma.done [#allocation18], 32
        $region152: #{tpu_custom_call.1} parent=111 // pred_fallthru
          _
        // Predicated region
        $region153: #{tpu_custom_call.1} parent=111 // pred_check
          %p837 = pneg %p298
        $region154: #{tpu_custom_call.1} parent=111 // pred_check_branch
          %839 = sbr.rel (%p837) target = $region156
        $region155: #{tpu_custom_call.1} parent=111 // pred_region
          %840 = dma.done [#allocation18], 8192
        $region156: #{tpu_custom_call.1} parent=111 // pred_fallthru
          _
        // Predicated region
        $region157: #{tpu_custom_call.1} parent=111 // pred_check
          %p841 = pneg %p319
        $region158: #{tpu_custom_call.1} parent=111 // pred_check_branch
          %843 = sbr.rel (%p841) target = $region160
        $region159: #{tpu_custom_call.1} parent=111 // pred_region
          %844 = dma.done [#allocation21], 128
        $region160: #{tpu_custom_call.1} parent=111 // pred_fallthru
          _
        // Predicated region
        $region161: #{tpu_custom_call.1} parent=111 // pred_check
          %p845 = pneg %p340
        $region162: #{tpu_custom_call.1} parent=111 // pred_check_branch
          %847 = sbr.rel (%p845) target = $region164
        $region163: #{tpu_custom_call.1} parent=111 // pred_region
          %848 = dma.done [#allocation21], 8192
        $region164: #{tpu_custom_call.1} parent=111 // pred_fallthru
          _
        // Predicated region
        $region165: #{tpu_custom_call.1} parent=111 // pred_check
          %p849 = pneg %p382
        $region166: #{tpu_custom_call.1} parent=111 // pred_check_branch
          %851 = sbr.rel (%p849) target = $region168
        $region167: #{tpu_custom_call.1} parent=111 // pred_region
          %852 = dma.done [#allocation24], 2048
        $region168: #{tpu_custom_call.1} parent=111 // pred_fallthru
          _
        %s853 = sand.u32 %s54, 1
        %s854 = scalar_lea.sflag [#allocation4], %s853
        %s855 = sand.u32 %s54, 1
        %s856 = smul.addr %s855, 16
        %s857 = scalar_lea.vmem [#allocation3], %s856
        %p858 = pneg %p67
        %p859 = pneg %p64
        %p860 = pneg %p88
        %p861 = pneg %p85
        %p862 = pneg %p109
        %p863 = pneg %p106
        %p864 = pneg %p130
        %p865 = pneg %p127
        %p866 = pneg %p151
        %p867 = pneg %p148
        %p868 = pneg %p172
        %p869 = pneg %p169
        %p870 = pneg %p193
        %p871 = pneg %p190
        %p872 = pneg %p214
        %p873 = pneg %p211
        %p874 = pneg %p235
        %p875 = pneg %p232
        %p876 = pneg %p256
        %p877 = pneg %p253
        %p878 = pneg %p277
        %p879 = pneg %p274
        %p880 = pneg %p298
        %p881 = pneg %p295
        %p882 = pneg %p319
        %p883 = pneg %p316
        %p884 = pneg %p340
        %p885 = pneg %p337
        %p886 = pneg %p361
        %p887 = pneg %p358
        %p888 = pneg %p382
        %p889 = pneg %p379
        %p890 = pneg %p403
        %p891 = pneg %p400
        %p892 = pneg %p424
        %p893 = pneg %p421
        %p894 = pneg %p445
        %p895 = pneg %p442
        %p896 = pneg %p466
        %p897 = pneg %p463
        %p898 = pneg %p487
        %p899 = pneg %p484
        %p900 = pneg %p508
        %p901 = pneg %p505
        %p902 = pneg %p529
        %p903 = pneg %p526
        %p904 = pneg %p555
        %p905 = pneg %p552
        %p906 = scmp.lt.s32.totalorder %s46, 1
        %s907 = scalar_select %p906, %s46, 1
        %s908 = scalar_lea.vmem %s23, %s907
        %p909 = scmp.lt.s32.totalorder %s46, 1
        %s910 = scalar_select %p909, %s46, 1
        %s911 = scalar_lea.vmem %s23, %s910
        %v913 = vld [vmem:[%s796] sm:$0xf]
        %v914 = vld [vmem:[%s796 + $0x4] sm:$0xf]
        %v915 = vld [vmem:[%s796 + $0x8] sm:$0xf]
        %v916 = vld [vmem:[%s796 + $0xc] sm:$0xf]
        %v917 = vld [vmem:[#allocation5] sm:$0xf]
        %v918 = vld [vmem:[#allocation5 + $0x4] sm:$0xf]
        %v919 = vld [vmem:[#allocation5 + $0x8] sm:$0xf]
        %v920 = vld [vmem:[#allocation5 + $0xc] sm:$0xf]
        %v925 = vunpack.c.l.b16 %v917
        %v926 = vunpack.c.l.b16 %v918
        %v927 = vunpack.c.l.b16 %v919
        %v928 = vunpack.c.l.b16 %v920
        %v929 = vpack.c.b16 %v926, %v925
        %v930 = vpack.c.b16 %v928, %v927
        %v935 = vunpack.c.l.b16 %v913
        %v936 = vunpack.c.l.b16 %v914
        %v937 = vunpack.c.l.b16 %v915
        %v938 = vunpack.c.l.b16 %v916
        %v939 = vpack.c.b16 %v936, %v935
        %v940 = vpack.c.b16 %v938, %v937
        %vm943 = vcmask 261120
        %v945 = vsel %vm943, %v929, 0
        %v948 = vsel %vm943, %v930, 0
        %950 = vmatprep.subr.bf16.mxu0 0
        %951 = vmatpush1.bf16.msra.mxu0 %v939
        %952 = vmatprep.subr.bf16.mxu0 0
        %953 = vmatpush1.bf16.msra.mxu0 %v940
        %954 = vmatprep.subr.bf16.mxu0 0
        %955 = vmatpush1.bf16.msra.mxu0 0
        %956 = vmatprep.subr.bf16.mxu0 0
        %957 = vmatpush1.bf16.msra.mxu0 0
        %958 = vmatprep.subr.bf16.mxu0 0
        %959 = vmatpush1.bf16.msra.mxu0 0
        %960 = vmatprep.subr.bf16.mxu0 0
        %961 = vmatpush1.bf16.msra.mxu0 0
        %962 = vmatprep.subr.bf16.mxu0 0
        %963 = vmatpush1.bf16.msra.mxu0 0
        %964 = vmatprep.subr.bf16.mxu0 0
        %965 = vmatpush1.bf16.msra.mxu0 0
        %966 = vmatprep.subr.bf16.mxu0 0
        %967 = vmatpush1.bf16.msra.mxu0 0
        %968 = vmatprep.subr.bf16.mxu0 0
        %969 = vmatpush1.bf16.msra.mxu0 0
        %970 = vmatprep.subr.bf16.mxu0 0
        %971 = vmatpush1.bf16.msra.mxu0 0
        %972 = vmatprep.subr.bf16.mxu0 0
        %973 = vmatpush1.bf16.msra.mxu0 0
        %974 = vmatprep.subr.bf16.mxu0 0
        %975 = vmatpush1.bf16.msra.mxu0 0
        %976 = vmatprep.subr.bf16.mxu0 0
        %977 = vmatpush1.bf16.msra.mxu0 0
        %978 = vmatprep.subr.bf16.mxu0 0
        %979 = vmatpush1.bf16.msra.mxu0 0
        %980 = vmatprep.subr.bf16.mxu0 0
        %981 = vmatpush1.bf16.msra.mxu0 0
        %982 = vmatprep.mubr.bf16.mxu0 0
        %983 = vmatmul.mubr.bf16.gmra.mrb[0].mxu0 %v945
        %v984 = vpop.f32.mrb[0].mxu0
        %v985 = vadd.f32 0.0, %v984
        %v986 = vpop.f32.mrb[0].mxu0
        %v987 = vpop.f32.mrb[0].mxu0
        %v988 = vadd.f32 0.0, %v987
        %v989 = vpop.f32.mrb[0].mxu0
        %990 = vmatprep.mubr.bf16.mxu0 0
        %991 = vmatmul.mubr.bf16.gmra.mrb[0].mxu0 %v948
        %v992 = vpop.f32.mrb[0].mxu0
        %v993 = vadd.f32 0.0, %v992
        %v994 = vpop.f32.mrb[0].mxu0
        %v995 = vpop.f32.mrb[0].mxu0
        %v996 = vadd.f32 0.0, %v995
        %v997 = vpop.f32.mrb[0].mxu0
        %998 = vdwg.mxu0
        %v999 = vpack.c.bf16 %v988, %v985
        %v1000 = vpack.c.bf16 %v996, %v993
        %s1001 = scalar_lea.vmem [#allocation5], 16
        %v1002 = vld [vmem:[%s1001] sm:$0xf]
        %v1003 = vld [vmem:[%s1001 + $0x4] sm:$0xf]
        %v1004 = vld [vmem:[%s1001 + $0x8] sm:$0xf]
        %v1005 = vld [vmem:[%s1001 + $0xc] sm:$0xf]
        %v1010 = vunpack.c.l.b16 %v1002
        %v1011 = vunpack.c.l.b16 %v1003
        %v1012 = vunpack.c.l.b16 %v1004
        %v1013 = vunpack.c.l.b16 %v1005
        %v1014 = vpack.c.b16 %v1011, %v1010
        %v1015 = vpack.c.b16 %v1013, %v1012
        %v1017 = vsel %vm943, %v1014, 0
        %v1020 = vsel %vm943, %v1015, 0
        %1022 = vmatprep.subr.bf16.mxu0 0
        %1023 = vmatpush1.bf16.msra.mxu0 %v939
        %1024 = vmatprep.subr.bf16.mxu0 0
        %1025 = vmatpush1.bf16.msra.mxu0 %v940
        %1026 = vmatprep.subr.bf16.mxu0 0
        %1027 = vmatpush1.bf16.msra.mxu0 0
        %1028 = vmatprep.subr.bf16.mxu0 0
        %1029 = vmatpush1.bf16.msra.mxu0 0
        %1030 = vmatprep.subr.bf16.mxu0 0
        %1031 = vmatpush1.bf16.msra.mxu0 0
        %1032 = vmatprep.subr.bf16.mxu0 0
        %1033 = vmatpush1.bf16.msra.mxu0 0
        %1034 = vmatprep.subr.bf16.mxu0 0
        %1035 = vmatpush1.bf16.msra.mxu0 0
        %1036 = vmatprep.subr.bf16.mxu0 0
        %1037 = vmatpush1.bf16.msra.mxu0 0
        %1038 = vmatprep.subr.bf16.mxu0 0
        %1039 = vmatpush1.bf16.msra.mxu0 0
        %1040 = vmatprep.subr.bf16.mxu0 0
        %1041 = vmatpush1.bf16.msra.mxu0 0
        %1042 = vmatprep.subr.bf16.mxu0 0
        %1043 = vmatpush1.bf16.msra.mxu0 0
        %1044 = vmatprep.subr.bf16.mxu0 0
        %1045 = vmatpush1.bf16.msra.mxu0 0
        %1046 = vmatprep.subr.bf16.mxu0 0
        %1047 = vmatpush1.bf16.msra.mxu0 0
        %1048 = vmatprep.subr.bf16.mxu0 0
        %1049 = vmatpush1.bf16.msra.mxu0 0
        %1050 = vmatprep.subr.bf16.mxu0 0
        %1051 = vmatpush1.bf16.msra.mxu0 0
        %1052 = vmatprep.subr.bf16.mxu0 0
        %1053 = vmatpush1.bf16.msra.mxu0 0
        %1054 = vmatprep.mubr.bf16.mxu0 0
        %1055 = vmatmul.mubr.bf16.gmra.mrb[0].mxu0 %v1017
        %v1056 = vpop.f32.mrb[0].mxu0
        %v1057 = vadd.f32 0.0, %v1056
        %v1058 = vpop.f32.mrb[0].mxu0
        %v1059 = vpop.f32.mrb[0].mxu0
        %v1060 = vadd.f32 0.0, %v1059
        %v1061 = vpop.f32.mrb[0].mxu0
        %1062 = vmatprep.mubr.bf16.mxu0 0
        %1063 = vmatmul.mubr.bf16.gmra.mrb[0].mxu0 %v1020
        %v1064 = vpop.f32.mrb[0].mxu0
        %v1065 = vadd.f32 0.0, %v1064
        %v1066 = vpop.f32.mrb[0].mxu0
        %v1067 = vpop.f32.mrb[0].mxu0
        %v1068 = vadd.f32 0.0, %v1067
        %v1069 = vpop.f32.mrb[0].mxu0
        %1070 = vdwg.mxu0
        %v1071 = vpack.c.bf16 %v1060, %v1057
        %v1072 = vpack.c.bf16 %v1068, %v1065
        %s1073 = scalar_lea.vmem [#allocation5], 32
        %v1074 = vld [vmem:[%s1073] sm:$0xf]
        %v1075 = vld [vmem:[%s1073 + $0x4] sm:$0xf]
        %v1076 = vld [vmem:[%s1073 + $0x8] sm:$0xf]
        %v1077 = vld [vmem:[%s1073 + $0xc] sm:$0xf]
        %v1082 = vunpack.c.l.b16 %v1074
        %v1083 = vunpack.c.l.b16 %v1075
        %v1084 = vunpack.c.l.b16 %v1076
        %v1085 = vunpack.c.l.b16 %v1077
        %v1086 = vpack.c.b16 %v1083, %v1082
        %v1087 = vpack.c.b16 %v1085, %v1084
        %v1089 = vsel %vm943, %v1086, 0
        %v1092 = vsel %vm943, %v1087, 0
        %1094 = vmatprep.subr.bf16.mxu0 0
        %1095 = vmatpush1.bf16.msra.mxu0 %v939
        %1096 = vmatprep.subr.bf16.mxu0 0
        %1097 = vmatpush1.bf16.msra.mxu0 %v940
        %1098 = vmatprep.subr.bf16.mxu0 0
        %1099 = vmatpush1.bf16.msra.mxu0 0
        %1100 = vmatprep.subr.bf16.mxu0 0
        %1101 = vmatpush1.bf16.msra.mxu0 0
        %1102 = vmatprep.subr.bf16.mxu0 0
        %1103 = vmatpush1.bf16.msra.mxu0 0
        %1104 = vmatprep.subr.bf16.mxu0 0
        %1105 = vmatpush1.bf16.msra.mxu0 0
        %1106 = vmatprep.subr.bf16.mxu0 0
        %1107 = vmatpush1.bf16.msra.mxu0 0
        %1108 = vmatprep.subr.bf16.mxu0 0
        %1109 = vmatpush1.bf16.msra.mxu0 0
        %1110 = vmatprep.subr.bf16.mxu0 0
        %1111 = vmatpush1.bf16.msra.mxu0 0
        %1112 = vmatprep.subr.bf16.mxu0 0
        %1113 = vmatpush1.bf16.msra.mxu0 0
        %1114 = vmatprep.subr.bf16.mxu0 0
        %1115 = vmatpush1.bf16.msra.mxu0 0
        %1116 = vmatprep.subr.bf16.mxu0 0
        %1117 = vmatpush1.bf16.msra.mxu0 0
        %1118 = vmatprep.subr.bf16.mxu0 0
        %1119 = vmatpush1.bf16.msra.mxu0 0
        %1120 = vmatprep.subr.bf16.mxu0 0
        %1121 = vmatpush1.bf16.msra.mxu0 0
        %1122 = vmatprep.subr.bf16.mxu0 0
        %1123 = vmatpush1.bf16.msra.mxu0 0
        %1124 = vmatprep.subr.bf16.mxu0 0
        %1125 = vmatpush1.bf16.msra.mxu0 0
        %1126 = vmatprep.mubr.bf16.mxu0 0
        %1127 = vmatmul.mubr.bf16.gmra.mrb[0].mxu0 %v1089
        %v1128 = vpop.f32.mrb[0].mxu0
        %v1129 = vadd.f32 0.0, %v1128
        %v1130 = vpop.f32.mrb[0].mxu0
        %v1131 = vpop.f32.mrb[0].mxu0
        %v1132 = vadd.f32 0.0, %v1131
        %v1133 = vpop.f32.mrb[0].mxu0
        %1134 = vmatprep.mubr.bf16.mxu0 0
        %1135 = vmatmul.mubr.bf16.gmra.mrb[0].mxu0 %v1092
        %v1136 = vpop.f32.mrb[0].mxu0
        %v1137 = vadd.f32 0.0, %v1136
        %v1138 = vpop.f32.mrb[0].mxu0
        %v1139 = vpop.f32.mrb[0].mxu0
        %v1140 = vadd.f32 0.0, %v1139
        %v1141 = vpop.f32.mrb[0].mxu0
        %1142 = vdwg.mxu0
        %v1143 = vpack.c.bf16 %v1132, %v1129
        %v1144 = vpack.c.bf16 %v1140, %v1137
        %s1145 = scalar_lea.vmem [#allocation5], 48
        %v1146 = vld [vmem:[%s1145] sm:$0xf]
        %v1147 = vld [vmem:[%s1145 + $0x4] sm:$0xf]
        %v1148 = vld [vmem:[%s1145 + $0x8] sm:$0xf]
        %v1149 = vld [vmem:[%s1145 + $0xc] sm:$0xf]
        %v1154 = vunpack.c.l.b16 %v1146
        %v1155 = vunpack.c.l.b16 %v1147
        %v1156 = vunpack.c.l.b16 %v1148
        %v1157 = vunpack.c.l.b16 %v1149
        %v1158 = vpack.c.b16 %v1155, %v1154
        %v1159 = vpack.c.b16 %v1157, %v1156
        %v1161 = vsel %vm943, %v1158, 0
        %v1164 = vsel %vm943, %v1159, 0
        %1166 = vmatprep.subr.bf16.mxu0 0
        %1167 = vmatpush1.bf16.msra.mxu0 %v939
        %1168 = vmatprep.subr.bf16.mxu0 0
        %1169 = vmatpush1.bf16.msra.mxu0 %v940
        %1170 = vmatprep.subr.bf16.mxu0 0
        %1171 = vmatpush1.bf16.msra.mxu0 0
        %1172 = vmatprep.subr.bf16.mxu0 0
        %1173 = vmatpush1.bf16.msra.mxu0 0
        %1174 = vmatprep.subr.bf16.mxu0 0
        %1175 = vmatpush1.bf16.msra.mxu0 0
        %1176 = vmatprep.subr.bf16.mxu0 0
        %1177 = vmatpush1.bf16.msra.mxu0 0
        %1178 = vmatprep.subr.bf16.mxu0 0
        %1179 = vmatpush1.bf16.msra.mxu0 0
        %1180 = vmatprep.subr.bf16.mxu0 0
        %1181 = vmatpush1.bf16.msra.mxu0 0
        %1182 = vmatprep.subr.bf16.mxu0 0
        %1183 = vmatpush1.bf16.msra.mxu0 0
        %1184 = vmatprep.subr.bf16.mxu0 0
        %1185 = vmatpush1.bf16.msra.mxu0 0
        %1186 = vmatprep.subr.bf16.mxu0 0
        %1187 = vmatpush1.bf16.msra.mxu0 0
        %1188 = vmatprep.subr.bf16.mxu0 0
        %1189 = vmatpush1.bf16.msra.mxu0 0
        %1190 = vmatprep.subr.bf16.mxu0 0
        %1191 = vmatpush1.bf16.msra.mxu0 0
        %1192 = vmatprep.subr.bf16.mxu0 0
        %1193 = vmatpush1.bf16.msra.mxu0 0
        %1194 = vmatprep.subr.bf16.mxu0 0
        %1195 = vmatpush1.bf16.msra.mxu0 0
        %1196 = vmatprep.subr.bf16.mxu0 0
        %1197 = vmatpush1.bf16.msra.mxu0 0
        %1198 = vmatprep.mubr.bf16.mxu0 0
        %1199 = vmatmul.mubr.bf16.gmra.mrb[0].mxu0 %v1161
        %v1200 = vpop.f32.mrb[0].mxu0
        %v1201 = vadd.f32 0.0, %v1200
        %v1202 = vpop.f32.mrb[0].mxu0
        %v1203 = vpop.f32.mrb[0].mxu0
        %v1204 = vadd.f32 0.0, %v1203
        %v1205 = vpop.f32.mrb[0].mxu0
        %1206 = vmatprep.mubr.bf16.mxu0 0
        %1207 = vmatmul.mubr.bf16.gmra.mrb[0].mxu0 %v1164
        %v1208 = vpop.f32.mrb[0].mxu0
        %v1209 = vadd.f32 0.0, %v1208
        %v1210 = vpop.f32.mrb[0].mxu0
        %v1211 = vpop.f32.mrb[0].mxu0
        %v1212 = vadd.f32 0.0, %v1211
        %v1213 = vpop.f32.mrb[0].mxu0
        %1214 = vdwg.mxu0
        %v1215 = vpack.c.bf16 %v1204, %v1201
        %v1216 = vpack.c.bf16 %v1212, %v1209
        %s1217 = scalar_lea.vmem [#allocation5], 64
        %v1218 = vld [vmem:[%s1217] sm:$0xf]
        %v1219 = vld [vmem:[%s1217 + $0x4] sm:$0xf]
        %v1220 = vld [vmem:[%s1217 + $0x8] sm:$0xf]
        %v1221 = vld [vmem:[%s1217 + $0xc] sm:$0xf]
        %v1226 = vunpack.c.l.b16 %v1218
        %v1227 = vunpack.c.l.b16 %v1219
        %v1228 = vunpack.c.l.b16 %v1220
        %v1229 = vunpack.c.l.b16 %v1221
        %v1230 = vpack.c.b16 %v1227, %v1226
        %v1231 = vpack.c.b16 %v1229, %v1228
        %v1233 = vsel %vm943, %v1230, 0
        %v1236 = vsel %vm943, %v1231, 0
        %1238 = vmatprep.subr.bf16.mxu0 0
        %1239 = vmatpush1.bf16.msra.mxu0 %v939
        %1240 = vmatprep.subr.bf16.mxu0 0
        %1241 = vmatpush1.bf16.msra.mxu0 %v940
        %1242 = vmatprep.subr.bf16.mxu0 0
        %1243 = vmatpush1.bf16.msra.mxu0 0
        %1244 = vmatprep.subr.bf16.mxu0 0
        %1245 = vmatpush1.bf16.msra.mxu0 0
        %1246 = vmatprep.subr.bf16.mxu0 0
        %1247 = vmatpush1.bf16.msra.mxu0 0
        %1248 = vmatprep.subr.bf16.mxu0 0
        %1249 = vmatpush1.bf16.msra.mxu0 0
        %1250 = vmatprep.subr.bf16.mxu0 0
        %1251 = vmatpush1.bf16.msra.mxu0 0
        %1252 = vmatprep.subr.bf16.mxu0 0
        %1253 = vmatpush1.bf16.msra.mxu0 0
        %1254 = vmatprep.subr.bf16.mxu0 0
        %1255 = vmatpush1.bf16.msra.mxu0 0
        %1256 = vmatprep.subr.bf16.mxu0 0
        %1257 = vmatpush1.bf16.msra.mxu0 0
        %1258 = vmatprep.subr.bf16.mxu0 0
        %1259 = vmatpush1.bf16.msra.mxu0 0
        %1260 = vmatprep.subr.bf16.mxu0 0
        %1261 = vmatpush1.bf16.msra.mxu0 0
        %1262 = vmatprep.subr.bf16.mxu0 0
        %1263 = vmatpush1.bf16.msra.mxu0 0
        %1264 = vmatprep.subr.bf16.mxu0 0
        %1265 = vmatpush1.bf16.msra.mxu0 0
        %1266 = vmatprep.subr.bf16.mxu0 0
        %1267 = vmatpush1.bf16.msra.mxu0 0
        %1268 = vmatprep.subr.bf16.mxu0 0
        %1269 = vmatpush1.bf16.msra.mxu0 0
        %1270 = vmatprep.mubr.bf16.mxu0 0
        %1271 = vmatmul.mubr.bf16.gmra.mrb[0].mxu0 %v1233
        %v1272 = vpop.f32.mrb[0].mxu0
        %v1273 = vadd.f32 0.0, %v1272
        %v1274 = vpop.f32.mrb[0].mxu0
        %v1275 = vpop.f32.mrb[0].mxu0
        %v1276 = vadd.f32 0.0, %v1275
        %v1277 = vpop.f32.mrb[0].mxu0
        %1278 = vmatprep.mubr.bf16.mxu0 0
        %1279 = vmatmul.mubr.bf16.gmra.mrb[0].mxu0 %v1236
        %v1280 = vpop.f32.mrb[0].mxu0
        %v1281 = vadd.f32 0.0, %v1280
        %v1282 = vpop.f32.mrb[0].mxu0
        %v1283 = vpop.f32.mrb[0].mxu0
        %v1284 = vadd.f32 0.0, %v1283
        %v1285 = vpop.f32.mrb[0].mxu0
        %1286 = vdwg.mxu0
        %v1287 = vpack.c.bf16 %v1276, %v1273
        %v1288 = vpack.c.bf16 %v1284, %v1281
        %s1289 = scalar_lea.vmem [#allocation5], 80
        %v1290 = vld [vmem:[%s1289] sm:$0xf]
        %v1291 = vld [vmem:[%s1289 + $0x4] sm:$0xf]
        %v1292 = vld [vmem:[%s1289 + $0x8] sm:$0xf]
        %v1293 = vld [vmem:[%s1289 + $0xc] sm:$0xf]
        %v1298 = vunpack.c.l.b16 %v1290
        %v1299 = vunpack.c.l.b16 %v1291
        %v1300 = vunpack.c.l.b16 %v1292
        %v1301 = vunpack.c.l.b16 %v1293
        %v1302 = vpack.c.b16 %v1299, %v1298
        %v1303 = vpack.c.b16 %v1301, %v1300
        %v1305 = vsel %vm943, %v1302, 0
        %v1308 = vsel %vm943, %v1303, 0
        %1310 = vmatprep.subr.bf16.mxu0 0
        %1311 = vmatpush1.bf16.msra.mxu0 %v939
        %1312 = vmatprep.subr.bf16.mxu0 0
        %1313 = vmatpush1.bf16.msra.mxu0 %v940
        %1314 = vmatprep.subr.bf16.mxu0 0
        %1315 = vmatpush1.bf16.msra.mxu0 0
        %1316 = vmatprep.subr.bf16.mxu0 0
        %1317 = vmatpush1.bf16.msra.mxu0 0
        %1318 = vmatprep.subr.bf16.mxu0 0
        %1319 = vmatpush1.bf16.msra.mxu0 0
        %1320 = vmatprep.subr.bf16.mxu0 0
        %1321 = vmatpush1.bf16.msra.mxu0 0
        %1322 = vmatprep.subr.bf16.mxu0 0
        %1323 = vmatpush1.bf16.msra.mxu0 0
        %1324 = vmatprep.subr.bf16.mxu0 0
        %1325 = vmatpush1.bf16.msra.mxu0 0
        %1326 = vmatprep.subr.bf16.mxu0 0
        %1327 = vmatpush1.bf16.msra.mxu0 0
        %1328 = vmatprep.subr.bf16.mxu0 0
        %1329 = vmatpush1.bf16.msra.mxu0 0
        %1330 = vmatprep.subr.bf16.mxu0 0
        %1331 = vmatpush1.bf16.msra.mxu0 0
        %1332 = vmatprep.subr.bf16.mxu0 0
        %1333 = vmatpush1.bf16.msra.mxu0 0
        %1334 = vmatprep.subr.bf16.mxu0 0
        %1335 = vmatpush1.bf16.msra.mxu0 0
        %1336 = vmatprep.subr.bf16.mxu0 0
        %1337 = vmatpush1.bf16.msra.mxu0 0
        %1338 = vmatprep.subr.bf16.mxu0 0
        %1339 = vmatpush1.bf16.msra.mxu0 0
        %1340 = vmatprep.subr.bf16.mxu0 0
        %1341 = vmatpush1.bf16.msra.mxu0 0
        %1342 = vmatprep.mubr.bf16.mxu0 0
        %1343 = vmatmul.mubr.bf16.gmra.mrb[0].mxu0 %v1305
        %v1344 = vpop.f32.mrb[0].mxu0
        %v1345 = vadd.f32 0.0, %v1344
        %v1346 = vpop.f32.mrb[0].mxu0
        %v1347 = vpop.f32.mrb[0].mxu0
        %v1348 = vadd.f32 0.0, %v1347
        %v1349 = vpop.f32.mrb[0].mxu0
        %1350 = vmatprep.mubr.bf16.mxu0 0
        %1351 = vmatmul.mubr.bf16.gmra.mrb[0].mxu0 %v1308
        %v1352 = vpop.f32.mrb[0].mxu0
        %v1353 = vadd.f32 0.0, %v1352
        %v1354 = vpop.f32.mrb[0].mxu0
        %v1355 = vpop.f32.mrb[0].mxu0
        %v1356 = vadd.f32 0.0, %v1355
        %v1357 = vpop.f32.mrb[0].mxu0
        %1358 = vdwg.mxu0
        %v1359 = vpack.c.bf16 %v1348, %v1345
        %v1360 = vpack.c.bf16 %v1356, %v1353
        %s1361 = scalar_lea.vmem [#allocation5], 96
        %v1362 = vld [vmem:[%s1361] sm:$0xf]
        %v1363 = vld [vmem:[%s1361 + $0x4] sm:$0xf]
        %v1364 = vld [vmem:[%s1361 + $0x8] sm:$0xf]
        %v1365 = vld [vmem:[%s1361 + $0xc] sm:$0xf]
        %v1370 = vunpack.c.l.b16 %v1362
        %v1371 = vunpack.c.l.b16 %v1363
        %v1372 = vunpack.c.l.b16 %v1364
        %v1373 = vunpack.c.l.b16 %v1365
        %v1374 = vpack.c.b16 %v1371, %v1370
        %v1375 = vpack.c.b16 %v1373, %v1372
        %v1377 = vsel %vm943, %v1374, 0
        %v1380 = vsel %vm943, %v1375, 0
        %1382 = vmatprep.subr.bf16.mxu0 0
        %1383 = vmatpush1.bf16.msra.mxu0 %v939
        %1384 = vmatprep.subr.bf16.mxu0 0
        %1385 = vmatpush1.bf16.msra.mxu0 %v940
        %1386 = vmatprep.subr.bf16.mxu0 0
        %1387 = vmatpush1.bf16.msra.mxu0 0
        %1388 = vmatprep.subr.bf16.mxu0 0
        %1389 = vmatpush1.bf16.msra.mxu0 0
        %1390 = vmatprep.subr.bf16.mxu0 0
        %1391 = vmatpush1.bf16.msra.mxu0 0
        %1392 = vmatprep.subr.bf16.mxu0 0
        %1393 = vmatpush1.bf16.msra.mxu0 0
        %1394 = vmatprep.subr.bf16.mxu0 0
        %1395 = vmatpush1.bf16.msra.mxu0 0
        %1396 = vmatprep.subr.bf16.mxu0 0
        %1397 = vmatpush1.bf16.msra.mxu0 0
        %1398 = vmatprep.subr.bf16.mxu0 0
        %1399 = vmatpush1.bf16.msra.mxu0 0
        %1400 = vmatprep.subr.bf16.mxu0 0
        %1401 = vmatpush1.bf16.msra.mxu0 0
        %1402 = vmatprep.subr.bf16.mxu0 0
        %1403 = vmatpush1.bf16.msra.mxu0 0
        %1404 = vmatprep.subr.bf16.mxu0 0
        %1405 = vmatpush1.bf16.msra.mxu0 0
        %1406 = vmatprep.subr.bf16.mxu0 0
        %1407 = vmatpush1.bf16.msra.mxu0 0
        %1408 = vmatprep.subr.bf16.mxu0 0
        %1409 = vmatpush1.bf16.msra.mxu0 0
        %1410 = vmatprep.subr.bf16.mxu0 0
        %1411 = vmatpush1.bf16.msra.mxu0 0
        %1412 = vmatprep.subr.bf16.mxu0 0
        %1413 = vmatpush1.bf16.msra.mxu0 0
        %1414 = vmatprep.mubr.bf16.mxu0 0
        %1415 = vmatmul.mubr.bf16.gmra.mrb[0].mxu0 %v1377
        %v1416 = vpop.f32.mrb[0].mxu0
        %v1417 = vadd.f32 0.0, %v1416
        %v1418 = vpop.f32.mrb[0].mxu0
        %v1419 = vpop.f32.mrb[0].mxu0
        %v1420 = vadd.f32 0.0, %v1419
        %v1421 = vpop.f32.mrb[0].mxu0
        %1422 = vmatprep.mubr.bf16.mxu0 0
        %1423 = vmatmul.mubr.bf16.gmra.mrb[0].mxu0 %v1380
        %v1424 = vpop.f32.mrb[0].mxu0
        %v1425 = vadd.f32 0.0, %v1424
        %v1426 = vpop.f32.mrb[0].mxu0
        %v1427 = vpop.f32.mrb[0].mxu0
        %v1428 = vadd.f32 0.0, %v1427
        %v1429 = vpop.f32.mrb[0].mxu0
        %1430 = vdwg.mxu0
        %v1431 = vpack.c.bf16 %v1420, %v1417
        %v1432 = vpack.c.bf16 %v1428, %v1425
        %v1433 = vld [vmem:[#allocation7] sm:$0xff]
        %v1434 = vld [vmem:[#allocation7 + $0x8] sm:$0xff]
        %v1435 = vld [vmem:[#allocation7 + $0x10] sm:$0xff]
        %v1436 = vld [vmem:[#allocation7 + $0x18] sm:$0xff]
        %v1437 = vld [vmem:[#allocation7 + $0x20] sm:$0xff]
        %v1438 = vld [vmem:[#allocation7 + $0x28] sm:$0xff]
        %v1439 = vld [vmem:[#allocation7 + $0x30] sm:$0xff]
        %v1440 = vld [vmem:[#allocation7 + $0x38] sm:$0xff]
        %v1441 = vld [vmem:[#allocation7 + $0x40] sm:$0xff]
        %v1442 = vld [vmem:[#allocation7 + $0x48] sm:$0xff]
        %v1443 = vld [vmem:[#allocation7 + $0x50] sm:$0xff]
        %v1444 = vld [vmem:[#allocation7 + $0x58] sm:$0xff]
        %v1445 = vld [vmem:[#allocation7 + $0x60] sm:$0xff]
        %v1446 = vld [vmem:[#allocation7 + $0x68] sm:$0xff]
        %v1447 = vld [vmem:[#allocation7 + $0x70] sm:$0xff]
        %v1448 = vld [vmem:[#allocation7 + $0x78] sm:$0xff]
        %v1449 = vld [vmem:[#allocation7 + $0x80] sm:$0xff]
        %v1450 = vld [vmem:[#allocation7 + $0x88] sm:$0xff]
        %v1451 = vld [vmem:[#allocation7 + $0x90] sm:$0xff]
        %v1452 = vld [vmem:[#allocation7 + $0x98] sm:$0xff]
        %v1453 = vld [vmem:[#allocation7 + $0xa0] sm:$0xff]
        %v1454 = vld [vmem:[#allocation7 + $0xa8] sm:$0xff]
        %v1455 = vld [vmem:[#allocation7 + $0xb0] sm:$0xff]
        %v1456 = vld [vmem:[#allocation7 + $0xb8] sm:$0xff]
        %v1457 = vld [vmem:[#allocation7 + $0xc0] sm:$0xff]
        %v1458 = vld [vmem:[#allocation7 + $0xc8] sm:$0xff]
        %v1459 = vld [vmem:[#allocation7 + $0xd0] sm:$0xff]
        %v1460 = vld [vmem:[#allocation7 + $0xd8] sm:$0xff]
        %v1461 = vld [vmem:[#allocation7 + $0xe0] sm:$0xff]
        %v1462 = vld [vmem:[#allocation7 + $0xe8] sm:$0xff]
        %v1463 = vld [vmem:[#allocation7 + $0xf0] sm:$0xff]
        %v1464 = vld [vmem:[#allocation7 + $0xf8] sm:$0xff]
        %v1465 = vld [vmem:[#allocation7 + $0x100] sm:$0xff]
        %v1466 = vld [vmem:[#allocation7 + $0x108] sm:$0xff]
        %v1467 = vld [vmem:[#allocation7 + $0x110] sm:$0xff]
        %v1468 = vld [vmem:[#allocation7 + $0x118] sm:$0xff]
        %v1469 = vld [vmem:[#allocation7 + $0x120] sm:$0xff]
        %v1470 = vld [vmem:[#allocation7 + $0x128] sm:$0xff]
        %v1471 = vld [vmem:[#allocation7 + $0x130] sm:$0xff]
        %v1472 = vld [vmem:[#allocation7 + $0x138] sm:$0xff]
        %v1473 = vld [vmem:[#allocation7 + $0x140] sm:$0xff]
        %v1474 = vld [vmem:[#allocation7 + $0x148] sm:$0xff]
        %v1475 = vld [vmem:[#allocation7 + $0x150] sm:$0xff]
        %v1476 = vld [vmem:[#allocation7 + $0x158] sm:$0xff]
        %v1477 = vld [vmem:[#allocation7 + $0x160] sm:$0xff]
        %v1478 = vld [vmem:[#allocation7 + $0x168] sm:$0xff]
        %v1479 = vld [vmem:[#allocation7 + $0x170] sm:$0xff]
        %v1480 = vld [vmem:[#allocation7 + $0x178] sm:$0xff]
        %v1481 = vld [vmem:[#allocation7 + $0x180] sm:$0xff]
        %v1482 = vld [vmem:[#allocation7 + $0x188] sm:$0xff]
        %v1483 = vld [vmem:[#allocation7 + $0x190] sm:$0xff]
        %v1484 = vld [vmem:[#allocation7 + $0x198] sm:$0xff]
        %v1485 = vld [vmem:[#allocation7 + $0x1a0] sm:$0xff]
        %v1486 = vld [vmem:[#allocation7 + $0x1a8] sm:$0xff]
        %v1487 = vld [vmem:[#allocation7 + $0x1b0] sm:$0xff]
        %v1488 = vld [vmem:[#allocation7 + $0x1b8] sm:$0xff]
        %v1489 = vld [vmem:[#allocation7 + $0x1c0] sm:$0xff]
        %v1490 = vld [vmem:[#allocation7 + $0x1c8] sm:$0xff]
        %v1491 = vld [vmem:[#allocation7 + $0x1d0] sm:$0xff]
        %v1492 = vld [vmem:[#allocation7 + $0x1d8] sm:$0xff]
        %v1493 = vld [vmem:[#allocation7 + $0x1e0] sm:$0xff]
        %v1494 = vld [vmem:[#allocation7 + $0x1e8] sm:$0xff]
        %v1495 = vld [vmem:[#allocation7 + $0x1f0] sm:$0xff]
        %v1496 = vld [vmem:[#allocation7 + $0x1f8] sm:$0xff]
        %v1497 = vld [vmem:[#allocation7 + $0x200] sm:$0xff]
        %v1498 = vld [vmem:[#allocation7 + $0x208] sm:$0xff]
        %v1499 = vld [vmem:[#allocation7 + $0x210] sm:$0xff]
        %v1500 = vld [vmem:[#allocation7 + $0x218] sm:$0xff]
        %v1501 = vld [vmem:[#allocation7 + $0x220] sm:$0xff]
        %v1502 = vld [vmem:[#allocation7 + $0x228] sm:$0xff]
        %v1503 = vld [vmem:[#allocation7 + $0x230] sm:$0xff]
        %v1504 = vld [vmem:[#allocation7 + $0x238] sm:$0xff]
        %v1505 = vld [vmem:[#allocation7 + $0x240] sm:$0xff]
        %v1506 = vld [vmem:[#allocation7 + $0x248] sm:$0xff]
        %v1507 = vld [vmem:[#allocation7 + $0x250] sm:$0xff]
        %v1508 = vld [vmem:[#allocation7 + $0x258] sm:$0xff]
        %v1509 = vld [vmem:[#allocation7 + $0x260] sm:$0xff]
        %v1510 = vld [vmem:[#allocation7 + $0x268] sm:$0xff]
        %v1511 = vld [vmem:[#allocation7 + $0x270] sm:$0xff]
        %v1512 = vld [vmem:[#allocation7 + $0x278] sm:$0xff]
        %v1513 = vld [vmem:[#allocation7 + $0x280] sm:$0xff]
        %v1514 = vld [vmem:[#allocation7 + $0x288] sm:$0xff]
        %v1515 = vld [vmem:[#allocation7 + $0x290] sm:$0xff]
        %v1516 = vld [vmem:[#allocation7 + $0x298] sm:$0xff]
        %v1517 = vld [vmem:[#allocation7 + $0x2a0] sm:$0xff]
        %v1518 = vld [vmem:[#allocation7 + $0x2a8] sm:$0xff]
        %v1519 = vld [vmem:[#allocation7 + $0x2b0] sm:$0xff]
        %v1520 = vld [vmem:[#allocation7 + $0x2b8] sm:$0xff]
        %v1521 = vld [vmem:[#allocation7 + $0x2c0] sm:$0xff]
        %v1522 = vld [vmem:[#allocation7 + $0x2c8] sm:$0xff]
        %v1523 = vld [vmem:[#allocation7 + $0x2d0] sm:$0xff]
        %v1524 = vld [vmem:[#allocation7 + $0x2d8] sm:$0xff]
        %v1525 = vld [vmem:[#allocation7 + $0x2e0] sm:$0xff]
        %v1526 = vld [vmem:[#allocation7 + $0x2e8] sm:$0xff]
        %v1527 = vld [vmem:[#allocation7 + $0x2f0] sm:$0xff]
        %v1528 = vld [vmem:[#allocation7 + $0x2f8] sm:$0xff]
        %v1529 = vld [vmem:[#allocation7 + $0x300] sm:$0xff]
        %v1530 = vld [vmem:[#allocation7 + $0x308] sm:$0xff]
        %v1531 = vld [vmem:[#allocation7 + $0x310] sm:$0xff]
        %v1532 = vld [vmem:[#allocation7 + $0x318] sm:$0xff]
        %v1533 = vld [vmem:[#allocation7 + $0x320] sm:$0xff]
        %v1534 = vld [vmem:[#allocation7 + $0x328] sm:$0xff]
        %v1535 = vld [vmem:[#allocation7 + $0x330] sm:$0xff]
        %v1536 = vld [vmem:[#allocation7 + $0x338] sm:$0xff]
        %v1537 = vld [vmem:[#allocation7 + $0x340] sm:$0xff]
        %v1538 = vld [vmem:[#allocation7 + $0x348] sm:$0xff]
        %v1539 = vld [vmem:[#allocation7 + $0x350] sm:$0xff]
        %v1540 = vld [vmem:[#allocation7 + $0x358] sm:$0xff]
        %v1541 = vld [vmem:[#allocation7 + $0x360] sm:$0xff]
        %v1542 = vld [vmem:[#allocation7 + $0x368] sm:$0xff]
        %v1543 = vld [vmem:[#allocation7 + $0x370] sm:$0xff]
        %v1544 = vld [vmem:[#allocation7 + $0x378] sm:$0xff]
        %v1545 = vld [vmem:[#allocation8] sm:$0x3]
        %v1547 = vlaneseq
        %v1548 = vshrl.u32 %v1547, 7
        %v1549 = vsub.s32 0, %v1548
        %v1550 = vrot.slane %v1545, %v1549
        %v1551 = vlaneseq
        %v1552 = vshrl.u32 %v1551, 7
        %v1553 = vsub.s32 1, %v1552
        %v1554 = vrot.slane %v1545, %v1553
        %v1669 = vunpack.c.l.b16 %v1433
        %v1670 = vunpack.c.h.b16 %v1433
        %v1671 = vunpack.c.l.b16 %v1434
        %v1672 = vunpack.c.h.b16 %v1434
        %v1673 = vunpack.c.l.b16 %v1435
        %v1674 = vunpack.c.h.b16 %v1435
        %v1675 = vunpack.c.l.b16 %v1436
        %v1676 = vunpack.c.h.b16 %v1436
        %v1677 = vunpack.c.l.b16 %v1437
        %v1678 = vunpack.c.h.b16 %v1437
        %v1679 = vunpack.c.l.b16 %v1438
        %v1680 = vunpack.c.h.b16 %v1438
        %v1681 = vunpack.c.l.b16 %v1439
        %v1682 = vunpack.c.h.b16 %v1439
        %v1683 = vunpack.c.l.b16 %v1440
        %v1684 = vunpack.c.h.b16 %v1440
        %v1685 = vunpack.c.l.b16 %v1441
        %v1686 = vunpack.c.h.b16 %v1441
        %v1687 = vunpack.c.l.b16 %v1442
        %v1688 = vunpack.c.h.b16 %v1442
        %v1689 = vunpack.c.l.b16 %v1443
        %v1690 = vunpack.c.h.b16 %v1443
        %v1691 = vunpack.c.l.b16 %v1444
        %v1692 = vunpack.c.h.b16 %v1444
        %v1693 = vunpack.c.l.b16 %v1445
        %v1694 = vunpack.c.h.b16 %v1445
        %v1695 = vunpack.c.l.b16 %v1446
        %v1696 = vunpack.c.h.b16 %v1446
        %v1697 = vunpack.c.l.b16 %v1447
        %v1698 = vunpack.c.h.b16 %v1447
        %v1699 = vunpack.c.l.b16 %v1448
        %v1700 = vunpack.c.h.b16 %v1448
        %v1701 = vunpack.c.l.b16 %v1449
        %v1702 = vunpack.c.h.b16 %v1449
        %v1703 = vunpack.c.l.b16 %v1450
        %v1704 = vunpack.c.h.b16 %v1450
        %v1705 = vunpack.c.l.b16 %v1451
        %v1706 = vunpack.c.h.b16 %v1451
        %v1707 = vunpack.c.l.b16 %v1452
        %v1708 = vunpack.c.h.b16 %v1452
        %v1709 = vunpack.c.l.b16 %v1453
        %v1710 = vunpack.c.h.b16 %v1453
        %v1711 = vunpack.c.l.b16 %v1454
        %v1712 = vunpack.c.h.b16 %v1454
        %v1713 = vunpack.c.l.b16 %v1455
        %v1714 = vunpack.c.h.b16 %v1455
        %v1715 = vunpack.c.l.b16 %v1456
        %v1716 = vunpack.c.h.b16 %v1456
        %v1717 = vunpack.c.l.b16 %v1457
        %v1718 = vunpack.c.h.b16 %v1457
        %v1719 = vunpack.c.l.b16 %v1458
        %v1720 = vunpack.c.h.b16 %v1458
        %v1721 = vunpack.c.l.b16 %v1459
        %v1722 = vunpack.c.h.b16 %v1459
        %v1723 = vunpack.c.l.b16 %v1460
        %v1724 = vunpack.c.h.b16 %v1460
        %v1725 = vunpack.c.l.b16 %v1461
        %v1726 = vunpack.c.h.b16 %v1461
        %v1727 = vunpack.c.l.b16 %v1462
        %v1728 = vunpack.c.h.b16 %v1462
        %v1729 = vunpack.c.l.b16 %v1463
        %v1730 = vunpack.c.h.b16 %v1463
        %v1731 = vunpack.c.l.b16 %v1464
        %v1732 = vunpack.c.h.b16 %v1464
        %v1733 = vunpack.c.l.b16 %v1465
        %v1734 = vunpack.c.h.b16 %v1465
        %v1735 = vunpack.c.l.b16 %v1466
        %v1736 = vunpack.c.h.b16 %v1466
        %v1737 = vunpack.c.l.b16 %v1467
        %v1738 = vunpack.c.h.b16 %v1467
        %v1739 = vunpack.c.l.b16 %v1468
        %v1740 = vunpack.c.h.b16 %v1468
        %v1741 = vunpack.c.l.b16 %v1469
        %v1742 = vunpack.c.h.b16 %v1469
        %v1743 = vunpack.c.l.b16 %v1470
        %v1744 = vunpack.c.h.b16 %v1470
        %v1745 = vunpack.c.l.b16 %v1471
        %v1746 = vunpack.c.h.b16 %v1471
        %v1747 = vunpack.c.l.b16 %v1472
        %v1748 = vunpack.c.h.b16 %v1472
        %v1749 = vunpack.c.l.b16 %v1473
        %v1750 = vunpack.c.h.b16 %v1473
        %v1751 = vunpack.c.l.b16 %v1474
        %v1752 = vunpack.c.h.b16 %v1474
        %v1753 = vunpack.c.l.b16 %v1475
        %v1754 = vunpack.c.h.b16 %v1475
        %v1755 = vunpack.c.l.b16 %v1476
        %v1756 = vunpack.c.h.b16 %v1476
        %v1757 = vunpack.c.l.b16 %v1477
        %v1758 = vunpack.c.h.b16 %v1477
        %v1759 = vunpack.c.l.b16 %v1478
        %v1760 = vunpack.c.h.b16 %v1478
        %v1761 = vunpack.c.l.b16 %v1479
        %v1762 = vunpack.c.h.b16 %v1479
        %v1763 = vunpack.c.l.b16 %v1480
        %v1764 = vunpack.c.h.b16 %v1480
        %v1765 = vunpack.c.l.b16 %v1481
        %v1766 = vunpack.c.h.b16 %v1481
        %v1767 = vunpack.c.l.b16 %v1482
        %v1768 = vunpack.c.h.b16 %v1482
        %v1769 = vunpack.c.l.b16 %v1483
        %v1770 = vunpack.c.h.b16 %v1483
        %v1771 = vunpack.c.l.b16 %v1484
        %v1772 = vunpack.c.h.b16 %v1484
        %v1773 = vunpack.c.l.b16 %v1485
        %v1774 = vunpack.c.h.b16 %v1485
        %v1775 = vunpack.c.l.b16 %v1486
        %v1776 = vunpack.c.h.b16 %v1486
        %v1777 = vunpack.c.l.b16 %v1487
        %v1778 = vunpack.c.h.b16 %v1487
        %v1779 = vunpack.c.l.b16 %v1488
        %v1780 = vunpack.c.h.b16 %v1488
        %v1781 = vunpack.c.l.b16 %v1489
        %v1782 = vunpack.c.h.b16 %v1489
        %v1783 = vunpack.c.l.b16 %v1490
        %v1784 = vunpack.c.h.b16 %v1490
        %v1785 = vunpack.c.l.b16 %v1491
        %v1786 = vunpack.c.h.b16 %v1491
        %v1787 = vunpack.c.l.b16 %v1492
        %v1788 = vunpack.c.h.b16 %v1492
        %v1789 = vunpack.c.l.b16 %v1493
        %v1790 = vunpack.c.h.b16 %v1493
        %v1791 = vunpack.c.l.b16 %v1494
        %v1792 = vunpack.c.h.b16 %v1494
        %v1793 = vunpack.c.l.b16 %v1495
        %v1794 = vunpack.c.h.b16 %v1495
        %v1795 = vunpack.c.l.b16 %v1496
        %v1796 = vunpack.c.h.b16 %v1496
        %v1797 = vunpack.c.l.b16 %v1497
        %v1798 = vunpack.c.h.b16 %v1497
        %v1799 = vunpack.c.l.b16 %v1498
        %v1800 = vunpack.c.h.b16 %v1498
        %v1801 = vunpack.c.l.b16 %v1499
        %v1802 = vunpack.c.h.b16 %v1499
        %v1803 = vunpack.c.l.b16 %v1500
        %v1804 = vunpack.c.h.b16 %v1500
        %v1805 = vunpack.c.l.b16 %v1501
        %v1806 = vunpack.c.h.b16 %v1501
        %v1807 = vunpack.c.l.b16 %v1502
        %v1808 = vunpack.c.h.b16 %v1502
        %v1809 = vunpack.c.l.b16 %v1503
        %v1810 = vunpack.c.h.b16 %v1503
        %v1811 = vunpack.c.l.b16 %v1504
        %v1812 = vunpack.c.h.b16 %v1504
        %v1813 = vunpack.c.l.b16 %v1505
        %v1814 = vunpack.c.h.b16 %v1505
        %v1815 = vunpack.c.l.b16 %v1506
        %v1816 = vunpack.c.h.b16 %v1506
        %v1817 = vunpack.c.l.b16 %v1507
        %v1818 = vunpack.c.h.b16 %v1507
        %v1819 = vunpack.c.l.b16 %v1508
        %v1820 = vunpack.c.h.b16 %v1508
        %v1821 = vunpack.c.l.b16 %v1509
        %v1822 = vunpack.c.h.b16 %v1509
        %v1823 = vunpack.c.l.b16 %v1510
        %v1824 = vunpack.c.h.b16 %v1510
        %v1825 = vunpack.c.l.b16 %v1511
        %v1826 = vunpack.c.h.b16 %v1511
        %v1827 = vunpack.c.l.b16 %v1512
        %v1828 = vunpack.c.h.b16 %v1512
        %v1829 = vunpack.c.l.b16 %v1513
        %v1830 = vunpack.c.h.b16 %v1513
        %v1831 = vunpack.c.l.b16 %v1514
        %v1832 = vunpack.c.h.b16 %v1514
        %v1833 = vunpack.c.l.b16 %v1515
        %v1834 = vunpack.c.h.b16 %v1515
        %v1835 = vunpack.c.l.b16 %v1516
        %v1836 = vunpack.c.h.b16 %v1516
        %v1837 = vunpack.c.l.b16 %v1517
        %v1838 = vunpack.c.h.b16 %v1517
        %v1839 = vunpack.c.l.b16 %v1518
        %v1840 = vunpack.c.h.b16 %v1518
        %v1841 = vunpack.c.l.b16 %v1519
        %v1842 = vunpack.c.h.b16 %v1519
        %v1843 = vunpack.c.l.b16 %v1520
        %v1844 = vunpack.c.h.b16 %v1520
        %v1845 = vunpack.c.l.b16 %v1521
        %v1846 = vunpack.c.h.b16 %v1521
        %v1847 = vunpack.c.l.b16 %v1522
        %v1848 = vunpack.c.h.b16 %v1522
        %v1849 = vunpack.c.l.b16 %v1523
        %v1850 = vunpack.c.h.b16 %v1523
        %v1851 = vunpack.c.l.b16 %v1524
        %v1852 = vunpack.c.h.b16 %v1524
        %v1853 = vunpack.c.l.b16 %v1525
        %v1854 = vunpack.c.h.b16 %v1525
        %v1855 = vunpack.c.l.b16 %v1526
        %v1856 = vunpack.c.h.b16 %v1526
        %v1857 = vunpack.c.l.b16 %v1527
        %v1858 = vunpack.c.h.b16 %v1527
        %v1859 = vunpack.c.l.b16 %v1528
        %v1860 = vunpack.c.h.b16 %v1528
        %v1861 = vunpack.c.l.b16 %v1529
        %v1862 = vunpack.c.h.b16 %v1529
        %v1863 = vunpack.c.l.b16 %v1530
        %v1864 = vunpack.c.h.b16 %v1530
        %v1865 = vunpack.c.l.b16 %v1531
        %v1866 = vunpack.c.h.b16 %v1531
        %v1867 = vunpack.c.l.b16 %v1532
        %v1868 = vunpack.c.h.b16 %v1532
        %v1869 = vunpack.c.l.b16 %v1533
        %v1870 = vunpack.c.h.b16 %v1533
        %v1871 = vunpack.c.l.b16 %v1534
        %v1872 = vunpack.c.h.b16 %v1534
        %v1873 = vunpack.c.l.b16 %v1535
        %v1874 = vunpack.c.h.b16 %v1535
        %v1875 = vunpack.c.l.b16 %v1536
        %v1876 = vunpack.c.h.b16 %v1536
        %v1877 = vunpack.c.l.b16 %v1537
        %v1878 = vunpack.c.h.b16 %v1537
        %v1879 = vunpack.c.l.b16 %v1538
        %v1880 = vunpack.c.h.b16 %v1538
        %v1881 = vunpack.c.l.b16 %v1539
        %v1882 = vunpack.c.h.b16 %v1539
        %v1883 = vunpack.c.l.b16 %v1540
        %v1884 = vunpack.c.h.b16 %v1540
        %v1885 = vunpack.c.l.b16 %v1541
        %v1886 = vunpack.c.h.b16 %v1541
        %v1887 = vunpack.c.l.b16 %v1542
        %v1888 = vunpack.c.h.b16 %v1542
        %v1889 = vunpack.c.l.b16 %v1543
        %v1890 = vunpack.c.h.b16 %v1543
        %v1891 = vunpack.c.l.b16 %v1544
        %v1892 = vunpack.c.h.b16 %v1544
        %v1893 = vpack.c.b16 %v1671, %v1669
        %v1894 = vpack.c.b16 %v1672, %v1670
        %v1895 = vpack.c.b16 %v1675, %v1673
        %v1896 = vpack.c.b16 %v1676, %v1674
        %v1897 = vpack.c.b16 %v1679, %v1677
        %v1898 = vpack.c.b16 %v1680, %v1678
        %v1899 = vpack.c.b16 %v1683, %v1681
        %v1900 = vpack.c.b16 %v1684, %v1682
        %v1901 = vpack.c.b16 %v1687, %v1685
        %v1902 = vpack.c.b16 %v1688, %v1686
        %v1903 = vpack.c.b16 %v1691, %v1689
        %v1904 = vpack.c.b16 %v1692, %v1690
        %v1905 = vpack.c.b16 %v1695, %v1693
        %v1906 = vpack.c.b16 %v1696, %v1694
        %v1907 = vpack.c.b16 %v1699, %v1697
        %v1908 = vpack.c.b16 %v1700, %v1698
        %v1909 = vpack.c.b16 %v1703, %v1701
        %v1910 = vpack.c.b16 %v1704, %v1702
        %v1911 = vpack.c.b16 %v1707, %v1705
        %v1912 = vpack.c.b16 %v1708, %v1706
        %v1913 = vpack.c.b16 %v1711, %v1709
        %v1914 = vpack.c.b16 %v1712, %v1710
        %v1915 = vpack.c.b16 %v1715, %v1713
        %v1916 = vpack.c.b16 %v1716, %v1714
        %v1917 = vpack.c.b16 %v1719, %v1717
        %v1918 = vpack.c.b16 %v1720, %v1718
        %v1919 = vpack.c.b16 %v1723, %v1721
        %v1920 = vpack.c.b16 %v1724, %v1722
        %v1921 = vpack.c.b16 %v1727, %v1725
        %v1922 = vpack.c.b16 %v1728, %v1726
        %v1923 = vpack.c.b16 %v1731, %v1729
        %v1924 = vpack.c.b16 %v1732, %v1730
        %v1925 = vpack.c.b16 %v1735, %v1733
        %v1926 = vpack.c.b16 %v1736, %v1734
        %v1927 = vpack.c.b16 %v1739, %v1737
        %v1928 = vpack.c.b16 %v1740, %v1738
        %v1929 = vpack.c.b16 %v1743, %v1741
        %v1930 = vpack.c.b16 %v1744, %v1742
        %v1931 = vpack.c.b16 %v1747, %v1745
        %v1932 = vpack.c.b16 %v1748, %v1746
        %v1933 = vpack.c.b16 %v1751, %v1749
        %v1934 = vpack.c.b16 %v1752, %v1750
        %v1935 = vpack.c.b16 %v1755, %v1753
        %v1936 = vpack.c.b16 %v1756, %v1754
        %v1937 = vpack.c.b16 %v1759, %v1757
        %v1938 = vpack.c.b16 %v1760, %v1758
        %v1939 = vpack.c.b16 %v1763, %v1761
        %v1940 = vpack.c.b16 %v1764, %v1762
        %v1941 = vpack.c.b16 %v1767, %v1765
        %v1942 = vpack.c.b16 %v1768, %v1766
        %v1943 = vpack.c.b16 %v1771, %v1769
        %v1944 = vpack.c.b16 %v1772, %v1770
        %v1945 = vpack.c.b16 %v1775, %v1773
        %v1946 = vpack.c.b16 %v1776, %v1774
        %v1947 = vpack.c.b16 %v1779, %v1777
        %v1948 = vpack.c.b16 %v1780, %v1778
        %v1949 = vpack.c.b16 %v1783, %v1781
        %v1950 = vpack.c.b16 %v1784, %v1782
        %v1951 = vpack.c.b16 %v1787, %v1785
        %v1952 = vpack.c.b16 %v1788, %v1786
        %v1953 = vpack.c.b16 %v1791, %v1789
        %v1954 = vpack.c.b16 %v1792, %v1790
        %v1955 = vpack.c.b16 %v1795, %v1793
        %v1956 = vpack.c.b16 %v1796, %v1794
        %v1957 = vpack.c.b16 %v1799, %v1797
        %v1958 = vpack.c.b16 %v1800, %v1798
        %v1959 = vpack.c.b16 %v1803, %v1801
        %v1960 = vpack.c.b16 %v1804, %v1802
        %v1961 = vpack.c.b16 %v1807, %v1805
        %v1962 = vpack.c.b16 %v1808, %v1806
        %v1963 = vpack.c.b16 %v1811, %v1809
        %v1964 = vpack.c.b16 %v1812, %v1810
        %v1965 = vpack.c.b16 %v1815, %v1813
        %v1966 = vpack.c.b16 %v1816, %v1814
        %v1967 = vpack.c.b16 %v1819, %v1817
        %v1968 = vpack.c.b16 %v1820, %v1818
        %v1969 = vpack.c.b16 %v1823, %v1821
        %v1970 = vpack.c.b16 %v1824, %v1822
        %v1971 = vpack.c.b16 %v1827, %v1825
        %v1972 = vpack.c.b16 %v1828, %v1826
        %v1973 = vpack.c.b16 %v1831, %v1829
        %v1974 = vpack.c.b16 %v1832, %v1830
        %v1975 = vpack.c.b16 %v1835, %v1833
        %v1976 = vpack.c.b16 %v1836, %v1834
        %v1977 = vpack.c.b16 %v1839, %v1837
        %v1978 = vpack.c.b16 %v1840, %v1838
        %v1979 = vpack.c.b16 %v1843, %v1841
        %v1980 = vpack.c.b16 %v1844, %v1842
        %v1981 = vpack.c.b16 %v1847, %v1845
        %v1982 = vpack.c.b16 %v1848, %v1846
        %v1983 = vpack.c.b16 %v1851, %v1849
        %v1984 = vpack.c.b16 %v1852, %v1850
        %v1985 = vpack.c.b16 %v1855, %v1853
        %v1986 = vpack.c.b16 %v1856, %v1854
        %v1987 = vpack.c.b16 %v1859, %v1857
        %v1988 = vpack.c.b16 %v1860, %v1858
        %v1989 = vpack.c.b16 %v1863, %v1861
        %v1990 = vpack.c.b16 %v1864, %v1862
        %v1991 = vpack.c.b16 %v1867, %v1865
        %v1992 = vpack.c.b16 %v1868, %v1866
        %v1993 = vpack.c.b16 %v1871, %v1869
        %v1994 = vpack.c.b16 %v1872, %v1870
        %v1995 = vpack.c.b16 %v1875, %v1873
        %v1996 = vpack.c.b16 %v1876, %v1874
        %v1997 = vpack.c.b16 %v1879, %v1877
        %v1998 = vpack.c.b16 %v1880, %v1878
        %v1999 = vpack.c.b16 %v1883, %v1881
        %v2000 = vpack.c.b16 %v1884, %v1882
        %v2001 = vpack.c.b16 %v1887, %v1885
        %v2002 = vpack.c.b16 %v1888, %v1886
        %v2003 = vpack.c.b16 %v1891, %v1889
        %v2004 = vpack.c.b16 %v1892, %v1890
        %2117 = vmatprep.subr.bf16.mxu0 %v1894
        %2118 = vmatpush1.bf16.msra.mxu0 %v1893
        %2119 = vmatprep.subr.bf16.mxu0 %v1896
        %2120 = vmatpush1.bf16.msra.mxu0 %v1895
        %2121 = vmatprep.subr.bf16.mxu0 %v1898
        %2122 = vmatpush1.bf16.msra.mxu0 %v1897
        %2123 = vmatprep.subr.bf16.mxu0 %v1900
        %2124 = vmatpush1.bf16.msra.mxu0 %v1899
        %2125 = vmatprep.subr.bf16.mxu0 %v1902
        %2126 = vmatpush1.bf16.msra.mxu0 %v1901
        %2127 = vmatprep.subr.bf16.mxu0 %v1904
        %2128 = vmatpush1.bf16.msra.mxu0 %v1903
        %2129 = vmatprep.subr.bf16.mxu0 %v1906
        %2130 = vmatpush1.bf16.msra.mxu0 %v1905
        %2131 = vmatprep.subr.bf16.mxu0 %v1908
        %2132 = vmatpush1.bf16.msra.mxu0 %v1907
        %2133 = vmatprep.subr.bf16.mxu0 %v1910
        %2134 = vmatpush1.bf16.msra.mxu0 %v1909
        %2135 = vmatprep.subr.bf16.mxu0 %v1912
        %2136 = vmatpush1.bf16.msra.mxu0 %v1911
        %2137 = vmatprep.subr.bf16.mxu0 %v1914
        %2138 = vmatpush1.bf16.msra.mxu0 %v1913
        %2139 = vmatprep.subr.bf16.mxu0 %v1916
        %2140 = vmatpush1.bf16.msra.mxu0 %v1915
        %2141 = vmatprep.subr.bf16.mxu0 %v1918
        %2142 = vmatpush1.bf16.msra.mxu0 %v1917
        %2143 = vmatprep.subr.bf16.mxu0 %v1920
        %2144 = vmatpush1.bf16.msra.mxu0 %v1919
        %2145 = vmatprep.subr.bf16.mxu0 %v1922
        %2146 = vmatpush1.bf16.msra.mxu0 %v1921
        %2147 = vmatprep.subr.bf16.mxu0 %v1924
        %2148 = vmatpush1.bf16.msra.mxu0 %v1923
        %2149 = vmatprep.mubr.bf16.mxu0 %v1071
        %2150 = vmatmul.mubr.bf16.gmra.mrb[0].mxu0 %v999
        %v2151 = vpop.f32.mrb[0].mxu0
        %v2152 = vadd.f32 %v1550, %v2151
        %v2153 = vpop.f32.mrb[0].mxu0
        %v2154 = vadd.f32 %v1554, %v2153
        %v2155 = vpop.f32.mrb[0].mxu0
        %v2156 = vadd.f32 %v1550, %v2155
        %v2157 = vpop.f32.mrb[0].mxu0
        %v2158 = vadd.f32 %v1554, %v2157
        %2159 = vmatprep.mubr.bf16.mxu0 %v1072
        %2160 = vmatmul.mubr.bf16.gmra.mrb[0].mxu0 %v1000
        %v2161 = vpop.f32.mrb[0].mxu0
        %v2162 = vadd.f32 %v1550, %v2161
        %v2163 = vpop.f32.mrb[0].mxu0
        %v2164 = vadd.f32 %v1554, %v2163
        %v2165 = vpop.f32.mrb[0].mxu0
        %v2166 = vadd.f32 %v1550, %v2165
        %v2167 = vpop.f32.mrb[0].mxu0
        %v2168 = vadd.f32 %v1554, %v2167
        %2169 = vdwg.mxu0
        %2170 = vmatprep.subr.bf16.mxu0 %v1926
        %2171 = vmatpush1.bf16.msra.mxu0 %v1925
        %2172 = vmatprep.subr.bf16.mxu0 %v1928
        %2173 = vmatpush1.bf16.msra.mxu0 %v1927
        %2174 = vmatprep.subr.bf16.mxu0 %v1930
        %2175 = vmatpush1.bf16.msra.mxu0 %v1929
        %2176 = vmatprep.subr.bf16.mxu0 %v1932
        %2177 = vmatpush1.bf16.msra.mxu0 %v1931
        %2178 = vmatprep.subr.bf16.mxu0 %v1934
        %2179 = vmatpush1.bf16.msra.mxu0 %v1933
        %2180 = vmatprep.subr.bf16.mxu0 %v1936
        %2181 = vmatpush1.bf16.msra.mxu0 %v1935
        %2182 = vmatprep.subr.bf16.mxu0 %v1938
        %2183 = vmatpush1.bf16.msra.mxu0 %v1937
        %2184 = vmatprep.subr.bf16.mxu0 %v1940
        %2185 = vmatpush1.bf16.msra.mxu0 %v1939
        %2186 = vmatprep.subr.bf16.mxu0 %v1942
        %2187 = vmatpush1.bf16.msra.mxu0 %v1941
        %2188 = vmatprep.subr.bf16.mxu0 %v1944
        %2189 = vmatpush1.bf16.msra.mxu0 %v1943
        %2190 = vmatprep.subr.bf16.mxu0 %v1946
        %2191 = vmatpush1.bf16.msra.mxu0 %v1945
        %2192 = vmatprep.subr.bf16.mxu0 %v1948
        %2193 = vmatpush1.bf16.msra.mxu0 %v1947
        %2194 = vmatprep.subr.bf16.mxu0 %v1950
        %2195 = vmatpush1.bf16.msra.mxu0 %v1949
        %2196 = vmatprep.subr.bf16.mxu0 %v1952
        %2197 = vmatpush1.bf16.msra.mxu0 %v1951
        %2198 = vmatprep.subr.bf16.mxu0 %v1954
        %2199 = vmatpush1.bf16.msra.mxu0 %v1953
        %2200 = vmatprep.subr.bf16.mxu0 %v1956
        %2201 = vmatpush1.bf16.msra.mxu0 %v1955
        %2202 = vmatprep.mubr.bf16.mxu0 %v1215
        %2203 = vmatmul.mubr.bf16.gmra.mrb[0].mxu0 %v1143
        %v2204 = vpop.f32.mrb[0].mxu0
        %v2205 = vadd.f32 %v2152, %v2204
        %v2206 = vpop.f32.mrb[0].mxu0
        %v2207 = vadd.f32 %v2154, %v2206
        %v2208 = vpop.f32.mrb[0].mxu0
        %v2209 = vadd.f32 %v2156, %v2208
        %v2210 = vpop.f32.mrb[0].mxu0
        %v2211 = vadd.f32 %v2158, %v2210
        %2212 = vmatprep.mubr.bf16.mxu0 %v1216
        %2213 = vmatmul.mubr.bf16.gmra.mrb[0].mxu0 %v1144
        %v2214 = vpop.f32.mrb[0].mxu0
        %v2215 = vadd.f32 %v2162, %v2214
        %v2216 = vpop.f32.mrb[0].mxu0
        %v2217 = vadd.f32 %v2164, %v2216
        %v2218 = vpop.f32.mrb[0].mxu0
        %v2219 = vadd.f32 %v2166, %v2218
        %v2220 = vpop.f32.mrb[0].mxu0
        %v2221 = vadd.f32 %v2168, %v2220
        %2222 = vdwg.mxu0
        %2223 = vmatprep.subr.bf16.mxu0 %v1958
        %2224 = vmatpush1.bf16.msra.mxu0 %v1957
        %2225 = vmatprep.subr.bf16.mxu0 %v1960
        %2226 = vmatpush1.bf16.msra.mxu0 %v1959
        %2227 = vmatprep.subr.bf16.mxu0 %v1962
        %2228 = vmatpush1.bf16.msra.mxu0 %v1961
        %2229 = vmatprep.subr.bf16.mxu0 %v1964
        %2230 = vmatpush1.bf16.msra.mxu0 %v1963
        %2231 = vmatprep.subr.bf16.mxu0 %v1966
        %2232 = vmatpush1.bf16.msra.mxu0 %v1965
        %2233 = vmatprep.subr.bf16.mxu0 %v1968
        %2234 = vmatpush1.bf16.msra.mxu0 %v1967
        %2235 = vmatprep.subr.bf16.mxu0 %v1970
        %2236 = vmatpush1.bf16.msra.mxu0 %v1969
        %2237 = vmatprep.subr.bf16.mxu0 %v1972
        %2238 = vmatpush1.bf16.msra.mxu0 %v1971
        %2239 = vmatprep.subr.bf16.mxu0 %v1974
        %2240 = vmatpush1.bf16.msra.mxu0 %v1973
        %2241 = vmatprep.subr.bf16.mxu0 %v1976
        %2242 = vmatpush1.bf16.msra.mxu0 %v1975
        %2243 = vmatprep.subr.bf16.mxu0 %v1978
        %2244 = vmatpush1.bf16.msra.mxu0 %v1977
        %2245 = vmatprep.subr.bf16.mxu0 %v1980
        %2246 = vmatpush1.bf16.msra.mxu0 %v1979
        %2247 = vmatprep.subr.bf16.mxu0 %v1982
        %2248 = vmatpush1.bf16.msra.mxu0 %v1981
        %2249 = vmatprep.subr.bf16.mxu0 %v1984
        %2250 = vmatpush1.bf16.msra.mxu0 %v1983
        %2251 = vmatprep.subr.bf16.mxu0 %v1986
        %2252 = vmatpush1.bf16.msra.mxu0 %v1985
        %2253 = vmatprep.subr.bf16.mxu0 %v1988
        %2254 = vmatpush1.bf16.msra.mxu0 %v1987
        %2255 = vmatprep.mubr.bf16.mxu0 %v1359
        %2256 = vmatmul.mubr.bf16.gmra.mrb[0].mxu0 %v1287
        %v2257 = vpop.f32.mrb[0].mxu0
        %v2258 = vadd.f32 %v2205, %v2257
        %v2259 = vpop.f32.mrb[0].mxu0
        %v2260 = vadd.f32 %v2207, %v2259
        %v2261 = vpop.f32.mrb[0].mxu0
        %v2262 = vadd.f32 %v2209, %v2261
        %v2263 = vpop.f32.mrb[0].mxu0
        %v2264 = vadd.f32 %v2211, %v2263
        %2265 = vmatprep.mubr.bf16.mxu0 %v1360
        %2266 = vmatmul.mubr.bf16.gmra.mrb[0].mxu0 %v1288
        %v2267 = vpop.f32.mrb[0].mxu0
        %v2268 = vadd.f32 %v2215, %v2267
        %v2269 = vpop.f32.mrb[0].mxu0
        %v2270 = vadd.f32 %v2217, %v2269
        %v2271 = vpop.f32.mrb[0].mxu0
        %v2272 = vadd.f32 %v2219, %v2271
        %v2273 = vpop.f32.mrb[0].mxu0
        %v2274 = vadd.f32 %v2221, %v2273
        %2275 = vdwg.mxu0
        %2276 = vmatprep.subr.bf16.mxu0 %v1990
        %2277 = vmatpush1.bf16.msra.mxu0 %v1989
        %2278 = vmatprep.subr.bf16.mxu0 %v1992
        %2279 = vmatpush1.bf16.msra.mxu0 %v1991
        %2280 = vmatprep.subr.bf16.mxu0 %v1994
        %2281 = vmatpush1.bf16.msra.mxu0 %v1993
        %2282 = vmatprep.subr.bf16.mxu0 %v1996
        %2283 = vmatpush1.bf16.msra.mxu0 %v1995
        %2284 = vmatprep.subr.bf16.mxu0 %v1998
        %2285 = vmatpush1.bf16.msra.mxu0 %v1997
        %2286 = vmatprep.subr.bf16.mxu0 %v2000
        %2287 = vmatpush1.bf16.msra.mxu0 %v1999
        %2288 = vmatprep.subr.bf16.mxu0 %v2002
        %2289 = vmatpush1.bf16.msra.mxu0 %v2001
        %2290 = vmatprep.subr.bf16.mxu0 %v2004
        %2291 = vmatpush1.bf16.msra.mxu0 %v2003
        %2292 = vmatprep.subr.bf16.mxu0 0
        %2293 = vmatpush1.bf16.msra.mxu0 0
        %2294 = vmatprep.subr.bf16.mxu0 0
        %2295 = vmatpush1.bf16.msra.mxu0 0
        %2296 = vmatprep.subr.bf16.mxu0 0
        %2297 = vmatpush1.bf16.msra.mxu0 0
        %2298 = vmatprep.subr.bf16.mxu0 0
        %2299 = vmatpush1.bf16.msra.mxu0 0
        %2300 = vmatprep.subr.bf16.mxu0 0
        %2301 = vmatpush1.bf16.msra.mxu0 0
        %2302 = vmatprep.subr.bf16.mxu0 0
        %2303 = vmatpush1.bf16.msra.mxu0 0
        %2304 = vmatprep.subr.bf16.mxu0 0
        %2305 = vmatpush1.bf16.msra.mxu0 0
        %2306 = vmatprep.subr.bf16.mxu0 0
        %2307 = vmatpush1.bf16.msra.mxu0 0
        %2308 = vmatprep.mubr.bf16.mxu0 0
        %2309 = vmatmul.mubr.bf16.gmra.mrb[0].mxu0 %v1431
        %v2310 = vpop.f32.mrb[0].mxu0
        %v2311 = vadd.f32 %v2258, %v2310
        %v2312 = vpop.f32.mrb[0].mxu0
        %v2313 = vadd.f32 %v2260, %v2312
        %v2314 = vpop.f32.mrb[0].mxu0
        %v2315 = vadd.f32 %v2262, %v2314
        %v2316 = vpop.f32.mrb[0].mxu0
        %v2317 = vadd.f32 %v2264, %v2316
        %2318 = vmatprep.mubr.bf16.mxu0 0
        %2319 = vmatmul.mubr.bf16.gmra.mrb[0].mxu0 %v1432
        %v2320 = vpop.f32.mrb[0].mxu0
        %v2321 = vadd.f32 %v2268, %v2320
        %v2322 = vpop.f32.mrb[0].mxu0
        %v2323 = vadd.f32 %v2270, %v2322
        %v2324 = vpop.f32.mrb[0].mxu0
        %v2325 = vadd.f32 %v2272, %v2324
        %v2326 = vpop.f32.mrb[0].mxu0
        %v2327 = vadd.f32 %v2274, %v2326
        %2328 = vdwg.mxu0
        %vm2329 = vcmp.ge.f32.partialorder %v2311, 0.0
        %vm2330 = vcmp.ge.f32.partialorder %v2313, 0.0
        %vm2331 = vcmp.ge.f32.partialorder %v2315, 0.0
        %vm2332 = vcmp.ge.f32.partialorder %v2317, 0.0
        %vm2333 = vcmp.ge.f32.partialorder %v2321, 0.0
        %vm2334 = vcmp.ge.f32.partialorder %v2323, 0.0
        %vm2335 = vcmp.ge.f32.partialorder %v2325, 0.0
        %vm2336 = vcmp.ge.f32.partialorder %v2327, 0.0
        %v2337 = vmul.f32 %v2311, 0.2
        %v2338 = vmul.f32 %v2313, 0.2
        %v2339 = vmul.f32 %v2315, 0.2
        %v2340 = vmul.f32 %v2317, 0.2
        %v2341 = vmul.f32 %v2321, 0.2
        %v2342 = vmul.f32 %v2323, 0.2
        %v2343 = vmul.f32 %v2325, 0.2
        %v2344 = vmul.f32 %v2327, 0.2
        %v2345 = vsel %vm2329, %v2311, %v2337
        %v2346 = vsel %vm2330, %v2313, %v2338
        %v2347 = vsel %vm2331, %v2315, %v2339
        %v2348 = vsel %vm2332, %v2317, %v2340
        %v2349 = vsel %vm2333, %v2321, %v2341
        %v2350 = vsel %vm2334, %v2323, %v2342
        %v2351 = vsel %vm2335, %v2325, %v2343
        %v2352 = vsel %vm2336, %v2327, %v2344
        %v2353 = vpack.c.bf16 %v2347, %v2345
        %v2354 = vpack.c.bf16 %v2348, %v2346
        %v2355 = vpack.c.bf16 %v2351, %v2349
        %v2356 = vpack.c.bf16 %v2352, %v2350
        %v2357 = vld [vmem:[#allocation10] sm:$0xf]
        %v2358 = vld [vmem:[#allocation10 + $0x4] sm:$0xf]
        %v2361 = vunpack.c.l.b16 %v2357
        %v2362 = vunpack.c.l.b16 %v2358
        %v2363 = vpack.c.b16 %v2362, %v2361
        %v2365 = vsel %vm943, %v2363, 0
        %2367 = vmatprep.subr.bf16.mxu0 %v2354
        %2368 = vmatpush1.bf16.msra.mxu0 %v2353
        %2369 = vmatprep.subr.bf16.mxu0 %v2356
        %2370 = vmatpush1.bf16.msra.mxu0 %v2355
        %2371 = vmatprep.subr.bf16.mxu0 0
        %2372 = vmatpush1.bf16.msra.mxu0 0
        %2373 = vmatprep.subr.bf16.mxu0 0
        %2374 = vmatpush1.bf16.msra.mxu0 0
        %2375 = vmatprep.subr.bf16.mxu0 0
        %2376 = vmatpush1.bf16.msra.mxu0 0
        %2377 = vmatprep.subr.bf16.mxu0 0
        %2378 = vmatpush1.bf16.msra.mxu0 0
        %2379 = vmatprep.subr.bf16.mxu0 0
        %2380 = vmatpush1.bf16.msra.mxu0 0
        %2381 = vmatprep.subr.bf16.mxu0 0
        %2382 = vmatpush1.bf16.msra.mxu0 0
        %2383 = vmatprep.subr.bf16.mxu0 0
        %2384 = vmatpush1.bf16.msra.mxu0 0
        %2385 = vmatprep.subr.bf16.mxu0 0
        %2386 = vmatpush1.bf16.msra.mxu0 0
        %2387 = vmatprep.subr.bf16.mxu0 0
        %2388 = vmatpush1.bf16.msra.mxu0 0
        %2389 = vmatprep.subr.bf16.mxu0 0
        %2390 = vmatpush1.bf16.msra.mxu0 0
        %2391 = vmatprep.subr.bf16.mxu0 0
        %2392 = vmatpush1.bf16.msra.mxu0 0
        %2393 = vmatprep.subr.bf16.mxu0 0
        %2394 = vmatpush1.bf16.msra.mxu0 0
        %2395 = vmatprep.subr.bf16.mxu0 0
        %2396 = vmatpush1.bf16.msra.mxu0 0
        %2397 = vmatprep.subr.bf16.mxu0 0
        %2398 = vmatpush1.bf16.msra.mxu0 0
        %2399 = vmatprep.mubr.bf16.mxu0 0
        %2400 = vmatmul.mubr.bf16.gmra.mrb[0].mxu0 %v2365
        %v2401 = vpop.f32.mrb[0].mxu0
        %v2402 = vadd.f32 0.0, %v2401
        %v2403 = vpop.f32.mrb[0].mxu0
        %v2404 = vadd.f32 0.0, %v2403
        %v2405 = vpop.f32.mrb[0].mxu0
        %v2406 = vadd.f32 0.0, %v2405
        %v2407 = vpop.f32.mrb[0].mxu0
        %v2408 = vadd.f32 0.0, %v2407
        %2409 = vdwg.mxu0
        %v2410 = vpack.c.bf16 %v2406, %v2402
        %v2411 = vpack.c.bf16 %v2408, %v2404
        %s2412 = scalar_lea.vmem [#allocation10], 8
        %v2413 = vld [vmem:[%s2412] sm:$0xf]
        %v2414 = vld [vmem:[%s2412 + $0x4] sm:$0xf]
        %v2417 = vunpack.c.l.b16 %v2413
        %v2418 = vunpack.c.l.b16 %v2414
        %v2419 = vpack.c.b16 %v2418, %v2417
        %v2421 = vsel %vm943, %v2419, 0
        %2423 = vmatprep.subr.bf16.mxu0 %v2354
        %2424 = vmatpush1.bf16.msra.mxu0 %v2353
        %2425 = vmatprep.subr.bf16.mxu0 %v2356
        %2426 = vmatpush1.bf16.msra.mxu0 %v2355
        %2427 = vmatprep.subr.bf16.mxu0 0
        %2428 = vmatpush1.bf16.msra.mxu0 0
        %2429 = vmatprep.subr.bf16.mxu0 0
        %2430 = vmatpush1.bf16.msra.mxu0 0
        %2431 = vmatprep.subr.bf16.mxu0 0
        %2432 = vmatpush1.bf16.msra.mxu0 0
        %2433 = vmatprep.subr.bf16.mxu0 0
        %2434 = vmatpush1.bf16.msra.mxu0 0
        %2435 = vmatprep.subr.bf16.mxu0 0
        %2436 = vmatpush1.bf16.msra.mxu0 0
        %2437 = vmatprep.subr.bf16.mxu0 0
        %2438 = vmatpush1.bf16.msra.mxu0 0
        %2439 = vmatprep.subr.bf16.mxu0 0
        %2440 = vmatpush1.bf16.msra.mxu0 0
        %2441 = vmatprep.subr.bf16.mxu0 0
        %2442 = vmatpush1.bf16.msra.mxu0 0
        %2443 = vmatprep.subr.bf16.mxu0 0
        %2444 = vmatpush1.bf16.msra.mxu0 0
        %2445 = vmatprep.subr.bf16.mxu0 0
        %2446 = vmatpush1.bf16.msra.mxu0 0
        %2447 = vmatprep.subr.bf16.mxu0 0
        %2448 = vmatpush1.bf16.msra.mxu0 0
        %2449 = vmatprep.subr.bf16.mxu0 0
        %2450 = vmatpush1.bf16.msra.mxu0 0
        %2451 = vmatprep.subr.bf16.mxu0 0
        %2452 = vmatpush1.bf16.msra.mxu0 0
        %2453 = vmatprep.subr.bf16.mxu0 0
        %2454 = vmatpush1.bf16.msra.mxu0 0
        %2455 = vmatprep.mubr.bf16.mxu0 0
        %2456 = vmatmul.mubr.bf16.gmra.mrb[0].mxu0 %v2421
        %v2457 = vpop.f32.mrb[0].mxu0
        %v2458 = vadd.f32 0.0, %v2457
        %v2459 = vpop.f32.mrb[0].mxu0
        %v2460 = vadd.f32 0.0, %v2459
        %v2461 = vpop.f32.mrb[0].mxu0
        %v2462 = vadd.f32 0.0, %v2461
        %v2463 = vpop.f32.mrb[0].mxu0
        %v2464 = vadd.f32 0.0, %v2463
        %2465 = vdwg.mxu0
        %v2466 = vpack.c.bf16 %v2462, %v2458
        %v2467 = vpack.c.bf16 %v2464, %v2460
        %s2468 = scalar_lea.vmem [#allocation10], 16
        %v2469 = vld [vmem:[%s2468] sm:$0xf]
        %v2470 = vld [vmem:[%s2468 + $0x4] sm:$0xf]
        %v2473 = vunpack.c.l.b16 %v2469
        %v2474 = vunpack.c.l.b16 %v2470
        %v2475 = vpack.c.b16 %v2474, %v2473
        %v2477 = vsel %vm943, %v2475, 0
        %2479 = vmatprep.subr.bf16.mxu0 %v2354
        %2480 = vmatpush1.bf16.msra.mxu0 %v2353
        %2481 = vmatprep.subr.bf16.mxu0 %v2356
        %2482 = vmatpush1.bf16.msra.mxu0 %v2355
        %2483 = vmatprep.subr.bf16.mxu0 0
        %2484 = vmatpush1.bf16.msra.mxu0 0
        %2485 = vmatprep.subr.bf16.mxu0 0
        %2486 = vmatpush1.bf16.msra.mxu0 0
        %2487 = vmatprep.subr.bf16.mxu0 0
        %2488 = vmatpush1.bf16.msra.mxu0 0
        %2489 = vmatprep.subr.bf16.mxu0 0
        %2490 = vmatpush1.bf16.msra.mxu0 0
        %2491 = vmatprep.subr.bf16.mxu0 0
        %2492 = vmatpush1.bf16.msra.mxu0 0
        %2493 = vmatprep.subr.bf16.mxu0 0
        %2494 = vmatpush1.bf16.msra.mxu0 0
        %2495 = vmatprep.subr.bf16.mxu0 0
        %2496 = vmatpush1.bf16.msra.mxu0 0
        %2497 = vmatprep.subr.bf16.mxu0 0
        %2498 = vmatpush1.bf16.msra.mxu0 0
        %2499 = vmatprep.subr.bf16.mxu0 0
        %2500 = vmatpush1.bf16.msra.mxu0 0
        %2501 = vmatprep.subr.bf16.mxu0 0
        %2502 = vmatpush1.bf16.msra.mxu0 0
        %2503 = vmatprep.subr.bf16.mxu0 0
        %2504 = vmatpush1.bf16.msra.mxu0 0
        %2505 = vmatprep.subr.bf16.mxu0 0
        %2506 = vmatpush1.bf16.msra.mxu0 0
        %2507 = vmatprep.subr.bf16.mxu0 0
        %2508 = vmatpush1.bf16.msra.mxu0 0
        %2509 = vmatprep.subr.bf16.mxu0 0
        %2510 = vmatpush1.bf16.msra.mxu0 0
        %2511 = vmatprep.mubr.bf16.mxu0 0
        %2512 = vmatmul.mubr.bf16.gmra.mrb[0].mxu0 %v2477
        %v2513 = vpop.f32.mrb[0].mxu0
        %v2514 = vadd.f32 0.0, %v2513
        %v2515 = vpop.f32.mrb[0].mxu0
        %v2516 = vadd.f32 0.0, %v2515
        %v2517 = vpop.f32.mrb[0].mxu0
        %v2518 = vadd.f32 0.0, %v2517
        %v2519 = vpop.f32.mrb[0].mxu0
        %v2520 = vadd.f32 0.0, %v2519
        %2521 = vdwg.mxu0
        %v2522 = vpack.c.bf16 %v2518, %v2514
        %v2523 = vpack.c.bf16 %v2520, %v2516
        %s2524 = scalar_lea.vmem [#allocation10], 24
        %v2525 = vld [vmem:[%s2524] sm:$0xf]
        %v2526 = vld [vmem:[%s2524 + $0x4] sm:$0xf]
        %v2529 = vunpack.c.l.b16 %v2525
        %v2530 = vunpack.c.l.b16 %v2526
        %v2531 = vpack.c.b16 %v2530, %v2529
        %v2533 = vsel %vm943, %v2531, 0
        %2535 = vmatprep.subr.bf16.mxu0 %v2354
        %2536 = vmatpush1.bf16.msra.mxu0 %v2353
        %2537 = vmatprep.subr.bf16.mxu0 %v2356
        %2538 = vmatpush1.bf16.msra.mxu0 %v2355
        %2539 = vmatprep.subr.bf16.mxu0 0
        %2540 = vmatpush1.bf16.msra.mxu0 0
        %2541 = vmatprep.subr.bf16.mxu0 0
        %2542 = vmatpush1.bf16.msra.mxu0 0
        %2543 = vmatprep.subr.bf16.mxu0 0
        %2544 = vmatpush1.bf16.msra.mxu0 0
        %2545 = vmatprep.subr.bf16.mxu0 0
        %2546 = vmatpush1.bf16.msra.mxu0 0
        %2547 = vmatprep.subr.bf16.mxu0 0
        %2548 = vmatpush1.bf16.msra.mxu0 0
        %2549 = vmatprep.subr.bf16.mxu0 0
        %2550 = vmatpush1.bf16.msra.mxu0 0
        %2551 = vmatprep.subr.bf16.mxu0 0
        %2552 = vmatpush1.bf16.msra.mxu0 0
        %2553 = vmatprep.subr.bf16.mxu0 0
        %2554 = vmatpush1.bf16.msra.mxu0 0
        %2555 = vmatprep.subr.bf16.mxu0 0
        %2556 = vmatpush1.bf16.msra.mxu0 0
        %2557 = vmatprep.subr.bf16.mxu0 0
        %2558 = vmatpush1.bf16.msra.mxu0 0
        %2559 = vmatprep.subr.bf16.mxu0 0
        %2560 = vmatpush1.bf16.msra.mxu0 0
        %2561 = vmatprep.subr.bf16.mxu0 0
        %2562 = vmatpush1.bf16.msra.mxu0 0
        %2563 = vmatprep.subr.bf16.mxu0 0
        %2564 = vmatpush1.bf16.msra.mxu0 0
        %2565 = vmatprep.subr.bf16.mxu0 0
        %2566 = vmatpush1.bf16.msra.mxu0 0
        %2567 = vmatprep.mubr.bf16.mxu0 0
        %2568 = vmatmul.mubr.bf16.gmra.mrb[0].mxu0 %v2533
        %v2569 = vpop.f32.mrb[0].mxu0
        %v2570 = vadd.f32 0.0, %v2569
        %v2571 = vpop.f32.mrb[0].mxu0
        %v2572 = vadd.f32 0.0, %v2571
        %v2573 = vpop.f32.mrb[0].mxu0
        %v2574 = vadd.f32 0.0, %v2573
        %v2575 = vpop.f32.mrb[0].mxu0
        %v2576 = vadd.f32 0.0, %v2575
        %2577 = vdwg.mxu0
        %v2578 = vpack.c.bf16 %v2574, %v2570
        %v2579 = vpack.c.bf16 %v2576, %v2572
        %v2580 = vld [vmem:[#allocation11] sm:$0xff]
        %v2581 = vld [vmem:[#allocation11 + $0x8] sm:$0xff]
        %v2582 = vld [vmem:[#allocation11 + $0x10] sm:$0xff]
        %v2583 = vld [vmem:[#allocation11 + $0x18] sm:$0xff]
        %v2584 = vld [vmem:[#allocation11 + $0x20] sm:$0xff]
        %v2585 = vld [vmem:[#allocation11 + $0x28] sm:$0xff]
        %v2586 = vld [vmem:[#allocation11 + $0x30] sm:$0xff]
        %v2587 = vld [vmem:[#allocation11 + $0x38] sm:$0xff]
        %v2588 = vld [vmem:[#allocation11 + $0x40] sm:$0xff]
        %v2589 = vld [vmem:[#allocation11 + $0x48] sm:$0xff]
        %v2590 = vld [vmem:[#allocation11 + $0x50] sm:$0xff]
        %v2591 = vld [vmem:[#allocation11 + $0x58] sm:$0xff]
        %v2592 = vld [vmem:[#allocation11 + $0x60] sm:$0xff]
        %v2593 = vld [vmem:[#allocation11 + $0x68] sm:$0xff]
        %v2594 = vld [vmem:[#allocation11 + $0x70] sm:$0xff]
        %v2595 = vld [vmem:[#allocation11 + $0x78] sm:$0xff]
        %v2596 = vld [vmem:[#allocation11 + $0x80] sm:$0xff]
        %v2597 = vld [vmem:[#allocation11 + $0x88] sm:$0xff]
        %v2598 = vld [vmem:[#allocation11 + $0x90] sm:$0xff]
        %v2599 = vld [vmem:[#allocation11 + $0x98] sm:$0xff]
        %v2600 = vld [vmem:[#allocation11 + $0xa0] sm:$0xff]
        %v2601 = vld [vmem:[#allocation11 + $0xa8] sm:$0xff]
        %v2602 = vld [vmem:[#allocation11 + $0xb0] sm:$0xff]
        %v2603 = vld [vmem:[#allocation11 + $0xb8] sm:$0xff]
        %v2604 = vld [vmem:[#allocation11 + $0xc0] sm:$0xff]
        %v2605 = vld [vmem:[#allocation11 + $0xc8] sm:$0xff]
        %v2606 = vld [vmem:[#allocation11 + $0xd0] sm:$0xff]
        %v2607 = vld [vmem:[#allocation11 + $0xd8] sm:$0xff]
        %v2608 = vld [vmem:[#allocation11 + $0xe0] sm:$0xff]
        %v2609 = vld [vmem:[#allocation11 + $0xe8] sm:$0xff]
        %v2610 = vld [vmem:[#allocation11 + $0xf0] sm:$0xff]
        %v2611 = vld [vmem:[#allocation11 + $0xf8] sm:$0xff]
        %v2612 = vld [vmem:[#allocation11 + $0x100] sm:$0xff]
        %v2613 = vld [vmem:[#allocation11 + $0x108] sm:$0xff]
        %v2614 = vld [vmem:[#allocation11 + $0x110] sm:$0xff]
        %v2615 = vld [vmem:[#allocation11 + $0x118] sm:$0xff]
        %v2616 = vld [vmem:[#allocation11 + $0x120] sm:$0xff]
        %v2617 = vld [vmem:[#allocation11 + $0x128] sm:$0xff]
        %v2618 = vld [vmem:[#allocation11 + $0x130] sm:$0xff]
        %v2619 = vld [vmem:[#allocation11 + $0x138] sm:$0xff]
        %v2620 = vld [vmem:[#allocation11 + $0x140] sm:$0xff]
        %v2621 = vld [vmem:[#allocation11 + $0x148] sm:$0xff]
        %v2622 = vld [vmem:[#allocation11 + $0x150] sm:$0xff]
        %v2623 = vld [vmem:[#allocation11 + $0x158] sm:$0xff]
        %v2624 = vld [vmem:[#allocation11 + $0x160] sm:$0xff]
        %v2625 = vld [vmem:[#allocation11 + $0x168] sm:$0xff]
        %v2626 = vld [vmem:[#allocation11 + $0x170] sm:$0xff]
        %v2627 = vld [vmem:[#allocation11 + $0x178] sm:$0xff]
        %v2628 = vld [vmem:[#allocation11 + $0x180] sm:$0xff]
        %v2629 = vld [vmem:[#allocation11 + $0x188] sm:$0xff]
        %v2630 = vld [vmem:[#allocation11 + $0x190] sm:$0xff]
        %v2631 = vld [vmem:[#allocation11 + $0x198] sm:$0xff]
        %v2632 = vld [vmem:[#allocation11 + $0x1a0] sm:$0xff]
        %v2633 = vld [vmem:[#allocation11 + $0x1a8] sm:$0xff]
        %v2634 = vld [vmem:[#allocation11 + $0x1b0] sm:$0xff]
        %v2635 = vld [vmem:[#allocation11 + $0x1b8] sm:$0xff]
        %v2636 = vld [vmem:[#allocation11 + $0x1c0] sm:$0xff]
        %v2637 = vld [vmem:[#allocation11 + $0x1c8] sm:$0xff]
        %v2638 = vld [vmem:[#allocation11 + $0x1d0] sm:$0xff]
        %v2639 = vld [vmem:[#allocation11 + $0x1d8] sm:$0xff]
        %v2640 = vld [vmem:[#allocation11 + $0x1e0] sm:$0xff]
        %v2641 = vld [vmem:[#allocation11 + $0x1e8] sm:$0xff]
        %v2642 = vld [vmem:[#allocation11 + $0x1f0] sm:$0xff]
        %v2643 = vld [vmem:[#allocation11 + $0x1f8] sm:$0xff]
        %v2644 = vld [vmem:[#allocation11 + $0x200] sm:$0xff]
        %v2645 = vld [vmem:[#allocation11 + $0x208] sm:$0xff]
        %v2646 = vld [vmem:[#allocation11 + $0x210] sm:$0xff]
        %v2647 = vld [vmem:[#allocation11 + $0x218] sm:$0xff]
        %v2648 = vld [vmem:[#allocation11 + $0x220] sm:$0xff]
        %v2649 = vld [vmem:[#allocation11 + $0x228] sm:$0xff]
        %v2650 = vld [vmem:[#allocation11 + $0x230] sm:$0xff]
        %v2651 = vld [vmem:[#allocation11 + $0x238] sm:$0xff]
        %v2652 = vld [vmem:[#allocation11 + $0x240] sm:$0xff]
        %v2653 = vld [vmem:[#allocation11 + $0x248] sm:$0xff]
        %v2654 = vld [vmem:[#allocation11 + $0x250] sm:$0xff]
        %v2655 = vld [vmem:[#allocation11 + $0x258] sm:$0xff]
        %v2656 = vld [vmem:[#allocation11 + $0x260] sm:$0xff]
        %v2657 = vld [vmem:[#allocation11 + $0x268] sm:$0xff]
        %v2658 = vld [vmem:[#allocation11 + $0x270] sm:$0xff]
        %v2659 = vld [vmem:[#allocation11 + $0x278] sm:$0xff]
        %v2660 = vld [vmem:[#allocation11 + $0x280] sm:$0xff]
        %v2661 = vld [vmem:[#allocation11 + $0x288] sm:$0xff]
        %v2662 = vld [vmem:[#allocation11 + $0x290] sm:$0xff]
        %v2663 = vld [vmem:[#allocation11 + $0x298] sm:$0xff]
        %v2664 = vld [vmem:[#allocation11 + $0x2a0] sm:$0xff]
        %v2665 = vld [vmem:[#allocation11 + $0x2a8] sm:$0xff]
        %v2666 = vld [vmem:[#allocation11 + $0x2b0] sm:$0xff]
        %v2667 = vld [vmem:[#allocation11 + $0x2b8] sm:$0xff]
        %v2668 = vld [vmem:[#allocation11 + $0x2c0] sm:$0xff]
        %v2669 = vld [vmem:[#allocation11 + $0x2c8] sm:$0xff]
        %v2670 = vld [vmem:[#allocation11 + $0x2d0] sm:$0xff]
        %v2671 = vld [vmem:[#allocation11 + $0x2d8] sm:$0xff]
        %v2672 = vld [vmem:[#allocation11 + $0x2e0] sm:$0xff]
        %v2673 = vld [vmem:[#allocation11 + $0x2e8] sm:$0xff]
        %v2674 = vld [vmem:[#allocation11 + $0x2f0] sm:$0xff]
        %v2675 = vld [vmem:[#allocation11 + $0x2f8] sm:$0xff]
        %v2676 = vld [vmem:[#allocation11 + $0x300] sm:$0xff]
        %v2677 = vld [vmem:[#allocation11 + $0x308] sm:$0xff]
        %v2678 = vld [vmem:[#allocation11 + $0x310] sm:$0xff]
        %v2679 = vld [vmem:[#allocation11 + $0x318] sm:$0xff]
        %v2680 = vld [vmem:[#allocation11 + $0x320] sm:$0xff]
        %v2681 = vld [vmem:[#allocation11 + $0x328] sm:$0xff]
        %v2682 = vld [vmem:[#allocation11 + $0x330] sm:$0xff]
        %v2683 = vld [vmem:[#allocation11 + $0x338] sm:$0xff]
        %v2684 = vld [vmem:[#allocation11 + $0x340] sm:$0xff]
        %v2685 = vld [vmem:[#allocation11 + $0x348] sm:$0xff]
        %v2686 = vld [vmem:[#allocation11 + $0x350] sm:$0xff]
        %v2687 = vld [vmem:[#allocation11 + $0x358] sm:$0xff]
        %v2688 = vld [vmem:[#allocation11 + $0x360] sm:$0xff]
        %v2689 = vld [vmem:[#allocation11 + $0x368] sm:$0xff]
        %v2690 = vld [vmem:[#allocation11 + $0x370] sm:$0xff]
        %v2691 = vld [vmem:[#allocation11 + $0x378] sm:$0xff]
        %v2692 = vld [vmem:[#allocation11 + $0x380] sm:$0xff]
        %v2693 = vld [vmem:[#allocation11 + $0x388] sm:$0xff]
        %v2694 = vld [vmem:[#allocation11 + $0x390] sm:$0xff]
        %v2695 = vld [vmem:[#allocation11 + $0x398] sm:$0xff]
        %v2696 = vld [vmem:[#allocation11 + $0x3a0] sm:$0xff]
        %v2697 = vld [vmem:[#allocation11 + $0x3a8] sm:$0xff]
        %v2698 = vld [vmem:[#allocation11 + $0x3b0] sm:$0xff]
        %v2699 = vld [vmem:[#allocation11 + $0x3b8] sm:$0xff]
        %v2700 = vld [vmem:[#allocation11 + $0x3c0] sm:$0xff]
        %v2701 = vld [vmem:[#allocation11 + $0x3c8] sm:$0xff]
        %v2702 = vld [vmem:[#allocation11 + $0x3d0] sm:$0xff]
        %v2703 = vld [vmem:[#allocation11 + $0x3d8] sm:$0xff]
        %v2704 = vld [vmem:[#allocation11 + $0x3e0] sm:$0xff]
        %v2705 = vld [vmem:[#allocation11 + $0x3e8] sm:$0xff]
        %v2706 = vld [vmem:[#allocation11 + $0x3f0] sm:$0xff]
        %v2707 = vld [vmem:[#allocation11 + $0x3f8] sm:$0xff]
        %v2708 = vld [vmem:[#allocation13] sm:$0x3]
        %v2710 = vlaneseq
        %v2711 = vshrl.u32 %v2710, 7
        %v2712 = vsub.s32 0, %v2711
        %v2713 = vrot.slane %v2708, %v2712
        %v2714 = vlaneseq
        %v2715 = vshrl.u32 %v2714, 7
        %v2716 = vsub.s32 1, %v2715
        %v2717 = vrot.slane %v2708, %v2716
        %v2848 = vunpack.c.l.b16 %v2580
        %v2849 = vunpack.c.h.b16 %v2580
        %v2850 = vunpack.c.l.b16 %v2581
        %v2851 = vunpack.c.h.b16 %v2581
        %v2852 = vunpack.c.l.b16 %v2582
        %v2853 = vunpack.c.h.b16 %v2582
        %v2854 = vunpack.c.l.b16 %v2583
        %v2855 = vunpack.c.h.b16 %v2583
        %v2856 = vunpack.c.l.b16 %v2584
        %v2857 = vunpack.c.h.b16 %v2584
        %v2858 = vunpack.c.l.b16 %v2585
        %v2859 = vunpack.c.h.b16 %v2585
        %v2860 = vunpack.c.l.b16 %v2586
        %v2861 = vunpack.c.h.b16 %v2586
        %v2862 = vunpack.c.l.b16 %v2587
        %v2863 = vunpack.c.h.b16 %v2587
        %v2864 = vunpack.c.l.b16 %v2588
        %v2865 = vunpack.c.h.b16 %v2588
        %v2866 = vunpack.c.l.b16 %v2589
        %v2867 = vunpack.c.h.b16 %v2589
        %v2868 = vunpack.c.l.b16 %v2590
        %v2869 = vunpack.c.h.b16 %v2590
        %v2870 = vunpack.c.l.b16 %v2591
        %v2871 = vunpack.c.h.b16 %v2591
        %v2872 = vunpack.c.l.b16 %v2592
        %v2873 = vunpack.c.h.b16 %v2592
        %v2874 = vunpack.c.l.b16 %v2593
        %v2875 = vunpack.c.h.b16 %v2593
        %v2876 = vunpack.c.l.b16 %v2594
        %v2877 = vunpack.c.h.b16 %v2594
        %v2878 = vunpack.c.l.b16 %v2595
        %v2879 = vunpack.c.h.b16 %v2595
        %v2880 = vunpack.c.l.b16 %v2596
        %v2881 = vunpack.c.h.b16 %v2596
        %v2882 = vunpack.c.l.b16 %v2597
        %v2883 = vunpack.c.h.b16 %v2597
        %v2884 = vunpack.c.l.b16 %v2598
        %v2885 = vunpack.c.h.b16 %v2598
        %v2886 = vunpack.c.l.b16 %v2599
        %v2887 = vunpack.c.h.b16 %v2599
        %v2888 = vunpack.c.l.b16 %v2600
        %v2889 = vunpack.c.h.b16 %v2600
        %v2890 = vunpack.c.l.b16 %v2601
        %v2891 = vunpack.c.h.b16 %v2601
        %v2892 = vunpack.c.l.b16 %v2602
        %v2893 = vunpack.c.h.b16 %v2602
        %v2894 = vunpack.c.l.b16 %v2603
        %v2895 = vunpack.c.h.b16 %v2603
        %v2896 = vunpack.c.l.b16 %v2604
        %v2897 = vunpack.c.h.b16 %v2604
        %v2898 = vunpack.c.l.b16 %v2605
        %v2899 = vunpack.c.h.b16 %v2605
        %v2900 = vunpack.c.l.b16 %v2606
        %v2901 = vunpack.c.h.b16 %v2606
        %v2902 = vunpack.c.l.b16 %v2607
        %v2903 = vunpack.c.h.b16 %v2607
        %v2904 = vunpack.c.l.b16 %v2608
        %v2905 = vunpack.c.h.b16 %v2608
        %v2906 = vunpack.c.l.b16 %v2609
        %v2907 = vunpack.c.h.b16 %v2609
        %v2908 = vunpack.c.l.b16 %v2610
        %v2909 = vunpack.c.h.b16 %v2610
        %v2910 = vunpack.c.l.b16 %v2611
        %v2911 = vunpack.c.h.b16 %v2611
        %v2912 = vunpack.c.l.b16 %v2612
        %v2913 = vunpack.c.h.b16 %v2612
        %v2914 = vunpack.c.l.b16 %v2613
        %v2915 = vunpack.c.h.b16 %v2613
        %v2916 = vunpack.c.l.b16 %v2614
        %v2917 = vunpack.c.h.b16 %v2614
        %v2918 = vunpack.c.l.b16 %v2615
        %v2919 = vunpack.c.h.b16 %v2615
        %v2920 = vunpack.c.l.b16 %v2616
        %v2921 = vunpack.c.h.b16 %v2616
        %v2922 = vunpack.c.l.b16 %v2617
        %v2923 = vunpack.c.h.b16 %v2617
        %v2924 = vunpack.c.l.b16 %v2618
        %v2925 = vunpack.c.h.b16 %v2618
        %v2926 = vunpack.c.l.b16 %v2619
        %v2927 = vunpack.c.h.b16 %v2619
        %v2928 = vunpack.c.l.b16 %v2620
        %v2929 = vunpack.c.h.b16 %v2620
        %v2930 = vunpack.c.l.b16 %v2621
        %v2931 = vunpack.c.h.b16 %v2621
        %v2932 = vunpack.c.l.b16 %v2622
        %v2933 = vunpack.c.h.b16 %v2622
        %v2934 = vunpack.c.l.b16 %v2623
        %v2935 = vunpack.c.h.b16 %v2623
        %v2936 = vunpack.c.l.b16 %v2624
        %v2937 = vunpack.c.h.b16 %v2624
        %v2938 = vunpack.c.l.b16 %v2625
        %v2939 = vunpack.c.h.b16 %v2625
        %v2940 = vunpack.c.l.b16 %v2626
        %v2941 = vunpack.c.h.b16 %v2626
        %v2942 = vunpack.c.l.b16 %v2627
        %v2943 = vunpack.c.h.b16 %v2627
        %v2944 = vunpack.c.l.b16 %v2628
        %v2945 = vunpack.c.h.b16 %v2628
        %v2946 = vunpack.c.l.b16 %v2629
        %v2947 = vunpack.c.h.b16 %v2629
        %v2948 = vunpack.c.l.b16 %v2630
        %v2949 = vunpack.c.h.b16 %v2630
        %v2950 = vunpack.c.l.b16 %v2631
        %v2951 = vunpack.c.h.b16 %v2631
        %v2952 = vunpack.c.l.b16 %v2632
        %v2953 = vunpack.c.h.b16 %v2632
        %v2954 = vunpack.c.l.b16 %v2633
        %v2955 = vunpack.c.h.b16 %v2633
        %v2956 = vunpack.c.l.b16 %v2634
        %v2957 = vunpack.c.h.b16 %v2634
        %v2958 = vunpack.c.l.b16 %v2635
        %v2959 = vunpack.c.h.b16 %v2635
        %v2960 = vunpack.c.l.b16 %v2636
        %v2961 = vunpack.c.h.b16 %v2636
        %v2962 = vunpack.c.l.b16 %v2637
        %v2963 = vunpack.c.h.b16 %v2637
        %v2964 = vunpack.c.l.b16 %v2638
        %v2965 = vunpack.c.h.b16 %v2638
        %v2966 = vunpack.c.l.b16 %v2639
        %v2967 = vunpack.c.h.b16 %v2639
        %v2968 = vunpack.c.l.b16 %v2640
        %v2969 = vunpack.c.h.b16 %v2640
        %v2970 = vunpack.c.l.b16 %v2641
        %v2971 = vunpack.c.h.b16 %v2641
        %v2972 = vunpack.c.l.b16 %v2642
        %v2973 = vunpack.c.h.b16 %v2642
        %v2974 = vunpack.c.l.b16 %v2643
        %v2975 = vunpack.c.h.b16 %v2643
        %v2976 = vunpack.c.l.b16 %v2644
        %v2977 = vunpack.c.h.b16 %v2644
        %v2978 = vunpack.c.l.b16 %v2645
        %v2979 = vunpack.c.h.b16 %v2645
        %v2980 = vunpack.c.l.b16 %v2646
        %v2981 = vunpack.c.h.b16 %v2646
        %v2982 = vunpack.c.l.b16 %v2647
        %v2983 = vunpack.c.h.b16 %v2647
        %v2984 = vunpack.c.l.b16 %v2648
        %v2985 = vunpack.c.h.b16 %v2648
        %v2986 = vunpack.c.l.b16 %v2649
        %v2987 = vunpack.c.h.b16 %v2649
        %v2988 = vunpack.c.l.b16 %v2650
        %v2989 = vunpack.c.h.b16 %v2650
        %v2990 = vunpack.c.l.b16 %v2651
        %v2991 = vunpack.c.h.b16 %v2651
        %v2992 = vunpack.c.l.b16 %v2652
        %v2993 = vunpack.c.h.b16 %v2652
        %v2994 = vunpack.c.l.b16 %v2653
        %v2995 = vunpack.c.h.b16 %v2653
        %v2996 = vunpack.c.l.b16 %v2654
        %v2997 = vunpack.c.h.b16 %v2654
        %v2998 = vunpack.c.l.b16 %v2655
        %v2999 = vunpack.c.h.b16 %v2655
        %v3000 = vunpack.c.l.b16 %v2656
        %v3001 = vunpack.c.h.b16 %v2656
        %v3002 = vunpack.c.l.b16 %v2657
        %v3003 = vunpack.c.h.b16 %v2657
        %v3004 = vunpack.c.l.b16 %v2658
        %v3005 = vunpack.c.h.b16 %v2658
        %v3006 = vunpack.c.l.b16 %v2659
        %v3007 = vunpack.c.h.b16 %v2659
        %v3008 = vunpack.c.l.b16 %v2660
        %v3009 = vunpack.c.h.b16 %v2660
        %v3010 = vunpack.c.l.b16 %v2661
        %v3011 = vunpack.c.h.b16 %v2661
        %v3012 = vunpack.c.l.b16 %v2662
        %v3013 = vunpack.c.h.b16 %v2662
        %v3014 = vunpack.c.l.b16 %v2663
        %v3015 = vunpack.c.h.b16 %v2663
        %v3016 = vunpack.c.l.b16 %v2664
        %v3017 = vunpack.c.h.b16 %v2664
        %v3018 = vunpack.c.l.b16 %v2665
        %v3019 = vunpack.c.h.b16 %v2665
        %v3020 = vunpack.c.l.b16 %v2666
        %v3021 = vunpack.c.h.b16 %v2666
        %v3022 = vunpack.c.l.b16 %v2667
        %v3023 = vunpack.c.h.b16 %v2667
        %v3024 = vunpack.c.l.b16 %v2668
        %v3025 = vunpack.c.h.b16 %v2668
        %v3026 = vunpack.c.l.b16 %v2669
        %v3027 = vunpack.c.h.b16 %v2669
        %v3028 = vunpack.c.l.b16 %v2670
        %v3029 = vunpack.c.h.b16 %v2670
        %v3030 = vunpack.c.l.b16 %v2671
        %v3031 = vunpack.c.h.b16 %v2671
        %v3032 = vunpack.c.l.b16 %v2672
        %v3033 = vunpack.c.h.b16 %v2672
        %v3034 = vunpack.c.l.b16 %v2673
        %v3035 = vunpack.c.h.b16 %v2673
        %v3036 = vunpack.c.l.b16 %v2674
        %v3037 = vunpack.c.h.b16 %v2674
        %v3038 = vunpack.c.l.b16 %v2675
        %v3039 = vunpack.c.h.b16 %v2675
        %v3040 = vunpack.c.l.b16 %v2676
        %v3041 = vunpack.c.h.b16 %v2676
        %v3042 = vunpack.c.l.b16 %v2677
        %v3043 = vunpack.c.h.b16 %v2677
        %v3044 = vunpack.c.l.b16 %v2678
        %v3045 = vunpack.c.h.b16 %v2678
        %v3046 = vunpack.c.l.b16 %v2679
        %v3047 = vunpack.c.h.b16 %v2679
        %v3048 = vunpack.c.l.b16 %v2680
        %v3049 = vunpack.c.h.b16 %v2680
        %v3050 = vunpack.c.l.b16 %v2681
        %v3051 = vunpack.c.h.b16 %v2681
        %v3052 = vunpack.c.l.b16 %v2682
        %v3053 = vunpack.c.h.b16 %v2682
        %v3054 = vunpack.c.l.b16 %v2683
        %v3055 = vunpack.c.h.b16 %v2683
        %v3056 = vunpack.c.l.b16 %v2684
        %v3057 = vunpack.c.h.b16 %v2684
        %v3058 = vunpack.c.l.b16 %v2685
        %v3059 = vunpack.c.h.b16 %v2685
        %v3060 = vunpack.c.l.b16 %v2686
        %v3061 = vunpack.c.h.b16 %v2686
        %v3062 = vunpack.c.l.b16 %v2687
        %v3063 = vunpack.c.h.b16 %v2687
        %v3064 = vunpack.c.l.b16 %v2688
        %v3065 = vunpack.c.h.b16 %v2688
        %v3066 = vunpack.c.l.b16 %v2689
        %v3067 = vunpack.c.h.b16 %v2689
        %v3068 = vunpack.c.l.b16 %v2690
        %v3069 = vunpack.c.h.b16 %v2690
        %v3070 = vunpack.c.l.b16 %v2691
        %v3071 = vunpack.c.h.b16 %v2691
        %v3072 = vunpack.c.l.b16 %v2692
        %v3073 = vunpack.c.h.b16 %v2692
        %v3074 = vunpack.c.l.b16 %v2693
        %v3075 = vunpack.c.h.b16 %v2693
        %v3076 = vunpack.c.l.b16 %v2694
        %v3077 = vunpack.c.h.b16 %v2694
        %v3078 = vunpack.c.l.b16 %v2695
        %v3079 = vunpack.c.h.b16 %v2695
        %v3080 = vunpack.c.l.b16 %v2696
        %v3081 = vunpack.c.h.b16 %v2696
        %v3082 = vunpack.c.l.b16 %v2697
        %v3083 = vunpack.c.h.b16 %v2697
        %v3084 = vunpack.c.l.b16 %v2698
        %v3085 = vunpack.c.h.b16 %v2698
        %v3086 = vunpack.c.l.b16 %v2699
        %v3087 = vunpack.c.h.b16 %v2699
        %v3088 = vunpack.c.l.b16 %v2700
        %v3089 = vunpack.c.h.b16 %v2700
        %v3090 = vunpack.c.l.b16 %v2701
        %v3091 = vunpack.c.h.b16 %v2701
        %v3092 = vunpack.c.l.b16 %v2702
        %v3093 = vunpack.c.h.b16 %v2702
        %v3094 = vunpack.c.l.b16 %v2703
        %v3095 = vunpack.c.h.b16 %v2703
        %v3096 = vunpack.c.l.b16 %v2704
        %v3097 = vunpack.c.h.b16 %v2704
        %v3098 = vunpack.c.l.b16 %v2705
        %v3099 = vunpack.c.h.b16 %v2705
        %v3100 = vunpack.c.l.b16 %v2706
        %v3101 = vunpack.c.h.b16 %v2706
        %v3102 = vunpack.c.l.b16 %v2707
        %v3103 = vunpack.c.h.b16 %v2707
        %v3104 = vpack.c.b16 %v2850, %v2848
        %v3105 = vpack.c.b16 %v2851, %v2849
        %v3106 = vpack.c.b16 %v2854, %v2852
        %v3107 = vpack.c.b16 %v2855, %v2853
        %v3108 = vpack.c.b16 %v2858, %v2856
        %v3109 = vpack.c.b16 %v2859, %v2857
        %v3110 = vpack.c.b16 %v2862, %v2860
        %v3111 = vpack.c.b16 %v2863, %v2861
        %v3112 = vpack.c.b16 %v2866, %v2864
        %v3113 = vpack.c.b16 %v2867, %v2865
        %v3114 = vpack.c.b16 %v2870, %v2868
        %v3115 = vpack.c.b16 %v2871, %v2869
        %v3116 = vpack.c.b16 %v2874, %v2872
        %v3117 = vpack.c.b16 %v2875, %v2873
        %v3118 = vpack.c.b16 %v2878, %v2876
        %v3119 = vpack.c.b16 %v2879, %v2877
        %v3120 = vpack.c.b16 %v2882, %v2880
        %v3121 = vpack.c.b16 %v2883, %v2881
        %v3122 = vpack.c.b16 %v2886, %v2884
        %v3123 = vpack.c.b16 %v2887, %v2885
        %v3124 = vpack.c.b16 %v2890, %v2888
        %v3125 = vpack.c.b16 %v2891, %v2889
        %v3126 = vpack.c.b16 %v2894, %v2892
        %v3127 = vpack.c.b16 %v2895, %v2893
        %v3128 = vpack.c.b16 %v2898, %v2896
        %v3129 = vpack.c.b16 %v2899, %v2897
        %v3130 = vpack.c.b16 %v2902, %v2900
        %v3131 = vpack.c.b16 %v2903, %v2901
        %v3132 = vpack.c.b16 %v2906, %v2904
        %v3133 = vpack.c.b16 %v2907, %v2905
        %v3134 = vpack.c.b16 %v2910, %v2908
        %v3135 = vpack.c.b16 %v2911, %v2909
        %v3136 = vpack.c.b16 %v2914, %v2912
        %v3137 = vpack.c.b16 %v2915, %v2913
        %v3138 = vpack.c.b16 %v2918, %v2916
        %v3139 = vpack.c.b16 %v2919, %v2917
        %v3140 = vpack.c.b16 %v2922, %v2920
        %v3141 = vpack.c.b16 %v2923, %v2921
        %v3142 = vpack.c.b16 %v2926, %v2924
        %v3143 = vpack.c.b16 %v2927, %v2925
        %v3144 = vpack.c.b16 %v2930, %v2928
        %v3145 = vpack.c.b16 %v2931, %v2929
        %v3146 = vpack.c.b16 %v2934, %v2932
        %v3147 = vpack.c.b16 %v2935, %v2933
        %v3148 = vpack.c.b16 %v2938, %v2936
        %v3149 = vpack.c.b16 %v2939, %v2937
        %v3150 = vpack.c.b16 %v2942, %v2940
        %v3151 = vpack.c.b16 %v2943, %v2941
        %v3152 = vpack.c.b16 %v2946, %v2944
        %v3153 = vpack.c.b16 %v2947, %v2945
        %v3154 = vpack.c.b16 %v2950, %v2948
        %v3155 = vpack.c.b16 %v2951, %v2949
        %v3156 = vpack.c.b16 %v2954, %v2952
        %v3157 = vpack.c.b16 %v2955, %v2953
        %v3158 = vpack.c.b16 %v2958, %v2956
        %v3159 = vpack.c.b16 %v2959, %v2957
        %v3160 = vpack.c.b16 %v2962, %v2960
        %v3161 = vpack.c.b16 %v2963, %v2961
        %v3162 = vpack.c.b16 %v2966, %v2964
        %v3163 = vpack.c.b16 %v2967, %v2965
        %v3164 = vpack.c.b16 %v2970, %v2968
        %v3165 = vpack.c.b16 %v2971, %v2969
        %v3166 = vpack.c.b16 %v2974, %v2972
        %v3167 = vpack.c.b16 %v2975, %v2973
        %v3168 = vpack.c.b16 %v2978, %v2976
        %v3169 = vpack.c.b16 %v2979, %v2977
        %v3170 = vpack.c.b16 %v2982, %v2980
        %v3171 = vpack.c.b16 %v2983, %v2981
        %v3172 = vpack.c.b16 %v2986, %v2984
        %v3173 = vpack.c.b16 %v2987, %v2985
        %v3174 = vpack.c.b16 %v2990, %v2988
        %v3175 = vpack.c.b16 %v2991, %v2989
        %v3176 = vpack.c.b16 %v2994, %v2992
        %v3177 = vpack.c.b16 %v2995, %v2993
        %v3178 = vpack.c.b16 %v2998, %v2996
        %v3179 = vpack.c.b16 %v2999, %v2997
        %v3180 = vpack.c.b16 %v3002, %v3000
        %v3181 = vpack.c.b16 %v3003, %v3001
        %v3182 = vpack.c.b16 %v3006, %v3004
        %v3183 = vpack.c.b16 %v3007, %v3005
        %v3184 = vpack.c.b16 %v3010, %v3008
        %v3185 = vpack.c.b16 %v3011, %v3009
        %v3186 = vpack.c.b16 %v3014, %v3012
        %v3187 = vpack.c.b16 %v3015, %v3013
        %v3188 = vpack.c.b16 %v3018, %v3016
        %v3189 = vpack.c.b16 %v3019, %v3017
        %v3190 = vpack.c.b16 %v3022, %v3020
        %v3191 = vpack.c.b16 %v3023, %v3021
        %v3192 = vpack.c.b16 %v3026, %v3024
        %v3193 = vpack.c.b16 %v3027, %v3025
        %v3194 = vpack.c.b16 %v3030, %v3028
        %v3195 = vpack.c.b16 %v3031, %v3029
        %v3196 = vpack.c.b16 %v3034, %v3032
        %v3197 = vpack.c.b16 %v3035, %v3033
        %v3198 = vpack.c.b16 %v3038, %v3036
        %v3199 = vpack.c.b16 %v3039, %v3037
        %v3200 = vpack.c.b16 %v3042, %v3040
        %v3201 = vpack.c.b16 %v3043, %v3041
        %v3202 = vpack.c.b16 %v3046, %v3044
        %v3203 = vpack.c.b16 %v3047, %v3045
        %v3204 = vpack.c.b16 %v3050, %v3048
        %v3205 = vpack.c.b16 %v3051, %v3049
        %v3206 = vpack.c.b16 %v3054, %v3052
        %v3207 = vpack.c.b16 %v3055, %v3053
        %v3208 = vpack.c.b16 %v3058, %v3056
        %v3209 = vpack.c.b16 %v3059, %v3057
        %v3210 = vpack.c.b16 %v3062, %v3060
        %v3211 = vpack.c.b16 %v3063, %v3061
        %v3212 = vpack.c.b16 %v3066, %v3064
        %v3213 = vpack.c.b16 %v3067, %v3065
        %v3214 = vpack.c.b16 %v3070, %v3068
        %v3215 = vpack.c.b16 %v3071, %v3069
        %v3216 = vpack.c.b16 %v3074, %v3072
        %v3217 = vpack.c.b16 %v3075, %v3073
        %v3218 = vpack.c.b16 %v3078, %v3076
        %v3219 = vpack.c.b16 %v3079, %v3077
        %v3220 = vpack.c.b16 %v3082, %v3080
        %v3221 = vpack.c.b16 %v3083, %v3081
        %v3222 = vpack.c.b16 %v3086, %v3084
        %v3223 = vpack.c.b16 %v3087, %v3085
        %v3224 = vpack.c.b16 %v3090, %v3088
        %v3225 = vpack.c.b16 %v3091, %v3089
        %v3226 = vpack.c.b16 %v3094, %v3092
        %v3227 = vpack.c.b16 %v3095, %v3093
        %v3228 = vpack.c.b16 %v3098, %v3096
        %v3229 = vpack.c.b16 %v3099, %v3097
        %v3230 = vpack.c.b16 %v3102, %v3100
        %v3231 = vpack.c.b16 %v3103, %v3101
        %3360 = vmatprep.subr.bf16.mxu0 %v3105
        %3361 = vmatpush1.bf16.msra.mxu0 %v3104
        %3362 = vmatprep.subr.bf16.mxu0 %v3107
        %3363 = vmatpush1.bf16.msra.mxu0 %v3106
        %3364 = vmatprep.subr.bf16.mxu0 %v3109
        %3365 = vmatpush1.bf16.msra.mxu0 %v3108
        %3366 = vmatprep.subr.bf16.mxu0 %v3111
        %3367 = vmatpush1.bf16.msra.mxu0 %v3110
        %3368 = vmatprep.subr.bf16.mxu0 %v3113
        %3369 = vmatpush1.bf16.msra.mxu0 %v3112
        %3370 = vmatprep.subr.bf16.mxu0 %v3115
        %3371 = vmatpush1.bf16.msra.mxu0 %v3114
        %3372 = vmatprep.subr.bf16.mxu0 %v3117
        %3373 = vmatpush1.bf16.msra.mxu0 %v3116
        %3374 = vmatprep.subr.bf16.mxu0 %v3119
        %3375 = vmatpush1.bf16.msra.mxu0 %v3118
        %3376 = vmatprep.subr.bf16.mxu0 %v3121
        %3377 = vmatpush1.bf16.msra.mxu0 %v3120
        %3378 = vmatprep.subr.bf16.mxu0 %v3123
        %3379 = vmatpush1.bf16.msra.mxu0 %v3122
        %3380 = vmatprep.subr.bf16.mxu0 %v3125
        %3381 = vmatpush1.bf16.msra.mxu0 %v3124
        %3382 = vmatprep.subr.bf16.mxu0 %v3127
        %3383 = vmatpush1.bf16.msra.mxu0 %v3126
        %3384 = vmatprep.subr.bf16.mxu0 %v3129
        %3385 = vmatpush1.bf16.msra.mxu0 %v3128
        %3386 = vmatprep.subr.bf16.mxu0 %v3131
        %3387 = vmatpush1.bf16.msra.mxu0 %v3130
        %3388 = vmatprep.subr.bf16.mxu0 %v3133
        %3389 = vmatpush1.bf16.msra.mxu0 %v3132
        %3390 = vmatprep.subr.bf16.mxu0 %v3135
        %3391 = vmatpush1.bf16.msra.mxu0 %v3134
        %3392 = vmatprep.mubr.bf16.mxu0 %v2411
        %3393 = vmatmul.mubr.bf16.gmra.mrb[0].mxu0 %v2410
        %v3394 = vpop.f32.mrb[0].mxu0
        %v3395 = vadd.f32 %v2713, %v3394
        %v3396 = vpop.f32.mrb[0].mxu0
        %v3397 = vadd.f32 %v2717, %v3396
        %v3398 = vpop.f32.mrb[0].mxu0
        %v3399 = vadd.f32 %v2713, %v3398
        %v3400 = vpop.f32.mrb[0].mxu0
        %v3401 = vadd.f32 %v2717, %v3400
        %3402 = vdwg.mxu0
        %3403 = vmatprep.subr.bf16.mxu0 %v3137
        %3404 = vmatpush1.bf16.msra.mxu0 %v3136
        %3405 = vmatprep.subr.bf16.mxu0 %v3139
        %3406 = vmatpush1.bf16.msra.mxu0 %v3138
        %3407 = vmatprep.subr.bf16.mxu0 %v3141
        %3408 = vmatpush1.bf16.msra.mxu0 %v3140
        %3409 = vmatprep.subr.bf16.mxu0 %v3143
        %3410 = vmatpush1.bf16.msra.mxu0 %v3142
        %3411 = vmatprep.subr.bf16.mxu0 %v3145
        %3412 = vmatpush1.bf16.msra.mxu0 %v3144
        %3413 = vmatprep.subr.bf16.mxu0 %v3147
        %3414 = vmatpush1.bf16.msra.mxu0 %v3146
        %3415 = vmatprep.subr.bf16.mxu0 %v3149
        %3416 = vmatpush1.bf16.msra.mxu0 %v3148
        %3417 = vmatprep.subr.bf16.mxu0 %v3151
        %3418 = vmatpush1.bf16.msra.mxu0 %v3150
        %3419 = vmatprep.subr.bf16.mxu0 %v3153
        %3420 = vmatpush1.bf16.msra.mxu0 %v3152
        %3421 = vmatprep.subr.bf16.mxu0 %v3155
        %3422 = vmatpush1.bf16.msra.mxu0 %v3154
        %3423 = vmatprep.subr.bf16.mxu0 %v3157
        %3424 = vmatpush1.bf16.msra.mxu0 %v3156
        %3425 = vmatprep.subr.bf16.mxu0 %v3159
        %3426 = vmatpush1.bf16.msra.mxu0 %v3158
        %3427 = vmatprep.subr.bf16.mxu0 %v3161
        %3428 = vmatpush1.bf16.msra.mxu0 %v3160
        %3429 = vmatprep.subr.bf16.mxu0 %v3163
        %3430 = vmatpush1.bf16.msra.mxu0 %v3162
        %3431 = vmatprep.subr.bf16.mxu0 %v3165
        %3432 = vmatpush1.bf16.msra.mxu0 %v3164
        %3433 = vmatprep.subr.bf16.mxu0 %v3167
        %3434 = vmatpush1.bf16.msra.mxu0 %v3166
        %3435 = vmatprep.mubr.bf16.mxu0 %v2467
        %3436 = vmatmul.mubr.bf16.gmra.mrb[0].mxu0 %v2466
        %v3437 = vpop.f32.mrb[0].mxu0
        %v3438 = vadd.f32 %v3395, %v3437
        %v3439 = vpop.f32.mrb[0].mxu0
        %v3440 = vadd.f32 %v3397, %v3439
        %v3441 = vpop.f32.mrb[0].mxu0
        %v3442 = vadd.f32 %v3399, %v3441
        %v3443 = vpop.f32.mrb[0].mxu0
        %v3444 = vadd.f32 %v3401, %v3443
        %3445 = vdwg.mxu0
        %3446 = vmatprep.subr.bf16.mxu0 %v3169
        %3447 = vmatpush1.bf16.msra.mxu0 %v3168
        %3448 = vmatprep.subr.bf16.mxu0 %v3171
        %3449 = vmatpush1.bf16.msra.mxu0 %v3170
        %3450 = vmatprep.subr.bf16.mxu0 %v3173
        %3451 = vmatpush1.bf16.msra.mxu0 %v3172
        %3452 = vmatprep.subr.bf16.mxu0 %v3175
        %3453 = vmatpush1.bf16.msra.mxu0 %v3174
        %3454 = vmatprep.subr.bf16.mxu0 %v3177
        %3455 = vmatpush1.bf16.msra.mxu0 %v3176
        %3456 = vmatprep.subr.bf16.mxu0 %v3179
        %3457 = vmatpush1.bf16.msra.mxu0 %v3178
        %3458 = vmatprep.subr.bf16.mxu0 %v3181
        %3459 = vmatpush1.bf16.msra.mxu0 %v3180
        %3460 = vmatprep.subr.bf16.mxu0 %v3183
        %3461 = vmatpush1.bf16.msra.mxu0 %v3182
        %3462 = vmatprep.subr.bf16.mxu0 %v3185
        %3463 = vmatpush1.bf16.msra.mxu0 %v3184
        %3464 = vmatprep.subr.bf16.mxu0 %v3187
        %3465 = vmatpush1.bf16.msra.mxu0 %v3186
        %3466 = vmatprep.subr.bf16.mxu0 %v3189
        %3467 = vmatpush1.bf16.msra.mxu0 %v3188
        %3468 = vmatprep.subr.bf16.mxu0 %v3191
        %3469 = vmatpush1.bf16.msra.mxu0 %v3190
        %3470 = vmatprep.subr.bf16.mxu0 %v3193
        %3471 = vmatpush1.bf16.msra.mxu0 %v3192
        %3472 = vmatprep.subr.bf16.mxu0 %v3195
        %3473 = vmatpush1.bf16.msra.mxu0 %v3194
        %3474 = vmatprep.subr.bf16.mxu0 %v3197
        %3475 = vmatpush1.bf16.msra.mxu0 %v3196
        %3476 = vmatprep.subr.bf16.mxu0 %v3199
        %3477 = vmatpush1.bf16.msra.mxu0 %v3198
        %3478 = vmatprep.mubr.bf16.mxu0 %v2523
        %3479 = vmatmul.mubr.bf16.gmra.mrb[0].mxu0 %v2522
        %v3480 = vpop.f32.mrb[0].mxu0
        %v3481 = vadd.f32 %v3438, %v3480
        %v3482 = vpop.f32.mrb[0].mxu0
        %v3483 = vadd.f32 %v3440, %v3482
        %v3484 = vpop.f32.mrb[0].mxu0
        %v3485 = vadd.f32 %v3442, %v3484
        %v3486 = vpop.f32.mrb[0].mxu0
        %v3487 = vadd.f32 %v3444, %v3486
        %3488 = vdwg.mxu0
        %3489 = vmatprep.subr.bf16.mxu0 %v3201
        %3490 = vmatpush1.bf16.msra.mxu0 %v3200
        %3491 = vmatprep.subr.bf16.mxu0 %v3203
        %3492 = vmatpush1.bf16.msra.mxu0 %v3202
        %3493 = vmatprep.subr.bf16.mxu0 %v3205
        %3494 = vmatpush1.bf16.msra.mxu0 %v3204
        %3495 = vmatprep.subr.bf16.mxu0 %v3207
        %3496 = vmatpush1.bf16.msra.mxu0 %v3206
        %3497 = vmatprep.subr.bf16.mxu0 %v3209
        %3498 = vmatpush1.bf16.msra.mxu0 %v3208
        %3499 = vmatprep.subr.bf16.mxu0 %v3211
        %3500 = vmatpush1.bf16.msra.mxu0 %v3210
        %3501 = vmatprep.subr.bf16.mxu0 %v3213
        %3502 = vmatpush1.bf16.msra.mxu0 %v3212
        %3503 = vmatprep.subr.bf16.mxu0 %v3215
        %3504 = vmatpush1.bf16.msra.mxu0 %v3214
        %3505 = vmatprep.subr.bf16.mxu0 %v3217
        %3506 = vmatpush1.bf16.msra.mxu0 %v3216
        %3507 = vmatprep.subr.bf16.mxu0 %v3219
        %3508 = vmatpush1.bf16.msra.mxu0 %v3218
        %3509 = vmatprep.subr.bf16.mxu0 %v3221
        %3510 = vmatpush1.bf16.msra.mxu0 %v3220
        %3511 = vmatprep.subr.bf16.mxu0 %v3223
        %3512 = vmatpush1.bf16.msra.mxu0 %v3222
        %3513 = vmatprep.subr.bf16.mxu0 %v3225
        %3514 = vmatpush1.bf16.msra.mxu0 %v3224
        %3515 = vmatprep.subr.bf16.mxu0 %v3227
        %3516 = vmatpush1.bf16.msra.mxu0 %v3226
        %3517 = vmatprep.subr.bf16.mxu0 %v3229
        %3518 = vmatpush1.bf16.msra.mxu0 %v3228
        %3519 = vmatprep.subr.bf16.mxu0 %v3231
        %3520 = vmatpush1.bf16.msra.mxu0 %v3230
        %3521 = vmatprep.mubr.bf16.mxu0 %v2579
        %3522 = vmatmul.mubr.bf16.gmra.mrb[0].mxu0 %v2578
        %v3523 = vpop.f32.mrb[0].mxu0
        %v3524 = vadd.f32 %v3481, %v3523
        %v3525 = vpop.f32.mrb[0].mxu0
        %v3526 = vadd.f32 %v3483, %v3525
        %v3527 = vpop.f32.mrb[0].mxu0
        %v3528 = vadd.f32 %v3485, %v3527
        %v3529 = vpop.f32.mrb[0].mxu0
        %v3530 = vadd.f32 %v3487, %v3529
        %3531 = vdwg.mxu0
        %v3532 = vadd.f32 %v3524, %v3528
        %v3533 = vrot.slane %v3532, 4
        %v3534 = vadd.f32 %v3532, %v3533
        %v3535 = vrot.slane %v3534, 2
        %v3536 = vadd.f32 %v3534, %v3535
        %v3537 = vrot.slane %v3536, 1
        %v3538 = vadd.f32 %v3536, %v3537
        %v3539 = vadd.f32 %v3526, %v3530
        %v3540 = vrot.slane %v3539, 4
        %v3541 = vadd.f32 %v3539, %v3540
        %v3542 = vrot.slane %v3541, 2
        %v3543 = vadd.f32 %v3541, %v3542
        %v3544 = vrot.slane %v3543, 1
        %v3545 = vadd.f32 %v3543, %v3544
        %v3546 = vmul.f32 %v3524, %v3524
        %v3547 = vmul.f32 %v3526, %v3526
        %v3548 = vmul.f32 %v3528, %v3528
        %v3549 = vmul.f32 %v3530, %v3530
        %v3550 = vadd.f32 %v3546, %v3548
        %v3551 = vrot.slane %v3550, 4
        %v3552 = vadd.f32 %v3550, %v3551
        %v3553 = vrot.slane %v3552, 2
        %v3554 = vadd.f32 %v3552, %v3553
        %v3555 = vrot.slane %v3554, 1
        %v3556 = vadd.f32 %v3554, %v3555
        %v3557 = vadd.f32 %v3547, %v3549
        %v3558 = vrot.slane %v3557, 4
        %v3559 = vadd.f32 %v3557, %v3558
        %v3560 = vrot.slane %v3559, 2
        %v3561 = vadd.f32 %v3559, %v3560
        %v3562 = vrot.slane %v3561, 1
        %v3563 = vadd.f32 %v3561, %v3562
        %v3564 = vld [vmem:[%s7] sm:$0xff]
        %v3565 = vld [vmem:[%s7 + $0x8] sm:$0xff]
        %v3566 = vld [vmem:[%s7 + $0x10] sm:$0xff]
        %v3567 = vld [vmem:[%s7 + $0x18] sm:$0xff]
        %v3568 = vld [vmem:[%s7 + $0x20] sm:$0xff]
        %v3569 = vld [vmem:[%s7 + $0x28] sm:$0xff]
        %v3570 = vld [vmem:[%s7 + $0x30] sm:$0xff]
        %v3571 = vld [vmem:[%s7 + $0x38] sm:$0xff]
        %v3572 = vld [vmem:[%s7 + $0x40] sm:$0xff]
        %v3573 = vld [vmem:[%s7 + $0x48] sm:$0xff]
        %v3574 = vld [vmem:[%s7 + $0x50] sm:$0xff]
        %v3575 = vld [vmem:[%s7 + $0x58] sm:$0xff]
        %v3576 = vld [vmem:[%s7 + $0x60] sm:$0xff]
        %v3577 = vld [vmem:[%s7 + $0x68] sm:$0xff]
        %v3578 = vld [vmem:[%s7 + $0x70] sm:$0xff]
        %v3579 = vld [vmem:[%s7 + $0x78] sm:$0xff]
        %v3580 = vld [vmem:[%s7 + $0x80] sm:$0xff]
        %v3581 = vld [vmem:[%s7 + $0x88] sm:$0xff]
        %v3582 = vld [vmem:[%s7 + $0x90] sm:$0xff]
        %v3583 = vld [vmem:[%s7 + $0x98] sm:$0xff]
        %v3584 = vld [vmem:[%s7 + $0xa0] sm:$0xff]
        %v3585 = vld [vmem:[%s7 + $0xa8] sm:$0xff]
        %v3586 = vld [vmem:[%s7 + $0xb0] sm:$0xff]
        %v3587 = vld [vmem:[%s7 + $0xb8] sm:$0xff]
        %v3588 = vld [vmem:[%s7 + $0xc0] sm:$0xff]
        %v3589 = vld [vmem:[%s7 + $0xc8] sm:$0xff]
        %v3590 = vld [vmem:[%s7 + $0xd0] sm:$0xff]
        %v3591 = vld [vmem:[%s7 + $0xd8] sm:$0xff]
        %v3592 = vld [vmem:[%s7 + $0xe0] sm:$0xff]
        %v3593 = vld [vmem:[%s7 + $0xe8] sm:$0xff]
        %v3594 = vld [vmem:[%s7 + $0xf0] sm:$0xff]
        %v3595 = vld [vmem:[%s7 + $0xf8] sm:$0xff]
        %v3596 = vld [vmem:[%s7 + $0x100] sm:$0xff]
        %v3597 = vld [vmem:[%s7 + $0x108] sm:$0xff]
        %v3598 = vld [vmem:[%s7 + $0x110] sm:$0xff]
        %v3599 = vld [vmem:[%s7 + $0x118] sm:$0xff]
        %v3600 = vld [vmem:[%s7 + $0x120] sm:$0xff]
        %v3601 = vld [vmem:[%s7 + $0x128] sm:$0xff]
        %v3602 = vld [vmem:[%s7 + $0x130] sm:$0xff]
        %v3603 = vld [vmem:[%s7 + $0x138] sm:$0xff]
        %v3604 = vld [vmem:[%s7 + $0x140] sm:$0xff]
        %v3605 = vld [vmem:[%s7 + $0x148] sm:$0xff]
        %v3606 = vld [vmem:[%s7 + $0x150] sm:$0xff]
        %v3607 = vld [vmem:[%s7 + $0x158] sm:$0xff]
        %v3608 = vld [vmem:[%s7 + $0x160] sm:$0xff]
        %v3609 = vld [vmem:[%s7 + $0x168] sm:$0xff]
        %v3610 = vld [vmem:[%s7 + $0x170] sm:$0xff]
        %v3611 = vld [vmem:[%s7 + $0x178] sm:$0xff]
        %v3612 = vld [vmem:[%s7 + $0x180] sm:$0xff]
        %v3613 = vld [vmem:[%s7 + $0x188] sm:$0xff]
        %v3614 = vld [vmem:[%s7 + $0x190] sm:$0xff]
        %v3615 = vld [vmem:[%s7 + $0x198] sm:$0xff]
        %v3616 = vld [vmem:[%s7 + $0x1a0] sm:$0xff]
        %v3617 = vld [vmem:[%s7 + $0x1a8] sm:$0xff]
        %v3618 = vld [vmem:[%s7 + $0x1b0] sm:$0xff]
        %v3619 = vld [vmem:[%s7 + $0x1b8] sm:$0xff]
        %v3620 = vld [vmem:[%s7 + $0x1c0] sm:$0xff]
        %v3621 = vld [vmem:[%s7 + $0x1c8] sm:$0xff]
        %v3622 = vld [vmem:[%s7 + $0x1d0] sm:$0xff]
        %v3623 = vld [vmem:[%s7 + $0x1d8] sm:$0xff]
        %v3624 = vld [vmem:[%s7 + $0x1e0] sm:$0xff]
        %v3625 = vld [vmem:[%s7 + $0x1e8] sm:$0xff]
        %v3626 = vld [vmem:[%s7 + $0x1f0] sm:$0xff]
        %v3627 = vld [vmem:[%s7 + $0x1f8] sm:$0xff]
        %3628 = vmatprep.subr.mxu0 %v3565
        %3629 = vmatpush1.msra.mxu0 %v3564
        %3630 = vmatprep.subr.mxu0 %v3567
        %3631 = vmatpush1.msra.mxu0 %v3566
        %3632 = vmatprep.subr.mxu0 %v3569
        %3633 = vmatpush1.msra.mxu0 %v3568
        %3634 = vmatprep.subr.mxu0 %v3571
        %3635 = vmatpush1.msra.mxu0 %v3570
        %3636 = vmatprep.subr.mxu0 %v3573
        %3637 = vmatpush1.msra.mxu0 %v3572
        %3638 = vmatprep.subr.mxu0 %v3575
        %3639 = vmatpush1.msra.mxu0 %v3574
        %3640 = vmatprep.subr.mxu0 %v3577
        %3641 = vmatpush1.msra.mxu0 %v3576
        %3642 = vmatprep.subr.mxu0 %v3579
        %3643 = vmatpush1.msra.mxu0 %v3578
        %3644 = vmatprep.subr.mxu0 %v3581
        %3645 = vmatpush1.msra.mxu0 %v3580
        %3646 = vmatprep.subr.mxu0 %v3583
        %3647 = vmatpush1.msra.mxu0 %v3582
        %3648 = vmatprep.subr.mxu0 %v3585
        %3649 = vmatpush1.msra.mxu0 %v3584
        %3650 = vmatprep.subr.mxu0 %v3587
        %3651 = vmatpush1.msra.mxu0 %v3586
        %3652 = vmatprep.subr.mxu0 %v3589
        %3653 = vmatpush1.msra.mxu0 %v3588
        %3654 = vmatprep.subr.mxu0 %v3591
        %3655 = vmatpush1.msra.mxu0 %v3590
        %3656 = vmatprep.subr.mxu0 %v3593
        %3657 = vmatpush1.msra.mxu0 %v3592
        %3658 = vmatprep.subr.mxu0 %v3595
        %3659 = vmatpush1.msra.mxu0 %v3594
        %3660 = vmatprep.subr.mxu0 %v3597
        %3661 = vmatpush1.msra.mxu0 %v3596
        %3662 = vmatprep.subr.mxu0 %v3599
        %3663 = vmatpush1.msra.mxu0 %v3598
        %3664 = vmatprep.subr.mxu0 %v3601
        %3665 = vmatpush1.msra.mxu0 %v3600
        %3666 = vmatprep.subr.mxu0 %v3603
        %3667 = vmatpush1.msra.mxu0 %v3602
        %3668 = vmatprep.subr.mxu0 %v3605
        %3669 = vmatpush1.msra.mxu0 %v3604
        %3670 = vmatprep.subr.mxu0 %v3607
        %3671 = vmatpush1.msra.mxu0 %v3606
        %3672 = vmatprep.subr.mxu0 %v3609
        %3673 = vmatpush1.msra.mxu0 %v3608
        %3674 = vmatprep.subr.mxu0 %v3611
        %3675 = vmatpush1.msra.mxu0 %v3610
        %3676 = vmatprep.subr.mxu0 %v3613
        %3677 = vmatpush1.msra.mxu0 %v3612
        %3678 = vmatprep.subr.mxu0 %v3615
        %3679 = vmatpush1.msra.mxu0 %v3614
        %3680 = vmatprep.subr.mxu0 %v3617
        %3681 = vmatpush1.msra.mxu0 %v3616
        %3682 = vmatprep.subr.mxu0 %v3619
        %3683 = vmatpush1.msra.mxu0 %v3618
        %3684 = vmatprep.subr.mxu0 %v3621
        %3685 = vmatpush1.msra.mxu0 %v3620
        %3686 = vmatprep.subr.mxu0 %v3623
        %3687 = vmatpush1.msra.mxu0 %v3622
        %3688 = vmatprep.subr.mxu0 %v3625
        %3689 = vmatpush1.msra.mxu0 %v3624
        %3690 = vmatprep.subr.mxu0 %v3627
        %3691 = vmatpush1.msra.mxu0 %v3626
        %3692 = vmatprep.mubr.f32.mxu0 %v3545
        %3693 = vmatmul.mubr.f32.gmra.mrb[0].mxu0 %v3538
        %v3694 = vpop.f32.mrb[0].mxu0
        %v3695 = vadd.f32 0.0, %v3694
        %v3696 = vpop.f32.mrb[0].mxu0
        %v3697 = vadd.f32 0.0, %v3696
        %3698 = vdwg.mxu0
        %3699 = vmatprep.subr.mxu0 %v3565
        %3700 = vmatpush1.msra.mxu0 %v3564
        %3701 = vmatprep.subr.mxu0 %v3567
        %3702 = vmatpush1.msra.mxu0 %v3566
        %3703 = vmatprep.subr.mxu0 %v3569
        %3704 = vmatpush1.msra.mxu0 %v3568
        %3705 = vmatprep.subr.mxu0 %v3571
        %3706 = vmatpush1.msra.mxu0 %v3570
        %3707 = vmatprep.subr.mxu0 %v3573
        %3708 = vmatpush1.msra.mxu0 %v3572
        %3709 = vmatprep.subr.mxu0 %v3575
        %3710 = vmatpush1.msra.mxu0 %v3574
        %3711 = vmatprep.subr.mxu0 %v3577
        %3712 = vmatpush1.msra.mxu0 %v3576
        %3713 = vmatprep.subr.mxu0 %v3579
        %3714 = vmatpush1.msra.mxu0 %v3578
        %3715 = vmatprep.subr.mxu0 %v3581
        %3716 = vmatpush1.msra.mxu0 %v3580
        %3717 = vmatprep.subr.mxu0 %v3583
        %3718 = vmatpush1.msra.mxu0 %v3582
        %3719 = vmatprep.subr.mxu0 %v3585
        %3720 = vmatpush1.msra.mxu0 %v3584
        %3721 = vmatprep.subr.mxu0 %v3587
        %3722 = vmatpush1.msra.mxu0 %v3586
        %3723 = vmatprep.subr.mxu0 %v3589
        %3724 = vmatpush1.msra.mxu0 %v3588
        %3725 = vmatprep.subr.mxu0 %v3591
        %3726 = vmatpush1.msra.mxu0 %v3590
        %3727 = vmatprep.subr.mxu0 %v3593
        %3728 = vmatpush1.msra.mxu0 %v3592
        %3729 = vmatprep.subr.mxu0 %v3595
        %3730 = vmatpush1.msra.mxu0 %v3594
        %3731 = vmatprep.subr.mxu0 %v3597
        %3732 = vmatpush1.msra.mxu0 %v3596
        %3733 = vmatprep.subr.mxu0 %v3599
        %3734 = vmatpush1.msra.mxu0 %v3598
        %3735 = vmatprep.subr.mxu0 %v3601
        %3736 = vmatpush1.msra.mxu0 %v3600
        %3737 = vmatprep.subr.mxu0 %v3603
        %3738 = vmatpush1.msra.mxu0 %v3602
        %3739 = vmatprep.subr.mxu0 %v3605
        %3740 = vmatpush1.msra.mxu0 %v3604
        %3741 = vmatprep.subr.mxu0 %v3607
        %3742 = vmatpush1.msra.mxu0 %v3606
        %3743 = vmatprep.subr.mxu0 %v3609
        %3744 = vmatpush1.msra.mxu0 %v3608
        %3745 = vmatprep.subr.mxu0 %v3611
        %3746 = vmatpush1.msra.mxu0 %v3610
        %3747 = vmatprep.subr.mxu0 %v3613
        %3748 = vmatpush1.msra.mxu0 %v3612
        %3749 = vmatprep.subr.mxu0 %v3615
        %3750 = vmatpush1.msra.mxu0 %v3614
        %3751 = vmatprep.subr.mxu0 %v3617
        %3752 = vmatpush1.msra.mxu0 %v3616
        %3753 = vmatprep.subr.mxu0 %v3619
        %3754 = vmatpush1.msra.mxu0 %v3618
        %3755 = vmatprep.subr.mxu0 %v3621
        %3756 = vmatpush1.msra.mxu0 %v3620
        %3757 = vmatprep.subr.mxu0 %v3623
        %3758 = vmatpush1.msra.mxu0 %v3622
        %3759 = vmatprep.subr.mxu0 %v3625
        %3760 = vmatpush1.msra.mxu0 %v3624
        %3761 = vmatprep.subr.mxu0 %v3627
        %3762 = vmatpush1.msra.mxu0 %v3626
        %3763 = vmatprep.mubr.f32.mxu0 %v3563
        %3764 = vmatmul.mubr.f32.gmra.mrb[0].mxu0 %v3556
        %v3765 = vpop.f32.mrb[0].mxu0
        %v3766 = vadd.f32 0.0, %v3765
        %v3767 = vpop.f32.mrb[0].mxu0
        %v3768 = vadd.f32 0.0, %v3767
        %3769 = vdwg.mxu0
        %v3770 = vmul.f32 %v3695, %v3695
        %v3771 = vmul.f32 %v3697, %v3697
        %v3772 = vsub.f32 %v3766, %v3770
        %v3773 = vsub.f32 %v3768, %v3771
        %v3774 = vlaneseq
        %v3775 = vshrl.u32 %v3774, 7
        %v3776 = vsub.s32 0, %v3775
        %v3777 = vrot.slane %v3695, %v3776
        %v3778 = vlaneseq
        %v3779 = vshrl.u32 %v3778, 7
        %v3780 = vsub.s32 0, %v3779
        %v3781 = vrot.slane %v3697, %v3780
        %v3782 = vsub.f32 %v3524, %v3777
        %v3783 = vsub.f32 %v3526, %v3781
        %v3784 = vsub.f32 %v3528, %v3777
        %v3785 = vsub.f32 %v3530, %v3781
        %v3786 = vadd.f32 %v3772, 1e-05
        %v3787 = vadd.f32 %v3773, 1e-05
        %v3788 = vrsqrt.pop %v3786
        %v3789 = vrsqrt.pop %v3787
        %v3790 = vlaneseq
        %v3791 = vshrl.u32 %v3790, 7
        %v3792 = vsub.s32 0, %v3791
        %v3793 = vrot.slane %v3788, %v3792
        %v3794 = vlaneseq
        %v3795 = vshrl.u32 %v3794, 7
        %v3796 = vsub.s32 0, %v3795
        %v3797 = vrot.slane %v3789, %v3796
        %v3798 = vmul.f32 %v3782, %v3793
        %v3799 = vmul.f32 %v3783, %v3797
        %v3800 = vmul.f32 %v3784, %v3793
        %v3801 = vmul.f32 %v3785, %v3797
        %vm3802 = vcmp.ge.f32.partialorder %v3798, 0.0
        %vm3803 = vcmp.ge.f32.partialorder %v3799, 0.0
        %vm3804 = vcmp.ge.f32.partialorder %v3800, 0.0
        %vm3805 = vcmp.ge.f32.partialorder %v3801, 0.0
        %v3806 = vmul.f32 %v3798, 0.2
        %v3807 = vmul.f32 %v3799, 0.2
        %v3808 = vmul.f32 %v3800, 0.2
        %v3809 = vmul.f32 %v3801, 0.2
        %v3810 = vsel %vm3802, %v3798, %v3806
        %v3811 = vsel %vm3803, %v3799, %v3807
        %v3812 = vsel %vm3804, %v3800, %v3808
        %v3813 = vsel %vm3805, %v3801, %v3809
        %v3814 = vpack.c.bf16 %v3812, %v3810
        %v3815 = vpack.c.bf16 %v3813, %v3811
        %v3816 = vld [vmem:[#allocation14] sm:$0xf]
        %vm3817 = vcmask 130048
        %v3819 = vsel %vm3817, %v3816, 0
        %3821 = vmatprep.subr.bf16.mxu0 %v3815
        %3822 = vmatpush1.bf16.msra.mxu0 %v3814
        %3823 = vmatprep.subr.bf16.mxu0 0
        %3824 = vmatpush1.bf16.msra.mxu0 0
        %3825 = vmatprep.subr.bf16.mxu0 0
        %3826 = vmatpush1.bf16.msra.mxu0 0
        %3827 = vmatprep.subr.bf16.mxu0 0
        %3828 = vmatpush1.bf16.msra.mxu0 0
        %3829 = vmatprep.subr.bf16.mxu0 0
        %3830 = vmatpush1.bf16.msra.mxu0 0
        %3831 = vmatprep.subr.bf16.mxu0 0
        %3832 = vmatpush1.bf16.msra.mxu0 0
        %3833 = vmatprep.subr.bf16.mxu0 0
        %3834 = vmatpush1.bf16.msra.mxu0 0
        %3835 = vmatprep.subr.bf16.mxu0 0
        %3836 = vmatpush1.bf16.msra.mxu0 0
        %3837 = vmatprep.subr.bf16.mxu0 0
        %3838 = vmatpush1.bf16.msra.mxu0 0
        %3839 = vmatprep.subr.bf16.mxu0 0
        %3840 = vmatpush1.bf16.msra.mxu0 0
        %3841 = vmatprep.subr.bf16.mxu0 0
        %3842 = vmatpush1.bf16.msra.mxu0 0
        %3843 = vmatprep.subr.bf16.mxu0 0
        %3844 = vmatpush1.bf16.msra.mxu0 0
        %3845 = vmatprep.subr.bf16.mxu0 0
        %3846 = vmatpush1.bf16.msra.mxu0 0
        %3847 = vmatprep.subr.bf16.mxu0 0
        %3848 = vmatpush1.bf16.msra.mxu0 0
        %3849 = vmatprep.subr.bf16.mxu0 0
        %3850 = vmatpush1.bf16.msra.mxu0 0
        %3851 = vmatprep.subr.bf16.mxu0 0
        %3852 = vmatpush1.bf16.msra.mxu0 0
        %3853 = vmatprep.mubr.bf16.mxu0 0
        %3854 = vmatmul.mubr.bf16.gmra.mrb[0].mxu0 %v3819
        %v3855 = vpop.f32.mrb[0].mxu0
        %v3856 = vadd.f32 0.0, %v3855
        %v3857 = vpop.f32.mrb[0].mxu0
        %v3858 = vadd.f32 0.0, %v3857
        %v3859 = vpop.f32.mrb[0].mxu0
        %v3860 = vpop.f32.mrb[0].mxu0
        %3861 = vdwg.mxu0
        %v3862 = vpack.c.bf16 %v3856, %v3856
        %v3863 = vpack.c.bf16 %v3858, %v3858
        %s3864 = scalar_lea.vmem [#allocation14], 4
        %v3865 = vld [vmem:[%s3864] sm:$0xf]
        %v3867 = vsel %vm3817, %v3865, 0
        %3869 = vmatprep.subr.bf16.mxu0 %v3815
        %3870 = vmatpush1.bf16.msra.mxu0 %v3814
        %3871 = vmatprep.subr.bf16.mxu0 0
        %3872 = vmatpush1.bf16.msra.mxu0 0
        %3873 = vmatprep.subr.bf16.mxu0 0
        %3874 = vmatpush1.bf16.msra.mxu0 0
        %3875 = vmatprep.subr.bf16.mxu0 0
        %3876 = vmatpush1.bf16.msra.mxu0 0
        %3877 = vmatprep.subr.bf16.mxu0 0
        %3878 = vmatpush1.bf16.msra.mxu0 0
        %3879 = vmatprep.subr.bf16.mxu0 0
        %3880 = vmatpush1.bf16.msra.mxu0 0
        %3881 = vmatprep.subr.bf16.mxu0 0
        %3882 = vmatpush1.bf16.msra.mxu0 0
        %3883 = vmatprep.subr.bf16.mxu0 0
        %3884 = vmatpush1.bf16.msra.mxu0 0
        %3885 = vmatprep.subr.bf16.mxu0 0
        %3886 = vmatpush1.bf16.msra.mxu0 0
        %3887 = vmatprep.subr.bf16.mxu0 0
        %3888 = vmatpush1.bf16.msra.mxu0 0
        %3889 = vmatprep.subr.bf16.mxu0 0
        %3890 = vmatpush1.bf16.msra.mxu0 0
        %3891 = vmatprep.subr.bf16.mxu0 0
        %3892 = vmatpush1.bf16.msra.mxu0 0
        %3893 = vmatprep.subr.bf16.mxu0 0
        %3894 = vmatpush1.bf16.msra.mxu0 0
        %3895 = vmatprep.subr.bf16.mxu0 0
        %3896 = vmatpush1.bf16.msra.mxu0 0
        %3897 = vmatprep.subr.bf16.mxu0 0
        %3898 = vmatpush1.bf16.msra.mxu0 0
        %3899 = vmatprep.subr.bf16.mxu0 0
        %3900 = vmatpush1.bf16.msra.mxu0 0
        %3901 = vmatprep.mubr.bf16.mxu0 0
        %3902 = vmatmul.mubr.bf16.gmra.mrb[0].mxu0 %v3867
        %v3903 = vpop.f32.mrb[0].mxu0
        %v3904 = vadd.f32 0.0, %v3903
        %v3905 = vpop.f32.mrb[0].mxu0
        %v3906 = vadd.f32 0.0, %v3905
        %v3907 = vpop.f32.mrb[0].mxu0
        %v3908 = vpop.f32.mrb[0].mxu0
        %3909 = vdwg.mxu0
        %v3910 = vpack.c.bf16 %v3904, %v3904
        %v3911 = vpack.c.bf16 %v3906, %v3906
        %s3912 = scalar_lea.vmem [#allocation14], 8
        %v3913 = vld [vmem:[%s3912] sm:$0xf]
        %v3915 = vsel %vm3817, %v3913, 0
        %3917 = vmatprep.subr.bf16.mxu0 %v3815
        %3918 = vmatpush1.bf16.msra.mxu0 %v3814
        %3919 = vmatprep.subr.bf16.mxu0 0
        %3920 = vmatpush1.bf16.msra.mxu0 0
        %3921 = vmatprep.subr.bf16.mxu0 0
        %3922 = vmatpush1.bf16.msra.mxu0 0
        %3923 = vmatprep.subr.bf16.mxu0 0
        %3924 = vmatpush1.bf16.msra.mxu0 0
        %3925 = vmatprep.subr.bf16.mxu0 0
        %3926 = vmatpush1.bf16.msra.mxu0 0
        %3927 = vmatprep.subr.bf16.mxu0 0
        %3928 = vmatpush1.bf16.msra.mxu0 0
        %3929 = vmatprep.subr.bf16.mxu0 0
        %3930 = vmatpush1.bf16.msra.mxu0 0
        %3931 = vmatprep.subr.bf16.mxu0 0
        %3932 = vmatpush1.bf16.msra.mxu0 0
        %3933 = vmatprep.subr.bf16.mxu0 0
        %3934 = vmatpush1.bf16.msra.mxu0 0
        %3935 = vmatprep.subr.bf16.mxu0 0
        %3936 = vmatpush1.bf16.msra.mxu0 0
        %3937 = vmatprep.subr.bf16.mxu0 0
        %3938 = vmatpush1.bf16.msra.mxu0 0
        %3939 = vmatprep.subr.bf16.mxu0 0
        %3940 = vmatpush1.bf16.msra.mxu0 0
        %3941 = vmatprep.subr.bf16.mxu0 0
        %3942 = vmatpush1.bf16.msra.mxu0 0
        %3943 = vmatprep.subr.bf16.mxu0 0
        %3944 = vmatpush1.bf16.msra.mxu0 0
        %3945 = vmatprep.subr.bf16.mxu0 0
        %3946 = vmatpush1.bf16.msra.mxu0 0
        %3947 = vmatprep.subr.bf16.mxu0 0
        %3948 = vmatpush1.bf16.msra.mxu0 0
        %3949 = vmatprep.mubr.bf16.mxu0 0
        %3950 = vmatmul.mubr.bf16.gmra.mrb[0].mxu0 %v3915
        %v3951 = vpop.f32.mrb[0].mxu0
        %v3952 = vadd.f32 0.0, %v3951
        %v3953 = vpop.f32.mrb[0].mxu0
        %v3954 = vadd.f32 0.0, %v3953
        %v3955 = vpop.f32.mrb[0].mxu0
        %v3956 = vpop.f32.mrb[0].mxu0
        %3957 = vdwg.mxu0
        %v3958 = vpack.c.bf16 %v3952, %v3952
        %v3959 = vpack.c.bf16 %v3954, %v3954
        %s3960 = scalar_lea.vmem [#allocation14], 12
        %v3961 = vld [vmem:[%s3960] sm:$0xf]
        %v3963 = vsel %vm3817, %v3961, 0
        %3965 = vmatprep.subr.bf16.mxu0 %v3815
        %3966 = vmatpush1.bf16.msra.mxu0 %v3814
        %3967 = vmatprep.subr.bf16.mxu0 0
        %3968 = vmatpush1.bf16.msra.mxu0 0
        %3969 = vmatprep.subr.bf16.mxu0 0
        %3970 = vmatpush1.bf16.msra.mxu0 0
        %3971 = vmatprep.subr.bf16.mxu0 0
        %3972 = vmatpush1.bf16.msra.mxu0 0
        %3973 = vmatprep.subr.bf16.mxu0 0
        %3974 = vmatpush1.bf16.msra.mxu0 0
        %3975 = vmatprep.subr.bf16.mxu0 0
        %3976 = vmatpush1.bf16.msra.mxu0 0
        %3977 = vmatprep.subr.bf16.mxu0 0
        %3978 = vmatpush1.bf16.msra.mxu0 0
        %3979 = vmatprep.subr.bf16.mxu0 0
        %3980 = vmatpush1.bf16.msra.mxu0 0
        %3981 = vmatprep.subr.bf16.mxu0 0
        %3982 = vmatpush1.bf16.msra.mxu0 0
        %3983 = vmatprep.subr.bf16.mxu0 0
        %3984 = vmatpush1.bf16.msra.mxu0 0
        %3985 = vmatprep.subr.bf16.mxu0 0
        %3986 = vmatpush1.bf16.msra.mxu0 0
        %3987 = vmatprep.subr.bf16.mxu0 0
        %3988 = vmatpush1.bf16.msra.mxu0 0
        %3989 = vmatprep.subr.bf16.mxu0 0
        %3990 = vmatpush1.bf16.msra.mxu0 0
        %3991 = vmatprep.subr.bf16.mxu0 0
        %3992 = vmatpush1.bf16.msra.mxu0 0
        %3993 = vmatprep.subr.bf16.mxu0 0
        %3994 = vmatpush1.bf16.msra.mxu0 0
        %3995 = vmatprep.subr.bf16.mxu0 0
        %3996 = vmatpush1.bf16.msra.mxu0 0
        %3997 = vmatprep.mubr.bf16.mxu0 0
        %3998 = vmatmul.mubr.bf16.gmra.mrb[0].mxu0 %v3963
        %v3999 = vpop.f32.mrb[0].mxu0
        %v4000 = vadd.f32 0.0, %v3999
        %v4001 = vpop.f32.mrb[0].mxu0
        %v4002 = vadd.f32 0.0, %v4001
        %v4003 = vpop.f32.mrb[0].mxu0
        %v4004 = vpop.f32.mrb[0].mxu0
        %4005 = vdwg.mxu0
        %v4006 = vpack.c.bf16 %v4000, %v4000
        %v4007 = vpack.c.bf16 %v4002, %v4002
        %v4008 = vld [vmem:[#allocation16] sm:$0xff]
        %v4009 = vld [vmem:[#allocation16 + $0x8] sm:$0xff]
        %v4010 = vld [vmem:[#allocation16 + $0x10] sm:$0xff]
        %v4011 = vld [vmem:[#allocation16 + $0x18] sm:$0xff]
        %v4012 = vld [vmem:[#allocation16 + $0x20] sm:$0xff]
        %v4013 = vld [vmem:[#allocation16 + $0x28] sm:$0xff]
        %v4014 = vld [vmem:[#allocation16 + $0x30] sm:$0xff]
        %v4015 = vld [vmem:[#allocation16 + $0x38] sm:$0xff]
        %v4016 = vld [vmem:[#allocation16 + $0x40] sm:$0xff]
        %v4017 = vld [vmem:[#allocation16 + $0x48] sm:$0xff]
        %v4018 = vld [vmem:[#allocation16 + $0x50] sm:$0xff]
        %v4019 = vld [vmem:[#allocation16 + $0x58] sm:$0xff]
        %v4020 = vld [vmem:[#allocation16 + $0x60] sm:$0xff]
        %v4021 = vld [vmem:[#allocation16 + $0x68] sm:$0xff]
        %v4022 = vld [vmem:[#allocation16 + $0x70] sm:$0xff]
        %v4023 = vld [vmem:[#allocation16 + $0x78] sm:$0xff]
        %v4024 = vld [vmem:[#allocation16 + $0x80] sm:$0xff]
        %v4025 = vld [vmem:[#allocation16 + $0x88] sm:$0xff]
        %v4026 = vld [vmem:[#allocation16 + $0x90] sm:$0xff]
        %v4027 = vld [vmem:[#allocation16 + $0x98] sm:$0xff]
        %v4028 = vld [vmem:[#allocation16 + $0xa0] sm:$0xff]
        %v4029 = vld [vmem:[#allocation16 + $0xa8] sm:$0xff]
        %v4030 = vld [vmem:[#allocation16 + $0xb0] sm:$0xff]
        %v4031 = vld [vmem:[#allocation16 + $0xb8] sm:$0xff]
        %v4032 = vld [vmem:[#allocation16 + $0xc0] sm:$0xff]
        %v4033 = vld [vmem:[#allocation16 + $0xc8] sm:$0xff]
        %v4034 = vld [vmem:[#allocation16 + $0xd0] sm:$0xff]
        %v4035 = vld [vmem:[#allocation16 + $0xd8] sm:$0xff]
        %v4036 = vld [vmem:[#allocation16 + $0xe0] sm:$0xff]
        %v4037 = vld [vmem:[#allocation16 + $0xe8] sm:$0xff]
        %v4038 = vld [vmem:[#allocation16 + $0xf0] sm:$0xff]
        %v4039 = vld [vmem:[#allocation16 + $0xf8] sm:$0xff]
        %v4040 = vld [vmem:[#allocation16 + $0x100] sm:$0xff]
        %v4041 = vld [vmem:[#allocation16 + $0x108] sm:$0xff]
        %v4042 = vld [vmem:[#allocation16 + $0x110] sm:$0xff]
        %v4043 = vld [vmem:[#allocation16 + $0x118] sm:$0xff]
        %v4044 = vld [vmem:[#allocation16 + $0x120] sm:$0xff]
        %v4045 = vld [vmem:[#allocation16 + $0x128] sm:$0xff]
        %v4046 = vld [vmem:[#allocation16 + $0x130] sm:$0xff]
        %v4047 = vld [vmem:[#allocation16 + $0x138] sm:$0xff]
        %v4048 = vld [vmem:[#allocation16 + $0x140] sm:$0xff]
        %v4049 = vld [vmem:[#allocation16 + $0x148] sm:$0xff]
        %v4050 = vld [vmem:[#allocation16 + $0x150] sm:$0xff]
        %v4051 = vld [vmem:[#allocation16 + $0x158] sm:$0xff]
        %v4052 = vld [vmem:[#allocation16 + $0x160] sm:$0xff]
        %v4053 = vld [vmem:[#allocation16 + $0x168] sm:$0xff]
        %v4054 = vld [vmem:[#allocation16 + $0x170] sm:$0xff]
        %v4055 = vld [vmem:[#allocation16 + $0x178] sm:$0xff]
        %v4056 = vld [vmem:[#allocation16 + $0x180] sm:$0xff]
        %v4057 = vld [vmem:[#allocation16 + $0x188] sm:$0xff]
        %v4058 = vld [vmem:[#allocation16 + $0x190] sm:$0xff]
        %v4059 = vld [vmem:[#allocation16 + $0x198] sm:$0xff]
        %v4060 = vld [vmem:[#allocation16 + $0x1a0] sm:$0xff]
        %v4061 = vld [vmem:[#allocation16 + $0x1a8] sm:$0xff]
        %v4062 = vld [vmem:[#allocation16 + $0x1b0] sm:$0xff]
        %v4063 = vld [vmem:[#allocation16 + $0x1b8] sm:$0xff]
        %v4064 = vld [vmem:[#allocation16 + $0x1c0] sm:$0xff]
        %v4065 = vld [vmem:[#allocation16 + $0x1c8] sm:$0xff]
        %v4066 = vld [vmem:[#allocation16 + $0x1d0] sm:$0xff]
        %v4067 = vld [vmem:[#allocation16 + $0x1d8] sm:$0xff]
        %v4068 = vld [vmem:[#allocation16 + $0x1e0] sm:$0xff]
        %v4069 = vld [vmem:[#allocation16 + $0x1e8] sm:$0xff]
        %v4070 = vld [vmem:[#allocation16 + $0x1f0] sm:$0xff]
        %v4071 = vld [vmem:[#allocation16 + $0x1f8] sm:$0xff]
        %v4072 = vld [vmem:[#allocation16 + $0x200] sm:$0xff]
        %v4073 = vld [vmem:[#allocation16 + $0x208] sm:$0xff]
        %v4074 = vld [vmem:[#allocation16 + $0x210] sm:$0xff]
        %v4075 = vld [vmem:[#allocation16 + $0x218] sm:$0xff]
        %v4076 = vld [vmem:[#allocation16 + $0x220] sm:$0xff]
        %v4077 = vld [vmem:[#allocation16 + $0x228] sm:$0xff]
        %v4078 = vld [vmem:[#allocation16 + $0x230] sm:$0xff]
        %v4079 = vld [vmem:[#allocation16 + $0x238] sm:$0xff]
        %v4080 = vld [vmem:[#allocation16 + $0x240] sm:$0xff]
        %v4081 = vld [vmem:[#allocation16 + $0x248] sm:$0xff]
        %v4082 = vld [vmem:[#allocation16 + $0x250] sm:$0xff]
        %v4083 = vld [vmem:[#allocation16 + $0x258] sm:$0xff]
        %v4084 = vld [vmem:[#allocation16 + $0x260] sm:$0xff]
        %v4085 = vld [vmem:[#allocation16 + $0x268] sm:$0xff]
        %v4086 = vld [vmem:[#allocation16 + $0x270] sm:$0xff]
        %v4087 = vld [vmem:[#allocation16 + $0x278] sm:$0xff]
        %v4088 = vld [vmem:[#allocation16 + $0x280] sm:$0xff]
        %v4089 = vld [vmem:[#allocation16 + $0x288] sm:$0xff]
        %v4090 = vld [vmem:[#allocation16 + $0x290] sm:$0xff]
        %v4091 = vld [vmem:[#allocation16 + $0x298] sm:$0xff]
        %v4092 = vld [vmem:[#allocation16 + $0x2a0] sm:$0xff]
        %v4093 = vld [vmem:[#allocation16 + $0x2a8] sm:$0xff]
        %v4094 = vld [vmem:[#allocation16 + $0x2b0] sm:$0xff]
        %v4095 = vld [vmem:[#allocation16 + $0x2b8] sm:$0xff]
        %v4096 = vld [vmem:[#allocation16 + $0x2c0] sm:$0xff]
        %v4097 = vld [vmem:[#allocation16 + $0x2c8] sm:$0xff]
        %v4098 = vld [vmem:[#allocation16 + $0x2d0] sm:$0xff]
        %v4099 = vld [vmem:[#allocation16 + $0x2d8] sm:$0xff]
        %v4100 = vld [vmem:[#allocation16 + $0x2e0] sm:$0xff]
        %v4101 = vld [vmem:[#allocation16 + $0x2e8] sm:$0xff]
        %v4102 = vld [vmem:[#allocation16 + $0x2f0] sm:$0xff]
        %v4103 = vld [vmem:[#allocation16 + $0x2f8] sm:$0xff]
        %v4104 = vld [vmem:[#allocation16 + $0x300] sm:$0xff]
        %v4105 = vld [vmem:[#allocation16 + $0x308] sm:$0xff]
        %v4106 = vld [vmem:[#allocation16 + $0x310] sm:$0xff]
        %v4107 = vld [vmem:[#allocation16 + $0x318] sm:$0xff]
        %v4108 = vld [vmem:[#allocation16 + $0x320] sm:$0xff]
        %v4109 = vld [vmem:[#allocation16 + $0x328] sm:$0xff]
        %v4110 = vld [vmem:[#allocation16 + $0x330] sm:$0xff]
        %v4111 = vld [vmem:[#allocation16 + $0x338] sm:$0xff]
        %v4112 = vld [vmem:[#allocation16 + $0x340] sm:$0xff]
        %v4113 = vld [vmem:[#allocation16 + $0x348] sm:$0xff]
        %v4114 = vld [vmem:[#allocation16 + $0x350] sm:$0xff]
        %v4115 = vld [vmem:[#allocation16 + $0x358] sm:$0xff]
        %v4116 = vld [vmem:[#allocation16 + $0x360] sm:$0xff]
        %v4117 = vld [vmem:[#allocation16 + $0x368] sm:$0xff]
        %v4118 = vld [vmem:[#allocation16 + $0x370] sm:$0xff]
        %v4119 = vld [vmem:[#allocation16 + $0x378] sm:$0xff]
        %v4120 = vld [vmem:[#allocation16 + $0x380] sm:$0xff]
        %v4121 = vld [vmem:[#allocation16 + $0x388] sm:$0xff]
        %v4122 = vld [vmem:[#allocation16 + $0x390] sm:$0xff]
        %v4123 = vld [vmem:[#allocation16 + $0x398] sm:$0xff]
        %v4124 = vld [vmem:[#allocation16 + $0x3a0] sm:$0xff]
        %v4125 = vld [vmem:[#allocation16 + $0x3a8] sm:$0xff]
        %v4126 = vld [vmem:[#allocation16 + $0x3b0] sm:$0xff]
        %v4127 = vld [vmem:[#allocation16 + $0x3b8] sm:$0xff]
        %v4128 = vld [vmem:[#allocation16 + $0x3c0] sm:$0xff]
        %v4129 = vld [vmem:[#allocation16 + $0x3c8] sm:$0xff]
        %v4130 = vld [vmem:[#allocation16 + $0x3d0] sm:$0xff]
        %v4131 = vld [vmem:[#allocation16 + $0x3d8] sm:$0xff]
        %v4132 = vld [vmem:[#allocation16 + $0x3e0] sm:$0xff]
        %v4133 = vld [vmem:[#allocation16 + $0x3e8] sm:$0xff]
        %v4134 = vld [vmem:[#allocation16 + $0x3f0] sm:$0xff]
        %v4135 = vld [vmem:[#allocation16 + $0x3f8] sm:$0xff]
        %v4136 = vld [vmem:[#allocation17] sm:$0x3]
        %v4138 = vlaneseq
        %v4139 = vshrl.u32 %v4138, 7
        %v4140 = vsub.s32 0, %v4139
        %v4141 = vrot.slane %v4136, %v4140
        %v4142 = vlaneseq
        %v4143 = vshrl.u32 %v4142, 7
        %v4144 = vsub.s32 1, %v4143
        %v4145 = vrot.slane %v4136, %v4144
        %v4276 = vunpack.c.l.b16 %v4008
        %v4277 = vunpack.c.h.b16 %v4008
        %v4278 = vunpack.c.l.b16 %v4009
        %v4279 = vunpack.c.h.b16 %v4009
        %v4280 = vunpack.c.l.b16 %v4010
        %v4281 = vunpack.c.h.b16 %v4010
        %v4282 = vunpack.c.l.b16 %v4011
        %v4283 = vunpack.c.h.b16 %v4011
        %v4284 = vunpack.c.l.b16 %v4012
        %v4285 = vunpack.c.h.b16 %v4012
        %v4286 = vunpack.c.l.b16 %v4013
        %v4287 = vunpack.c.h.b16 %v4013
        %v4288 = vunpack.c.l.b16 %v4014
        %v4289 = vunpack.c.h.b16 %v4014
        %v4290 = vunpack.c.l.b16 %v4015
        %v4291 = vunpack.c.h.b16 %v4015
        %v4292 = vunpack.c.l.b16 %v4016
        %v4293 = vunpack.c.h.b16 %v4016
        %v4294 = vunpack.c.l.b16 %v4017
        %v4295 = vunpack.c.h.b16 %v4017
        %v4296 = vunpack.c.l.b16 %v4018
        %v4297 = vunpack.c.h.b16 %v4018
        %v4298 = vunpack.c.l.b16 %v4019
        %v4299 = vunpack.c.h.b16 %v4019
        %v4300 = vunpack.c.l.b16 %v4020
        %v4301 = vunpack.c.h.b16 %v4020
        %v4302 = vunpack.c.l.b16 %v4021
        %v4303 = vunpack.c.h.b16 %v4021
        %v4304 = vunpack.c.l.b16 %v4022
        %v4305 = vunpack.c.h.b16 %v4022
        %v4306 = vunpack.c.l.b16 %v4023
        %v4307 = vunpack.c.h.b16 %v4023
        %v4308 = vunpack.c.l.b16 %v4024
        %v4309 = vunpack.c.h.b16 %v4024
        %v4310 = vunpack.c.l.b16 %v4025
        %v4311 = vunpack.c.h.b16 %v4025
        %v4312 = vunpack.c.l.b16 %v4026
        %v4313 = vunpack.c.h.b16 %v4026
        %v4314 = vunpack.c.l.b16 %v4027
        %v4315 = vunpack.c.h.b16 %v4027
        %v4316 = vunpack.c.l.b16 %v4028
        %v4317 = vunpack.c.h.b16 %v4028
        %v4318 = vunpack.c.l.b16 %v4029
        %v4319 = vunpack.c.h.b16 %v4029
        %v4320 = vunpack.c.l.b16 %v4030
        %v4321 = vunpack.c.h.b16 %v4030
        %v4322 = vunpack.c.l.b16 %v4031
        %v4323 = vunpack.c.h.b16 %v4031
        %v4324 = vunpack.c.l.b16 %v4032
        %v4325 = vunpack.c.h.b16 %v4032
        %v4326 = vunpack.c.l.b16 %v4033
        %v4327 = vunpack.c.h.b16 %v4033
        %v4328 = vunpack.c.l.b16 %v4034
        %v4329 = vunpack.c.h.b16 %v4034
        %v4330 = vunpack.c.l.b16 %v4035
        %v4331 = vunpack.c.h.b16 %v4035
        %v4332 = vunpack.c.l.b16 %v4036
        %v4333 = vunpack.c.h.b16 %v4036
        %v4334 = vunpack.c.l.b16 %v4037
        %v4335 = vunpack.c.h.b16 %v4037
        %v4336 = vunpack.c.l.b16 %v4038
        %v4337 = vunpack.c.h.b16 %v4038
        %v4338 = vunpack.c.l.b16 %v4039
        %v4339 = vunpack.c.h.b16 %v4039
        %v4340 = vunpack.c.l.b16 %v4040
        %v4341 = vunpack.c.h.b16 %v4040
        %v4342 = vunpack.c.l.b16 %v4041
        %v4343 = vunpack.c.h.b16 %v4041
        %v4344 = vunpack.c.l.b16 %v4042
        %v4345 = vunpack.c.h.b16 %v4042
        %v4346 = vunpack.c.l.b16 %v4043
        %v4347 = vunpack.c.h.b16 %v4043
        %v4348 = vunpack.c.l.b16 %v4044
        %v4349 = vunpack.c.h.b16 %v4044
        %v4350 = vunpack.c.l.b16 %v4045
        %v4351 = vunpack.c.h.b16 %v4045
        %v4352 = vunpack.c.l.b16 %v4046
        %v4353 = vunpack.c.h.b16 %v4046
        %v4354 = vunpack.c.l.b16 %v4047
        %v4355 = vunpack.c.h.b16 %v4047
        %v4356 = vunpack.c.l.b16 %v4048
        %v4357 = vunpack.c.h.b16 %v4048
        %v4358 = vunpack.c.l.b16 %v4049
        %v4359 = vunpack.c.h.b16 %v4049
        %v4360 = vunpack.c.l.b16 %v4050
        %v4361 = vunpack.c.h.b16 %v4050
        %v4362 = vunpack.c.l.b16 %v4051
        %v4363 = vunpack.c.h.b16 %v4051
        %v4364 = vunpack.c.l.b16 %v4052
        %v4365 = vunpack.c.h.b16 %v4052
        %v4366 = vunpack.c.l.b16 %v4053
        %v4367 = vunpack.c.h.b16 %v4053
        %v4368 = vunpack.c.l.b16 %v4054
        %v4369 = vunpack.c.h.b16 %v4054
        %v4370 = vunpack.c.l.b16 %v4055
        %v4371 = vunpack.c.h.b16 %v4055
        %v4372 = vunpack.c.l.b16 %v4056
        %v4373 = vunpack.c.h.b16 %v4056
        %v4374 = vunpack.c.l.b16 %v4057
        %v4375 = vunpack.c.h.b16 %v4057
        %v4376 = vunpack.c.l.b16 %v4058
        %v4377 = vunpack.c.h.b16 %v4058
        %v4378 = vunpack.c.l.b16 %v4059
        %v4379 = vunpack.c.h.b16 %v4059
        %v4380 = vunpack.c.l.b16 %v4060
        %v4381 = vunpack.c.h.b16 %v4060
        %v4382 = vunpack.c.l.b16 %v4061
        %v4383 = vunpack.c.h.b16 %v4061
        %v4384 = vunpack.c.l.b16 %v4062
        %v4385 = vunpack.c.h.b16 %v4062
        %v4386 = vunpack.c.l.b16 %v4063
        %v4387 = vunpack.c.h.b16 %v4063
        %v4388 = vunpack.c.l.b16 %v4064
        %v4389 = vunpack.c.h.b16 %v4064
        %v4390 = vunpack.c.l.b16 %v4065
        %v4391 = vunpack.c.h.b16 %v4065
        %v4392 = vunpack.c.l.b16 %v4066
        %v4393 = vunpack.c.h.b16 %v4066
        %v4394 = vunpack.c.l.b16 %v4067
        %v4395 = vunpack.c.h.b16 %v4067
        %v4396 = vunpack.c.l.b16 %v4068
        %v4397 = vunpack.c.h.b16 %v4068
        %v4398 = vunpack.c.l.b16 %v4069
        %v4399 = vunpack.c.h.b16 %v4069
        %v4400 = vunpack.c.l.b16 %v4070
        %v4401 = vunpack.c.h.b16 %v4070
        %v4402 = vunpack.c.l.b16 %v4071
        %v4403 = vunpack.c.h.b16 %v4071
        %v4404 = vunpack.c.l.b16 %v4072
        %v4405 = vunpack.c.h.b16 %v4072
        %v4406 = vunpack.c.l.b16 %v4073
        %v4407 = vunpack.c.h.b16 %v4073
        %v4408 = vunpack.c.l.b16 %v4074
        %v4409 = vunpack.c.h.b16 %v4074
        %v4410 = vunpack.c.l.b16 %v4075
        %v4411 = vunpack.c.h.b16 %v4075
        %v4412 = vunpack.c.l.b16 %v4076
        %v4413 = vunpack.c.h.b16 %v4076
        %v4414 = vunpack.c.l.b16 %v4077
        %v4415 = vunpack.c.h.b16 %v4077
        %v4416 = vunpack.c.l.b16 %v4078
        %v4417 = vunpack.c.h.b16 %v4078
        %v4418 = vunpack.c.l.b16 %v4079
        %v4419 = vunpack.c.h.b16 %v4079
        %v4420 = vunpack.c.l.b16 %v4080
        %v4421 = vunpack.c.h.b16 %v4080
        %v4422 = vunpack.c.l.b16 %v4081
        %v4423 = vunpack.c.h.b16 %v4081
        %v4424 = vunpack.c.l.b16 %v4082
        %v4425 = vunpack.c.h.b16 %v4082
        %v4426 = vunpack.c.l.b16 %v4083
        %v4427 = vunpack.c.h.b16 %v4083
        %v4428 = vunpack.c.l.b16 %v4084
        %v4429 = vunpack.c.h.b16 %v4084
        %v4430 = vunpack.c.l.b16 %v4085
        %v4431 = vunpack.c.h.b16 %v4085
        %v4432 = vunpack.c.l.b16 %v4086
        %v4433 = vunpack.c.h.b16 %v4086
        %v4434 = vunpack.c.l.b16 %v4087
        %v4435 = vunpack.c.h.b16 %v4087
        %v4436 = vunpack.c.l.b16 %v4088
        %v4437 = vunpack.c.h.b16 %v4088
        %v4438 = vunpack.c.l.b16 %v4089
        %v4439 = vunpack.c.h.b16 %v4089
        %v4440 = vunpack.c.l.b16 %v4090
        %v4441 = vunpack.c.h.b16 %v4090
        %v4442 = vunpack.c.l.b16 %v4091
        %v4443 = vunpack.c.h.b16 %v4091
        %v4444 = vunpack.c.l.b16 %v4092
        %v4445 = vunpack.c.h.b16 %v4092
        %v4446 = vunpack.c.l.b16 %v4093
        %v4447 = vunpack.c.h.b16 %v4093
        %v4448 = vunpack.c.l.b16 %v4094
        %v4449 = vunpack.c.h.b16 %v4094
        %v4450 = vunpack.c.l.b16 %v4095
        %v4451 = vunpack.c.h.b16 %v4095
        %v4452 = vunpack.c.l.b16 %v4096
        %v4453 = vunpack.c.h.b16 %v4096
        %v4454 = vunpack.c.l.b16 %v4097
        %v4455 = vunpack.c.h.b16 %v4097
        %v4456 = vunpack.c.l.b16 %v4098
        %v4457 = vunpack.c.h.b16 %v4098
        %v4458 = vunpack.c.l.b16 %v4099
        %v4459 = vunpack.c.h.b16 %v4099
        %v4460 = vunpack.c.l.b16 %v4100
        %v4461 = vunpack.c.h.b16 %v4100
        %v4462 = vunpack.c.l.b16 %v4101
        %v4463 = vunpack.c.h.b16 %v4101
        %v4464 = vunpack.c.l.b16 %v4102
        %v4465 = vunpack.c.h.b16 %v4102
        %v4466 = vunpack.c.l.b16 %v4103
        %v4467 = vunpack.c.h.b16 %v4103
        %v4468 = vunpack.c.l.b16 %v4104
        %v4469 = vunpack.c.h.b16 %v4104
        %v4470 = vunpack.c.l.b16 %v4105
        %v4471 = vunpack.c.h.b16 %v4105
        %v4472 = vunpack.c.l.b16 %v4106
        %v4473 = vunpack.c.h.b16 %v4106
        %v4474 = vunpack.c.l.b16 %v4107
        %v4475 = vunpack.c.h.b16 %v4107
        %v4476 = vunpack.c.l.b16 %v4108
        %v4477 = vunpack.c.h.b16 %v4108
        %v4478 = vunpack.c.l.b16 %v4109
        %v4479 = vunpack.c.h.b16 %v4109
        %v4480 = vunpack.c.l.b16 %v4110
        %v4481 = vunpack.c.h.b16 %v4110
        %v4482 = vunpack.c.l.b16 %v4111
        %v4483 = vunpack.c.h.b16 %v4111
        %v4484 = vunpack.c.l.b16 %v4112
        %v4485 = vunpack.c.h.b16 %v4112
        %v4486 = vunpack.c.l.b16 %v4113
        %v4487 = vunpack.c.h.b16 %v4113
        %v4488 = vunpack.c.l.b16 %v4114
        %v4489 = vunpack.c.h.b16 %v4114
        %v4490 = vunpack.c.l.b16 %v4115
        %v4491 = vunpack.c.h.b16 %v4115
        %v4492 = vunpack.c.l.b16 %v4116
        %v4493 = vunpack.c.h.b16 %v4116
        %v4494 = vunpack.c.l.b16 %v4117
        %v4495 = vunpack.c.h.b16 %v4117
        %v4496 = vunpack.c.l.b16 %v4118
        %v4497 = vunpack.c.h.b16 %v4118
        %v4498 = vunpack.c.l.b16 %v4119
        %v4499 = vunpack.c.h.b16 %v4119
        %v4500 = vunpack.c.l.b16 %v4120
        %v4501 = vunpack.c.h.b16 %v4120
        %v4502 = vunpack.c.l.b16 %v4121
        %v4503 = vunpack.c.h.b16 %v4121
        %v4504 = vunpack.c.l.b16 %v4122
        %v4505 = vunpack.c.h.b16 %v4122
        %v4506 = vunpack.c.l.b16 %v4123
        %v4507 = vunpack.c.h.b16 %v4123
        %v4508 = vunpack.c.l.b16 %v4124
        %v4509 = vunpack.c.h.b16 %v4124
        %v4510 = vunpack.c.l.b16 %v4125
        %v4511 = vunpack.c.h.b16 %v4125
        %v4512 = vunpack.c.l.b16 %v4126
        %v4513 = vunpack.c.h.b16 %v4126
        %v4514 = vunpack.c.l.b16 %v4127
        %v4515 = vunpack.c.h.b16 %v4127
        %v4516 = vunpack.c.l.b16 %v4128
        %v4517 = vunpack.c.h.b16 %v4128
        %v4518 = vunpack.c.l.b16 %v4129
        %v4519 = vunpack.c.h.b16 %v4129
        %v4520 = vunpack.c.l.b16 %v4130
        %v4521 = vunpack.c.h.b16 %v4130
        %v4522 = vunpack.c.l.b16 %v4131
        %v4523 = vunpack.c.h.b16 %v4131
        %v4524 = vunpack.c.l.b16 %v4132
        %v4525 = vunpack.c.h.b16 %v4132
        %v4526 = vunpack.c.l.b16 %v4133
        %v4527 = vunpack.c.h.b16 %v4133
        %v4528 = vunpack.c.l.b16 %v4134
        %v4529 = vunpack.c.h.b16 %v4134
        %v4530 = vunpack.c.l.b16 %v4135
        %v4531 = vunpack.c.h.b16 %v4135
        %v4532 = vpack.c.b16 %v4278, %v4276
        %v4533 = vpack.c.b16 %v4279, %v4277
        %v4534 = vpack.c.b16 %v4282, %v4280
        %v4535 = vpack.c.b16 %v4283, %v4281
        %v4536 = vpack.c.b16 %v4286, %v4284
        %v4537 = vpack.c.b16 %v4287, %v4285
        %v4538 = vpack.c.b16 %v4290, %v4288
        %v4539 = vpack.c.b16 %v4291, %v4289
        %v4540 = vpack.c.b16 %v4294, %v4292
        %v4541 = vpack.c.b16 %v4295, %v4293
        %v4542 = vpack.c.b16 %v4298, %v4296
        %v4543 = vpack.c.b16 %v4299, %v4297
        %v4544 = vpack.c.b16 %v4302, %v4300
        %v4545 = vpack.c.b16 %v4303, %v4301
        %v4546 = vpack.c.b16 %v4306, %v4304
        %v4547 = vpack.c.b16 %v4307, %v4305
        %v4548 = vpack.c.b16 %v4310, %v4308
        %v4549 = vpack.c.b16 %v4311, %v4309
        %v4550 = vpack.c.b16 %v4314, %v4312
        %v4551 = vpack.c.b16 %v4315, %v4313
        %v4552 = vpack.c.b16 %v4318, %v4316
        %v4553 = vpack.c.b16 %v4319, %v4317
        %v4554 = vpack.c.b16 %v4322, %v4320
        %v4555 = vpack.c.b16 %v4323, %v4321
        %v4556 = vpack.c.b16 %v4326, %v4324
        %v4557 = vpack.c.b16 %v4327, %v4325
        %v4558 = vpack.c.b16 %v4330, %v4328
        %v4559 = vpack.c.b16 %v4331, %v4329
        %v4560 = vpack.c.b16 %v4334, %v4332
        %v4561 = vpack.c.b16 %v4335, %v4333
        %v4562 = vpack.c.b16 %v4338, %v4336
        %v4563 = vpack.c.b16 %v4339, %v4337
        %v4564 = vpack.c.b16 %v4342, %v4340
        %v4565 = vpack.c.b16 %v4343, %v4341
        %v4566 = vpack.c.b16 %v4346, %v4344
        %v4567 = vpack.c.b16 %v4347, %v4345
        %v4568 = vpack.c.b16 %v4350, %v4348
        %v4569 = vpack.c.b16 %v4351, %v4349
        %v4570 = vpack.c.b16 %v4354, %v4352
        %v4571 = vpack.c.b16 %v4355, %v4353
        %v4572 = vpack.c.b16 %v4358, %v4356
        %v4573 = vpack.c.b16 %v4359, %v4357
        %v4574 = vpack.c.b16 %v4362, %v4360
        %v4575 = vpack.c.b16 %v4363, %v4361
        %v4576 = vpack.c.b16 %v4366, %v4364
        %v4577 = vpack.c.b16 %v4367, %v4365
        %v4578 = vpack.c.b16 %v4370, %v4368
        %v4579 = vpack.c.b16 %v4371, %v4369
        %v4580 = vpack.c.b16 %v4374, %v4372
        %v4581 = vpack.c.b16 %v4375, %v4373
        %v4582 = vpack.c.b16 %v4378, %v4376
        %v4583 = vpack.c.b16 %v4379, %v4377
        %v4584 = vpack.c.b16 %v4382, %v4380
        %v4585 = vpack.c.b16 %v4383, %v4381
        %v4586 = vpack.c.b16 %v4386, %v4384
        %v4587 = vpack.c.b16 %v4387, %v4385
        %v4588 = vpack.c.b16 %v4390, %v4388
        %v4589 = vpack.c.b16 %v4391, %v4389
        %v4590 = vpack.c.b16 %v4394, %v4392
        %v4591 = vpack.c.b16 %v4395, %v4393
        %v4592 = vpack.c.b16 %v4398, %v4396
        %v4593 = vpack.c.b16 %v4399, %v4397
        %v4594 = vpack.c.b16 %v4402, %v4400
        %v4595 = vpack.c.b16 %v4403, %v4401
        %v4596 = vpack.c.b16 %v4406, %v4404
        %v4597 = vpack.c.b16 %v4407, %v4405
        %v4598 = vpack.c.b16 %v4410, %v4408
        %v4599 = vpack.c.b16 %v4411, %v4409
        %v4600 = vpack.c.b16 %v4414, %v4412
        %v4601 = vpack.c.b16 %v4415, %v4413
        %v4602 = vpack.c.b16 %v4418, %v4416
        %v4603 = vpack.c.b16 %v4419, %v4417
        %v4604 = vpack.c.b16 %v4422, %v4420
        %v4605 = vpack.c.b16 %v4423, %v4421
        %v4606 = vpack.c.b16 %v4426, %v4424
        %v4607 = vpack.c.b16 %v4427, %v4425
        %v4608 = vpack.c.b16 %v4430, %v4428
        %v4609 = vpack.c.b16 %v4431, %v4429
        %v4610 = vpack.c.b16 %v4434, %v4432
        %v4611 = vpack.c.b16 %v4435, %v4433
        %v4612 = vpack.c.b16 %v4438, %v4436
        %v4613 = vpack.c.b16 %v4439, %v4437
        %v4614 = vpack.c.b16 %v4442, %v4440
        %v4615 = vpack.c.b16 %v4443, %v4441
        %v4616 = vpack.c.b16 %v4446, %v4444
        %v4617 = vpack.c.b16 %v4447, %v4445
        %v4618 = vpack.c.b16 %v4450, %v4448
        %v4619 = vpack.c.b16 %v4451, %v4449
        %v4620 = vpack.c.b16 %v4454, %v4452
        %v4621 = vpack.c.b16 %v4455, %v4453
        %v4622 = vpack.c.b16 %v4458, %v4456
        %v4623 = vpack.c.b16 %v4459, %v4457
        %v4624 = vpack.c.b16 %v4462, %v4460
        %v4625 = vpack.c.b16 %v4463, %v4461
        %v4626 = vpack.c.b16 %v4466, %v4464
        %v4627 = vpack.c.b16 %v4467, %v4465
        %v4628 = vpack.c.b16 %v4470, %v4468
        %v4629 = vpack.c.b16 %v4471, %v4469
        %v4630 = vpack.c.b16 %v4474, %v4472
        %v4631 = vpack.c.b16 %v4475, %v4473
        %v4632 = vpack.c.b16 %v4478, %v4476
        %v4633 = vpack.c.b16 %v4479, %v4477
        %v4634 = vpack.c.b16 %v4482, %v4480
        %v4635 = vpack.c.b16 %v4483, %v4481
        %v4636 = vpack.c.b16 %v4486, %v4484
        %v4637 = vpack.c.b16 %v4487, %v4485
        %v4638 = vpack.c.b16 %v4490, %v4488
        %v4639 = vpack.c.b16 %v4491, %v4489
        %v4640 = vpack.c.b16 %v4494, %v4492
        %v4641 = vpack.c.b16 %v4495, %v4493
        %v4642 = vpack.c.b16 %v4498, %v4496
        %v4643 = vpack.c.b16 %v4499, %v4497
        %v4644 = vpack.c.b16 %v4502, %v4500
        %v4645 = vpack.c.b16 %v4503, %v4501
        %v4646 = vpack.c.b16 %v4506, %v4504
        %v4647 = vpack.c.b16 %v4507, %v4505
        %v4648 = vpack.c.b16 %v4510, %v4508
        %v4649 = vpack.c.b16 %v4511, %v4509
        %v4650 = vpack.c.b16 %v4514, %v4512
        %v4651 = vpack.c.b16 %v4515, %v4513
        %v4652 = vpack.c.b16 %v4518, %v4516
        %v4653 = vpack.c.b16 %v4519, %v4517
        %v4654 = vpack.c.b16 %v4522, %v4520
        %v4655 = vpack.c.b16 %v4523, %v4521
        %v4656 = vpack.c.b16 %v4526, %v4524
        %v4657 = vpack.c.b16 %v4527, %v4525
        %v4658 = vpack.c.b16 %v4530, %v4528
        %v4659 = vpack.c.b16 %v4531, %v4529
        %4788 = vmatprep.subr.bf16.mxu0 %v4533
        %4789 = vmatpush1.bf16.msra.mxu0 %v4532
        %4790 = vmatprep.subr.bf16.mxu0 %v4535
        %4791 = vmatpush1.bf16.msra.mxu0 %v4534
        %4792 = vmatprep.subr.bf16.mxu0 %v4537
        %4793 = vmatpush1.bf16.msra.mxu0 %v4536
        %4794 = vmatprep.subr.bf16.mxu0 %v4539
        %4795 = vmatpush1.bf16.msra.mxu0 %v4538
        %4796 = vmatprep.subr.bf16.mxu0 %v4541
        %4797 = vmatpush1.bf16.msra.mxu0 %v4540
        %4798 = vmatprep.subr.bf16.mxu0 %v4543
        %4799 = vmatpush1.bf16.msra.mxu0 %v4542
        %4800 = vmatprep.subr.bf16.mxu0 %v4545
        %4801 = vmatpush1.bf16.msra.mxu0 %v4544
        %4802 = vmatprep.subr.bf16.mxu0 %v4547
        %4803 = vmatpush1.bf16.msra.mxu0 %v4546
        %4804 = vmatprep.subr.bf16.mxu0 %v4549
        %4805 = vmatpush1.bf16.msra.mxu0 %v4548
        %4806 = vmatprep.subr.bf16.mxu0 %v4551
        %4807 = vmatpush1.bf16.msra.mxu0 %v4550
        %4808 = vmatprep.subr.bf16.mxu0 %v4553
        %4809 = vmatpush1.bf16.msra.mxu0 %v4552
        %4810 = vmatprep.subr.bf16.mxu0 %v4555
        %4811 = vmatpush1.bf16.msra.mxu0 %v4554
        %4812 = vmatprep.subr.bf16.mxu0 %v4557
        %4813 = vmatpush1.bf16.msra.mxu0 %v4556
        %4814 = vmatprep.subr.bf16.mxu0 %v4559
        %4815 = vmatpush1.bf16.msra.mxu0 %v4558
        %4816 = vmatprep.subr.bf16.mxu0 %v4561
        %4817 = vmatpush1.bf16.msra.mxu0 %v4560
        %4818 = vmatprep.subr.bf16.mxu0 %v4563
        %4819 = vmatpush1.bf16.msra.mxu0 %v4562
        %4820 = vmatprep.mubr.bf16.mxu0 %v3863
        %4821 = vmatmul.mubr.bf16.gmra.mrb[0].mxu0 %v3862
        %v4822 = vpop.f32.mrb[0].mxu0
        %v4823 = vadd.f32 %v4141, %v4822
        %v4824 = vpop.f32.mrb[0].mxu0
        %v4825 = vadd.f32 %v4145, %v4824
        %v4826 = vpop.f32.mrb[0].mxu0
        %v4827 = vpop.f32.mrb[0].mxu0
        %4828 = vdwg.mxu0
        %4829 = vmatprep.subr.bf16.mxu0 %v4565
        %4830 = vmatpush1.bf16.msra.mxu0 %v4564
        %4831 = vmatprep.subr.bf16.mxu0 %v4567
        %4832 = vmatpush1.bf16.msra.mxu0 %v4566
        %4833 = vmatprep.subr.bf16.mxu0 %v4569
        %4834 = vmatpush1.bf16.msra.mxu0 %v4568
        %4835 = vmatprep.subr.bf16.mxu0 %v4571
        %4836 = vmatpush1.bf16.msra.mxu0 %v4570
        %4837 = vmatprep.subr.bf16.mxu0 %v4573
        %4838 = vmatpush1.bf16.msra.mxu0 %v4572
        %4839 = vmatprep.subr.bf16.mxu0 %v4575
        %4840 = vmatpush1.bf16.msra.mxu0 %v4574
        %4841 = vmatprep.subr.bf16.mxu0 %v4577
        %4842 = vmatpush1.bf16.msra.mxu0 %v4576
        %4843 = vmatprep.subr.bf16.mxu0 %v4579
        %4844 = vmatpush1.bf16.msra.mxu0 %v4578
        %4845 = vmatprep.subr.bf16.mxu0 %v4581
        %4846 = vmatpush1.bf16.msra.mxu0 %v4580
        %4847 = vmatprep.subr.bf16.mxu0 %v4583
        %4848 = vmatpush1.bf16.msra.mxu0 %v4582
        %4849 = vmatprep.subr.bf16.mxu0 %v4585
        %4850 = vmatpush1.bf16.msra.mxu0 %v4584
        %4851 = vmatprep.subr.bf16.mxu0 %v4587
        %4852 = vmatpush1.bf16.msra.mxu0 %v4586
        %4853 = vmatprep.subr.bf16.mxu0 %v4589
        %4854 = vmatpush1.bf16.msra.mxu0 %v4588
        %4855 = vmatprep.subr.bf16.mxu0 %v4591
        %4856 = vmatpush1.bf16.msra.mxu0 %v4590
        %4857 = vmatprep.subr.bf16.mxu0 %v4593
        %4858 = vmatpush1.bf16.msra.mxu0 %v4592
        %4859 = vmatprep.subr.bf16.mxu0 %v4595
        %4860 = vmatpush1.bf16.msra.mxu0 %v4594
        %4861 = vmatprep.mubr.bf16.mxu0 %v3911
        %4862 = vmatmul.mubr.bf16.gmra.mrb[0].mxu0 %v3910
        %v4863 = vpop.f32.mrb[0].mxu0
        %v4864 = vadd.f32 %v4823, %v4863
        %v4865 = vpop.f32.mrb[0].mxu0
        %v4866 = vadd.f32 %v4825, %v4865
        %v4867 = vpop.f32.mrb[0].mxu0
        %v4868 = vpop.f32.mrb[0].mxu0
        %4869 = vdwg.mxu0
        %4870 = vmatprep.subr.bf16.mxu0 %v4597
        %4871 = vmatpush1.bf16.msra.mxu0 %v4596
        %4872 = vmatprep.subr.bf16.mxu0 %v4599
        %4873 = vmatpush1.bf16.msra.mxu0 %v4598
        %4874 = vmatprep.subr.bf16.mxu0 %v4601
        %4875 = vmatpush1.bf16.msra.mxu0 %v4600
        %4876 = vmatprep.subr.bf16.mxu0 %v4603
        %4877 = vmatpush1.bf16.msra.mxu0 %v4602
        %4878 = vmatprep.subr.bf16.mxu0 %v4605
        %4879 = vmatpush1.bf16.msra.mxu0 %v4604
        %4880 = vmatprep.subr.bf16.mxu0 %v4607
        %4881 = vmatpush1.bf16.msra.mxu0 %v4606
        %4882 = vmatprep.subr.bf16.mxu0 %v4609
        %4883 = vmatpush1.bf16.msra.mxu0 %v4608
        %4884 = vmatprep.subr.bf16.mxu0 %v4611
        %4885 = vmatpush1.bf16.msra.mxu0 %v4610
        %4886 = vmatprep.subr.bf16.mxu0 %v4613
        %4887 = vmatpush1.bf16.msra.mxu0 %v4612
        %4888 = vmatprep.subr.bf16.mxu0 %v4615
        %4889 = vmatpush1.bf16.msra.mxu0 %v4614
        %4890 = vmatprep.subr.bf16.mxu0 %v4617
        %4891 = vmatpush1.bf16.msra.mxu0 %v4616
        %4892 = vmatprep.subr.bf16.mxu0 %v4619
        %4893 = vmatpush1.bf16.msra.mxu0 %v4618
        %4894 = vmatprep.subr.bf16.mxu0 %v4621
        %4895 = vmatpush1.bf16.msra.mxu0 %v4620
        %4896 = vmatprep.subr.bf16.mxu0 %v4623
        %4897 = vmatpush1.bf16.msra.mxu0 %v4622
        %4898 = vmatprep.subr.bf16.mxu0 %v4625
        %4899 = vmatpush1.bf16.msra.mxu0 %v4624
        %4900 = vmatprep.subr.bf16.mxu0 %v4627
        %4901 = vmatpush1.bf16.msra.mxu0 %v4626
        %4902 = vmatprep.mubr.bf16.mxu0 %v3959
        %4903 = vmatmul.mubr.bf16.gmra.mrb[0].mxu0 %v3958
        %v4904 = vpop.f32.mrb[0].mxu0
        %v4905 = vadd.f32 %v4864, %v4904
        %v4906 = vpop.f32.mrb[0].mxu0
        %v4907 = vadd.f32 %v4866, %v4906
        %v4908 = vpop.f32.mrb[0].mxu0
        %v4909 = vpop.f32.mrb[0].mxu0
        %4910 = vdwg.mxu0
        %4911 = vmatprep.subr.bf16.mxu0 %v4629
        %4912 = vmatpush1.bf16.msra.mxu0 %v4628
        %4913 = vmatprep.subr.bf16.mxu0 %v4631
        %4914 = vmatpush1.bf16.msra.mxu0 %v4630
        %4915 = vmatprep.subr.bf16.mxu0 %v4633
        %4916 = vmatpush1.bf16.msra.mxu0 %v4632
        %4917 = vmatprep.subr.bf16.mxu0 %v4635
        %4918 = vmatpush1.bf16.msra.mxu0 %v4634
        %4919 = vmatprep.subr.bf16.mxu0 %v4637
        %4920 = vmatpush1.bf16.msra.mxu0 %v4636
        %4921 = vmatprep.subr.bf16.mxu0 %v4639
        %4922 = vmatpush1.bf16.msra.mxu0 %v4638
        %4923 = vmatprep.subr.bf16.mxu0 %v4641
        %4924 = vmatpush1.bf16.msra.mxu0 %v4640
        %4925 = vmatprep.subr.bf16.mxu0 %v4643
        %4926 = vmatpush1.bf16.msra.mxu0 %v4642
        %4927 = vmatprep.subr.bf16.mxu0 %v4645
        %4928 = vmatpush1.bf16.msra.mxu0 %v4644
        %4929 = vmatprep.subr.bf16.mxu0 %v4647
        %4930 = vmatpush1.bf16.msra.mxu0 %v4646
        %4931 = vmatprep.subr.bf16.mxu0 %v4649
        %4932 = vmatpush1.bf16.msra.mxu0 %v4648
        %4933 = vmatprep.subr.bf16.mxu0 %v4651
        %4934 = vmatpush1.bf16.msra.mxu0 %v4650
        %4935 = vmatprep.subr.bf16.mxu0 %v4653
        %4936 = vmatpush1.bf16.msra.mxu0 %v4652
        %4937 = vmatprep.subr.bf16.mxu0 %v4655
        %4938 = vmatpush1.bf16.msra.mxu0 %v4654
        %4939 = vmatprep.subr.bf16.mxu0 %v4657
        %4940 = vmatpush1.bf16.msra.mxu0 %v4656
        %4941 = vmatprep.subr.bf16.mxu0 %v4659
        %4942 = vmatpush1.bf16.msra.mxu0 %v4658
        %4943 = vmatprep.mubr.bf16.mxu0 %v4007
        %4944 = vmatmul.mubr.bf16.gmra.mrb[0].mxu0 %v4006
        %v4945 = vpop.f32.mrb[0].mxu0
        %v4946 = vadd.f32 %v4905, %v4945
        %v4947 = vpop.f32.mrb[0].mxu0
        %v4948 = vadd.f32 %v4907, %v4947
        %v4949 = vpop.f32.mrb[0].mxu0
        %v4950 = vpop.f32.mrb[0].mxu0
        %4951 = vdwg.mxu0
        %v4952 = vrot.slane %v4946, 4
        %v4953 = vadd.f32 %v4946, %v4952
        %v4954 = vrot.slane %v4953, 2
        %v4955 = vadd.f32 %v4953, %v4954
        %v4956 = vrot.slane %v4955, 1
        %v4957 = vadd.f32 %v4955, %v4956
        %v4958 = vrot.slane %v4948, 4
        %v4959 = vadd.f32 %v4948, %v4958
        %v4960 = vrot.slane %v4959, 2
        %v4961 = vadd.f32 %v4959, %v4960
        %v4962 = vrot.slane %v4961, 1
        %v4963 = vadd.f32 %v4961, %v4962
        %v4964 = vmul.f32 %v4946, %v4946
        %v4965 = vmul.f32 %v4948, %v4948
        %v4966 = vrot.slane %v4964, 4
        %v4967 = vadd.f32 %v4964, %v4966
        %v4968 = vrot.slane %v4967, 2
        %v4969 = vadd.f32 %v4967, %v4968
        %v4970 = vrot.slane %v4969, 1
        %v4971 = vadd.f32 %v4969, %v4970
        %v4972 = vrot.slane %v4965, 4
        %v4973 = vadd.f32 %v4965, %v4972
        %v4974 = vrot.slane %v4973, 2
        %v4975 = vadd.f32 %v4973, %v4974
        %v4976 = vrot.slane %v4975, 1
        %v4977 = vadd.f32 %v4975, %v4976
        %v4978 = vld [vmem:[#allocation19] sm:$0xff]
        %v4979 = vld [vmem:[#allocation19 + $0x8] sm:$0xff]
        %v4980 = vld [vmem:[#allocation19 + $0x10] sm:$0xff]
        %v4981 = vld [vmem:[#allocation19 + $0x18] sm:$0xff]
        %v4982 = vld [vmem:[#allocation19 + $0x20] sm:$0xff]
        %v4983 = vld [vmem:[#allocation19 + $0x28] sm:$0xff]
        %v4984 = vld [vmem:[#allocation19 + $0x30] sm:$0xff]
        %v4985 = vld [vmem:[#allocation19 + $0x38] sm:$0xff]
        %v4986 = vld [vmem:[#allocation19 + $0x40] sm:$0xff]
        %v4987 = vld [vmem:[#allocation19 + $0x48] sm:$0xff]
        %v4988 = vld [vmem:[#allocation19 + $0x50] sm:$0xff]
        %v4989 = vld [vmem:[#allocation19 + $0x58] sm:$0xff]
        %v4990 = vld [vmem:[#allocation19 + $0x60] sm:$0xff]
        %v4991 = vld [vmem:[#allocation19 + $0x68] sm:$0xff]
        %v4992 = vld [vmem:[#allocation19 + $0x70] sm:$0xff]
        %v4993 = vld [vmem:[#allocation19 + $0x78] sm:$0xff]
        %v4994 = vld [vmem:[#allocation19 + $0x80] sm:$0xff]
        %v4995 = vld [vmem:[#allocation19 + $0x88] sm:$0xff]
        %v4996 = vld [vmem:[#allocation19 + $0x90] sm:$0xff]
        %v4997 = vld [vmem:[#allocation19 + $0x98] sm:$0xff]
        %v4998 = vld [vmem:[#allocation19 + $0xa0] sm:$0xff]
        %v4999 = vld [vmem:[#allocation19 + $0xa8] sm:$0xff]
        %v5000 = vld [vmem:[#allocation19 + $0xb0] sm:$0xff]
        %v5001 = vld [vmem:[#allocation19 + $0xb8] sm:$0xff]
        %v5002 = vld [vmem:[#allocation19 + $0xc0] sm:$0xff]
        %v5003 = vld [vmem:[#allocation19 + $0xc8] sm:$0xff]
        %v5004 = vld [vmem:[#allocation19 + $0xd0] sm:$0xff]
        %v5005 = vld [vmem:[#allocation19 + $0xd8] sm:$0xff]
        %v5006 = vld [vmem:[#allocation19 + $0xe0] sm:$0xff]
        %v5007 = vld [vmem:[#allocation19 + $0xe8] sm:$0xff]
        %v5008 = vld [vmem:[#allocation19 + $0xf0] sm:$0xff]
        %v5009 = vld [vmem:[#allocation19 + $0xf8] sm:$0xff]
        %v5010 = vld [vmem:[#allocation19 + $0x100] sm:$0xff]
        %v5011 = vld [vmem:[#allocation19 + $0x108] sm:$0xff]
        %v5012 = vld [vmem:[#allocation19 + $0x110] sm:$0xff]
        %v5013 = vld [vmem:[#allocation19 + $0x118] sm:$0xff]
        %v5014 = vld [vmem:[#allocation19 + $0x120] sm:$0xff]
        %v5015 = vld [vmem:[#allocation19 + $0x128] sm:$0xff]
        %v5016 = vld [vmem:[#allocation19 + $0x130] sm:$0xff]
        %v5017 = vld [vmem:[#allocation19 + $0x138] sm:$0xff]
        %v5018 = vld [vmem:[#allocation19 + $0x140] sm:$0xff]
        %v5019 = vld [vmem:[#allocation19 + $0x148] sm:$0xff]
        %v5020 = vld [vmem:[#allocation19 + $0x150] sm:$0xff]
        %v5021 = vld [vmem:[#allocation19 + $0x158] sm:$0xff]
        %v5022 = vld [vmem:[#allocation19 + $0x160] sm:$0xff]
        %v5023 = vld [vmem:[#allocation19 + $0x168] sm:$0xff]
        %v5024 = vld [vmem:[#allocation19 + $0x170] sm:$0xff]
        %v5025 = vld [vmem:[#allocation19 + $0x178] sm:$0xff]
        %v5026 = vld [vmem:[#allocation19 + $0x180] sm:$0xff]
        %v5027 = vld [vmem:[#allocation19 + $0x188] sm:$0xff]
        %v5028 = vld [vmem:[#allocation19 + $0x190] sm:$0xff]
        %v5029 = vld [vmem:[#allocation19 + $0x198] sm:$0xff]
        %v5030 = vld [vmem:[#allocation19 + $0x1a0] sm:$0xff]
        %v5031 = vld [vmem:[#allocation19 + $0x1a8] sm:$0xff]
        %v5032 = vld [vmem:[#allocation19 + $0x1b0] sm:$0xff]
        %v5033 = vld [vmem:[#allocation19 + $0x1b8] sm:$0xff]
        %v5034 = vld [vmem:[#allocation19 + $0x1c0] sm:$0xff]
        %v5035 = vld [vmem:[#allocation19 + $0x1c8] sm:$0xff]
        %v5036 = vld [vmem:[#allocation19 + $0x1d0] sm:$0xff]
        %v5037 = vld [vmem:[#allocation19 + $0x1d8] sm:$0xff]
        %v5038 = vld [vmem:[#allocation19 + $0x1e0] sm:$0xff]
        %v5039 = vld [vmem:[#allocation19 + $0x1e8] sm:$0xff]
        %v5040 = vld [vmem:[#allocation19 + $0x1f0] sm:$0xff]
        %v5041 = vld [vmem:[#allocation19 + $0x1f8] sm:$0xff]
        %5042 = vmatprep.subr.mxu0 %v4979
        %5043 = vmatpush1.msra.mxu0 %v4978
        %5044 = vmatprep.subr.mxu0 %v4981
        %5045 = vmatpush1.msra.mxu0 %v4980
        %5046 = vmatprep.subr.mxu0 %v4983
        %5047 = vmatpush1.msra.mxu0 %v4982
        %5048 = vmatprep.subr.mxu0 %v4985
        %5049 = vmatpush1.msra.mxu0 %v4984
        %5050 = vmatprep.subr.mxu0 %v4987
        %5051 = vmatpush1.msra.mxu0 %v4986
        %5052 = vmatprep.subr.mxu0 %v4989
        %5053 = vmatpush1.msra.mxu0 %v4988
        %5054 = vmatprep.subr.mxu0 %v4991
        %5055 = vmatpush1.msra.mxu0 %v4990
        %5056 = vmatprep.subr.mxu0 %v4993
        %5057 = vmatpush1.msra.mxu0 %v4992
        %5058 = vmatprep.subr.mxu0 %v4995
        %5059 = vmatpush1.msra.mxu0 %v4994
        %5060 = vmatprep.subr.mxu0 %v4997
        %5061 = vmatpush1.msra.mxu0 %v4996
        %5062 = vmatprep.subr.mxu0 %v4999
        %5063 = vmatpush1.msra.mxu0 %v4998
        %5064 = vmatprep.subr.mxu0 %v5001
        %5065 = vmatpush1.msra.mxu0 %v5000
        %5066 = vmatprep.subr.mxu0 %v5003
        %5067 = vmatpush1.msra.mxu0 %v5002
        %5068 = vmatprep.subr.mxu0 %v5005
        %5069 = vmatpush1.msra.mxu0 %v5004
        %5070 = vmatprep.subr.mxu0 %v5007
        %5071 = vmatpush1.msra.mxu0 %v5006
        %5072 = vmatprep.subr.mxu0 %v5009
        %5073 = vmatpush1.msra.mxu0 %v5008
        %5074 = vmatprep.subr.mxu0 %v5011
        %5075 = vmatpush1.msra.mxu0 %v5010
        %5076 = vmatprep.subr.mxu0 %v5013
        %5077 = vmatpush1.msra.mxu0 %v5012
        %5078 = vmatprep.subr.mxu0 %v5015
        %5079 = vmatpush1.msra.mxu0 %v5014
        %5080 = vmatprep.subr.mxu0 %v5017
        %5081 = vmatpush1.msra.mxu0 %v5016
        %5082 = vmatprep.subr.mxu0 %v5019
        %5083 = vmatpush1.msra.mxu0 %v5018
        %5084 = vmatprep.subr.mxu0 %v5021
        %5085 = vmatpush1.msra.mxu0 %v5020
        %5086 = vmatprep.subr.mxu0 %v5023
        %5087 = vmatpush1.msra.mxu0 %v5022
        %5088 = vmatprep.subr.mxu0 %v5025
        %5089 = vmatpush1.msra.mxu0 %v5024
        %5090 = vmatprep.subr.mxu0 %v5027
        %5091 = vmatpush1.msra.mxu0 %v5026
        %5092 = vmatprep.subr.mxu0 %v5029
        %5093 = vmatpush1.msra.mxu0 %v5028
        %5094 = vmatprep.subr.mxu0 %v5031
        %5095 = vmatpush1.msra.mxu0 %v5030
        %5096 = vmatprep.subr.mxu0 %v5033
        %5097 = vmatpush1.msra.mxu0 %v5032
        %5098 = vmatprep.subr.mxu0 %v5035
        %5099 = vmatpush1.msra.mxu0 %v5034
        %5100 = vmatprep.subr.mxu0 %v5037
        %5101 = vmatpush1.msra.mxu0 %v5036
        %5102 = vmatprep.subr.mxu0 %v5039
        %5103 = vmatpush1.msra.mxu0 %v5038
        %5104 = vmatprep.subr.mxu0 %v5041
        %5105 = vmatpush1.msra.mxu0 %v5040
        %5106 = vmatprep.mubr.f32.mxu0 %v4963
        %5107 = vmatmul.mubr.f32.gmra.mrb[0].mxu0 %v4957
        %v5108 = vpop.f32.mrb[0].mxu0
        %v5109 = vadd.f32 0.0, %v5108
        %v5110 = vpop.f32.mrb[0].mxu0
        %v5111 = vadd.f32 0.0, %v5110
        %5112 = vdwg.mxu0
        %5113 = vmatprep.subr.mxu0 %v4979
        %5114 = vmatpush1.msra.mxu0 %v4978
        %5115 = vmatprep.subr.mxu0 %v4981
        %5116 = vmatpush1.msra.mxu0 %v4980
        %5117 = vmatprep.subr.mxu0 %v4983
        %5118 = vmatpush1.msra.mxu0 %v4982
        %5119 = vmatprep.subr.mxu0 %v4985
        %5120 = vmatpush1.msra.mxu0 %v4984
        %5121 = vmatprep.subr.mxu0 %v4987
        %5122 = vmatpush1.msra.mxu0 %v4986
        %5123 = vmatprep.subr.mxu0 %v4989
        %5124 = vmatpush1.msra.mxu0 %v4988
        %5125 = vmatprep.subr.mxu0 %v4991
        %5126 = vmatpush1.msra.mxu0 %v4990
        %5127 = vmatprep.subr.mxu0 %v4993
        %5128 = vmatpush1.msra.mxu0 %v4992
        %5129 = vmatprep.subr.mxu0 %v4995
        %5130 = vmatpush1.msra.mxu0 %v4994
        %5131 = vmatprep.subr.mxu0 %v4997
        %5132 = vmatpush1.msra.mxu0 %v4996
        %5133 = vmatprep.subr.mxu0 %v4999
        %5134 = vmatpush1.msra.mxu0 %v4998
        %5135 = vmatprep.subr.mxu0 %v5001
        %5136 = vmatpush1.msra.mxu0 %v5000
        %5137 = vmatprep.subr.mxu0 %v5003
        %5138 = vmatpush1.msra.mxu0 %v5002
        %5139 = vmatprep.subr.mxu0 %v5005
        %5140 = vmatpush1.msra.mxu0 %v5004
        %5141 = vmatprep.subr.mxu0 %v5007
        %5142 = vmatpush1.msra.mxu0 %v5006
        %5143 = vmatprep.subr.mxu0 %v5009
        %5144 = vmatpush1.msra.mxu0 %v5008
        %5145 = vmatprep.subr.mxu0 %v5011
        %5146 = vmatpush1.msra.mxu0 %v5010
        %5147 = vmatprep.subr.mxu0 %v5013
        %5148 = vmatpush1.msra.mxu0 %v5012
        %5149 = vmatprep.subr.mxu0 %v5015
        %5150 = vmatpush1.msra.mxu0 %v5014
        %5151 = vmatprep.subr.mxu0 %v5017
        %5152 = vmatpush1.msra.mxu0 %v5016
        %5153 = vmatprep.subr.mxu0 %v5019
        %5154 = vmatpush1.msra.mxu0 %v5018
        %5155 = vmatprep.subr.mxu0 %v5021
        %5156 = vmatpush1.msra.mxu0 %v5020
        %5157 = vmatprep.subr.mxu0 %v5023
        %5158 = vmatpush1.msra.mxu0 %v5022
        %5159 = vmatprep.subr.mxu0 %v5025
        %5160 = vmatpush1.msra.mxu0 %v5024
        %5161 = vmatprep.subr.mxu0 %v5027
        %5162 = vmatpush1.msra.mxu0 %v5026
        %5163 = vmatprep.subr.mxu0 %v5029
        %5164 = vmatpush1.msra.mxu0 %v5028
        %5165 = vmatprep.subr.mxu0 %v5031
        %5166 = vmatpush1.msra.mxu0 %v5030
        %5167 = vmatprep.subr.mxu0 %v5033
        %5168 = vmatpush1.msra.mxu0 %v5032
        %5169 = vmatprep.subr.mxu0 %v5035
        %5170 = vmatpush1.msra.mxu0 %v5034
        %5171 = vmatprep.subr.mxu0 %v5037
        %5172 = vmatpush1.msra.mxu0 %v5036
        %5173 = vmatprep.subr.mxu0 %v5039
        %5174 = vmatpush1.msra.mxu0 %v5038
        %5175 = vmatprep.subr.mxu0 %v5041
        %5176 = vmatpush1.msra.mxu0 %v5040
        %5177 = vmatprep.mubr.f32.mxu0 %v4977
        %5178 = vmatmul.mubr.f32.gmra.mrb[0].mxu0 %v4971
        %v5179 = vpop.f32.mrb[0].mxu0
        %v5180 = vadd.f32 0.0, %v5179
        %v5181 = vpop.f32.mrb[0].mxu0
        %v5182 = vadd.f32 0.0, %v5181
        %5183 = vdwg.mxu0
        %v5184 = vmul.f32 %v5109, %v5109
        %v5185 = vmul.f32 %v5111, %v5111
        %v5186 = vsub.f32 %v5180, %v5184
        %v5187 = vsub.f32 %v5182, %v5185
        %v5188 = vlaneseq
        %v5189 = vshrl.u32 %v5188, 7
        %v5190 = vsub.s32 0, %v5189
        %v5191 = vrot.slane %v5109, %v5190
        %v5192 = vlaneseq
        %v5193 = vshrl.u32 %v5192, 7
        %v5194 = vsub.s32 0, %v5193
        %v5195 = vrot.slane %v5111, %v5194
        %v5196 = vsub.f32 %v4946, %v5191
        %v5197 = vsub.f32 %v4948, %v5195
        %v5198 = vadd.f32 %v5186, 1e-05
        %v5199 = vadd.f32 %v5187, 1e-05
        %v5200 = vrsqrt.pop %v5198
        %v5201 = vrsqrt.pop %v5199
        %v5202 = vlaneseq
        %v5203 = vshrl.u32 %v5202, 7
        %v5204 = vsub.s32 0, %v5203
        %v5205 = vrot.slane %v5200, %v5204
        %v5206 = vlaneseq
        %v5207 = vshrl.u32 %v5206, 7
        %v5208 = vsub.s32 0, %v5207
        %v5209 = vrot.slane %v5201, %v5208
        %v5210 = vmul.f32 %v5196, %v5205
        %v5211 = vmul.f32 %v5197, %v5209
        %vm5212 = vcmp.ge.f32.partialorder %v5210, 0.0
        %vm5213 = vcmp.ge.f32.partialorder %v5211, 0.0
        %v5214 = vmul.f32 %v5210, 0.2
        %v5215 = vmul.f32 %v5211, 0.2
        %v5216 = vsel %vm5212, %v5210, %v5214
        %v5217 = vsel %vm5213, %v5211, %v5215
        %v5218 = vpack.c.bf16 %v5216, %v5216
        %v5219 = vpack.c.bf16 %v5217, %v5217
        %v5220 = vld [vmem:[#allocation20] sm:$0x3]
        %vm5221 = vcmask 64512
        %v5223 = vsel %vm5221, %v5220, 0
        %vm5225 = vcmask 1043456
        %v5227 = vsel %vm5225, %v5218, 0
        %v5230 = vsel %vm5225, %v5219, 0
        %5232 = vmatprep.subr.bf16.mxu0 %v5230
        %5233 = vmatpush1.bf16.msra.mxu0 %v5227
        %5234 = vmatprep.subr.bf16.mxu0 0
        %5235 = vmatpush1.bf16.msra.mxu0 0
        %5236 = vmatprep.subr.bf16.mxu0 0
        %5237 = vmatpush1.bf16.msra.mxu0 0
        %5238 = vmatprep.subr.bf16.mxu0 0
        %5239 = vmatpush1.bf16.msra.mxu0 0
        %5240 = vmatprep.subr.bf16.mxu0 0
        %5241 = vmatpush1.bf16.msra.mxu0 0
        %5242 = vmatprep.subr.bf16.mxu0 0
        %5243 = vmatpush1.bf16.msra.mxu0 0
        %5244 = vmatprep.subr.bf16.mxu0 0
        %5245 = vmatpush1.bf16.msra.mxu0 0
        %5246 = vmatprep.subr.bf16.mxu0 0
        %5247 = vmatpush1.bf16.msra.mxu0 0
        %5248 = vmatprep.subr.bf16.mxu0 0
        %5249 = vmatpush1.bf16.msra.mxu0 0
        %5250 = vmatprep.subr.bf16.mxu0 0
        %5251 = vmatpush1.bf16.msra.mxu0 0
        %5252 = vmatprep.subr.bf16.mxu0 0
        %5253 = vmatpush1.bf16.msra.mxu0 0
        %5254 = vmatprep.subr.bf16.mxu0 0
        %5255 = vmatpush1.bf16.msra.mxu0 0
        %5256 = vmatprep.subr.bf16.mxu0 0
        %5257 = vmatpush1.bf16.msra.mxu0 0
        %5258 = vmatprep.subr.bf16.mxu0 0
        %5259 = vmatpush1.bf16.msra.mxu0 0
        %5260 = vmatprep.subr.bf16.mxu0 0
        %5261 = vmatpush1.bf16.msra.mxu0 0
        %5262 = vmatprep.subr.bf16.mxu0 0
        %5263 = vmatpush1.bf16.msra.mxu0 0
        %5264 = vmatprep.mubr.bf16.mxu0 0
        %5265 = vmatmul.mubr.bf16.gmra.mrb[0].mxu0 %v5223
        %v5266 = vpop.f32.mrb[0].mxu0
        %v5267 = vadd.f32 0.0, %v5266
        %v5268 = vpop.f32.mrb[0].mxu0
        %v5269 = vadd.f32 0.0, %v5268
        %v5270 = vpop.f32.mrb[0].mxu0
        %v5271 = vpop.f32.mrb[0].mxu0
        %5272 = vdwg.mxu0
        %v5273 = vpack.c.bf16 %v5267, %v5267
        %v5274 = vpack.c.bf16 %v5269, %v5269
        %s5275 = scalar_lea.vmem [#allocation20], 2
        %v5276 = vld [vmem:[%s5275] sm:$0x3]
        %v5278 = vsel %vm5221, %v5276, 0
        %5280 = vmatprep.subr.bf16.mxu0 %v5230
        %5281 = vmatpush1.bf16.msra.mxu0 %v5227
        %5282 = vmatprep.subr.bf16.mxu0 0
        %5283 = vmatpush1.bf16.msra.mxu0 0
        %5284 = vmatprep.subr.bf16.mxu0 0
        %5285 = vmatpush1.bf16.msra.mxu0 0
        %5286 = vmatprep.subr.bf16.mxu0 0
        %5287 = vmatpush1.bf16.msra.mxu0 0
        %5288 = vmatprep.subr.bf16.mxu0 0
        %5289 = vmatpush1.bf16.msra.mxu0 0
        %5290 = vmatprep.subr.bf16.mxu0 0
        %5291 = vmatpush1.bf16.msra.mxu0 0
        %5292 = vmatprep.subr.bf16.mxu0 0
        %5293 = vmatpush1.bf16.msra.mxu0 0
        %5294 = vmatprep.subr.bf16.mxu0 0
        %5295 = vmatpush1.bf16.msra.mxu0 0
        %5296 = vmatprep.subr.bf16.mxu0 0
        %5297 = vmatpush1.bf16.msra.mxu0 0
        %5298 = vmatprep.subr.bf16.mxu0 0
        %5299 = vmatpush1.bf16.msra.mxu0 0
        %5300 = vmatprep.subr.bf16.mxu0 0
        %5301 = vmatpush1.bf16.msra.mxu0 0
        %5302 = vmatprep.subr.bf16.mxu0 0
        %5303 = vmatpush1.bf16.msra.mxu0 0
        %5304 = vmatprep.subr.bf16.mxu0 0
        %5305 = vmatpush1.bf16.msra.mxu0 0
        %5306 = vmatprep.subr.bf16.mxu0 0
        %5307 = vmatpush1.bf16.msra.mxu0 0
        %5308 = vmatprep.subr.bf16.mxu0 0
        %5309 = vmatpush1.bf16.msra.mxu0 0
        %5310 = vmatprep.subr.bf16.mxu0 0
        %5311 = vmatpush1.bf16.msra.mxu0 0
        %5312 = vmatprep.mubr.bf16.mxu0 0
        %5313 = vmatmul.mubr.bf16.gmra.mrb[0].mxu0 %v5278
        %v5314 = vpop.f32.mrb[0].mxu0
        %v5315 = vadd.f32 0.0, %v5314
        %v5316 = vpop.f32.mrb[0].mxu0
        %v5317 = vadd.f32 0.0, %v5316
        %v5318 = vpop.f32.mrb[0].mxu0
        %v5319 = vpop.f32.mrb[0].mxu0
        %5320 = vdwg.mxu0
        %v5321 = vpack.c.bf16 %v5315, %v5315
        %v5322 = vpack.c.bf16 %v5317, %v5317
        %s5323 = scalar_lea.vmem [#allocation20], 4
        %v5324 = vld [vmem:[%s5323] sm:$0x3]
        %v5326 = vsel %vm5221, %v5324, 0
        %5328 = vmatprep.subr.bf16.mxu0 %v5230
        %5329 = vmatpush1.bf16.msra.mxu0 %v5227
        %5330 = vmatprep.subr.bf16.mxu0 0
        %5331 = vmatpush1.bf16.msra.mxu0 0
        %5332 = vmatprep.subr.bf16.mxu0 0
        %5333 = vmatpush1.bf16.msra.mxu0 0
        %5334 = vmatprep.subr.bf16.mxu0 0
        %5335 = vmatpush1.bf16.msra.mxu0 0
        %5336 = vmatprep.subr.bf16.mxu0 0
        %5337 = vmatpush1.bf16.msra.mxu0 0
        %5338 = vmatprep.subr.bf16.mxu0 0
        %5339 = vmatpush1.bf16.msra.mxu0 0
        %5340 = vmatprep.subr.bf16.mxu0 0
        %5341 = vmatpush1.bf16.msra.mxu0 0
        %5342 = vmatprep.subr.bf16.mxu0 0
        %5343 = vmatpush1.bf16.msra.mxu0 0
        %5344 = vmatprep.subr.bf16.mxu0 0
        %5345 = vmatpush1.bf16.msra.mxu0 0
        %5346 = vmatprep.subr.bf16.mxu0 0
        %5347 = vmatpush1.bf16.msra.mxu0 0
        %5348 = vmatprep.subr.bf16.mxu0 0
        %5349 = vmatpush1.bf16.msra.mxu0 0
        %5350 = vmatprep.subr.bf16.mxu0 0
        %5351 = vmatpush1.bf16.msra.mxu0 0
        %5352 = vmatprep.subr.bf16.mxu0 0
        %5353 = vmatpush1.bf16.msra.mxu0 0
        %5354 = vmatprep.subr.bf16.mxu0 0
        %5355 = vmatpush1.bf16.msra.mxu0 0
        %5356 = vmatprep.subr.bf16.mxu0 0
        %5357 = vmatpush1.bf16.msra.mxu0 0
        %5358 = vmatprep.subr.bf16.mxu0 0
        %5359 = vmatpush1.bf16.msra.mxu0 0
        %5360 = vmatprep.mubr.bf16.mxu0 0
        %5361 = vmatmul.mubr.bf16.gmra.mrb[0].mxu0 %v5326
        %v5362 = vpop.f32.mrb[0].mxu0
        %v5363 = vadd.f32 0.0, %v5362
        %v5364 = vpop.f32.mrb[0].mxu0
        %v5365 = vadd.f32 0.0, %v5364
        %v5366 = vpop.f32.mrb[0].mxu0
        %v5367 = vpop.f32.mrb[0].mxu0
        %5368 = vdwg.mxu0
        %v5369 = vpack.c.bf16 %v5363, %v5363
        %v5370 = vpack.c.bf16 %v5365, %v5365
        %s5371 = scalar_lea.vmem [#allocation20], 6
        %v5372 = vld [vmem:[%s5371] sm:$0x3]
        %v5374 = vsel %vm5221, %v5372, 0
        %5376 = vmatprep.subr.bf16.mxu0 %v5230
        %5377 = vmatpush1.bf16.msra.mxu0 %v5227
        %5378 = vmatprep.subr.bf16.mxu0 0
        %5379 = vmatpush1.bf16.msra.mxu0 0
        %5380 = vmatprep.subr.bf16.mxu0 0
        %5381 = vmatpush1.bf16.msra.mxu0 0
        %5382 = vmatprep.subr.bf16.mxu0 0
        %5383 = vmatpush1.bf16.msra.mxu0 0
        %5384 = vmatprep.subr.bf16.mxu0 0
        %5385 = vmatpush1.bf16.msra.mxu0 0
        %5386 = vmatprep.subr.bf16.mxu0 0
        %5387 = vmatpush1.bf16.msra.mxu0 0
        %5388 = vmatprep.subr.bf16.mxu0 0
        %5389 = vmatpush1.bf16.msra.mxu0 0
        %5390 = vmatprep.subr.bf16.mxu0 0
        %5391 = vmatpush1.bf16.msra.mxu0 0
        %5392 = vmatprep.subr.bf16.mxu0 0
        %5393 = vmatpush1.bf16.msra.mxu0 0
        %5394 = vmatprep.subr.bf16.mxu0 0
        %5395 = vmatpush1.bf16.msra.mxu0 0
        %5396 = vmatprep.subr.bf16.mxu0 0
        %5397 = vmatpush1.bf16.msra.mxu0 0
        %5398 = vmatprep.subr.bf16.mxu0 0
        %5399 = vmatpush1.bf16.msra.mxu0 0
        %5400 = vmatprep.subr.bf16.mxu0 0
        %5401 = vmatpush1.bf16.msra.mxu0 0
        %5402 = vmatprep.subr.bf16.mxu0 0
        %5403 = vmatpush1.bf16.msra.mxu0 0
        %5404 = vmatprep.subr.bf16.mxu0 0
        %5405 = vmatpush1.bf16.msra.mxu0 0
        %5406 = vmatprep.subr.bf16.mxu0 0
        %5407 = vmatpush1.bf16.msra.mxu0 0
        %5408 = vmatprep.mubr.bf16.mxu0 0
        %5409 = vmatmul.mubr.bf16.gmra.mrb[0].mxu0 %v5374
        %v5410 = vpop.f32.mrb[0].mxu0
        %v5411 = vadd.f32 0.0, %v5410
        %v5412 = vpop.f32.mrb[0].mxu0
        %v5413 = vadd.f32 0.0, %v5412
        %v5414 = vpop.f32.mrb[0].mxu0
        %v5415 = vpop.f32.mrb[0].mxu0
        %5416 = vdwg.mxu0
        %v5417 = vpack.c.bf16 %v5411, %v5411
        %v5418 = vpack.c.bf16 %v5413, %v5413
        %v5419 = vld [vmem:[#allocation22] sm:$0xf]
        %v5420 = vld [vmem:[#allocation22 + $0x4] sm:$0xf]
        %v5421 = vld [vmem:[#allocation22 + $0x8] sm:$0xf]
        %v5422 = vld [vmem:[#allocation22 + $0xc] sm:$0xf]
        %v5423 = vld [vmem:[#allocation22 + $0x10] sm:$0xf]
        %v5424 = vld [vmem:[#allocation22 + $0x14] sm:$0xf]
        %v5425 = vld [vmem:[#allocation22 + $0x18] sm:$0xf]
        %v5426 = vld [vmem:[#allocation22 + $0x1c] sm:$0xf]
        %v5427 = vld [vmem:[#allocation22 + $0x20] sm:$0xf]
        %v5428 = vld [vmem:[#allocation22 + $0x24] sm:$0xf]
        %v5429 = vld [vmem:[#allocation22 + $0x28] sm:$0xf]
        %v5430 = vld [vmem:[#allocation22 + $0x2c] sm:$0xf]
        %v5431 = vld [vmem:[#allocation22 + $0x30] sm:$0xf]
        %v5432 = vld [vmem:[#allocation22 + $0x34] sm:$0xf]
        %v5433 = vld [vmem:[#allocation22 + $0x38] sm:$0xf]
        %v5434 = vld [vmem:[#allocation22 + $0x3c] sm:$0xf]
        %v5435 = vld [vmem:[#allocation22 + $0x40] sm:$0xf]
        %v5436 = vld [vmem:[#allocation22 + $0x44] sm:$0xf]
        %v5437 = vld [vmem:[#allocation22 + $0x48] sm:$0xf]
        %v5438 = vld [vmem:[#allocation22 + $0x4c] sm:$0xf]
        %v5439 = vld [vmem:[#allocation22 + $0x50] sm:$0xf]
        %v5440 = vld [vmem:[#allocation22 + $0x54] sm:$0xf]
        %v5441 = vld [vmem:[#allocation22 + $0x58] sm:$0xf]
        %v5442 = vld [vmem:[#allocation22 + $0x5c] sm:$0xf]
        %v5443 = vld [vmem:[#allocation22 + $0x60] sm:$0xf]
        %v5444 = vld [vmem:[#allocation22 + $0x64] sm:$0xf]
        %v5445 = vld [vmem:[#allocation22 + $0x68] sm:$0xf]
        %v5446 = vld [vmem:[#allocation22 + $0x6c] sm:$0xf]
        %v5447 = vld [vmem:[#allocation22 + $0x70] sm:$0xf]
        %v5448 = vld [vmem:[#allocation22 + $0x74] sm:$0xf]
        %v5449 = vld [vmem:[#allocation22 + $0x78] sm:$0xf]
        %v5450 = vld [vmem:[#allocation22 + $0x7c] sm:$0xf]
        %v5451 = vld [vmem:[#allocation22 + $0x80] sm:$0xf]
        %v5452 = vld [vmem:[#allocation22 + $0x84] sm:$0xf]
        %v5453 = vld [vmem:[#allocation22 + $0x88] sm:$0xf]
        %v5454 = vld [vmem:[#allocation22 + $0x8c] sm:$0xf]
        %v5455 = vld [vmem:[#allocation22 + $0x90] sm:$0xf]
        %v5456 = vld [vmem:[#allocation22 + $0x94] sm:$0xf]
        %v5457 = vld [vmem:[#allocation22 + $0x98] sm:$0xf]
        %v5458 = vld [vmem:[#allocation22 + $0x9c] sm:$0xf]
        %v5459 = vld [vmem:[#allocation22 + $0xa0] sm:$0xf]
        %v5460 = vld [vmem:[#allocation22 + $0xa4] sm:$0xf]
        %v5461 = vld [vmem:[#allocation22 + $0xa8] sm:$0xf]
        %v5462 = vld [vmem:[#allocation22 + $0xac] sm:$0xf]
        %v5463 = vld [vmem:[#allocation22 + $0xb0] sm:$0xf]
        %v5464 = vld [vmem:[#allocation22 + $0xb4] sm:$0xf]
        %v5465 = vld [vmem:[#allocation22 + $0xb8] sm:$0xf]
        %v5466 = vld [vmem:[#allocation22 + $0xbc] sm:$0xf]
        %v5467 = vld [vmem:[#allocation22 + $0xc0] sm:$0xf]
        %v5468 = vld [vmem:[#allocation22 + $0xc4] sm:$0xf]
        %v5469 = vld [vmem:[#allocation22 + $0xc8] sm:$0xf]
        %v5470 = vld [vmem:[#allocation22 + $0xcc] sm:$0xf]
        %v5471 = vld [vmem:[#allocation22 + $0xd0] sm:$0xf]
        %v5472 = vld [vmem:[#allocation22 + $0xd4] sm:$0xf]
        %v5473 = vld [vmem:[#allocation22 + $0xd8] sm:$0xf]
        %v5474 = vld [vmem:[#allocation22 + $0xdc] sm:$0xf]
        %v5475 = vld [vmem:[#allocation22 + $0xe0] sm:$0xf]
        %v5476 = vld [vmem:[#allocation22 + $0xe4] sm:$0xf]
        %v5477 = vld [vmem:[#allocation22 + $0xe8] sm:$0xf]
        %v5478 = vld [vmem:[#allocation22 + $0xec] sm:$0xf]
        %v5479 = vld [vmem:[#allocation22 + $0xf0] sm:$0xf]
        %v5480 = vld [vmem:[#allocation22 + $0xf4] sm:$0xf]
        %v5481 = vld [vmem:[#allocation22 + $0xf8] sm:$0xf]
        %v5482 = vld [vmem:[#allocation22 + $0xfc] sm:$0xf]
        %v5483 = vld [vmem:[#allocation22 + $0x100] sm:$0xf]
        %v5484 = vld [vmem:[#allocation22 + $0x104] sm:$0xf]
        %v5485 = vld [vmem:[#allocation22 + $0x108] sm:$0xf]
        %v5486 = vld [vmem:[#allocation22 + $0x10c] sm:$0xf]
        %v5487 = vld [vmem:[#allocation22 + $0x110] sm:$0xf]
        %v5488 = vld [vmem:[#allocation22 + $0x114] sm:$0xf]
        %v5489 = vld [vmem:[#allocation22 + $0x118] sm:$0xf]
        %v5490 = vld [vmem:[#allocation22 + $0x11c] sm:$0xf]
        %v5491 = vld [vmem:[#allocation22 + $0x120] sm:$0xf]
        %v5492 = vld [vmem:[#allocation22 + $0x124] sm:$0xf]
        %v5493 = vld [vmem:[#allocation22 + $0x128] sm:$0xf]
        %v5494 = vld [vmem:[#allocation22 + $0x12c] sm:$0xf]
        %v5495 = vld [vmem:[#allocation22 + $0x130] sm:$0xf]
        %v5496 = vld [vmem:[#allocation22 + $0x134] sm:$0xf]
        %v5497 = vld [vmem:[#allocation22 + $0x138] sm:$0xf]
        %v5498 = vld [vmem:[#allocation22 + $0x13c] sm:$0xf]
        %v5499 = vld [vmem:[#allocation22 + $0x140] sm:$0xf]
        %v5500 = vld [vmem:[#allocation22 + $0x144] sm:$0xf]
        %v5501 = vld [vmem:[#allocation22 + $0x148] sm:$0xf]
        %v5502 = vld [vmem:[#allocation22 + $0x14c] sm:$0xf]
        %v5503 = vld [vmem:[#allocation22 + $0x150] sm:$0xf]
        %v5504 = vld [vmem:[#allocation22 + $0x154] sm:$0xf]
        %v5505 = vld [vmem:[#allocation22 + $0x158] sm:$0xf]
        %v5506 = vld [vmem:[#allocation22 + $0x15c] sm:$0xf]
        %v5507 = vld [vmem:[#allocation22 + $0x160] sm:$0xf]
        %v5508 = vld [vmem:[#allocation22 + $0x164] sm:$0xf]
        %v5509 = vld [vmem:[#allocation22 + $0x168] sm:$0xf]
        %v5510 = vld [vmem:[#allocation22 + $0x16c] sm:$0xf]
        %v5511 = vld [vmem:[#allocation22 + $0x170] sm:$0xf]
        %v5512 = vld [vmem:[#allocation22 + $0x174] sm:$0xf]
        %v5513 = vld [vmem:[#allocation22 + $0x178] sm:$0xf]
        %v5514 = vld [vmem:[#allocation22 + $0x17c] sm:$0xf]
        %v5515 = vld [vmem:[#allocation22 + $0x180] sm:$0xf]
        %v5516 = vld [vmem:[#allocation22 + $0x184] sm:$0xf]
        %v5517 = vld [vmem:[#allocation22 + $0x188] sm:$0xf]
        %v5518 = vld [vmem:[#allocation22 + $0x18c] sm:$0xf]
        %v5519 = vld [vmem:[#allocation22 + $0x190] sm:$0xf]
        %v5520 = vld [vmem:[#allocation22 + $0x194] sm:$0xf]
        %v5521 = vld [vmem:[#allocation22 + $0x198] sm:$0xf]
        %v5522 = vld [vmem:[#allocation22 + $0x19c] sm:$0xf]
        %v5523 = vld [vmem:[#allocation22 + $0x1a0] sm:$0xf]
        %v5524 = vld [vmem:[#allocation22 + $0x1a4] sm:$0xf]
        %v5525 = vld [vmem:[#allocation22 + $0x1a8] sm:$0xf]
        %v5526 = vld [vmem:[#allocation22 + $0x1ac] sm:$0xf]
        %v5527 = vld [vmem:[#allocation22 + $0x1b0] sm:$0xf]
        %v5528 = vld [vmem:[#allocation22 + $0x1b4] sm:$0xf]
        %v5529 = vld [vmem:[#allocation22 + $0x1b8] sm:$0xf]
        %v5530 = vld [vmem:[#allocation22 + $0x1bc] sm:$0xf]
        %v5531 = vld [vmem:[#allocation22 + $0x1c0] sm:$0xf]
        %v5532 = vld [vmem:[#allocation22 + $0x1c4] sm:$0xf]
        %v5533 = vld [vmem:[#allocation22 + $0x1c8] sm:$0xf]
        %v5534 = vld [vmem:[#allocation22 + $0x1cc] sm:$0xf]
        %v5535 = vld [vmem:[#allocation22 + $0x1d0] sm:$0xf]
        %v5536 = vld [vmem:[#allocation22 + $0x1d4] sm:$0xf]
        %v5537 = vld [vmem:[#allocation22 + $0x1d8] sm:$0xf]
        %v5538 = vld [vmem:[#allocation22 + $0x1dc] sm:$0xf]
        %v5539 = vld [vmem:[#allocation22 + $0x1e0] sm:$0xf]
        %v5540 = vld [vmem:[#allocation22 + $0x1e4] sm:$0xf]
        %v5541 = vld [vmem:[#allocation22 + $0x1e8] sm:$0xf]
        %v5542 = vld [vmem:[#allocation22 + $0x1ec] sm:$0xf]
        %v5543 = vld [vmem:[#allocation22 + $0x1f0] sm:$0xf]
        %v5544 = vld [vmem:[#allocation22 + $0x1f4] sm:$0xf]
        %v5545 = vld [vmem:[#allocation22 + $0x1f8] sm:$0xf]
        %v5546 = vld [vmem:[#allocation22 + $0x1fc] sm:$0xf]
        %v5547 = vld [vmem:[%s14] sm:$0x1]
        %v5549 = vlaneseq
        %v5550 = vshrl.u32 %v5549, 7
        %v5551 = vsub.s32 0, %v5550
        %v5552 = vrot.slane %v5547, %v5551
        %v5682 = vunpack.c.l.b16 %v5419
        %v5683 = vunpack.c.l.b16 %v5420
        %v5684 = vunpack.c.l.b16 %v5421
        %v5685 = vunpack.c.l.b16 %v5422
        %v5686 = vunpack.c.l.b16 %v5423
        %v5687 = vunpack.c.l.b16 %v5424
        %v5688 = vunpack.c.l.b16 %v5425
        %v5689 = vunpack.c.l.b16 %v5426
        %v5690 = vunpack.c.l.b16 %v5427
        %v5691 = vunpack.c.l.b16 %v5428
        %v5692 = vunpack.c.l.b16 %v5429
        %v5693 = vunpack.c.l.b16 %v5430
        %v5694 = vunpack.c.l.b16 %v5431
        %v5695 = vunpack.c.l.b16 %v5432
        %v5696 = vunpack.c.l.b16 %v5433
        %v5697 = vunpack.c.l.b16 %v5434
        %v5698 = vunpack.c.l.b16 %v5435
        %v5699 = vunpack.c.l.b16 %v5436
        %v5700 = vunpack.c.l.b16 %v5437
        %v5701 = vunpack.c.l.b16 %v5438
        %v5702 = vunpack.c.l.b16 %v5439
        %v5703 = vunpack.c.l.b16 %v5440
        %v5704 = vunpack.c.l.b16 %v5441
        %v5705 = vunpack.c.l.b16 %v5442
        %v5706 = vunpack.c.l.b16 %v5443
        %v5707 = vunpack.c.l.b16 %v5444
        %v5708 = vunpack.c.l.b16 %v5445
        %v5709 = vunpack.c.l.b16 %v5446
        %v5710 = vunpack.c.l.b16 %v5447
        %v5711 = vunpack.c.l.b16 %v5448
        %v5712 = vunpack.c.l.b16 %v5449
        %v5713 = vunpack.c.l.b16 %v5450
        %v5714 = vunpack.c.l.b16 %v5451
        %v5715 = vunpack.c.l.b16 %v5452
        %v5716 = vunpack.c.l.b16 %v5453
        %v5717 = vunpack.c.l.b16 %v5454
        %v5718 = vunpack.c.l.b16 %v5455
        %v5719 = vunpack.c.l.b16 %v5456
        %v5720 = vunpack.c.l.b16 %v5457
        %v5721 = vunpack.c.l.b16 %v5458
        %v5722 = vunpack.c.l.b16 %v5459
        %v5723 = vunpack.c.l.b16 %v5460
        %v5724 = vunpack.c.l.b16 %v5461
        %v5725 = vunpack.c.l.b16 %v5462
        %v5726 = vunpack.c.l.b16 %v5463
        %v5727 = vunpack.c.l.b16 %v5464
        %v5728 = vunpack.c.l.b16 %v5465
        %v5729 = vunpack.c.l.b16 %v5466
        %v5730 = vunpack.c.l.b16 %v5467
        %v5731 = vunpack.c.l.b16 %v5468
        %v5732 = vunpack.c.l.b16 %v5469
        %v5733 = vunpack.c.l.b16 %v5470
        %v5734 = vunpack.c.l.b16 %v5471
        %v5735 = vunpack.c.l.b16 %v5472
        %v5736 = vunpack.c.l.b16 %v5473
        %v5737 = vunpack.c.l.b16 %v5474
        %v5738 = vunpack.c.l.b16 %v5475
        %v5739 = vunpack.c.l.b16 %v5476
        %v5740 = vunpack.c.l.b16 %v5477
        %v5741 = vunpack.c.l.b16 %v5478
        %v5742 = vunpack.c.l.b16 %v5479
        %v5743 = vunpack.c.l.b16 %v5480
        %v5744 = vunpack.c.l.b16 %v5481
        %v5745 = vunpack.c.l.b16 %v5482
        %v5746 = vunpack.c.l.b16 %v5483
        %v5747 = vunpack.c.l.b16 %v5484
        %v5748 = vunpack.c.l.b16 %v5485
        %v5749 = vunpack.c.l.b16 %v5486
        %v5750 = vunpack.c.l.b16 %v5487
        %v5751 = vunpack.c.l.b16 %v5488
        %v5752 = vunpack.c.l.b16 %v5489
        %v5753 = vunpack.c.l.b16 %v5490
        %v5754 = vunpack.c.l.b16 %v5491
        %v5755 = vunpack.c.l.b16 %v5492
        %v5756 = vunpack.c.l.b16 %v5493
        %v5757 = vunpack.c.l.b16 %v5494
        %v5758 = vunpack.c.l.b16 %v5495
        %v5759 = vunpack.c.l.b16 %v5496
        %v5760 = vunpack.c.l.b16 %v5497
        %v5761 = vunpack.c.l.b16 %v5498
        %v5762 = vunpack.c.l.b16 %v5499
        %v5763 = vunpack.c.l.b16 %v5500
        %v5764 = vunpack.c.l.b16 %v5501
        %v5765 = vunpack.c.l.b16 %v5502
        %v5766 = vunpack.c.l.b16 %v5503
        %v5767 = vunpack.c.l.b16 %v5504
        %v5768 = vunpack.c.l.b16 %v5505
        %v5769 = vunpack.c.l.b16 %v5506
        %v5770 = vunpack.c.l.b16 %v5507
        %v5771 = vunpack.c.l.b16 %v5508
        %v5772 = vunpack.c.l.b16 %v5509
        %v5773 = vunpack.c.l.b16 %v5510
        %v5774 = vunpack.c.l.b16 %v5511
        %v5775 = vunpack.c.l.b16 %v5512
        %v5776 = vunpack.c.l.b16 %v5513
        %v5777 = vunpack.c.l.b16 %v5514
        %v5778 = vunpack.c.l.b16 %v5515
        %v5779 = vunpack.c.l.b16 %v5516
        %v5780 = vunpack.c.l.b16 %v5517
        %v5781 = vunpack.c.l.b16 %v5518
        %v5782 = vunpack.c.l.b16 %v5519
        %v5783 = vunpack.c.l.b16 %v5520
        %v5784 = vunpack.c.l.b16 %v5521
        %v5785 = vunpack.c.l.b16 %v5522
        %v5786 = vunpack.c.l.b16 %v5523
        %v5787 = vunpack.c.l.b16 %v5524
        %v5788 = vunpack.c.l.b16 %v5525
        %v5789 = vunpack.c.l.b16 %v5526
        %v5790 = vunpack.c.l.b16 %v5527
        %v5791 = vunpack.c.l.b16 %v5528
        %v5792 = vunpack.c.l.b16 %v5529
        %v5793 = vunpack.c.l.b16 %v5530
        %v5794 = vunpack.c.l.b16 %v5531
        %v5795 = vunpack.c.l.b16 %v5532
        %v5796 = vunpack.c.l.b16 %v5533
        %v5797 = vunpack.c.l.b16 %v5534
        %v5798 = vunpack.c.l.b16 %v5535
        %v5799 = vunpack.c.l.b16 %v5536
        %v5800 = vunpack.c.l.b16 %v5537
        %v5801 = vunpack.c.l.b16 %v5538
        %v5802 = vunpack.c.l.b16 %v5539
        %v5803 = vunpack.c.l.b16 %v5540
        %v5804 = vunpack.c.l.b16 %v5541
        %v5805 = vunpack.c.l.b16 %v5542
        %v5806 = vunpack.c.l.b16 %v5543
        %v5807 = vunpack.c.l.b16 %v5544
        %v5808 = vunpack.c.l.b16 %v5545
        %v5809 = vunpack.c.l.b16 %v5546
        %v5810 = vpack.c.b16 %v5683, %v5682
        %v5811 = vpack.c.b16 %v5685, %v5684
        %v5812 = vpack.c.b16 %v5687, %v5686
        %v5813 = vpack.c.b16 %v5689, %v5688
        %v5814 = vpack.c.b16 %v5691, %v5690
        %v5815 = vpack.c.b16 %v5693, %v5692
        %v5816 = vpack.c.b16 %v5695, %v5694
        %v5817 = vpack.c.b16 %v5697, %v5696
        %v5818 = vpack.c.b16 %v5699, %v5698
        %v5819 = vpack.c.b16 %v5701, %v5700
        %v5820 = vpack.c.b16 %v5703, %v5702
        %v5821 = vpack.c.b16 %v5705, %v5704
        %v5822 = vpack.c.b16 %v5707, %v5706
        %v5823 = vpack.c.b16 %v5709, %v5708
        %v5824 = vpack.c.b16 %v5711, %v5710
        %v5825 = vpack.c.b16 %v5713, %v5712
        %v5826 = vpack.c.b16 %v5715, %v5714
        %v5827 = vpack.c.b16 %v5717, %v5716
        %v5828 = vpack.c.b16 %v5719, %v5718
        %v5829 = vpack.c.b16 %v5721, %v5720
        %v5830 = vpack.c.b16 %v5723, %v5722
        %v5831 = vpack.c.b16 %v5725, %v5724
        %v5832 = vpack.c.b16 %v5727, %v5726
        %v5833 = vpack.c.b16 %v5729, %v5728
        %v5834 = vpack.c.b16 %v5731, %v5730
        %v5835 = vpack.c.b16 %v5733, %v5732
        %v5836 = vpack.c.b16 %v5735, %v5734
        %v5837 = vpack.c.b16 %v5737, %v5736
        %v5838 = vpack.c.b16 %v5739, %v5738
        %v5839 = vpack.c.b16 %v5741, %v5740
        %v5840 = vpack.c.b16 %v5743, %v5742
        %v5841 = vpack.c.b16 %v5745, %v5744
        %v5842 = vpack.c.b16 %v5747, %v5746
        %v5843 = vpack.c.b16 %v5749, %v5748
        %v5844 = vpack.c.b16 %v5751, %v5750
        %v5845 = vpack.c.b16 %v5753, %v5752
        %v5846 = vpack.c.b16 %v5755, %v5754
        %v5847 = vpack.c.b16 %v5757, %v5756
        %v5848 = vpack.c.b16 %v5759, %v5758
        %v5849 = vpack.c.b16 %v5761, %v5760
        %v5850 = vpack.c.b16 %v5763, %v5762
        %v5851 = vpack.c.b16 %v5765, %v5764
        %v5852 = vpack.c.b16 %v5767, %v5766
        %v5853 = vpack.c.b16 %v5769, %v5768
        %v5854 = vpack.c.b16 %v5771, %v5770
        %v5855 = vpack.c.b16 %v5773, %v5772
        %v5856 = vpack.c.b16 %v5775, %v5774
        %v5857 = vpack.c.b16 %v5777, %v5776
        %v5858 = vpack.c.b16 %v5779, %v5778
        %v5859 = vpack.c.b16 %v5781, %v5780
        %v5860 = vpack.c.b16 %v5783, %v5782
        %v5861 = vpack.c.b16 %v5785, %v5784
        %v5862 = vpack.c.b16 %v5787, %v5786
        %v5863 = vpack.c.b16 %v5789, %v5788
        %v5864 = vpack.c.b16 %v5791, %v5790
        %v5865 = vpack.c.b16 %v5793, %v5792
        %v5866 = vpack.c.b16 %v5795, %v5794
        %v5867 = vpack.c.b16 %v5797, %v5796
        %v5868 = vpack.c.b16 %v5799, %v5798
        %v5869 = vpack.c.b16 %v5801, %v5800
        %v5870 = vpack.c.b16 %v5803, %v5802
        %v5871 = vpack.c.b16 %v5805, %v5804
        %v5872 = vpack.c.b16 %v5807, %v5806
        %v5873 = vpack.c.b16 %v5809, %v5808
        %5938 = vmatprep.subr.bf16.mxu0 0
        %5939 = vmatpush1.bf16.msra.mxu0 %v5810
        %5940 = vmatprep.subr.bf16.mxu0 0
        %5941 = vmatpush1.bf16.msra.mxu0 %v5811
        %5942 = vmatprep.subr.bf16.mxu0 0
        %5943 = vmatpush1.bf16.msra.mxu0 %v5812
        %5944 = vmatprep.subr.bf16.mxu0 0
        %5945 = vmatpush1.bf16.msra.mxu0 %v5813
        %5946 = vmatprep.subr.bf16.mxu0 0
        %5947 = vmatpush1.bf16.msra.mxu0 %v5814
        %5948 = vmatprep.subr.bf16.mxu0 0
        %5949 = vmatpush1.bf16.msra.mxu0 %v5815
        %5950 = vmatprep.subr.bf16.mxu0 0
        %5951 = vmatpush1.bf16.msra.mxu0 %v5816
        %5952 = vmatprep.subr.bf16.mxu0 0
        %5953 = vmatpush1.bf16.msra.mxu0 %v5817
        %5954 = vmatprep.subr.bf16.mxu0 0
        %5955 = vmatpush1.bf16.msra.mxu0 %v5818
        %5956 = vmatprep.subr.bf16.mxu0 0
        %5957 = vmatpush1.bf16.msra.mxu0 %v5819
        %5958 = vmatprep.subr.bf16.mxu0 0
        %5959 = vmatpush1.bf16.msra.mxu0 %v5820
        %5960 = vmatprep.subr.bf16.mxu0 0
        %5961 = vmatpush1.bf16.msra.mxu0 %v5821
        %5962 = vmatprep.subr.bf16.mxu0 0
        %5963 = vmatpush1.bf16.msra.mxu0 %v5822
        %5964 = vmatprep.subr.bf16.mxu0 0
        %5965 = vmatpush1.bf16.msra.mxu0 %v5823
        %5966 = vmatprep.subr.bf16.mxu0 0
        %5967 = vmatpush1.bf16.msra.mxu0 %v5824
        %5968 = vmatprep.subr.bf16.mxu0 0
        %5969 = vmatpush1.bf16.msra.mxu0 %v5825
        %5970 = vmatprep.mubr.bf16.mxu0 %v5274
        %5971 = vmatmul.mubr.bf16.gmra.mrb[0].mxu0 %v5273
        %v5972 = vpop.f32.mrb[0].mxu0
        %v5973 = vadd.f32 %v5552, %v5972
        %v5974 = vpop.f32.mrb[0].mxu0
        %v5975 = vpop.f32.mrb[0].mxu0
        %v5976 = vpop.f32.mrb[0].mxu0
        %5977 = vdwg.mxu0
        %5978 = vmatprep.subr.bf16.mxu0 0
        %5979 = vmatpush1.bf16.msra.mxu0 %v5826
        %5980 = vmatprep.subr.bf16.mxu0 0
        %5981 = vmatpush1.bf16.msra.mxu0 %v5827
        %5982 = vmatprep.subr.bf16.mxu0 0
        %5983 = vmatpush1.bf16.msra.mxu0 %v5828
        %5984 = vmatprep.subr.bf16.mxu0 0
        %5985 = vmatpush1.bf16.msra.mxu0 %v5829
        %5986 = vmatprep.subr.bf16.mxu0 0
        %5987 = vmatpush1.bf16.msra.mxu0 %v5830
        %5988 = vmatprep.subr.bf16.mxu0 0
        %5989 = vmatpush1.bf16.msra.mxu0 %v5831
        %5990 = vmatprep.subr.bf16.mxu0 0
        %5991 = vmatpush1.bf16.msra.mxu0 %v5832
        %5992 = vmatprep.subr.bf16.mxu0 0
        %5993 = vmatpush1.bf16.msra.mxu0 %v5833
        %5994 = vmatprep.subr.bf16.mxu0 0
        %5995 = vmatpush1.bf16.msra.mxu0 %v5834
        %5996 = vmatprep.subr.bf16.mxu0 0
        %5997 = vmatpush1.bf16.msra.mxu0 %v5835
        %5998 = vmatprep.subr.bf16.mxu0 0
        %5999 = vmatpush1.bf16.msra.mxu0 %v5836
        %6000 = vmatprep.subr.bf16.mxu0 0
        %6001 = vmatpush1.bf16.msra.mxu0 %v5837
        %6002 = vmatprep.subr.bf16.mxu0 0
        %6003 = vmatpush1.bf16.msra.mxu0 %v5838
        %6004 = vmatprep.subr.bf16.mxu0 0
        %6005 = vmatpush1.bf16.msra.mxu0 %v5839
        %6006 = vmatprep.subr.bf16.mxu0 0
        %6007 = vmatpush1.bf16.msra.mxu0 %v5840
        %6008 = vmatprep.subr.bf16.mxu0 0
        %6009 = vmatpush1.bf16.msra.mxu0 %v5841
        %6010 = vmatprep.mubr.bf16.mxu0 %v5322
        %6011 = vmatmul.mubr.bf16.gmra.mrb[0].mxu0 %v5321
        %v6012 = vpop.f32.mrb[0].mxu0
        %v6013 = vadd.f32 %v5973, %v6012
        %v6014 = vpop.f32.mrb[0].mxu0
        %v6015 = vpop.f32.mrb[0].mxu0
        %v6016 = vpop.f32.mrb[0].mxu0
        %6017 = vdwg.mxu0
        %6018 = vmatprep.subr.bf16.mxu0 0
        %6019 = vmatpush1.bf16.msra.mxu0 %v5842
        %6020 = vmatprep.subr.bf16.mxu0 0
        %6021 = vmatpush1.bf16.msra.mxu0 %v5843
        %6022 = vmatprep.subr.bf16.mxu0 0
        %6023 = vmatpush1.bf16.msra.mxu0 %v5844
        %6024 = vmatprep.subr.bf16.mxu0 0
        %6025 = vmatpush1.bf16.msra.mxu0 %v5845
        %6026 = vmatprep.subr.bf16.mxu0 0
        %6027 = vmatpush1.bf16.msra.mxu0 %v5846
        %6028 = vmatprep.subr.bf16.mxu0 0
        %6029 = vmatpush1.bf16.msra.mxu0 %v5847
        %6030 = vmatprep.subr.bf16.mxu0 0
        %6031 = vmatpush1.bf16.msra.mxu0 %v5848
        %6032 = vmatprep.subr.bf16.mxu0 0
        %6033 = vmatpush1.bf16.msra.mxu0 %v5849
        %6034 = vmatprep.subr.bf16.mxu0 0
        %6035 = vmatpush1.bf16.msra.mxu0 %v5850
        %6036 = vmatprep.subr.bf16.mxu0 0
        %6037 = vmatpush1.bf16.msra.mxu0 %v5851
        %6038 = vmatprep.subr.bf16.mxu0 0
        %6039 = vmatpush1.bf16.msra.mxu0 %v5852
        %6040 = vmatprep.subr.bf16.mxu0 0
        %6041 = vmatpush1.bf16.msra.mxu0 %v5853
        %6042 = vmatprep.subr.bf16.mxu0 0
        %6043 = vmatpush1.bf16.msra.mxu0 %v5854
        %6044 = vmatprep.subr.bf16.mxu0 0
        %6045 = vmatpush1.bf16.msra.mxu0 %v5855
        %6046 = vmatprep.subr.bf16.mxu0 0
        %6047 = vmatpush1.bf16.msra.mxu0 %v5856
        %6048 = vmatprep.subr.bf16.mxu0 0
        %6049 = vmatpush1.bf16.msra.mxu0 %v5857
        %6050 = vmatprep.mubr.bf16.mxu0 %v5370
        %6051 = vmatmul.mubr.bf16.gmra.mrb[0].mxu0 %v5369
        %v6052 = vpop.f32.mrb[0].mxu0
        %v6053 = vadd.f32 %v6013, %v6052
        %v6054 = vpop.f32.mrb[0].mxu0
        %v6055 = vpop.f32.mrb[0].mxu0
        %v6056 = vpop.f32.mrb[0].mxu0
        %6057 = vdwg.mxu0
        %6058 = vmatprep.subr.bf16.mxu0 0
        %6059 = vmatpush1.bf16.msra.mxu0 %v5858
        %6060 = vmatprep.subr.bf16.mxu0 0
        %6061 = vmatpush1.bf16.msra.mxu0 %v5859
        %6062 = vmatprep.subr.bf16.mxu0 0
        %6063 = vmatpush1.bf16.msra.mxu0 %v5860
        %6064 = vmatprep.subr.bf16.mxu0 0
        %6065 = vmatpush1.bf16.msra.mxu0 %v5861
        %6066 = vmatprep.subr.bf16.mxu0 0
        %6067 = vmatpush1.bf16.msra.mxu0 %v5862
        %6068 = vmatprep.subr.bf16.mxu0 0
        %6069 = vmatpush1.bf16.msra.mxu0 %v5863
        %6070 = vmatprep.subr.bf16.mxu0 0
        %6071 = vmatpush1.bf16.msra.mxu0 %v5864
        %6072 = vmatprep.subr.bf16.mxu0 0
        %6073 = vmatpush1.bf16.msra.mxu0 %v5865
        %6074 = vmatprep.subr.bf16.mxu0 0
        %6075 = vmatpush1.bf16.msra.mxu0 %v5866
        %6076 = vmatprep.subr.bf16.mxu0 0
        %6077 = vmatpush1.bf16.msra.mxu0 %v5867
        %6078 = vmatprep.subr.bf16.mxu0 0
        %6079 = vmatpush1.bf16.msra.mxu0 %v5868
        %6080 = vmatprep.subr.bf16.mxu0 0
        %6081 = vmatpush1.bf16.msra.mxu0 %v5869
        %6082 = vmatprep.subr.bf16.mxu0 0
        %6083 = vmatpush1.bf16.msra.mxu0 %v5870
        %6084 = vmatprep.subr.bf16.mxu0 0
        %6085 = vmatpush1.bf16.msra.mxu0 %v5871
        %6086 = vmatprep.subr.bf16.mxu0 0
        %6087 = vmatpush1.bf16.msra.mxu0 %v5872
        %6088 = vmatprep.subr.bf16.mxu0 0
        %6089 = vmatpush1.bf16.msra.mxu0 %v5873
        %6090 = vmatprep.mubr.bf16.mxu0 %v5418
        %6091 = vmatmul.mubr.bf16.gmra.mrb[0].mxu0 %v5417
        %v6092 = vpop.f32.mrb[0].mxu0
        %v6093 = vadd.f32 %v6053, %v6092
        %v6094 = vpop.f32.mrb[0].mxu0
        %v6095 = vpop.f32.mrb[0].mxu0
        %v6096 = vpop.f32.mrb[0].mxu0
        %6097 = vdwg.mxu0
        %v6098 = vsel %vm5225, %v6093, 0.0
        %v6099 = vrot.slane %v6098, 4
        %v6100 = vadd.f32 %v6098, %v6099
        %v6101 = vrot.slane %v6100, 2
        %v6102 = vadd.f32 %v6100, %v6101
        %v6103 = vrot.slane %v6102, 1
        %v6104 = vadd.f32 %v6102, %v6103
        %v6105 = vmul.f32 %v6093, %v6093
        %v6106 = vsel %vm5225, %v6105, 0.0
        %v6107 = vrot.slane %v6106, 4
        %v6108 = vadd.f32 %v6106, %v6107
        %v6109 = vrot.slane %v6108, 2
        %v6110 = vadd.f32 %v6108, %v6109
        %v6111 = vrot.slane %v6110, 1
        %v6112 = vadd.f32 %v6110, %v6111
        %v6113 = vld [vmem:[#allocation23] sm:$0xff]
        %v6114 = vld [vmem:[#allocation23 + $0x8] sm:$0xff]
        %v6115 = vld [vmem:[#allocation23 + $0x10] sm:$0xff]
        %v6116 = vld [vmem:[#allocation23 + $0x18] sm:$0xff]
        %v6117 = vld [vmem:[#allocation23 + $0x20] sm:$0xff]
        %v6118 = vld [vmem:[#allocation23 + $0x28] sm:$0xff]
        %v6119 = vld [vmem:[#allocation23 + $0x30] sm:$0xff]
        %v6120 = vld [vmem:[#allocation23 + $0x38] sm:$0xff]
        %v6121 = vld [vmem:[#allocation23 + $0x40] sm:$0xff]
        %v6122 = vld [vmem:[#allocation23 + $0x48] sm:$0xff]
        %v6123 = vld [vmem:[#allocation23 + $0x50] sm:$0xff]
        %v6124 = vld [vmem:[#allocation23 + $0x58] sm:$0xff]
        %v6125 = vld [vmem:[#allocation23 + $0x60] sm:$0xff]
        %v6126 = vld [vmem:[#allocation23 + $0x68] sm:$0xff]
        %v6127 = vld [vmem:[#allocation23 + $0x70] sm:$0xff]
        %v6128 = vld [vmem:[#allocation23 + $0x78] sm:$0xff]
        %6129 = vmatprep.subr.mxu0 0.0
        %6130 = vmatpush1.msra.mxu0 %v6113
        %6131 = vmatprep.subr.mxu0 0.0
        %6132 = vmatpush1.msra.mxu0 %v6114
        %6133 = vmatprep.subr.mxu0 0.0
        %6134 = vmatpush1.msra.mxu0 %v6115
        %6135 = vmatprep.subr.mxu0 0.0
        %6136 = vmatpush1.msra.mxu0 %v6116
        %6137 = vmatprep.subr.mxu0 0.0
        %6138 = vmatpush1.msra.mxu0 %v6117
        %6139 = vmatprep.subr.mxu0 0.0
        %6140 = vmatpush1.msra.mxu0 %v6118
        %6141 = vmatprep.subr.mxu0 0.0
        %6142 = vmatpush1.msra.mxu0 %v6119
        %6143 = vmatprep.subr.mxu0 0.0
        %6144 = vmatpush1.msra.mxu0 %v6120
        %6145 = vmatprep.subr.mxu0 0.0
        %6146 = vmatpush1.msra.mxu0 %v6121
        %6147 = vmatprep.subr.mxu0 0.0
        %6148 = vmatpush1.msra.mxu0 %v6122
        %6149 = vmatprep.subr.mxu0 0.0
        %6150 = vmatpush1.msra.mxu0 %v6123
        %6151 = vmatprep.subr.mxu0 0.0
        %6152 = vmatpush1.msra.mxu0 %v6124
        %6153 = vmatprep.subr.mxu0 0.0
        %6154 = vmatpush1.msra.mxu0 %v6125
        %6155 = vmatprep.subr.mxu0 0.0
        %6156 = vmatpush1.msra.mxu0 %v6126
        %6157 = vmatprep.subr.mxu0 0.0
        %6158 = vmatpush1.msra.mxu0 %v6127
        %6159 = vmatprep.subr.mxu0 0.0
        %6160 = vmatpush1.msra.mxu0 %v6128
        %6161 = vmatprep.subr.mxu0 0.0
        %6162 = vmatpush1.msra.mxu0 0.0
        %6163 = vmatprep.subr.mxu0 0.0
        %6164 = vmatpush1.msra.mxu0 0.0
        %6165 = vmatprep.subr.mxu0 0.0
        %6166 = vmatpush1.msra.mxu0 0.0
        %6167 = vmatprep.subr.mxu0 0.0
        %6168 = vmatpush1.msra.mxu0 0.0
        %6169 = vmatprep.subr.mxu0 0.0
        %6170 = vmatpush1.msra.mxu0 0.0
        %6171 = vmatprep.subr.mxu0 0.0
        %6172 = vmatpush1.msra.mxu0 0.0
        %6173 = vmatprep.subr.mxu0 0.0
        %6174 = vmatpush1.msra.mxu0 0.0
        %6175 = vmatprep.subr.mxu0 0.0
        %6176 = vmatpush1.msra.mxu0 0.0
        %6177 = vmatprep.subr.mxu0 0.0
        %6178 = vmatpush1.msra.mxu0 0.0
        %6179 = vmatprep.subr.mxu0 0.0
        %6180 = vmatpush1.msra.mxu0 0.0
        %6181 = vmatprep.subr.mxu0 0.0
        %6182 = vmatpush1.msra.mxu0 0.0
        %6183 = vmatprep.subr.mxu0 0.0
        %6184 = vmatpush1.msra.mxu0 0.0
        %6185 = vmatprep.subr.mxu0 0.0
        %6186 = vmatpush1.msra.mxu0 0.0
        %6187 = vmatprep.subr.mxu0 0.0
        %6188 = vmatpush1.msra.mxu0 0.0
        %6189 = vmatprep.subr.mxu0 0.0
        %6190 = vmatpush1.msra.mxu0 0.0
        %6191 = vmatprep.subr.mxu0 0.0
        %6192 = vmatpush1.msra.mxu0 0.0
        %6193 = vmatprep.mubr.f32.mxu0 0.0
        %6194 = vmatmul.mubr.f32.gmra.mrb[0].mxu0 %v6104
        %v6195 = vpop.f32.mrb[0].mxu0
        %v6196 = vadd.f32 0.0, %v6195
        %v6197 = vpop.f32.mrb[0].mxu0
        %6198 = vdwg.mxu0
        %6199 = vmatprep.subr.mxu0 0.0
        %6200 = vmatpush1.msra.mxu0 %v6113
        %6201 = vmatprep.subr.mxu0 0.0
        %6202 = vmatpush1.msra.mxu0 %v6114
        %6203 = vmatprep.subr.mxu0 0.0
        %6204 = vmatpush1.msra.mxu0 %v6115
        %6205 = vmatprep.subr.mxu0 0.0
        %6206 = vmatpush1.msra.mxu0 %v6116
        %6207 = vmatprep.subr.mxu0 0.0
        %6208 = vmatpush1.msra.mxu0 %v6117
        %6209 = vmatprep.subr.mxu0 0.0
        %6210 = vmatpush1.msra.mxu0 %v6118
        %6211 = vmatprep.subr.mxu0 0.0
        %6212 = vmatpush1.msra.mxu0 %v6119
        %6213 = vmatprep.subr.mxu0 0.0
        %6214 = vmatpush1.msra.mxu0 %v6120
        %6215 = vmatprep.subr.mxu0 0.0
        %6216 = vmatpush1.msra.mxu0 %v6121
        %6217 = vmatprep.subr.mxu0 0.0
        %6218 = vmatpush1.msra.mxu0 %v6122
        %6219 = vmatprep.subr.mxu0 0.0
        %6220 = vmatpush1.msra.mxu0 %v6123
        %6221 = vmatprep.subr.mxu0 0.0
        %6222 = vmatpush1.msra.mxu0 %v6124
        %6223 = vmatprep.subr.mxu0 0.0
        %6224 = vmatpush1.msra.mxu0 %v6125
        %6225 = vmatprep.subr.mxu0 0.0
        %6226 = vmatpush1.msra.mxu0 %v6126
        %6227 = vmatprep.subr.mxu0 0.0
        %6228 = vmatpush1.msra.mxu0 %v6127
        %6229 = vmatprep.subr.mxu0 0.0
        %6230 = vmatpush1.msra.mxu0 %v6128
        %6231 = vmatprep.subr.mxu0 0.0
        %6232 = vmatpush1.msra.mxu0 0.0
        %6233 = vmatprep.subr.mxu0 0.0
        %6234 = vmatpush1.msra.mxu0 0.0
        %6235 = vmatprep.subr.mxu0 0.0
        %6236 = vmatpush1.msra.mxu0 0.0
        %6237 = vmatprep.subr.mxu0 0.0
        %6238 = vmatpush1.msra.mxu0 0.0
        %6239 = vmatprep.subr.mxu0 0.0
        %6240 = vmatpush1.msra.mxu0 0.0
        %6241 = vmatprep.subr.mxu0 0.0
        %6242 = vmatpush1.msra.mxu0 0.0
        %6243 = vmatprep.subr.mxu0 0.0
        %6244 = vmatpush1.msra.mxu0 0.0
        %6245 = vmatprep.subr.mxu0 0.0
        %6246 = vmatpush1.msra.mxu0 0.0
        %6247 = vmatprep.subr.mxu0 0.0
        %6248 = vmatpush1.msra.mxu0 0.0
        %6249 = vmatprep.subr.mxu0 0.0
        %6250 = vmatpush1.msra.mxu0 0.0
        %6251 = vmatprep.subr.mxu0 0.0
        %6252 = vmatpush1.msra.mxu0 0.0
        %6253 = vmatprep.subr.mxu0 0.0
        %6254 = vmatpush1.msra.mxu0 0.0
        %6255 = vmatprep.subr.mxu0 0.0
        %6256 = vmatpush1.msra.mxu0 0.0
        %6257 = vmatprep.subr.mxu0 0.0
        %6258 = vmatpush1.msra.mxu0 0.0
        %6259 = vmatprep.subr.mxu0 0.0
        %6260 = vmatpush1.msra.mxu0 0.0
        %6261 = vmatprep.subr.mxu0 0.0
        %6262 = vmatpush1.msra.mxu0 0.0
        %6263 = vmatprep.mubr.f32.mxu0 0.0
        %6264 = vmatmul.mubr.f32.gmra.mrb[0].mxu0 %v6112
        %v6265 = vpop.f32.mrb[0].mxu0
        %v6266 = vadd.f32 0.0, %v6265
        %v6267 = vpop.f32.mrb[0].mxu0
        %6268 = vdwg.mxu0
        %v6269 = vmul.f32 %v6196, %v6196
        %v6270 = vsub.f32 %v6266, %v6269
        %v6271 = vlaneseq
        %v6272 = vshrl.u32 %v6271, 7
        %v6273 = vsub.s32 0, %v6272
        %v6274 = vrot.slane %v6196, %v6273
        %v6275 = vsub.f32 %v6093, %v6274
        %v6276 = vadd.f32 %v6270, 1e-05
        %v6277 = vrsqrt.pop %v6276
        %v6278 = vlaneseq
        %v6279 = vshrl.u32 %v6278, 7
        %v6280 = vsub.s32 0, %v6279
        %v6281 = vrot.slane %v6277, %v6280
        %v6282 = vmul.f32 %v6275, %v6281
        %vm6283 = vcmp.ge.f32.partialorder %v6282, 0.0
        %v6284 = vmul.f32 %v6282, 0.2
        %v6285 = vsel %vm6283, %v6282, %v6284
        %v6286 = vpack.c.bf16 %v6285, %v6285
        %v6287 = vld [vmem:[%s16] sm:$0x1]
        %vm6288 = vcmask 31744
        %v6290 = vsel %vm6288, %v6287, 0
        %vm6292 = vcmask 1041408
        %v6294 = vsel %vm6292, %v6286, 0
        %6296 = vmatprep.subr.bf16.mxu0 0
        %6297 = vmatpush1.bf16.msra.mxu0 %v6294
        %6298 = vmatprep.subr.bf16.mxu0 0
        %6299 = vmatpush1.bf16.msra.mxu0 0
        %6300 = vmatprep.subr.bf16.mxu0 0
        %6301 = vmatpush1.bf16.msra.mxu0 0
        %6302 = vmatprep.subr.bf16.mxu0 0
        %6303 = vmatpush1.bf16.msra.mxu0 0
        %6304 = vmatprep.subr.bf16.mxu0 0
        %6305 = vmatpush1.bf16.msra.mxu0 0
        %6306 = vmatprep.subr.bf16.mxu0 0
        %6307 = vmatpush1.bf16.msra.mxu0 0
        %6308 = vmatprep.subr.bf16.mxu0 0
        %6309 = vmatpush1.bf16.msra.mxu0 0
        %6310 = vmatprep.subr.bf16.mxu0 0
        %6311 = vmatpush1.bf16.msra.mxu0 0
        %6312 = vmatprep.subr.bf16.mxu0 0
        %6313 = vmatpush1.bf16.msra.mxu0 0
        %6314 = vmatprep.subr.bf16.mxu0 0
        %6315 = vmatpush1.bf16.msra.mxu0 0
        %6316 = vmatprep.subr.bf16.mxu0 0
        %6317 = vmatpush1.bf16.msra.mxu0 0
        %6318 = vmatprep.subr.bf16.mxu0 0
        %6319 = vmatpush1.bf16.msra.mxu0 0
        %6320 = vmatprep.subr.bf16.mxu0 0
        %6321 = vmatpush1.bf16.msra.mxu0 0
        %6322 = vmatprep.subr.bf16.mxu0 0
        %6323 = vmatpush1.bf16.msra.mxu0 0
        %6324 = vmatprep.subr.bf16.mxu0 0
        %6325 = vmatpush1.bf16.msra.mxu0 0
        %6326 = vmatprep.subr.bf16.mxu0 0
        %6327 = vmatpush1.bf16.msra.mxu0 0
        %6328 = vmatprep.mubr.bf16.mxu0 0
        %6329 = vmatmul.mubr.bf16.gmra.mrb[0].mxu0 %v6290
        %v6330 = vpop.f32.mrb[0].mxu0
        %v6331 = vadd.f32 0.0, %v6330
        %v6332 = vpop.f32.mrb[0].mxu0
        %v6333 = vpop.f32.mrb[0].mxu0
        %v6334 = vpop.f32.mrb[0].mxu0
        %6335 = vdwg.mxu0
        %v6336 = vpack.c.bf16 %v6331, %v6331
        %s6337 = scalar_lea.vmem %s16, 1
        %v6338 = vld [vmem:[%s6337] sm:$0x1]
        %v6340 = vsel %vm6288, %v6338, 0
        %6342 = vmatprep.subr.bf16.mxu0 0
        %6343 = vmatpush1.bf16.msra.mxu0 %v6294
        %6344 = vmatprep.subr.bf16.mxu0 0
        %6345 = vmatpush1.bf16.msra.mxu0 0
        %6346 = vmatprep.subr.bf16.mxu0 0
        %6347 = vmatpush1.bf16.msra.mxu0 0
        %6348 = vmatprep.subr.bf16.mxu0 0
        %6349 = vmatpush1.bf16.msra.mxu0 0
        %6350 = vmatprep.subr.bf16.mxu0 0
        %6351 = vmatpush1.bf16.msra.mxu0 0
        %6352 = vmatprep.subr.bf16.mxu0 0
        %6353 = vmatpush1.bf16.msra.mxu0 0
        %6354 = vmatprep.subr.bf16.mxu0 0
        %6355 = vmatpush1.bf16.msra.mxu0 0
        %6356 = vmatprep.subr.bf16.mxu0 0
        %6357 = vmatpush1.bf16.msra.mxu0 0
        %6358 = vmatprep.subr.bf16.mxu0 0
        %6359 = vmatpush1.bf16.msra.mxu0 0
        %6360 = vmatprep.subr.bf16.mxu0 0
        %6361 = vmatpush1.bf16.msra.mxu0 0
        %6362 = vmatprep.subr.bf16.mxu0 0
        %6363 = vmatpush1.bf16.msra.mxu0 0
        %6364 = vmatprep.subr.bf16.mxu0 0
        %6365 = vmatpush1.bf16.msra.mxu0 0
        %6366 = vmatprep.subr.bf16.mxu0 0
        %6367 = vmatpush1.bf16.msra.mxu0 0
        %6368 = vmatprep.subr.bf16.mxu0 0
        %6369 = vmatpush1.bf16.msra.mxu0 0
        %6370 = vmatprep.subr.bf16.mxu0 0
        %6371 = vmatpush1.bf16.msra.mxu0 0
        %6372 = vmatprep.subr.bf16.mxu0 0
        %6373 = vmatpush1.bf16.msra.mxu0 0
        %6374 = vmatprep.mubr.bf16.mxu0 0
        %6375 = vmatmul.mubr.bf16.gmra.mrb[0].mxu0 %v6340
        %v6376 = vpop.f32.mrb[0].mxu0
        %v6377 = vadd.f32 0.0, %v6376
        %v6378 = vpop.f32.mrb[0].mxu0
        %v6379 = vpop.f32.mrb[0].mxu0
        %v6380 = vpop.f32.mrb[0].mxu0
        %6381 = vdwg.mxu0
        %v6382 = vpack.c.bf16 %v6377, %v6377
        %s6383 = scalar_lea.vmem %s16, 2
        %v6384 = vld [vmem:[%s6383] sm:$0x1]
        %v6386 = vsel %vm6288, %v6384, 0
        %6388 = vmatprep.subr.bf16.mxu0 0
        %6389 = vmatpush1.bf16.msra.mxu0 %v6294
        %6390 = vmatprep.subr.bf16.mxu0 0
        %6391 = vmatpush1.bf16.msra.mxu0 0
        %6392 = vmatprep.subr.bf16.mxu0 0
        %6393 = vmatpush1.bf16.msra.mxu0 0
        %6394 = vmatprep.subr.bf16.mxu0 0
        %6395 = vmatpush1.bf16.msra.mxu0 0
        %6396 = vmatprep.subr.bf16.mxu0 0
        %6397 = vmatpush1.bf16.msra.mxu0 0
        %6398 = vmatprep.subr.bf16.mxu0 0
        %6399 = vmatpush1.bf16.msra.mxu0 0
        %6400 = vmatprep.subr.bf16.mxu0 0
        %6401 = vmatpush1.bf16.msra.mxu0 0
        %6402 = vmatprep.subr.bf16.mxu0 0
        %6403 = vmatpush1.bf16.msra.mxu0 0
        %6404 = vmatprep.subr.bf16.mxu0 0
        %6405 = vmatpush1.bf16.msra.mxu0 0
        %6406 = vmatprep.subr.bf16.mxu0 0
        %6407 = vmatpush1.bf16.msra.mxu0 0
        %6408 = vmatprep.subr.bf16.mxu0 0
        %6409 = vmatpush1.bf16.msra.mxu0 0
        %6410 = vmatprep.subr.bf16.mxu0 0
        %6411 = vmatpush1.bf16.msra.mxu0 0
        %6412 = vmatprep.subr.bf16.mxu0 0
        %6413 = vmatpush1.bf16.msra.mxu0 0
        %6414 = vmatprep.subr.bf16.mxu0 0
        %6415 = vmatpush1.bf16.msra.mxu0 0
        %6416 = vmatprep.subr.bf16.mxu0 0
        %6417 = vmatpush1.bf16.msra.mxu0 0
        %6418 = vmatprep.subr.bf16.mxu0 0
        %6419 = vmatpush1.bf16.msra.mxu0 0
        %6420 = vmatprep.mubr.bf16.mxu0 0
        %6421 = vmatmul.mubr.bf16.gmra.mrb[0].mxu0 %v6386
        %v6422 = vpop.f32.mrb[0].mxu0
        %v6423 = vadd.f32 0.0, %v6422
        %v6424 = vpop.f32.mrb[0].mxu0
        %v6425 = vpop.f32.mrb[0].mxu0
        %v6426 = vpop.f32.mrb[0].mxu0
        %6427 = vdwg.mxu0
        %v6428 = vpack.c.bf16 %v6423, %v6423
        %s6429 = scalar_lea.vmem %s16, 3
        %v6430 = vld [vmem:[%s6429] sm:$0x1]
        %v6432 = vsel %vm6288, %v6430, 0
        %6434 = vmatprep.subr.bf16.mxu0 0
        %6435 = vmatpush1.bf16.msra.mxu0 %v6294
        %6436 = vmatprep.subr.bf16.mxu0 0
        %6437 = vmatpush1.bf16.msra.mxu0 0
        %6438 = vmatprep.subr.bf16.mxu0 0
        %6439 = vmatpush1.bf16.msra.mxu0 0
        %6440 = vmatprep.subr.bf16.mxu0 0
        %6441 = vmatpush1.bf16.msra.mxu0 0
        %6442 = vmatprep.subr.bf16.mxu0 0
        %6443 = vmatpush1.bf16.msra.mxu0 0
        %6444 = vmatprep.subr.bf16.mxu0 0
        %6445 = vmatpush1.bf16.msra.mxu0 0
        %6446 = vmatprep.subr.bf16.mxu0 0
        %6447 = vmatpush1.bf16.msra.mxu0 0
        %6448 = vmatprep.subr.bf16.mxu0 0
        %6449 = vmatpush1.bf16.msra.mxu0 0
        %6450 = vmatprep.subr.bf16.mxu0 0
        %6451 = vmatpush1.bf16.msra.mxu0 0
        %6452 = vmatprep.subr.bf16.mxu0 0
        %6453 = vmatpush1.bf16.msra.mxu0 0
        %6454 = vmatprep.subr.bf16.mxu0 0
        %6455 = vmatpush1.bf16.msra.mxu0 0
        %6456 = vmatprep.subr.bf16.mxu0 0
        %6457 = vmatpush1.bf16.msra.mxu0 0
        %6458 = vmatprep.subr.bf16.mxu0 0
        %6459 = vmatpush1.bf16.msra.mxu0 0
        %6460 = vmatprep.subr.bf16.mxu0 0
        %6461 = vmatpush1.bf16.msra.mxu0 0
        %6462 = vmatprep.subr.bf16.mxu0 0
        %6463 = vmatpush1.bf16.msra.mxu0 0
        %6464 = vmatprep.subr.bf16.mxu0 0
        %6465 = vmatpush1.bf16.msra.mxu0 0
        %6466 = vmatprep.mubr.bf16.mxu0 0
        %6467 = vmatmul.mubr.bf16.gmra.mrb[0].mxu0 %v6432
        %v6468 = vpop.f32.mrb[0].mxu0
        %v6469 = vadd.f32 0.0, %v6468
        %v6470 = vpop.f32.mrb[0].mxu0
        %v6471 = vpop.f32.mrb[0].mxu0
        %v6472 = vpop.f32.mrb[0].mxu0
        %6473 = vdwg.mxu0
        %v6474 = vpack.c.bf16 %v6469, %v6469
        %v6475 = vld [vmem:[%s17] sm:$0xf]
        %v6476 = vld [vmem:[%s17 + $0x4] sm:$0xf]
        %v6477 = vld [vmem:[%s17 + $0x8] sm:$0xf]
        %v6478 = vld [vmem:[%s17 + $0xc] sm:$0xf]
        %v6479 = vld [vmem:[%s17 + $0x10] sm:$0xf]
        %v6480 = vld [vmem:[%s17 + $0x14] sm:$0xf]
        %v6481 = vld [vmem:[%s17 + $0x18] sm:$0xf]
        %v6482 = vld [vmem:[%s17 + $0x1c] sm:$0xf]
        %v6483 = vld [vmem:[%s17 + $0x20] sm:$0xf]
        %v6484 = vld [vmem:[%s17 + $0x24] sm:$0xf]
        %v6485 = vld [vmem:[%s17 + $0x28] sm:$0xf]
        %v6486 = vld [vmem:[%s17 + $0x2c] sm:$0xf]
        %v6487 = vld [vmem:[%s17 + $0x30] sm:$0xf]
        %v6488 = vld [vmem:[%s17 + $0x34] sm:$0xf]
        %v6489 = vld [vmem:[%s17 + $0x38] sm:$0xf]
        %v6490 = vld [vmem:[%s17 + $0x3c] sm:$0xf]
        %v6491 = vld [vmem:[%s17 + $0x40] sm:$0xf]
        %v6492 = vld [vmem:[%s17 + $0x44] sm:$0xf]
        %v6493 = vld [vmem:[%s17 + $0x48] sm:$0xf]
        %v6494 = vld [vmem:[%s17 + $0x4c] sm:$0xf]
        %v6495 = vld [vmem:[%s17 + $0x50] sm:$0xf]
        %v6496 = vld [vmem:[%s17 + $0x54] sm:$0xf]
        %v6497 = vld [vmem:[%s17 + $0x58] sm:$0xf]
        %v6498 = vld [vmem:[%s17 + $0x5c] sm:$0xf]
        %v6499 = vld [vmem:[%s17 + $0x60] sm:$0xf]
        %v6500 = vld [vmem:[%s17 + $0x64] sm:$0xf]
        %v6501 = vld [vmem:[%s17 + $0x68] sm:$0xf]
        %v6502 = vld [vmem:[%s17 + $0x6c] sm:$0xf]
        %v6503 = vld [vmem:[%s17 + $0x70] sm:$0xf]
        %v6504 = vld [vmem:[%s17 + $0x74] sm:$0xf]
        %v6505 = vld [vmem:[%s17 + $0x78] sm:$0xf]
        %v6506 = vld [vmem:[%s17 + $0x7c] sm:$0xf]
        %v6507 = vld [vmem:[%s17 + $0x80] sm:$0xf]
        %v6508 = vld [vmem:[%s17 + $0x84] sm:$0xf]
        %v6509 = vld [vmem:[%s17 + $0x88] sm:$0xf]
        %v6510 = vld [vmem:[%s17 + $0x8c] sm:$0xf]
        %v6511 = vld [vmem:[%s17 + $0x90] sm:$0xf]
        %v6512 = vld [vmem:[%s17 + $0x94] sm:$0xf]
        %v6513 = vld [vmem:[%s17 + $0x98] sm:$0xf]
        %v6514 = vld [vmem:[%s17 + $0x9c] sm:$0xf]
        %v6515 = vld [vmem:[%s17 + $0xa0] sm:$0xf]
        %v6516 = vld [vmem:[%s17 + $0xa4] sm:$0xf]
        %v6517 = vld [vmem:[%s17 + $0xa8] sm:$0xf]
        %v6518 = vld [vmem:[%s17 + $0xac] sm:$0xf]
        %v6519 = vld [vmem:[%s17 + $0xb0] sm:$0xf]
        %v6520 = vld [vmem:[%s17 + $0xb4] sm:$0xf]
        %v6521 = vld [vmem:[%s17 + $0xb8] sm:$0xf]
        %v6522 = vld [vmem:[%s17 + $0xbc] sm:$0xf]
        %v6523 = vld [vmem:[%s17 + $0xc0] sm:$0xf]
        %v6524 = vld [vmem:[%s17 + $0xc4] sm:$0xf]
        %v6525 = vld [vmem:[%s17 + $0xc8] sm:$0xf]
        %v6526 = vld [vmem:[%s17 + $0xcc] sm:$0xf]
        %v6527 = vld [vmem:[%s17 + $0xd0] sm:$0xf]
        %v6528 = vld [vmem:[%s17 + $0xd4] sm:$0xf]
        %v6529 = vld [vmem:[%s17 + $0xd8] sm:$0xf]
        %v6530 = vld [vmem:[%s17 + $0xdc] sm:$0xf]
        %v6531 = vld [vmem:[%s17 + $0xe0] sm:$0xf]
        %v6532 = vld [vmem:[%s17 + $0xe4] sm:$0xf]
        %v6533 = vld [vmem:[%s17 + $0xe8] sm:$0xf]
        %v6534 = vld [vmem:[%s17 + $0xec] sm:$0xf]
        %v6535 = vld [vmem:[%s17 + $0xf0] sm:$0xf]
        %v6536 = vld [vmem:[%s17 + $0xf4] sm:$0xf]
        %v6537 = vld [vmem:[%s17 + $0xf8] sm:$0xf]
        %v6538 = vld [vmem:[%s17 + $0xfc] sm:$0xf]
        %v6539 = vld [vmem:[%s18] sm:$0x1]
        %v6541 = vlaneseq
        %v6542 = vshrl.u32 %v6541, 7
        %v6543 = vsub.s32 0, %v6542
        %v6544 = vrot.slane %v6539, %v6543
        %v6610 = vunpack.c.l.b16 %v6475
        %v6611 = vunpack.c.l.b16 %v6476
        %v6612 = vunpack.c.l.b16 %v6477
        %v6613 = vunpack.c.l.b16 %v6478
        %v6614 = vunpack.c.l.b16 %v6479
        %v6615 = vunpack.c.l.b16 %v6480
        %v6616 = vunpack.c.l.b16 %v6481
        %v6617 = vunpack.c.l.b16 %v6482
        %v6618 = vunpack.c.l.b16 %v6483
        %v6619 = vunpack.c.l.b16 %v6484
        %v6620 = vunpack.c.l.b16 %v6485
        %v6621 = vunpack.c.l.b16 %v6486
        %v6622 = vunpack.c.l.b16 %v6487
        %v6623 = vunpack.c.l.b16 %v6488
        %v6624 = vunpack.c.l.b16 %v6489
        %v6625 = vunpack.c.l.b16 %v6490
        %v6626 = vunpack.c.l.b16 %v6491
        %v6627 = vunpack.c.l.b16 %v6492
        %v6628 = vunpack.c.l.b16 %v6493
        %v6629 = vunpack.c.l.b16 %v6494
        %v6630 = vunpack.c.l.b16 %v6495
        %v6631 = vunpack.c.l.b16 %v6496
        %v6632 = vunpack.c.l.b16 %v6497
        %v6633 = vunpack.c.l.b16 %v6498
        %v6634 = vunpack.c.l.b16 %v6499
        %v6635 = vunpack.c.l.b16 %v6500
        %v6636 = vunpack.c.l.b16 %v6501
        %v6637 = vunpack.c.l.b16 %v6502
        %v6638 = vunpack.c.l.b16 %v6503
        %v6639 = vunpack.c.l.b16 %v6504
        %v6640 = vunpack.c.l.b16 %v6505
        %v6641 = vunpack.c.l.b16 %v6506
        %v6642 = vunpack.c.l.b16 %v6507
        %v6643 = vunpack.c.l.b16 %v6508
        %v6644 = vunpack.c.l.b16 %v6509
        %v6645 = vunpack.c.l.b16 %v6510
        %v6646 = vunpack.c.l.b16 %v6511
        %v6647 = vunpack.c.l.b16 %v6512
        %v6648 = vunpack.c.l.b16 %v6513
        %v6649 = vunpack.c.l.b16 %v6514
        %v6650 = vunpack.c.l.b16 %v6515
        %v6651 = vunpack.c.l.b16 %v6516
        %v6652 = vunpack.c.l.b16 %v6517
        %v6653 = vunpack.c.l.b16 %v6518
        %v6654 = vunpack.c.l.b16 %v6519
        %v6655 = vunpack.c.l.b16 %v6520
        %v6656 = vunpack.c.l.b16 %v6521
        %v6657 = vunpack.c.l.b16 %v6522
        %v6658 = vunpack.c.l.b16 %v6523
        %v6659 = vunpack.c.l.b16 %v6524
        %v6660 = vunpack.c.l.b16 %v6525
        %v6661 = vunpack.c.l.b16 %v6526
        %v6662 = vunpack.c.l.b16 %v6527
        %v6663 = vunpack.c.l.b16 %v6528
        %v6664 = vunpack.c.l.b16 %v6529
        %v6665 = vunpack.c.l.b16 %v6530
        %v6666 = vunpack.c.l.b16 %v6531
        %v6667 = vunpack.c.l.b16 %v6532
        %v6668 = vunpack.c.l.b16 %v6533
        %v6669 = vunpack.c.l.b16 %v6534
        %v6670 = vunpack.c.l.b16 %v6535
        %v6671 = vunpack.c.l.b16 %v6536
        %v6672 = vunpack.c.l.b16 %v6537
        %v6673 = vunpack.c.l.b16 %v6538
        %v6674 = vpack.c.b16 %v6611, %v6610
        %v6675 = vpack.c.b16 %v6613, %v6612
        %v6676 = vpack.c.b16 %v6615, %v6614
        %v6677 = vpack.c.b16 %v6617, %v6616
        %v6678 = vpack.c.b16 %v6619, %v6618
        %v6679 = vpack.c.b16 %v6621, %v6620
        %v6680 = vpack.c.b16 %v6623, %v6622
        %v6681 = vpack.c.b16 %v6625, %v6624
        %v6682 = vpack.c.b16 %v6627, %v6626
        %v6683 = vpack.c.b16 %v6629, %v6628
        %v6684 = vpack.c.b16 %v6631, %v6630
        %v6685 = vpack.c.b16 %v6633, %v6632
        %v6686 = vpack.c.b16 %v6635, %v6634
        %v6687 = vpack.c.b16 %v6637, %v6636
        %v6688 = vpack.c.b16 %v6639, %v6638
        %v6689 = vpack.c.b16 %v6641, %v6640
        %v6690 = vpack.c.b16 %v6643, %v6642
        %v6691 = vpack.c.b16 %v6645, %v6644
        %v6692 = vpack.c.b16 %v6647, %v6646
        %v6693 = vpack.c.b16 %v6649, %v6648
        %v6694 = vpack.c.b16 %v6651, %v6650
        %v6695 = vpack.c.b16 %v6653, %v6652
        %v6696 = vpack.c.b16 %v6655, %v6654
        %v6697 = vpack.c.b16 %v6657, %v6656
        %v6698 = vpack.c.b16 %v6659, %v6658
        %v6699 = vpack.c.b16 %v6661, %v6660
        %v6700 = vpack.c.b16 %v6663, %v6662
        %v6701 = vpack.c.b16 %v6665, %v6664
        %v6702 = vpack.c.b16 %v6667, %v6666
        %v6703 = vpack.c.b16 %v6669, %v6668
        %v6704 = vpack.c.b16 %v6671, %v6670
        %v6705 = vpack.c.b16 %v6673, %v6672
        %6738 = vmatprep.subr.bf16.mxu0 0
        %6739 = vmatpush1.bf16.msra.mxu0 %v6674
        %6740 = vmatprep.subr.bf16.mxu0 0
        %6741 = vmatpush1.bf16.msra.mxu0 %v6675
        %6742 = vmatprep.subr.bf16.mxu0 0
        %6743 = vmatpush1.bf16.msra.mxu0 %v6676
        %6744 = vmatprep.subr.bf16.mxu0 0
        %6745 = vmatpush1.bf16.msra.mxu0 %v6677
        %6746 = vmatprep.subr.bf16.mxu0 0
        %6747 = vmatpush1.bf16.msra.mxu0 %v6678
        %6748 = vmatprep.subr.bf16.mxu0 0
        %6749 = vmatpush1.bf16.msra.mxu0 %v6679
        %6750 = vmatprep.subr.bf16.mxu0 0
        %6751 = vmatpush1.bf16.msra.mxu0 %v6680
        %6752 = vmatprep.subr.bf16.mxu0 0
        %6753 = vmatpush1.bf16.msra.mxu0 %v6681
        %6754 = vmatprep.subr.bf16.mxu0 0
        %6755 = vmatpush1.bf16.msra.mxu0 %v6682
        %6756 = vmatprep.subr.bf16.mxu0 0
        %6757 = vmatpush1.bf16.msra.mxu0 %v6683
        %6758 = vmatprep.subr.bf16.mxu0 0
        %6759 = vmatpush1.bf16.msra.mxu0 %v6684
        %6760 = vmatprep.subr.bf16.mxu0 0
        %6761 = vmatpush1.bf16.msra.mxu0 %v6685
        %6762 = vmatprep.subr.bf16.mxu0 0
        %6763 = vmatpush1.bf16.msra.mxu0 %v6686
        %6764 = vmatprep.subr.bf16.mxu0 0
        %6765 = vmatpush1.bf16.msra.mxu0 %v6687
        %6766 = vmatprep.subr.bf16.mxu0 0
        %6767 = vmatpush1.bf16.msra.mxu0 %v6688
        %6768 = vmatprep.subr.bf16.mxu0 0
        %6769 = vmatpush1.bf16.msra.mxu0 %v6689
        %6770 = vmatprep.mubr.bf16.mxu0 %v6382
        %6771 = vmatmul.mubr.bf16.gmra.mrb[0].mxu0 %v6336
        %v6772 = vpop.f32.mrb[0].mxu0
        %v6773 = vadd.f32 %v6544, %v6772
        %v6774 = vpop.f32.mrb[0].mxu0
        %v6775 = vpop.f32.mrb[0].mxu0
        %v6776 = vpop.f32.mrb[0].mxu0
        %6777 = vdwg.mxu0
        %6778 = vmatprep.subr.bf16.mxu0 0
        %6779 = vmatpush1.bf16.msra.mxu0 %v6690
        %6780 = vmatprep.subr.bf16.mxu0 0
        %6781 = vmatpush1.bf16.msra.mxu0 %v6691
        %6782 = vmatprep.subr.bf16.mxu0 0
        %6783 = vmatpush1.bf16.msra.mxu0 %v6692
        %6784 = vmatprep.subr.bf16.mxu0 0
        %6785 = vmatpush1.bf16.msra.mxu0 %v6693
        %6786 = vmatprep.subr.bf16.mxu0 0
        %6787 = vmatpush1.bf16.msra.mxu0 %v6694
        %6788 = vmatprep.subr.bf16.mxu0 0
        %6789 = vmatpush1.bf16.msra.mxu0 %v6695
        %6790 = vmatprep.subr.bf16.mxu0 0
        %6791 = vmatpush1.bf16.msra.mxu0 %v6696
        %6792 = vmatprep.subr.bf16.mxu0 0
        %6793 = vmatpush1.bf16.msra.mxu0 %v6697
        %6794 = vmatprep.subr.bf16.mxu0 0
        %6795 = vmatpush1.bf16.msra.mxu0 %v6698
        %6796 = vmatprep.subr.bf16.mxu0 0
        %6797 = vmatpush1.bf16.msra.mxu0 %v6699
        %6798 = vmatprep.subr.bf16.mxu0 0
        %6799 = vmatpush1.bf16.msra.mxu0 %v6700
        %6800 = vmatprep.subr.bf16.mxu0 0
        %6801 = vmatpush1.bf16.msra.mxu0 %v6701
        %6802 = vmatprep.subr.bf16.mxu0 0
        %6803 = vmatpush1.bf16.msra.mxu0 %v6702
        %6804 = vmatprep.subr.bf16.mxu0 0
        %6805 = vmatpush1.bf16.msra.mxu0 %v6703
        %6806 = vmatprep.subr.bf16.mxu0 0
        %6807 = vmatpush1.bf16.msra.mxu0 %v6704
        %6808 = vmatprep.subr.bf16.mxu0 0
        %6809 = vmatpush1.bf16.msra.mxu0 %v6705
        %6810 = vmatprep.mubr.bf16.mxu0 %v6474
        %6811 = vmatmul.mubr.bf16.gmra.mrb[0].mxu0 %v6428
        %v6812 = vpop.f32.mrb[0].mxu0
        %v6813 = vadd.f32 %v6773, %v6812
        %v6814 = vpop.f32.mrb[0].mxu0
        %v6815 = vpop.f32.mrb[0].mxu0
        %v6816 = vpop.f32.mrb[0].mxu0
        %6817 = vdwg.mxu0
        %vm6818 = vcmask 517120
        %v6819 = vsel %vm6818, %v6813, 0.0
        %v6820 = vrot.slane %v6819, 4
        %v6821 = vadd.f32 %v6819, %v6820
        %v6822 = vrot.slane %v6821, 2
        %v6823 = vadd.f32 %v6821, %v6822
        %v6824 = vrot.slane %v6823, 1
        %v6825 = vadd.f32 %v6823, %v6824
        %v6826 = vmul.f32 %v6813, %v6813
        %v6827 = vsel %vm6818, %v6826, 0.0
        %v6828 = vrot.slane %v6827, 4
        %v6829 = vadd.f32 %v6827, %v6828
        %v6830 = vrot.slane %v6829, 2
        %v6831 = vadd.f32 %v6829, %v6830
        %v6832 = vrot.slane %v6831, 1
        %v6833 = vadd.f32 %v6831, %v6832
        %v6834 = vld [vmem:[%s19] sm:$0xff]
        %v6835 = vld [vmem:[%s19 + $0x8] sm:$0xff]
        %v6836 = vld [vmem:[%s19 + $0x10] sm:$0xff]
        %v6837 = vld [vmem:[%s19 + $0x18] sm:$0xff]
        %v6838 = vld [vmem:[%s19 + $0x20] sm:$0xff]
        %v6839 = vld [vmem:[%s19 + $0x28] sm:$0xff]
        %v6840 = vld [vmem:[%s19 + $0x30] sm:$0xff]
        %v6841 = vld [vmem:[%s19 + $0x38] sm:$0xff]
        %vm6842 = vcmask 523264
        %v6844 = vsel %vm6842, %v6825, 0
        %6846 = vmatprep.subr.mxu0 0.0
        %6847 = vmatpush1.msra.mxu0 %v6834
        %6848 = vmatprep.subr.mxu0 0.0
        %6849 = vmatpush1.msra.mxu0 %v6835
        %6850 = vmatprep.subr.mxu0 0.0
        %6851 = vmatpush1.msra.mxu0 %v6836
        %6852 = vmatprep.subr.mxu0 0.0
        %6853 = vmatpush1.msra.mxu0 %v6837
        %6854 = vmatprep.subr.mxu0 0.0
        %6855 = vmatpush1.msra.mxu0 %v6838
        %6856 = vmatprep.subr.mxu0 0.0
        %6857 = vmatpush1.msra.mxu0 %v6839
        %6858 = vmatprep.subr.mxu0 0.0
        %6859 = vmatpush1.msra.mxu0 %v6840
        %6860 = vmatprep.subr.mxu0 0.0
        %6861 = vmatpush1.msra.mxu0 %v6841
        %6862 = vmatprep.subr.mxu0 0.0
        %6863 = vmatpush1.msra.mxu0 0.0
        %6864 = vmatprep.subr.mxu0 0.0
        %6865 = vmatpush1.msra.mxu0 0.0
        %6866 = vmatprep.subr.mxu0 0.0
        %6867 = vmatpush1.msra.mxu0 0.0
        %6868 = vmatprep.subr.mxu0 0.0
        %6869 = vmatpush1.msra.mxu0 0.0
        %6870 = vmatprep.subr.mxu0 0.0
        %6871 = vmatpush1.msra.mxu0 0.0
        %6872 = vmatprep.subr.mxu0 0.0
        %6873 = vmatpush1.msra.mxu0 0.0
        %6874 = vmatprep.subr.mxu0 0.0
        %6875 = vmatpush1.msra.mxu0 0.0
        %6876 = vmatprep.subr.mxu0 0.0
        %6877 = vmatpush1.msra.mxu0 0.0
        %6878 = vmatprep.subr.mxu0 0.0
        %6879 = vmatpush1.msra.mxu0 0.0
        %6880 = vmatprep.subr.mxu0 0.0
        %6881 = vmatpush1.msra.mxu0 0.0
        %6882 = vmatprep.subr.mxu0 0.0
        %6883 = vmatpush1.msra.mxu0 0.0
        %6884 = vmatprep.subr.mxu0 0.0
        %6885 = vmatpush1.msra.mxu0 0.0
        %6886 = vmatprep.subr.mxu0 0.0
        %6887 = vmatpush1.msra.mxu0 0.0
        %6888 = vmatprep.subr.mxu0 0.0
        %6889 = vmatpush1.msra.mxu0 0.0
        %6890 = vmatprep.subr.mxu0 0.0
        %6891 = vmatpush1.msra.mxu0 0.0
        %6892 = vmatprep.subr.mxu0 0.0
        %6893 = vmatpush1.msra.mxu0 0.0
        %6894 = vmatprep.subr.mxu0 0.0
        %6895 = vmatpush1.msra.mxu0 0.0
        %6896 = vmatprep.subr.mxu0 0.0
        %6897 = vmatpush1.msra.mxu0 0.0
        %6898 = vmatprep.subr.mxu0 0.0
        %6899 = vmatpush1.msra.mxu0 0.0
        %6900 = vmatprep.subr.mxu0 0.0
        %6901 = vmatpush1.msra.mxu0 0.0
        %6902 = vmatprep.subr.mxu0 0.0
        %6903 = vmatpush1.msra.mxu0 0.0
        %6904 = vmatprep.subr.mxu0 0.0
        %6905 = vmatpush1.msra.mxu0 0.0
        %6906 = vmatprep.subr.mxu0 0.0
        %6907 = vmatpush1.msra.mxu0 0.0
        %6908 = vmatprep.subr.mxu0 0.0
        %6909 = vmatpush1.msra.mxu0 0.0
        %6910 = vmatprep.mubr.f32.mxu0 0.0
        %6911 = vmatmul.mubr.f32.gmra.mrb[0].mxu0 %v6844
        %v6912 = vpop.f32.mrb[0].mxu0
        %v6913 = vadd.f32 0.0, %v6912
        %v6914 = vpop.f32.mrb[0].mxu0
        %6915 = vdwg.mxu0
        %v6917 = vsel %vm6842, %v6833, 0
        %6919 = vmatprep.subr.mxu0 0.0
        %6920 = vmatpush1.msra.mxu0 %v6834
        %6921 = vmatprep.subr.mxu0 0.0
        %6922 = vmatpush1.msra.mxu0 %v6835
        %6923 = vmatprep.subr.mxu0 0.0
        %6924 = vmatpush1.msra.mxu0 %v6836
        %6925 = vmatprep.subr.mxu0 0.0
        %6926 = vmatpush1.msra.mxu0 %v6837
        %6927 = vmatprep.subr.mxu0 0.0
        %6928 = vmatpush1.msra.mxu0 %v6838
        %6929 = vmatprep.subr.mxu0 0.0
        %6930 = vmatpush1.msra.mxu0 %v6839
        %6931 = vmatprep.subr.mxu0 0.0
        %6932 = vmatpush1.msra.mxu0 %v6840
        %6933 = vmatprep.subr.mxu0 0.0
        %6934 = vmatpush1.msra.mxu0 %v6841
        %6935 = vmatprep.subr.mxu0 0.0
        %6936 = vmatpush1.msra.mxu0 0.0
        %6937 = vmatprep.subr.mxu0 0.0
        %6938 = vmatpush1.msra.mxu0 0.0
        %6939 = vmatprep.subr.mxu0 0.0
        %6940 = vmatpush1.msra.mxu0 0.0
        %6941 = vmatprep.subr.mxu0 0.0
        %6942 = vmatpush1.msra.mxu0 0.0
        %6943 = vmatprep.subr.mxu0 0.0
        %6944 = vmatpush1.msra.mxu0 0.0
        %6945 = vmatprep.subr.mxu0 0.0
        %6946 = vmatpush1.msra.mxu0 0.0
        %6947 = vmatprep.subr.mxu0 0.0
        %6948 = vmatpush1.msra.mxu0 0.0
        %6949 = vmatprep.subr.mxu0 0.0
        %6950 = vmatpush1.msra.mxu0 0.0
        %6951 = vmatprep.subr.mxu0 0.0
        %6952 = vmatpush1.msra.mxu0 0.0
        %6953 = vmatprep.subr.mxu0 0.0
        %6954 = vmatpush1.msra.mxu0 0.0
        %6955 = vmatprep.subr.mxu0 0.0
        %6956 = vmatpush1.msra.mxu0 0.0
        %6957 = vmatprep.subr.mxu0 0.0
        %6958 = vmatpush1.msra.mxu0 0.0
        %6959 = vmatprep.subr.mxu0 0.0
        %6960 = vmatpush1.msra.mxu0 0.0
        %6961 = vmatprep.subr.mxu0 0.0
        %6962 = vmatpush1.msra.mxu0 0.0
        %6963 = vmatprep.subr.mxu0 0.0
        %6964 = vmatpush1.msra.mxu0 0.0
        %6965 = vmatprep.subr.mxu0 0.0
        %6966 = vmatpush1.msra.mxu0 0.0
        %6967 = vmatprep.subr.mxu0 0.0
        %6968 = vmatpush1.msra.mxu0 0.0
        %6969 = vmatprep.subr.mxu0 0.0
        %6970 = vmatpush1.msra.mxu0 0.0
        %6971 = vmatprep.subr.mxu0 0.0
        %6972 = vmatpush1.msra.mxu0 0.0
        %6973 = vmatprep.subr.mxu0 0.0
        %6974 = vmatpush1.msra.mxu0 0.0
        %6975 = vmatprep.subr.mxu0 0.0
        %6976 = vmatpush1.msra.mxu0 0.0
        %6977 = vmatprep.subr.mxu0 0.0
        %6978 = vmatpush1.msra.mxu0 0.0
        %6979 = vmatprep.subr.mxu0 0.0
        %6980 = vmatpush1.msra.mxu0 0.0
        %6981 = vmatprep.subr.mxu0 0.0
        %6982 = vmatpush1.msra.mxu0 0.0
        %6983 = vmatprep.mubr.f32.mxu0 0.0
        %6984 = vmatmul.mubr.f32.gmra.mrb[0].mxu0 %v6917
        %v6985 = vpop.f32.mrb[0].mxu0
        %v6986 = vadd.f32 0.0, %v6985
        %v6987 = vpop.f32.mrb[0].mxu0
        %6988 = vdwg.mxu0
        %v6989 = vmul.f32 %v6913, %v6913
        %v6990 = vsub.f32 %v6986, %v6989
        %v6991 = vlaneseq
        %v6992 = vshrl.u32 %v6991, 7
        %v6993 = vsub.s32 0, %v6992
        %v6994 = vrot.slane %v6913, %v6993
        %v6995 = vsub.f32 %v6813, %v6994
        %v6996 = vadd.f32 %v6990, 1e-05
        %v6997 = vrsqrt.pop %v6996
        %v6998 = vlaneseq
        %v6999 = vshrl.u32 %v6998, 7
        %v7000 = vsub.s32 0, %v6999
        %v7001 = vrot.slane %v6997, %v7000
        %v7002 = vmul.f32 %v6995, %v7001
        %vm7003 = vcmp.ge.f32.partialorder %v7002, 0.0
        %v7004 = vmul.f32 %v7002, 0.2
        %v7005 = vsel %vm7003, %v7002, %v7004
        %v7006 = vpack.c.bf16 %v7005, %v7005
        %v7007 = vld [vmem:[%s20] sm:$0x1]
        %vm7008 = vcmask 15360
        %v7010 = vsel %vm7008, %v7007, 0
        %vm7012 = vcmask 1040384
        %v7014 = vsel %vm7012, %v7006, 0
        %7016 = vmatprep.subr.bf16.mxu0 0
        %7017 = vmatpush1.bf16.msra.mxu0 %v7014
        %7018 = vmatprep.subr.bf16.mxu0 0
        %7019 = vmatpush1.bf16.msra.mxu0 0
        %7020 = vmatprep.subr.bf16.mxu0 0
        %7021 = vmatpush1.bf16.msra.mxu0 0
        %7022 = vmatprep.subr.bf16.mxu0 0
        %7023 = vmatpush1.bf16.msra.mxu0 0
        %7024 = vmatprep.subr.bf16.mxu0 0
        %7025 = vmatpush1.bf16.msra.mxu0 0
        %7026 = vmatprep.subr.bf16.mxu0 0
        %7027 = vmatpush1.bf16.msra.mxu0 0
        %7028 = vmatprep.subr.bf16.mxu0 0
        %7029 = vmatpush1.bf16.msra.mxu0 0
        %7030 = vmatprep.subr.bf16.mxu0 0
        %7031 = vmatpush1.bf16.msra.mxu0 0
        %7032 = vmatprep.subr.bf16.mxu0 0
        %7033 = vmatpush1.bf16.msra.mxu0 0
        %7034 = vmatprep.subr.bf16.mxu0 0
        %7035 = vmatpush1.bf16.msra.mxu0 0
        %7036 = vmatprep.subr.bf16.mxu0 0
        %7037 = vmatpush1.bf16.msra.mxu0 0
        %7038 = vmatprep.subr.bf16.mxu0 0
        %7039 = vmatpush1.bf16.msra.mxu0 0
        %7040 = vmatprep.subr.bf16.mxu0 0
        %7041 = vmatpush1.bf16.msra.mxu0 0
        %7042 = vmatprep.subr.bf16.mxu0 0
        %7043 = vmatpush1.bf16.msra.mxu0 0
        %7044 = vmatprep.subr.bf16.mxu0 0
        %7045 = vmatpush1.bf16.msra.mxu0 0
        %7046 = vmatprep.subr.bf16.mxu0 0
        %7047 = vmatpush1.bf16.msra.mxu0 0
        %7048 = vmatprep.mubr.bf16.mxu0 0
        %7049 = vmatmul.mubr.bf16.gmra.mrb[0].mxu0 %v7010
        %v7050 = vpop.f32.mrb[0].mxu0
        %v7051 = vadd.f32 0.0, %v7050
        %v7052 = vpop.f32.mrb[0].mxu0
        %v7053 = vpop.f32.mrb[0].mxu0
        %v7054 = vpop.f32.mrb[0].mxu0
        %7055 = vdwg.mxu0
        %v7056 = vpack.c.bf16 %v7051, %v7051
        %s7057 = scalar_lea.vmem %s20, 1
        %v7058 = vld [vmem:[%s7057] sm:$0x1]
        %v7060 = vsel %vm7008, %v7058, 0
        %7062 = vmatprep.subr.bf16.mxu0 0
        %7063 = vmatpush1.bf16.msra.mxu0 %v7014
        %7064 = vmatprep.subr.bf16.mxu0 0
        %7065 = vmatpush1.bf16.msra.mxu0 0
        %7066 = vmatprep.subr.bf16.mxu0 0
        %7067 = vmatpush1.bf16.msra.mxu0 0
        %7068 = vmatprep.subr.bf16.mxu0 0
        %7069 = vmatpush1.bf16.msra.mxu0 0
        %7070 = vmatprep.subr.bf16.mxu0 0
        %7071 = vmatpush1.bf16.msra.mxu0 0
        %7072 = vmatprep.subr.bf16.mxu0 0
        %7073 = vmatpush1.bf16.msra.mxu0 0
        %7074 = vmatprep.subr.bf16.mxu0 0
        %7075 = vmatpush1.bf16.msra.mxu0 0
        %7076 = vmatprep.subr.bf16.mxu0 0
        %7077 = vmatpush1.bf16.msra.mxu0 0
        %7078 = vmatprep.subr.bf16.mxu0 0
        %7079 = vmatpush1.bf16.msra.mxu0 0
        %7080 = vmatprep.subr.bf16.mxu0 0
        %7081 = vmatpush1.bf16.msra.mxu0 0
        %7082 = vmatprep.subr.bf16.mxu0 0
        %7083 = vmatpush1.bf16.msra.mxu0 0
        %7084 = vmatprep.subr.bf16.mxu0 0
        %7085 = vmatpush1.bf16.msra.mxu0 0
        %7086 = vmatprep.subr.bf16.mxu0 0
        %7087 = vmatpush1.bf16.msra.mxu0 0
        %7088 = vmatprep.subr.bf16.mxu0 0
        %7089 = vmatpush1.bf16.msra.mxu0 0
        %7090 = vmatprep.subr.bf16.mxu0 0
        %7091 = vmatpush1.bf16.msra.mxu0 0
        %7092 = vmatprep.subr.bf16.mxu0 0
        %7093 = vmatpush1.bf16.msra.mxu0 0
        %7094 = vmatprep.mubr.bf16.mxu0 0
        %7095 = vmatmul.mubr.bf16.gmra.mrb[0].mxu0 %v7060
        %v7096 = vpop.f32.mrb[0].mxu0
        %v7097 = vadd.f32 0.0, %v7096
        %v7098 = vpop.f32.mrb[0].mxu0
        %v7099 = vpop.f32.mrb[0].mxu0
        %v7100 = vpop.f32.mrb[0].mxu0
        %7101 = vdwg.mxu0
        %v7102 = vpack.c.bf16 %v7097, %v7097
        %s7103 = scalar_lea.vmem %s20, 2
        %v7104 = vld [vmem:[%s7103] sm:$0x1]
        %v7106 = vsel %vm7008, %v7104, 0
        %7108 = vmatprep.subr.bf16.mxu0 0
        %7109 = vmatpush1.bf16.msra.mxu0 %v7014
        %7110 = vmatprep.subr.bf16.mxu0 0
        %7111 = vmatpush1.bf16.msra.mxu0 0
        %7112 = vmatprep.subr.bf16.mxu0 0
        %7113 = vmatpush1.bf16.msra.mxu0 0
        %7114 = vmatprep.subr.bf16.mxu0 0
        %7115 = vmatpush1.bf16.msra.mxu0 0
        %7116 = vmatprep.subr.bf16.mxu0 0
        %7117 = vmatpush1.bf16.msra.mxu0 0
        %7118 = vmatprep.subr.bf16.mxu0 0
        %7119 = vmatpush1.bf16.msra.mxu0 0
        %7120 = vmatprep.subr.bf16.mxu0 0
        %7121 = vmatpush1.bf16.msra.mxu0 0
        %7122 = vmatprep.subr.bf16.mxu0 0
        %7123 = vmatpush1.bf16.msra.mxu0 0
        %7124 = vmatprep.subr.bf16.mxu0 0
        %7125 = vmatpush1.bf16.msra.mxu0 0
        %7126 = vmatprep.subr.bf16.mxu0 0
        %7127 = vmatpush1.bf16.msra.mxu0 0
        %7128 = vmatprep.subr.bf16.mxu0 0
        %7129 = vmatpush1.bf16.msra.mxu0 0
        %7130 = vmatprep.subr.bf16.mxu0 0
        %7131 = vmatpush1.bf16.msra.mxu0 0
        %7132 = vmatprep.subr.bf16.mxu0 0
        %7133 = vmatpush1.bf16.msra.mxu0 0
        %7134 = vmatprep.subr.bf16.mxu0 0
        %7135 = vmatpush1.bf16.msra.mxu0 0
        %7136 = vmatprep.subr.bf16.mxu0 0
        %7137 = vmatpush1.bf16.msra.mxu0 0
        %7138 = vmatprep.subr.bf16.mxu0 0
        %7139 = vmatpush1.bf16.msra.mxu0 0
        %7140 = vmatprep.mubr.bf16.mxu0 0
        %7141 = vmatmul.mubr.bf16.gmra.mrb[0].mxu0 %v7106
        %v7142 = vpop.f32.mrb[0].mxu0
        %v7143 = vadd.f32 0.0, %v7142
        %v7144 = vpop.f32.mrb[0].mxu0
        %v7145 = vpop.f32.mrb[0].mxu0
        %v7146 = vpop.f32.mrb[0].mxu0
        %7147 = vdwg.mxu0
        %v7148 = vpack.c.bf16 %v7143, %v7143
        %s7149 = scalar_lea.vmem %s20, 3
        %v7150 = vld [vmem:[%s7149] sm:$0x1]
        %v7152 = vsel %vm7008, %v7150, 0
        %7154 = vmatprep.subr.bf16.mxu0 0
        %7155 = vmatpush1.bf16.msra.mxu0 %v7014
        %7156 = vmatprep.subr.bf16.mxu0 0
        %7157 = vmatpush1.bf16.msra.mxu0 0
        %7158 = vmatprep.subr.bf16.mxu0 0
        %7159 = vmatpush1.bf16.msra.mxu0 0
        %7160 = vmatprep.subr.bf16.mxu0 0
        %7161 = vmatpush1.bf16.msra.mxu0 0
        %7162 = vmatprep.subr.bf16.mxu0 0
        %7163 = vmatpush1.bf16.msra.mxu0 0
        %7164 = vmatprep.subr.bf16.mxu0 0
        %7165 = vmatpush1.bf16.msra.mxu0 0
        %7166 = vmatprep.subr.bf16.mxu0 0
        %7167 = vmatpush1.bf16.msra.mxu0 0
        %7168 = vmatprep.subr.bf16.mxu0 0
        %7169 = vmatpush1.bf16.msra.mxu0 0
        %7170 = vmatprep.subr.bf16.mxu0 0
        %7171 = vmatpush1.bf16.msra.mxu0 0
        %7172 = vmatprep.subr.bf16.mxu0 0
        %7173 = vmatpush1.bf16.msra.mxu0 0
        %7174 = vmatprep.subr.bf16.mxu0 0
        %7175 = vmatpush1.bf16.msra.mxu0 0
        %7176 = vmatprep.subr.bf16.mxu0 0
        %7177 = vmatpush1.bf16.msra.mxu0 0
        %7178 = vmatprep.subr.bf16.mxu0 0
        %7179 = vmatpush1.bf16.msra.mxu0 0
        %7180 = vmatprep.subr.bf16.mxu0 0
        %7181 = vmatpush1.bf16.msra.mxu0 0
        %7182 = vmatprep.subr.bf16.mxu0 0
        %7183 = vmatpush1.bf16.msra.mxu0 0
        %7184 = vmatprep.subr.bf16.mxu0 0
        %7185 = vmatpush1.bf16.msra.mxu0 0
        %7186 = vmatprep.mubr.bf16.mxu0 0
        %7187 = vmatmul.mubr.bf16.gmra.mrb[0].mxu0 %v7152
        %v7188 = vpop.f32.mrb[0].mxu0
        %v7189 = vadd.f32 0.0, %v7188
        %v7190 = vpop.f32.mrb[0].mxu0
        %v7191 = vpop.f32.mrb[0].mxu0
        %v7192 = vpop.f32.mrb[0].mxu0
        %7193 = vdwg.mxu0
        %v7194 = vpack.c.bf16 %v7189, %v7189
        %7196 = vrot.lane.b32.xlu0 %v7102, 64
        %v7197 = vpop.permute.xlu0 %7196
        %7199 = vrot.lane.b32.xlu0 %v7194, 64
        %v7200 = vpop.permute.xlu0 %7199
        %v7203 = vsel %vm6842, %v7056, %v7197
        %v7207 = vsel %vm6842, %v7148, %v7200
        %v7209 = vld [vmem:[%s21] sm:$0xf]
        %v7210 = vld [vmem:[%s21 + $0x4] sm:$0xf]
        %v7211 = vld [vmem:[%s21 + $0x8] sm:$0xf]
        %v7212 = vld [vmem:[%s21 + $0xc] sm:$0xf]
        %v7213 = vld [vmem:[%s21 + $0x10] sm:$0xf]
        %v7214 = vld [vmem:[%s21 + $0x14] sm:$0xf]
        %v7215 = vld [vmem:[%s21 + $0x18] sm:$0xf]
        %v7216 = vld [vmem:[%s21 + $0x1c] sm:$0xf]
        %v7217 = vld [vmem:[%s21 + $0x20] sm:$0xf]
        %v7218 = vld [vmem:[%s21 + $0x24] sm:$0xf]
        %v7219 = vld [vmem:[%s21 + $0x28] sm:$0xf]
        %v7220 = vld [vmem:[%s21 + $0x2c] sm:$0xf]
        %v7221 = vld [vmem:[%s21 + $0x30] sm:$0xf]
        %v7222 = vld [vmem:[%s21 + $0x34] sm:$0xf]
        %v7223 = vld [vmem:[%s21 + $0x38] sm:$0xf]
        %v7224 = vld [vmem:[%s21 + $0x3c] sm:$0xf]
        %v7225 = vld [vmem:[%s21 + $0x40] sm:$0xf]
        %v7226 = vld [vmem:[%s21 + $0x44] sm:$0xf]
        %v7227 = vld [vmem:[%s21 + $0x48] sm:$0xf]
        %v7228 = vld [vmem:[%s21 + $0x4c] sm:$0xf]
        %v7229 = vld [vmem:[%s21 + $0x50] sm:$0xf]
        %v7230 = vld [vmem:[%s21 + $0x54] sm:$0xf]
        %v7231 = vld [vmem:[%s21 + $0x58] sm:$0xf]
        %v7232 = vld [vmem:[%s21 + $0x5c] sm:$0xf]
        %v7233 = vld [vmem:[%s21 + $0x60] sm:$0xf]
        %v7234 = vld [vmem:[%s21 + $0x64] sm:$0xf]
        %v7235 = vld [vmem:[%s21 + $0x68] sm:$0xf]
        %v7236 = vld [vmem:[%s21 + $0x6c] sm:$0xf]
        %v7237 = vld [vmem:[%s21 + $0x70] sm:$0xf]
        %v7238 = vld [vmem:[%s21 + $0x74] sm:$0xf]
        %v7239 = vld [vmem:[%s21 + $0x78] sm:$0xf]
        %v7240 = vld [vmem:[%s21 + $0x7c] sm:$0xf]
        %v7241 = vld [vmem:[#allocation2] sm:$0x1]
        %v7274 = vunpack.c.l.b16 %v7209
        %v7275 = vunpack.c.l.b16 %v7210
        %v7276 = vunpack.c.l.b16 %v7211
        %v7277 = vunpack.c.l.b16 %v7212
        %v7278 = vunpack.c.l.b16 %v7213
        %v7279 = vunpack.c.l.b16 %v7214
        %v7280 = vunpack.c.l.b16 %v7215
        %v7281 = vunpack.c.l.b16 %v7216
        %v7282 = vunpack.c.l.b16 %v7217
        %v7283 = vunpack.c.l.b16 %v7218
        %v7284 = vunpack.c.l.b16 %v7219
        %v7285 = vunpack.c.l.b16 %v7220
        %v7286 = vunpack.c.l.b16 %v7221
        %v7287 = vunpack.c.l.b16 %v7222
        %v7288 = vunpack.c.l.b16 %v7223
        %v7289 = vunpack.c.l.b16 %v7224
        %v7290 = vunpack.c.l.b16 %v7225
        %v7291 = vunpack.c.l.b16 %v7226
        %v7292 = vunpack.c.l.b16 %v7227
        %v7293 = vunpack.c.l.b16 %v7228
        %v7294 = vunpack.c.l.b16 %v7229
        %v7295 = vunpack.c.l.b16 %v7230
        %v7296 = vunpack.c.l.b16 %v7231
        %v7297 = vunpack.c.l.b16 %v7232
        %v7298 = vunpack.c.l.b16 %v7233
        %v7299 = vunpack.c.l.b16 %v7234
        %v7300 = vunpack.c.l.b16 %v7235
        %v7301 = vunpack.c.l.b16 %v7236
        %v7302 = vunpack.c.l.b16 %v7237
        %v7303 = vunpack.c.l.b16 %v7238
        %v7304 = vunpack.c.l.b16 %v7239
        %v7305 = vunpack.c.l.b16 %v7240
        %v7306 = vpack.c.b16 %v7275, %v7274
        %v7307 = vpack.c.b16 %v7277, %v7276
        %v7308 = vpack.c.b16 %v7279, %v7278
        %v7309 = vpack.c.b16 %v7281, %v7280
        %v7310 = vpack.c.b16 %v7283, %v7282
        %v7311 = vpack.c.b16 %v7285, %v7284
        %v7312 = vpack.c.b16 %v7287, %v7286
        %v7313 = vpack.c.b16 %v7289, %v7288
        %v7314 = vpack.c.b16 %v7291, %v7290
        %v7315 = vpack.c.b16 %v7293, %v7292
        %v7316 = vpack.c.b16 %v7295, %v7294
        %v7317 = vpack.c.b16 %v7297, %v7296
        %v7318 = vpack.c.b16 %v7299, %v7298
        %v7319 = vpack.c.b16 %v7301, %v7300
        %v7320 = vpack.c.b16 %v7303, %v7302
        %v7321 = vpack.c.b16 %v7305, %v7304
        %7338 = vmatprep.subr.bf16.mxu0 0
        %7339 = vmatpush1.bf16.msra.mxu0 %v7306
        %7340 = vmatprep.subr.bf16.mxu0 0
        %7341 = vmatpush1.bf16.msra.mxu0 %v7307
        %7342 = vmatprep.subr.bf16.mxu0 0
        %7343 = vmatpush1.bf16.msra.mxu0 %v7308
        %7344 = vmatprep.subr.bf16.mxu0 0
        %7345 = vmatpush1.bf16.msra.mxu0 %v7309
        %7346 = vmatprep.subr.bf16.mxu0 0
        %7347 = vmatpush1.bf16.msra.mxu0 %v7310
        %7348 = vmatprep.subr.bf16.mxu0 0
        %7349 = vmatpush1.bf16.msra.mxu0 %v7311
        %7350 = vmatprep.subr.bf16.mxu0 0
        %7351 = vmatpush1.bf16.msra.mxu0 %v7312
        %7352 = vmatprep.subr.bf16.mxu0 0
        %7353 = vmatpush1.bf16.msra.mxu0 %v7313
        %7354 = vmatprep.subr.bf16.mxu0 0
        %7355 = vmatpush1.bf16.msra.mxu0 %v7314
        %7356 = vmatprep.subr.bf16.mxu0 0
        %7357 = vmatpush1.bf16.msra.mxu0 %v7315
        %7358 = vmatprep.subr.bf16.mxu0 0
        %7359 = vmatpush1.bf16.msra.mxu0 %v7316
        %7360 = vmatprep.subr.bf16.mxu0 0
        %7361 = vmatpush1.bf16.msra.mxu0 %v7317
        %7362 = vmatprep.subr.bf16.mxu0 0
        %7363 = vmatpush1.bf16.msra.mxu0 %v7318
        %7364 = vmatprep.subr.bf16.mxu0 0
        %7365 = vmatpush1.bf16.msra.mxu0 %v7319
        %7366 = vmatprep.subr.bf16.mxu0 0
        %7367 = vmatpush1.bf16.msra.mxu0 %v7320
        %7368 = vmatprep.subr.bf16.mxu0 0
        %7369 = vmatpush1.bf16.msra.mxu0 %v7321
        %7370 = vmatprep.mubr.bf16.mxu0 %v7207
        %7371 = vmatmul.mubr.bf16.gmra.mrb[0].mxu0 %v7203
        %v7372 = vpop.f32.mrb[0].mxu0
        %v7373 = vadd.f32 %v7241, %v7372
        %v7374 = vpop.f32.mrb[0].mxu0
        %v7375 = vpop.f32.mrb[0].mxu0
        %v7376 = vpop.f32.mrb[0].mxu0
        %7377 = vdwg.mxu0
        %vm7378 = vcmask 0
        %7379 = vst.msk [vmem:[%s911] sm:$0x1] %vm7378, %v7373
        %p7380 = scmp.lt.s32.totalorder %s46, 1
        %s7381 = scalar_select %p7380, %s46, 1
        %s7382 = scalar_lea.vmem %s23, %s7381
        // Predicated region
        $region169: #{tpu_custom_call.1} parent=111 // pred_check
          %p7383 = pneg %p552
        $region170: #{tpu_custom_call.1} parent=111 // pred_check_branch
          %7385 = sbr.rel (%p7383) target = $region172
        $region171: #{tpu_custom_call.1} parent=111 // pred_region
          _
        $region172: #{tpu_custom_call.1} parent=111 // pred_fallthru
          _
      $region112: #{tpu_custom_call.1} parent=5 // pred_fallthru
        _
      %p7386 = scmp.le.s32.totalorder 2, %s41
      // Predicated region
      $region173: #{tpu_custom_call.1} parent=5 // pred_check
        %p7387 = pneg %p7386
      $region174: #{tpu_custom_call.1} parent=5 // pred_check_branch
        %7389 = sbr.rel (%p7387) target = $region176
      $region175: #{tpu_custom_call.1} parent=5 // pred_region
        %s7390 = ssub.s32 %s41, 2
        // Predicated region
        $region177: #{tpu_custom_call.1} parent=175 // pred_check
          %p7391 = pneg %p558
        $region178: #{tpu_custom_call.1} parent=175 // pred_check_branch
          %7393 = sbr.rel (%p7391) target = $region180
        $region179: #{tpu_custom_call.1} parent=175 // pred_region
          %p7394 = scmp.lt.s32.totalorder %s47, 1
          %s7395 = scalar_select %p7394, %s47, 1
          %s7396 = scalar_lea.vmem %s23, %s7395
        $region180: #{tpu_custom_call.1} parent=175 // pred_fallthru
          _
      $region176: #{tpu_custom_call.1} parent=5 // pred_fallthru
        _
    $region6: #{tpu_custom_call.1} parent=1 // loop_footer
      %s45 = sadd.s32 1, %s41
    $region7: #{tpu_custom_call.1} parent=1 // loop_footer_branch
      %40 = sbr.rel target = $region3
    $region8: #{tpu_custom_call.1} parent=1 // loop_exit
      _
    %7397 = vsyncpa [#allocation4], 1
    %s7398 = scalar_lea.sflag [#allocation4], 1
    %7399 = vsyncpa %s7398, 1
    %7400 = vsyncpa [#allocation6], 1
    %7401 = vsyncpa [#allocation9], 1
    %7402 = vsyncpa [#allocation12], 1
    %7403 = vsyncpa [#allocation15], 1
    %7404 = vsyncpa [#allocation18], 1
    %7405 = vsyncpa [#allocation21], 1
    %7406 = vsyncpa [#allocation24], 1

</llo_original>
